<compile_context>
chip_gen: v6e
topology: v6e:2x2x1
jax: 0.10.0
libtpu: 0.0.40
codegen_flags: <defaults>
</compile_context>

<pallas_src>
import functools

import jax
import jax.numpy as jnp
from jax import lax
from jax.experimental import pallas as pl
from jax.experimental.pallas import tpu as pltpu

LANE = 128


def _round_up(v, m):
    return (v + m - 1) // m * m


# ----------------------------------------------------------------------------
# Pallas kernels
# ----------------------------------------------------------------------------

def _stats_kernel(x_ref, sum_ref, sumsq_ref):
    """Per-channel sum / sum-of-squares of one image (single pass over x)."""
    C = x_ref.shape[-1]
    x = x_ref[...].astype(jnp.float32).reshape(-1, C)
    sum_ref[...] = jnp.sum(x, axis=0).reshape(1, 1, C)
    sumsq_ref[...] = jnp.sum(x * x, axis=0).reshape(1, 1, C)


def channel_moments(x):
    """x: [N,H,W,C] -> (sum[C], sumsq[C]) in one Pallas pass, grid over batch."""
    N, H, W, C = x.shape
    s, ss = pl.pallas_call(
        _stats_kernel,
        out_shape=(jax.ShapeDtypeStruct((N, 1, C), jnp.float32),
                   jax.ShapeDtypeStruct((N, 1, C), jnp.float32)),
        grid=(N,),
        in_specs=[pl.BlockSpec((1, H, W, C), lambda n: (n, 0, 0, 0))],
        out_specs=(pl.BlockSpec((1, 1, C), lambda n: (n, 0, 0)),
                   pl.BlockSpec((1, 1, C), lambda n: (n, 0, 0))),
        compiler_params=pltpu.CompilerParams(dimension_semantics=("parallel",)),
    )(x)
    return jnp.sum(s, axis=0).reshape(C), jnp.sum(ss, axis=0).reshape(C)


def _conv1x1_kernel(x_ref, w_ref, o_ref, sum_ref, sumsq_ref):
    """1x1 conv (no bias) + per-channel output moments, one image per step."""
    _, Ho, Wo, C = x_ref.shape
    Coutp = w_ref.shape[1]
    a = x_ref[...].reshape(Ho * Wo, C).astype(jnp.bfloat16)
    y = jnp.dot(a, w_ref[...], preferred_element_type=jnp.float32)
    sum_ref[...] = jnp.sum(y, axis=0).reshape(1, 1, Coutp)
    sumsq_ref[...] = jnp.sum(y * y, axis=0).reshape(1, 1, Coutp)
    o_ref[...] = y.reshape(1, Ho, Wo, Coutp)


def conv1x1_with_moments(x, w_pad):
    """x: [N,Ho,Wo,C]; w_pad: [C,Coutp] bf16 -> (y [N,Ho,Wo,Coutp] f32, sum, sumsq)."""
    N, Ho, Wo, C = x.shape
    Coutp = w_pad.shape[1]
    y, s, ss = pl.pallas_call(
        _conv1x1_kernel,
        out_shape=(jax.ShapeDtypeStruct((N, Ho, Wo, Coutp), jnp.float32),
                   jax.ShapeDtypeStruct((N, 1, Coutp), jnp.float32),
                   jax.ShapeDtypeStruct((N, 1, Coutp), jnp.float32)),
        grid=(N,),
        in_specs=[pl.BlockSpec((1, Ho, Wo, C), lambda n: (n, 0, 0, 0)),
                  pl.BlockSpec((C, Coutp), lambda n: (0, 0))],
        out_specs=(pl.BlockSpec((1, Ho, Wo, Coutp), lambda n: (n, 0, 0, 0)),
                   pl.BlockSpec((1, 1, Coutp), lambda n: (n, 0, 0)),
                   pl.BlockSpec((1, 1, Coutp), lambda n: (n, 0, 0))),
        compiler_params=pltpu.CompilerParams(dimension_semantics=("parallel",)),
    )(x, w_pad)
    return y, jnp.sum(s, axis=0).reshape(Coutp), jnp.sum(ss, axis=0).reshape(Coutp)


def _fused_bn_relu_conv3x3_kernel(*refs, stride, Ho, Wo, nph, has_residual):
    """BN(scale,shift)+ReLU on the input, 3x3 conv as 9 accumulating matmuls,
    optional fused residual epilogue, plus per-channel output moments.
    One image (grid step) per invocation; taps are statically unrolled."""
    i = 0
    phase_refs = refs[i:i + nph]; i += nph
    mask_refs = refs[i:i + nph]; i += nph
    scale_ref, shift_ref, w_ref, bias_ref = refs[i:i + 4]; i += 4
    if has_residual:
        res_ref, rscale_ref, rshift_ref = refs[i:i + 3]; i += 3
    out_ref, sum_ref, sumsq_ref = refs[i:i + 3]

    C = scale_ref.shape[1]
    Coutp = bias_ref.shape[1]
    scale = scale_ref[...].reshape(1, 1, C)
    shift = shift_ref[...].reshape(1, 1, C)

    acc = jnp.zeros((Ho * Wo, Coutp), jnp.float32)
    for t in range(9):                       # static unroll over the 9 taps
        dh, dw = t // 3, t % 3
        if stride == 1:
            p, hoff, woff = 0, dh, dw
        else:                                # stride-2: 4 spatial phases
            p = (dh % 2) * 2 + (dw % 2)
            hoff, woff = dh // 2, dw // 2
        win = phase_refs[p][0, hoff:hoff + Ho, woff:woff + Wo, :].astype(jnp.float32)
        m = mask_refs[p][0, hoff:hoff + Ho, woff:woff + Wo, :]
        # BN affine + ReLU in f32; mask restores true zero padding.
        a = jnp.maximum(win * scale + shift, 0.0) * m
        a2 = a.reshape(Ho * Wo, C).astype(jnp.bfloat16)
        acc = acc + jnp.dot(a2, w_ref[t], preferred_element_type=jnp.float32)

    conv = acc + bias_ref[...]
    sum_ref[...] = jnp.sum(conv, axis=0).reshape(1, 1, Coutp)
    sumsq_ref[...] = jnp.sum(conv * conv, axis=0).reshape(1, 1, Coutp)
    out = conv
    if has_residual:
        out = (out + res_ref[...].reshape(Ho * Wo, Coutp) * rscale_ref[...]
               + rshift_ref[...])
    out_ref[...] = out.reshape(1, Ho, Wo, Coutp).astype(out_ref.dtype)


def fused_bn_relu_conv3x3(x, scale, shift, w_taps, bias_pad, stride,
                          residual=None, out_dtype=jnp.float32):
    """x: [N,H,W,C] raw conv-layer input (BN scale/shift + ReLU applied in-kernel).
    w_taps: [9,C,Coutp] bf16; bias_pad: [Coutp].
    residual: optional (res [N,Ho,Wo,Coutp] f32, rscale [Coutp], rshift [Coutp]).
    Returns (out [N,Ho,Wo,Coutp] out_dtype, col_sum [Coutp], col_sumsq [Coutp])."""
    N, H, W, C = x.shape
    Coutp = bias_pad.shape[0]
    Ho = (H - 1) // stride + 1
    Wo = (W - 1) // stride + 1

    xp = jnp.pad(x, ((0, 0), (1, 1), (1, 1), (0, 0)))
    mask = jnp.pad(jnp.ones((1, H, W, 1), jnp.float32),
                   ((0, 0), (1, 1), (1, 1), (0, 0)))
    if stride == 1:
        phases, masks = [xp], [mask]
    else:
        phases = [xp[:, ph::2, pw::2, :] for ph in (0, 1) for pw in (0, 1)]
        masks = [mask[:, ph::2, pw::2, :] for ph in (0, 1) for pw in (0, 1)]
    nph = len(phases)

    in_specs, args = [], []
    for p in phases:
        in_specs.append(pl.BlockSpec((1,) + p.shape[1:], lambda n: (n, 0, 0, 0)))
        args.append(p)
    for m in masks:
        in_specs.append(pl.BlockSpec(m.shape, lambda n: (0, 0, 0, 0)))
        args.append(m)
    in_specs += [pl.BlockSpec((1, C), lambda n: (0, 0)),
                 pl.BlockSpec((1, C), lambda n: (0, 0)),
                 pl.BlockSpec((9, C, Coutp), lambda n: (0, 0, 0)),
                 pl.BlockSpec((1, Coutp), lambda n: (0, 0))]
    args += [scale.reshape(1, C).astype(jnp.float32),
             shift.reshape(1, C).astype(jnp.float32),
             w_taps, bias_pad.reshape(1, Coutp).astype(jnp.float32)]
    has_residual = residual is not None
    if has_residual:
        res, rscale, rshift = residual
        in_specs += [pl.BlockSpec((1, Ho, Wo, Coutp), lambda n: (n, 0, 0, 0)),
                     pl.BlockSpec((1, Coutp), lambda n: (0, 0)),
                     pl.BlockSpec((1, Coutp), lambda n: (0, 0))]
        args += [res, rscale.reshape(1, Coutp).astype(jnp.float32),
                 rshift.reshape(1, Coutp).astype(jnp.float32)]

    kernel = functools.partial(_fused_bn_relu_conv3x3_kernel, stride=stride,
                               Ho=Ho, Wo=Wo, nph=nph, has_residual=has_residual)
    out, s, ss = pl.pallas_call(
        kernel,
        out_shape=(jax.ShapeDtypeStruct((N, Ho, Wo, Coutp), out_dtype),
                   jax.ShapeDtypeStruct((N, 1, Coutp), jnp.float32),
                   jax.ShapeDtypeStruct((N, 1, Coutp), jnp.float32)),
        grid=(N,),
        in_specs=in_specs,
        out_specs=(pl.BlockSpec((1, Ho, Wo, Coutp), lambda n: (n, 0, 0, 0)),
                   pl.BlockSpec((1, 1, Coutp), lambda n: (n, 0, 0)),
                   pl.BlockSpec((1, 1, Coutp), lambda n: (n, 0, 0))),
        compiler_params=pltpu.CompilerParams(dimension_semantics=("parallel",)),
    )(*args)
    return out, jnp.sum(s, axis=0).reshape(Coutp), jnp.sum(ss, axis=0).reshape(Coutp)


# ----------------------------------------------------------------------------
# Parameter packing & BN helpers (tiny per-channel math, plain JAX)
# ----------------------------------------------------------------------------

def _bn_scale_shift(s, ss, count, gamma, beta, eps=1e-5):
    mean = s / count
    var = jnp.maximum(ss / count - mean * mean, 0.0)   # biased (training-mode) var
    scale = gamma * lax.rsqrt(var + eps)
    shift = beta - mean * scale
    return scale, shift


def pack_conv3x3_weight(w, cinp, coutp):
    """[Cout,Cin,3,3] (PyTorch) -> [9,Cinp,Coutp] bf16 (tap-major, zero-padded)."""
    cout, cin = w.shape[0], w.shape[1]
    wt = jnp.transpose(w, (2, 3, 1, 0)).reshape(9, cin, cout)
    wt = jnp.pad(wt, ((0, 0), (0, cinp - cin), (0, coutp - cout)))
    return wt.astype(jnp.bfloat16)


def pack_conv1x1_weight(w, coutp):
    cout, cin = w.shape[0], w.shape[1]
    wt = jnp.pad(w.reshape(cout, cin).T, ((0, 0), (0, coutp - cout)))
    return wt.astype(jnp.bfloat16)


def pad_vec(v, coutp):
    return jnp.pad(v, (0, coutp - v.shape[0]))


# ----------------------------------------------------------------------------
# ResUNetDownBlock forward (Pallas path)
# ----------------------------------------------------------------------------

def res_unet_down_block_forward(params, x_nchw, start_block):
    x = jnp.transpose(x_nchw, (0, 2, 3, 1)).astype(jnp.float32)   # NCHW -> NHWC
    N, H, W, Cin = x.shape
    cout = params["conv1_w"].shape[0]
    coutp = _round_up(cout, LANE)
    stride = 1 if start_block else 2

    # bn1 statistics of the raw input (single Pallas pass).
    s1, ss1 = channel_moments(x)
    scale1, shift1 = _bn_scale_shift(s1, ss1, N * H * W,
                                     params["bn1_g"], params["bn1_b"])

    # Shortcut: bias-free 1x1 conv on the stride-subsampled raw input, with its
    # output moments produced in the same kernel.  Its BN affine is folded into
    # the final conv kernel's epilogue together with the residual add.
    xs = x if stride == 1 else x[:, ::stride, ::stride, :]
    ys, ssc, sssc = conv1x1_with_moments(xs, pack_conv1x1_weight(params["sc_w"], coutp))
    n_sc = ys.shape[0] * ys.shape[1] * ys.shape[2]
    scale_sc, shift_sc = _bn_scale_shift(ssc, sssc, n_sc,
                                         pad_vec(params["sc_bn_g"], coutp),
                                         pad_vec(params["sc_bn_b"], coutp))

    w1 = pack_conv3x3_weight(params["conv1_w"], Cin, coutp)
    b1 = pad_vec(params["conv1_b"], coutp)

    if start_block:
        # ShortConvBlock: bn1 -> relu -> conv1  (+ fused shortcut-BN + residual)
        out, _, _ = fused_bn_relu_conv3x3(
            x, scale1, shift1, w1, b1, stride,
            residual=(ys, scale_sc, shift_sc), out_dtype=jnp.float32)
    else:
        # ConvBlock: bn1 -> relu -> conv1(s2) -> bn2 -> relu -> conv2
        y1, s2, ss2 = fused_bn_relu_conv3x3(
            x, scale1, shift1, w1, b1, stride, residual=None,
            out_dtype=jnp.bfloat16)
        Ho, Wo = y1.shape[1], y1.shape[2]
        scale2, shift2 = _bn_scale_shift(s2, ss2, N * Ho * Wo,
                                         pad_vec(params["bn2_g"], coutp),
                                         pad_vec(params["bn2_b"], coutp))
        w2 = pack_conv3x3_weight(params["conv2_w"], coutp, coutp)
        b2 = pad_vec(params["conv2_b"], coutp)
        out, _, _ = fused_bn_relu_conv3x3(
            y1, scale2, shift2, w2, b2, 1,
            residual=(ys, scale_sc, shift_sc), out_dtype=jnp.float32)

    out = out[:, :, :, :cout]                                     # drop lane padding
    return jnp.transpose(out, (0, 3, 1, 2))                       # NHWC -> NCHW


# ----------------------------------------------------------------------------
# Pure-JAX reference (for correctness check)
# ----------------------------------------------------------------------------

def _ref_bn(x, g, b, relu, eps=1e-5):
    mean = jnp.mean(x, axis=(0, 1, 2))
    var = jnp.mean((x - mean) ** 2, axis=(0, 1, 2))
    y = (x - mean) / jnp.sqrt(var + eps) * g + b
    return jnp.maximum(y, 0.0) if relu else y


def _ref_conv(x, w, b, stride, pad):
    y = lax.conv_general_dilated(
        x, jnp.transpose(w, (2, 3, 1, 0)), window_strides=(stride, stride),
        padding=((pad, pad), (pad, pad)),
        dimension_numbers=("NHWC", "HWIO", "NHWC"))
    return y if b is None else y + b


def ref_down_block(params, x_nchw, start_block):
    x = jnp.transpose(x_nchw, (0, 2, 3, 1)).astype(jnp.float32)
    stride = 1 if start_block else 2
    h = _ref_bn(x, params["bn1_g"], params["bn1_b"], relu=True)
    h = _ref_conv(h, params["conv1_w"], params["conv1_b"], stride, 1)
    if not start_block:
        h = _ref_bn(h, params["bn2_g"], params["bn2_b"], relu=True)
        h = _ref_conv(h, params["conv2_w"], params["conv2_b"], 1, 1)
    sc = _ref_conv(x, params["sc_w"], None, stride, 0)
    sc = _ref_bn(sc, params["sc_bn_g"], params["sc_bn_b"], relu=False)
    return jnp.transpose(sc + h, (0, 3, 1, 2))


# ----------------------------------------------------------------------------
# Main
# ----------------------------------------------------------------------------

def init_params(key, in_ch, out_ch, start_block):
    ks = jax.random.split(key, 12)
    p = {"bn1_g": 1.0 + 0.1 * jax.random.normal(ks[0], (in_ch,), jnp.float32),
         "bn1_b": 0.05 * jax.random.normal(ks[1], (in_ch,), jnp.float32),
         "conv1_w": 0.1 * jax.random.normal(ks[2], (out_ch, in_ch, 3, 3), jnp.float32),
         "conv1_b": 0.01 * jax.random.normal(ks[3], (out_ch,), jnp.float32),
         "sc_w": 0.1 * jax.random.normal(ks[8], (out_ch, in_ch, 1, 1), jnp.float32),
         "sc_bn_g": 1.0 + 0.1 * jax.random.normal(ks[9], (out_ch,), jnp.float32),
         "sc_bn_b": 0.05 * jax.random.normal(ks[10], (out_ch,), jnp.float32)}
    if not start_block:
        p["bn2_g"] = 1.0 + 0.1 * jax.random.normal(ks[4], (out_ch,), jnp.float32)
        p["bn2_b"] = 0.05 * jax.random.normal(ks[5], (out_ch,), jnp.float32)
        p["conv2_w"] = 0.1 * jax.random.normal(ks[6], (out_ch, out_ch, 3, 3), jnp.float32)
        p["conv2_b"] = 0.01 * jax.random.normal(ks[7], (out_ch,), jnp.float32)
    return p


if __name__ == "__main__":
    IN_CH, OUT_CH = 4, 8
    B, H, W = 2, 16, 16

    root = jax.random.PRNGKey(0)
    kx, kp0, kp1 = jax.random.split(root, 3)
    x = jax.random.normal(kx, (B, IN_CH, H, W), jnp.float32)

    for start_block, kp in ((False, kp0), (True, kp1)):
        params = init_params(kp, IN_CH, OUT_CH, start_block)
        fwd = jax.jit(functools.partial(res_unet_down_block_forward,
                                        start_block=start_block))
        out = jax.block_until_ready(fwd(params, x))

        sp = (H, W) if start_block else (H // 2, W // 2)
        assert out.shape == (B, OUT_CH) + sp, out.shape
        assert bool(jnp.all(jnp.isfinite(out)))

        ref = ref_down_block(params, x, start_block)
        rel_err = float(jnp.max(jnp.abs(out - ref)) /
                        (1e-3 + jnp.max(jnp.abs(ref))))
        assert rel_err < 0.08, f"start_block={start_block} rel_err={rel_err}"

    print("KERNEL_OK")
</pallas_src>

<mosaic_0001>
module attributes {stable_mosaic.version = 11 : i64} {
  func.func @_stats_kernel(%arg0: i32, %arg1: memref<1x16x16x4xf32, #tpu.memory_space<vmem>>, %arg2: memref<1x1x4xf32, #tpu.memory_space<vmem>>, %arg3: memref<1x1x4xf32, #tpu.memory_space<vmem>>) attributes {dimension_semantics = [#tpu.dimension_semantics<parallel>], iteration_bounds = array<i64: 2>, scalar_prefetch = 0 : i64, scratch_operands = 0 : i64, tpu.core_type = #tpu.core_type<tc>, window_params = [{transform_indices = @transform_0, window_bounds = array<i64: 1, 16, 16, 4>}, {transform_indices = @transform_1, window_bounds = array<i64: 1, 1, 4>}, {transform_indices = @transform_2, window_bounds = array<i64: 1, 1, 4>}]} {
    %c0 = arith.constant 0 : index
    %c0_0 = arith.constant 0 : index
    %c0_1 = arith.constant 0 : index
    %c0_2 = arith.constant 0 : index
    %0 = vector.load %arg1[%c0, %c0_0, %c0_1, %c0_2] : memref<1x16x16x4xf32, #tpu.memory_space<vmem>>, vector<1x16x16x4xf32>
    %1 = vector.shape_cast %0 : vector<1x16x16x4xf32> to vector<256x4xf32>
    %cst = arith.constant dense<0.000000e+00> : vector<4xf32>
    %2 = vector.multi_reduction <add>, %1, %cst [0] : vector<256x4xf32> to vector<4xf32>
    %3 = vector.shape_cast %2 : vector<4xf32> to vector<1x1x4xf32>
    %c0_3 = arith.constant 0 : index
    %c0_4 = arith.constant 0 : index
    %c0_5 = arith.constant 0 : index
    %4 = vector.load %arg2[%c0_3, %c0_4, %c0_5] : memref<1x1x4xf32, #tpu.memory_space<vmem>>, vector<1x1x4xf32>
    tpu.vector_store %arg2[%c0_3, %c0_4, %c0_5], %3 {strides = array<i32>} : memref<1x1x4xf32, #tpu.memory_space<vmem>>, vector<1x1x4xf32>,
    %5 = arith.mulf %1, %1 : vector<256x4xf32>
    %cst_6 = arith.constant dense<0.000000e+00> : vector<4xf32>
    %6 = vector.multi_reduction <add>, %5, %cst_6 [0] : vector<256x4xf32> to vector<4xf32>
    %7 = vector.shape_cast %6 : vector<4xf32> to vector<1x1x4xf32>
    %c0_7 = arith.constant 0 : index
    %c0_8 = arith.constant 0 : index
    %c0_9 = arith.constant 0 : index
    %8 = vector.load %arg3[%c0_7, %c0_8, %c0_9] : memref<1x1x4xf32, #tpu.memory_space<vmem>>, vector<1x1x4xf32>
    tpu.vector_store %arg3[%c0_7, %c0_8, %c0_9], %7 {strides = array<i32>} : memref<1x1x4xf32, #tpu.memory_space<vmem>>, vector<1x1x4xf32>,
    return
  }
  func.func @transform_0(%arg0: i32) -> (i32, i32, i32, i32) {
    %c0_i32 = arith.constant 0 : i32
    %c0_i32_0 = arith.constant 0 : i32
    %c0_i32_1 = arith.constant 0 : i32
    %c0_i32_2 = arith.constant 0 : i32
    return %arg0, %c0_i32, %c0_i32_0, %c0_i32_1 : i32, i32, i32, i32
  }
  func.func @transform_1(%arg0: i32) -> (i32, i32, i32) {
    %c0_i32 = arith.constant 0 : i32
    %c0_i32_0 = arith.constant 0 : i32
    %c0_i32_1 = arith.constant 0 : i32
    return %arg0, %c0_i32, %c0_i32_0 : i32, i32, i32
  }
  func.func @transform_2(%arg0: i32) -> (i32, i32, i32) {
    %c0_i32 = arith.constant 0 : i32
    %c0_i32_0 = arith.constant 0 : i32
    %c0_i32_1 = arith.constant 0 : i32
    return %arg0, %c0_i32, %c0_i32_0 : i32, i32, i32
  }
}

module attributes {stable_mosaic.version = 11 : i64} {
  func.func @_fused_bn_relu_conv3x3_kernel(%arg0: i32, %arg1: memref<1x9x9x4xf32, #tpu.memory_space<vmem>>, %arg2: memref<1x9x9x4xf32, #tpu.memory_space<vmem>>, %arg3: memref<1x9x9x4xf32, #tpu.memory_space<vmem>>, %arg4: memref<1x9x9x4xf32, #tpu.memory_space<vmem>>, %arg5: memref<1x9x9x1xf32, #tpu.memory_space<vmem>>, %arg6: memref<1x9x9x1xf32, #tpu.memory_space<vmem>>, %arg7: memref<1x9x9x1xf32, #tpu.memory_space<vmem>>, %arg8: memref<1x9x9x1xf32, #tpu.memory_space<vmem>>, %arg9: memref<1x4xf32, #tpu.memory_space<vmem>>, %arg10: memref<1x4xf32, #tpu.memory_space<vmem>>, %arg11: memref<9x4x128xbf16, #tpu.memory_space<vmem>>, %arg12: memref<1x128xf32, #tpu.memory_space<vmem>>, %arg13: memref<1x8x8x128xbf16, #tpu.memory_space<vmem>>, %arg14: memref<1x1x128xf32, #tpu.memory_space<vmem>>, %arg15: memref<1x1x128xf32, #tpu.memory_space<vmem>>) attributes {dimension_semantics = [#tpu.dimension_semantics<parallel>], iteration_bounds = array<i64: 2>, scalar_prefetch = 0 : i64, scratch_operands = 0 : i64, tpu.core_type = #tpu.core_type<tc>, window_params = [{transform_indices = @transform_0, window_bounds = array<i64: 1, 9, 9, 4>}, {transform_indices = @transform_1, window_bounds = array<i64: 1, 9, 9, 4>}, {transform_indices = @transform_2, window_bounds = array<i64: 1, 9, 9, 4>}, {transform_indices = @transform_3, window_bounds = array<i64: 1, 9, 9, 4>}, {pipeline_mode = #tpu.pipeline_mode<synchronous>, transform_indices = @transform_4, window_bounds = array<i64: 1, 9, 9, 1>}, {pipeline_mode = #tpu.pipeline_mode<synchronous>, transform_indices = @transform_5, window_bounds = array<i64: 1, 9, 9, 1>}, {pipeline_mode = #tpu.pipeline_mode<synchronous>, transform_indices = @transform_6, window_bounds = array<i64: 1, 9, 9, 1>}, {pipeline_mode = #tpu.pipeline_mode<synchronous>, transform_indices = @transform_7, window_bounds = array<i64: 1, 9, 9, 1>}, {pipeline_mode = #tpu.pipeline_mode<synchronous>, transform_indices = @transform_8, window_bounds = array<i64: 1, 4>}, {pipeline_mode = #tpu.pipeline_mode<synchronous>, transform_indices = @transform_9, window_bounds = array<i64: 1, 4>}, {pipeline_mode = #tpu.pipeline_mode<synchronous>, transform_indices = @transform_10, window_bounds = array<i64: 9, 4, 128>}, {pipeline_mode = #tpu.pipeline_mode<synchronous>, transform_indices = @transform_11, window_bounds = array<i64: 1, 128>}, {transform_indices = @transform_12, window_bounds = array<i64: 1, 8, 8, 128>}, {transform_indices = @transform_13, window_bounds = array<i64: 1, 1, 128>}, {transform_indices = @transform_14, window_bounds = array<i64: 1, 1, 128>}]} {
    %c0 = arith.constant 0 : index
    %c0_0 = arith.constant 0 : index
    %0 = vector.load %arg9[%c0, %c0_0] : memref<1x4xf32, #tpu.memory_space<vmem>>, vector<1x4xf32>
    %1 = vector.shape_cast %0 : vector<1x4xf32> to vector<1x1x4xf32>
    %c0_1 = arith.constant 0 : index
    %c0_2 = arith.constant 0 : index
    %2 = vector.load %arg10[%c0_1, %c0_2] : memref<1x4xf32, #tpu.memory_space<vmem>>, vector<1x4xf32>
    %3 = vector.shape_cast %2 : vector<1x4xf32> to vector<1x1x4xf32>
    %cst = arith.constant 0.000000e+00 : f32
    %4 = vector.broadcast %cst : f32 to vector<64x128xf32>
    %c0_3 = arith.constant 0 : index
    %c0_4 = arith.constant 0 : index
    %c0_5 = arith.constant 0 : index
    %c0_6 = arith.constant 0 : index
    %5 = vector.load %arg1[%c0_3, %c0_4, %c0_5, %c0_6] : memref<1x9x9x4xf32, #tpu.memory_space<vmem>>, vector<1x8x8x4xf32>
    %6 = vector.shape_cast %5 : vector<1x8x8x4xf32> to vector<8x8x4xf32>
    %c0_7 = arith.constant 0 : index
    %c0_8 = arith.constant 0 : index
    %c0_9 = arith.constant 0 : index
    %c0_10 = arith.constant 0 : index
    %7 = vector.load %arg5[%c0_7, %c0_8, %c0_9, %c0_10] : memref<1x9x9x1xf32, #tpu.memory_space<vmem>>, vector<1x8x8x1xf32>
    %8 = vector.shape_cast %7 : vector<1x8x8x1xf32> to vector<8x8x1xf32>
    %9 = vector.broadcast %1 : vector<1x1x4xf32> to vector<8x8x4xf32>
    %10 = arith.mulf %6, %9 : vector<8x8x4xf32>
    %11 = vector.broadcast %3 : vector<1x1x4xf32> to vector<8x8x4xf32>
    %12 = arith.addf %10, %11 : vector<8x8x4xf32>
    %cst_11 = arith.constant 0.000000e+00 : f32
    %13 = vector.broadcast %cst_11 : f32 to vector<8x8x4xf32>
    %14 = arith.maximumf %12, %13 : vector<8x8x4xf32>
    %15 = vector.broadcast %8 : vector<8x8x1xf32> to vector<8x8x4xf32>
    %16 = arith.mulf %14, %15 : vector<8x8x4xf32>
    %17 = vector.shape_cast %16 : vector<8x8x4xf32> to vector<64x4xf32>
    %18 = arith.truncf %17 : vector<64x4xf32> to vector<64x4xbf16>
    %c0_12 = arith.constant 0 : index
    %c0_13 = arith.constant 0 : index
    %c0_14 = arith.constant 0 : index
    %19 = vector.load %arg11[%c0_12, %c0_13, %c0_14] : memref<9x4x128xbf16, #tpu.memory_space<vmem>>, vector<1x4x128xbf16>
    %20 = vector.shape_cast %19 : vector<1x4x128xbf16> to vector<4x128xbf16>
    %cst_15 = arith.constant dense<0.000000e+00> : vector<64x128xf32>
    %21 = tpu.matmul %18, %20, %cst_15 {dimension_numbers = #tpu.dot_dimension_numbers<[1], [0], [0], [1], [0, 0, 1, 1], [], []>} : vector<64x4xbf16>, vector<4x128xbf16>, vector<64x128xf32> -> vector<64x128xf32>
    %22 = arith.addf %4, %21 : vector<64x128xf32>
    %c0_16 = arith.constant 0 : index
    %c0_17 = arith.constant 0 : index
    %c0_18 = arith.constant 0 : index
    %c0_19 = arith.constant 0 : index
    %23 = vector.load %arg2[%c0_16, %c0_17, %c0_18, %c0_19] : memref<1x9x9x4xf32, #tpu.memory_space<vmem>>, vector<1x8x8x4xf32>
    %24 = vector.shape_cast %23 : vector<1x8x8x4xf32> to vector<8x8x4xf32>
    %c0_20 = arith.constant 0 : index
    %c0_21 = arith.constant 0 : index
    %c0_22 = arith.constant 0 : index
    %c0_23 = arith.constant 0 : index
    %25 = vector.load %arg6[%c0_20, %c0_21, %c0_22, %c0_23] : memref<1x9x9x1xf32, #tpu.memory_space<vmem>>, vector<1x8x8x1xf32>
    %26 = vector.shape_cast %25 : vector<1x8x8x1xf32> to vector<8x8x1xf32>
    %27 = vector.broadcast %1 : vector<1x1x4xf32> to vector<8x8x4xf32>
    %28 = arith.mulf %24, %27 : vector<8x8x4xf32>
    %29 = vector.broadcast %3 : vector<1x1x4xf32> to vector<8x8x4xf32>
    %30 = arith.addf %28, %29 : vector<8x8x4xf32>
    %cst_24 = arith.constant 0.000000e+00 : f32
    %31 = vector.broadcast %cst_24 : f32 to vector<8x8x4xf32>
    %32 = arith.maximumf %30, %31 : vector<8x8x4xf32>
    %33 = vector.broadcast %26 : vector<8x8x1xf32> to vector<8x8x4xf32>
    %34 = arith.mulf %32, %33 : vector<8x8x4xf32>
    %35 = vector.shape_cast %34 : vector<8x8x4xf32> to vector<64x4xf32>
    %36 = arith.truncf %35 : vector<64x4xf32> to vector<64x4xbf16>
    %c1 = arith.constant 1 : index
    %c0_25 = arith.constant 0 : index
    %c0_26 = arith.constant 0 : index
    %37 = vector.load %arg11[%c1, %c0_25, %c0_26] : memref<9x4x128xbf16, #tpu.memory_space<vmem>>, vector<1x4x128xbf16>
    %38 = vector.shape_cast %37 : vector<1x4x128xbf16> to vector<4x128xbf16>
    %cst_27 = arith.constant dense<0.000000e+00> : vector<64x128xf32>
    %39 = tpu.matmul %36, %38, %cst_27 {dimension_numbers = #tpu.dot_dimension_numbers<[1], [0], [0], [1], [0, 0, 1, 1], [], []>} : vector<64x4xbf16>, vector<4x128xbf16>, vector<64x128xf32> -> vector<64x128xf32>
    %40 = arith.addf %22, %39 : vector<64x128xf32>
    %c0_28 = arith.constant 0 : index
    %c0_29 = arith.constant 0 : index
    %c1_30 = arith.constant 1 : index
    %c0_31 = arith.constant 0 : index
    %41 = vector.load %arg1[%c0_28, %c0_29, %c1_30, %c0_31] : memref<1x9x9x4xf32, #tpu.memory_space<vmem>>, vector<1x8x8x4xf32>
    %42 = vector.shape_cast %41 : vector<1x8x8x4xf32> to vector<8x8x4xf32>
    %c0_32 = arith.constant 0 : index
    %c0_33 = arith.constant 0 : index
    %c1_34 = arith.constant 1 : index
    %c0_35 = arith.constant 0 : index
    %43 = vector.load %arg5[%c0_32, %c0_33, %c1_34, %c0_35] : memref<1x9x9x1xf32, #tpu.memory_space<vmem>>, vector<1x8x8x1xf32>
    %44 = vector.shape_cast %43 : vector<1x8x8x1xf32> to vector<8x8x1xf32>
    %45 = vector.broadcast %1 : vector<1x1x4xf32> to vector<8x8x4xf32>
    %46 = arith.mulf %42, %45 : vector<8x8x4xf32>
    %47 = vector.broadcast %3 : vector<1x1x4xf32> to vector<8x8x4xf32>
    %48 = arith.addf %46, %47 : vector<8x8x4xf32>
    %cst_36 = arith.constant 0.000000e+00 : f32
    %49 = vector.broadcast %cst_36 : f32 to vector<8x8x4xf32>
    %50 = arith.maximumf %48, %49 : vector<8x8x4xf32>
    %51 = vector.broadcast %44 : vector<8x8x1xf32> to vector<8x8x4xf32>
    %52 = arith.mulf %50, %51 : vector<8x8x4xf32>
    %53 = vector.shape_cast %52 : vector<8x8x4xf32> to vector<64x4xf32>
    %54 = arith.truncf %53 : vector<64x4xf32> to vector<64x4xbf16>
    %c2 = arith.constant 2 : index
    %c0_37 = arith.constant 0 : index
    %c0_38 = arith.constant 0 : index
    %55 = vector.load %arg11[%c2, %c0_37, %c0_38] : memref<9x4x128xbf16, #tpu.memory_space<vmem>>, vector<1x4x128xbf16>
    %56 = vector.shape_cast %55 : vector<1x4x128xbf16> to vector<4x128xbf16>
    %cst_39 = arith.constant dense<0.000000e+00> : vector<64x128xf32>
    %57 = tpu.matmul %54, %56, %cst_39 {dimension_numbers = #tpu.dot_dimension_numbers<[1], [0], [0], [1], [0, 0, 1, 1], [], []>} : vector<64x4xbf16>, vector<4x128xbf16>, vector<64x128xf32> -> vector<64x128xf32>
    %58 = arith.addf %40, %57 : vector<64x128xf32>
    %c0_40 = arith.constant 0 : index
    %c0_41 = arith.constant 0 : index
    %c0_42 = arith.constant 0 : index
    %c0_43 = arith.constant 0 : index
    %59 = vector.load %arg3[%c0_40, %c0_41, %c0_42, %c0_43] : memref<1x9x9x4xf32, #tpu.memory_space<vmem>>, vector<1x8x8x4xf32>
    %60 = vector.shape_cast %59 : vector<1x8x8x4xf32> to vector<8x8x4xf32>
    %c0_44 = arith.constant 0 : index
    %c0_45 = arith.constant 0 : index
    %c0_46 = arith.constant 0 : index
    %c0_47 = arith.constant 0 : index
    %61 = vector.load %arg7[%c0_44, %c0_45, %c0_46, %c0_47] : memref<1x9x9x1xf32, #tpu.memory_space<vmem>>, vector<1x8x8x1xf32>
    %62 = vector.shape_cast %61 : vector<1x8x8x1xf32> to vector<8x8x1xf32>
    %63 = vector.broadcast %1 : vector<1x1x4xf32> to vector<8x8x4xf32>
    %64 = arith.mulf %60, %63 : vector<8x8x4xf32>
    %65 = vector.broadcast %3 : vector<1x1x4xf32> to vector<8x8x4xf32>
    %66 = arith.addf %64, %65 : vector<8x8x4xf32>
    %cst_48 = arith.constant 0.000000e+00 : f32
    %67 = vector.broadcast %cst_48 : f32 to vector<8x8x4xf32>
    %68 = arith.maximumf %66, %67 : vector<8x8x4xf32>
    %69 = vector.broadcast %62 : vector<8x8x1xf32> to vector<8x8x4xf32>
    %70 = arith.mulf %68, %69 : vector<8x8x4xf32>
    %71 = vector.shape_cast %70 : vector<8x8x4xf32> to vector<64x4xf32>
    %72 = arith.truncf %71 : vector<64x4xf32> to vector<64x4xbf16>
    %c3 = arith.constant 3 : index
    %c0_49 = arith.constant 0 : index
    %c0_50 = arith.constant 0 : index
    %73 = vector.load %arg11[%c3, %c0_49, %c0_50] : memref<9x4x128xbf16, #tpu.memory_space<vmem>>, vector<1x4x128xbf16>
    %74 = vector.shape_cast %73 : vector<1x4x128xbf16> to vector<4x128xbf16>
    %cst_51 = arith.constant dense<0.000000e+00> : vector<64x128xf32>
    %75 = tpu.matmul %72, %74, %cst_51 {dimension_numbers = #tpu.dot_dimension_numbers<[1], [0], [0], [1], [0, 0, 1, 1], [], []>} : vector<64x4xbf16>, vector<4x128xbf16>, vector<64x128xf32> -> vector<64x128xf32>
    %76 = arith.addf %58, %75 : vector<64x128xf32>
    %c0_52 = arith.constant 0 : index
    %c0_53 = arith.constant 0 : index
    %c0_54 = arith.constant 0 : index
    %c0_55 = arith.constant 0 : index
    %77 = vector.load %arg4[%c0_52, %c0_53, %c0_54, %c0_55] : memref<1x9x9x4xf32, #tpu.memory_space<vmem>>, vector<1x8x8x4xf32>
    %78 = vector.shape_cast %77 : vector<1x8x8x4xf32> to vector<8x8x4xf32>
    %c0_56 = arith.constant 0 : index
    %c0_57 = arith.constant 0 : index
    %c0_58 = arith.constant 0 : index
    %c0_59 = arith.constant 0 : index
    %79 = vector.load %arg8[%c0_56, %c0_57, %c0_58, %c0_59] : memref<1x9x9x1xf32, #tpu.memory_space<vmem>>, vector<1x8x8x1xf32>
    %80 = vector.shape_cast %79 : vector<1x8x8x1xf32> to vector<8x8x1xf32>
    %81 = vector.broadcast %1 : vector<1x1x4xf32> to vector<8x8x4xf32>
    %82 = arith.mulf %78, %81 : vector<8x8x4xf32>
    %83 = vector.broadcast %3 : vector<1x1x4xf32> to vector<8x8x4xf32>
    %84 = arith.addf %82, %83 : vector<8x8x4xf32>
    %cst_60 = arith.constant 0.000000e+00 : f32
    %85 = vector.broadcast %cst_60 : f32 to vector<8x8x4xf32>
    %86 = arith.maximumf %84, %85 : vector<8x8x4xf32>
    %87 = vector.broadcast %80 : vector<8x8x1xf32> to vector<8x8x4xf32>
    %88 = arith.mulf %86, %87 : vector<8x8x4xf32>
    %89 = vector.shape_cast %88 : vector<8x8x4xf32> to vector<64x4xf32>
    %90 = arith.truncf %89 : vector<64x4xf32> to vector<64x4xbf16>
    %c4 = arith.constant 4 : index
    %c0_61 = arith.constant 0 : index
    %c0_62 = arith.constant 0 : index
    %91 = vector.load %arg11[%c4, %c0_61, %c0_62] : memref<9x4x128xbf16, #tpu.memory_space<vmem>>, vector<1x4x128xbf16>
    %92 = vector.shape_cast %91 : vector<1x4x128xbf16> to vector<4x128xbf16>
    %cst_63 = arith.constant dense<0.000000e+00> : vector<64x128xf32>
    %93 = tpu.matmul %90, %92, %cst_63 {dimension_numbers = #tpu.dot_dimension_numbers<[1], [0], [0], [1], [0, 0, 1, 1], [], []>} : vector<64x4xbf16>, vector<4x128xbf16>, vector<64x128xf32> -> vector<64x128xf32>
    %94 = arith.addf %76, %93 : vector<64x128xf32>
    %c0_64 = arith.constant 0 : index
    %c0_65 = arith.constant 0 : index
    %c1_66 = arith.constant 1 : index
    %c0_67 = arith.constant 0 : index
    %95 = vector.load %arg3[%c0_64, %c0_65, %c1_66, %c0_67] : memref<1x9x9x4xf32, #tpu.memory_space<vmem>>, vector<1x8x8x4xf32>
    %96 = vector.shape_cast %95 : vector<1x8x8x4xf32> to vector<8x8x4xf32>
    %c0_68 = arith.constant 0 : index
    %c0_69 = arith.constant 0 : index
    %c1_70 = arith.constant 1 : index
    %c0_71 = arith.constant 0 : index
    %97 = vector.load %arg7[%c0_68, %c0_69, %c1_70, %c0_71] : memref<1x9x9x1xf32, #tpu.memory_space<vmem>>, vector<1x8x8x1xf32>
    %98 = vector.shape_cast %97 : vector<1x8x8x1xf32> to vector<8x8x1xf32>
    %99 = vector.broadcast %1 : vector<1x1x4xf32> to vector<8x8x4xf32>
    %100 = arith.mulf %96, %99 : vector<8x8x4xf32>
    %101 = vector.broadcast %3 : vector<1x1x4xf32> to vector<8x8x4xf32>
    %102 = arith.addf %100, %101 : vector<8x8x4xf32>
    %cst_72 = arith.constant 0.000000e+00 : f32
    %103 = vector.broadcast %cst_72 : f32 to vector<8x8x4xf32>
    %104 = arith.maximumf %102, %103 : vector<8x8x4xf32>
    %105 = vector.broadcast %98 : vector<8x8x1xf32> to vector<8x8x4xf32>
    %106 = arith.mulf %104, %105 : vector<8x8x4xf32>
    %107 = vector.shape_cast %106 : vector<8x8x4xf32> to vector<64x4xf32>
    %108 = arith.truncf %107 : vector<64x4xf32> to vector<64x4xbf16>
    %c5 = arith.constant 5 : index
    %c0_73 = arith.constant 0 : index
    %c0_74 = arith.constant 0 : index
    %109 = vector.load %arg11[%c5, %c0_73, %c0_74] : memref<9x4x128xbf16, #tpu.memory_space<vmem>>, vector<1x4x128xbf16>
    %110 = vector.shape_cast %109 : vector<1x4x128xbf16> to vector<4x128xbf16>
    %cst_75 = arith.constant dense<0.000000e+00> : vector<64x128xf32>
    %111 = tpu.matmul %108, %110, %cst_75 {dimension_numbers = #tpu.dot_dimension_numbers<[1], [0], [0], [1], [0, 0, 1, 1], [], []>} : vector<64x4xbf16>, vector<4x128xbf16>, vector<64x128xf32> -> vector<64x128xf32>
    %112 = arith.addf %94, %111 : vector<64x128xf32>
    %c0_76 = arith.constant 0 : index
    %c1_77 = arith.constant 1 : index
    %c0_78 = arith.constant 0 : index
    %c0_79 = arith.constant 0 : index
    %113 = vector.load %arg1[%c0_76, %c1_77, %c0_78, %c0_79] : memref<1x9x9x4xf32, #tpu.memory_space<vmem>>, vector<1x8x8x4xf32>
    %114 = vector.shape_cast %113 : vector<1x8x8x4xf32> to vector<8x8x4xf32>
    %c0_80 = arith.constant 0 : index
    %c1_81 = arith.constant 1 : index
    %c0_82 = arith.constant 0 : index
    %c0_83 = arith.constant 0 : index
    %115 = vector.load %arg5[%c0_80, %c1_81, %c0_82, %c0_83] : memref<1x9x9x1xf32, #tpu.memory_space<vmem>>, vector<1x8x8x1xf32>
    %116 = vector.shape_cast %115 : vector<1x8x8x1xf32> to vector<8x8x1xf32>
    %117 = vector.broadcast %1 : vector<1x1x4xf32> to vector<8x8x4xf32>
    %118 = arith.mulf %114, %117 : vector<8x8x4xf32>
    %119 = vector.broadcast %3 : vector<1x1x4xf32> to vector<8x8x4xf32>
    %120 = arith.addf %118, %119 : vector<8x8x4xf32>
    %cst_84 = arith.constant 0.000000e+00 : f32
    %121 = vector.broadcast %cst_84 : f32 to vector<8x8x4xf32>
    %122 = arith.maximumf %120, %121 : vector<8x8x4xf32>
    %123 = vector.broadcast %116 : vector<8x8x1xf32> to vector<8x8x4xf32>
    %124 = arith.mulf %122, %123 : vector<8x8x4xf32>
    %125 = vector.shape_cast %124 : vector<8x8x4xf32> to vector<64x4xf32>
    %126 = arith.truncf %125 : vector<64x4xf32> to vector<64x4xbf16>
    %c6 = arith.constant 6 : index
    %c0_85 = arith.constant 0 : index
    %c0_86 = arith.constant 0 : index
    %127 = vector.load %arg11[%c6, %c0_85, %c0_86] : memref<9x4x128xbf16, #tpu.memory_space<vmem>>, vector<1x4x128xbf16>
    %128 = vector.shape_cast %127 : vector<1x4x128xbf16> to vector<4x128xbf16>
    %cst_87 = arith.constant dense<0.000000e+00> : vector<64x128xf32>
    %129 = tpu.matmul %126, %128, %cst_87 {dimension_numbers = #tpu.dot_dimension_numbers<[1], [0], [0], [1], [0, 0, 1, 1], [], []>} : vector<64x4xbf16>, vector<4x128xbf16>, vector<64x128xf32> -> vector<64x128xf32>
    %130 = arith.addf %112, %129 : vector<64x128xf32>
    %c0_88 = arith.constant 0 : index
    %c1_89 = arith.constant 1 : index
    %c0_90 = arith.constant 0 : index
    %c0_91 = arith.constant 0 : index
    %131 = vector.load %arg2[%c0_88, %c1_89, %c0_90, %c0_91] : memref<1x9x9x4xf32, #tpu.memory_space<vmem>>, vector<1x8x8x4xf32>
    %132 = vector.shape_cast %131 : vector<1x8x8x4xf32> to vector<8x8x4xf32>
    %c0_92 = arith.constant 0 : index
    %c1_93 = arith.constant 1 : index
    %c0_94 = arith.constant 0 : index
    %c0_95 = arith.constant 0 : index
    %133 = vector.load %arg6[%c0_92, %c1_93, %c0_94, %c0_95] : memref<1x9x9x1xf32, #tpu.memory_space<vmem>>, vector<1x8x8x1xf32>
    %134 = vector.shape_cast %133 : vector<1x8x8x1xf32> to vector<8x8x1xf32>
    %135 = vector.broadcast %1 : vector<1x1x4xf32> to vector<8x8x4xf32>
    %136 = arith.mulf %132, %135 : vector<8x8x4xf32>
    %137 = vector.broadcast %3 : vector<1x1x4xf32> to vector<8x8x4xf32>
    %138 = arith.addf %136, %137 : vector<8x8x4xf32>
    %cst_96 = arith.constant 0.000000e+00 : f32
    %139 = vector.broadcast %cst_96 : f32 to vector<8x8x4xf32>
    %140 = arith.maximumf %138, %139 : vector<8x8x4xf32>
    %141 = vector.broadcast %134 : vector<8x8x1xf32> to vector<8x8x4xf32>
    %142 = arith.mulf %140, %141 : vector<8x8x4xf32>
    %143 = vector.shape_cast %142 : vector<8x8x4xf32> to vector<64x4xf32>
    %144 = arith.truncf %143 : vector<64x4xf32> to vector<64x4xbf16>
    %c7 = arith.constant 7 : index
    %c0_97 = arith.constant 0 : index
    %c0_98 = arith.constant 0 : index
    %145 = vector.load %arg11[%c7, %c0_97, %c0_98] : memref<9x4x128xbf16, #tpu.memory_space<vmem>>, vector<1x4x128xbf16>
    %146 = vector.shape_cast %145 : vector<1x4x128xbf16> to vector<4x128xbf16>
    %cst_99 = arith.constant dense<0.000000e+00> : vector<64x128xf32>
    %147 = tpu.matmul %144, %146, %cst_99 {dimension_numbers = #tpu.dot_dimension_numbers<[1], [0], [0], [1], [0, 0, 1, 1], [], []>} : vector<64x4xbf16>, vector<4x128xbf16>, vector<64x128xf32> -> vector<64x128xf32>
    %148 = arith.addf %130, %147 : vector<64x128xf32>
    %c0_100 = arith.constant 0 : index
    %c1_101 = arith.constant 1 : index
    %c1_102 = arith.constant 1 : index
    %c0_103 = arith.constant 0 : index
    %149 = vector.load %arg1[%c0_100, %c1_101, %c1_102, %c0_103] : memref<1x9x9x4xf32, #tpu.memory_space<vmem>>, vector<1x8x8x4xf32>
    %150 = vector.shape_cast %149 : vector<1x8x8x4xf32> to vector<8x8x4xf32>
    %c0_104 = arith.constant 0 : index
    %c1_105 = arith.constant 1 : index
    %c1_106 = arith.constant 1 : index
    %c0_107 = arith.constant 0 : index
    %151 = vector.load %arg5[%c0_104, %c1_105, %c1_106, %c0_107] : memref<1x9x9x1xf32, #tpu.memory_space<vmem>>, vector<1x8x8x1xf32>
    %152 = vector.shape_cast %151 : vector<1x8x8x1xf32> to vector<8x8x1xf32>
    %153 = vector.broadcast %1 : vector<1x1x4xf32> to vector<8x8x4xf32>
    %154 = arith.mulf %150, %153 : vector<8x8x4xf32>
    %155 = vector.broadcast %3 : vector<1x1x4xf32> to vector<8x8x4xf32>
    %156 = arith.addf %154, %155 : vector<8x8x4xf32>
    %cst_108 = arith.constant 0.000000e+00 : f32
    %157 = vector.broadcast %cst_108 : f32 to vector<8x8x4xf32>
    %158 = arith.maximumf %156, %157 : vector<8x8x4xf32>
    %159 = vector.broadcast %152 : vector<8x8x1xf32> to vector<8x8x4xf32>
    %160 = arith.mulf %158, %159 : vector<8x8x4xf32>
    %161 = vector.shape_cast %160 : vector<8x8x4xf32> to vector<64x4xf32>
    %162 = arith.truncf %161 : vector<64x4xf32> to vector<64x4xbf16>
    %c8 = arith.constant 8 : index
    %c0_109 = arith.constant 0 : index
    %c0_110 = arith.constant 0 : index
    %163 = vector.load %arg11[%c8, %c0_109, %c0_110] : memref<9x4x128xbf16, #tpu.memory_space<vmem>>, vector<1x4x128xbf16>
    %164 = vector.shape_cast %163 : vector<1x4x128xbf16> to vector<4x128xbf16>
    %cst_111 = arith.constant dense<0.000000e+00> : vector<64x128xf32>
    %165 = tpu.matmul %162, %164, %cst_111 {dimension_numbers = #tpu.dot_dimension_numbers<[1], [0], [0], [1], [0, 0, 1, 1], [], []>} : vector<64x4xbf16>, vector<4x128xbf16>, vector<64x128xf32> -> vector<64x128xf32>
    %166 = arith.addf %148, %165 : vector<64x128xf32>
    %c0_112 = arith.constant 0 : index
    %c0_113 = arith.constant 0 : index
    %167 = vector.load %arg12[%c0_112, %c0_113] : memref<1x128xf32, #tpu.memory_space<vmem>>, vector<1x128xf32>
    %168 = vector.broadcast %167 : vector<1x128xf32> to vector<64x128xf32>
    %169 = arith.addf %166, %168 : vector<64x128xf32>
    %cst_114 = arith.constant dense<0.000000e+00> : vector<128xf32>
    %170 = vector.multi_reduction <add>, %169, %cst_114 [0] : vector<64x128xf32> to vector<128xf32>
    %171 = vector.shape_cast %170 : vector<128xf32> to vector<1x1x128xf32>
    %c0_115 = arith.constant 0 : index
    %c0_116 = arith.constant 0 : index
    %c0_117 = arith.constant 0 : index
    %172 = vector.load %arg14[%c0_115, %c0_116, %c0_117] : memref<1x1x128xf32, #tpu.memory_space<vmem>>, vector<1x1x128xf32>
    tpu.vector_store %arg14[%c0_115, %c0_116, %c0_117], %171 {strides = array<i32>} : memref<1x1x128xf32, #tpu.memory_space<vmem>>, vector<1x1x128xf32>,
    %173 = arith.mulf %169, %169 : vector<64x128xf32>
    %cst_118 = arith.constant dense<0.000000e+00> : vector<128xf32>
    %174 = vector.multi_reduction <add>, %173, %cst_118 [0] : vector<64x128xf32> to vector<128xf32>
    %175 = vector.shape_cast %174 : vector<128xf32> to vector<1x1x128xf32>
    %c0_119 = arith.constant 0 : index
    %c0_120 = arith.constant 0 : index
    %c0_121 = arith.constant 0 : index
    %176 = vector.load %arg15[%c0_119, %c0_120, %c0_121] : memref<1x1x128xf32, #tpu.memory_space<vmem>>, vector<1x1x128xf32>
    tpu.vector_store %arg15[%c0_119, %c0_120, %c0_121], %175 {strides = array<i32>} : memref<1x1x128xf32, #tpu.memory_space<vmem>>, vector<1x1x128xf32>,
    %177 = vector.shape_cast %169 : vector<64x128xf32> to vector<1x8x8x128xf32>
    %178 = arith.truncf %177 : vector<1x8x8x128xf32> to vector<1x8x8x128xbf16>
    %c0_122 = arith.constant 0 : index
    %c0_123 = arith.constant 0 : index
    %c0_124 = arith.constant 0 : index
    %c0_125 = arith.constant 0 : index
    %179 = vector.load %arg13[%c0_122, %c0_123, %c0_124, %c0_125] : memref<1x8x8x128xbf16, #tpu.memory_space<vmem>>, vector<1x8x8x128xbf16>
    tpu.vector_store %arg13[%c0_122, %c0_123, %c0_124, %c0_125], %178 {strides = array<i32>} : memref<1x8x8x128xbf16, #tpu.memory_space<vmem>>, vector<1x8x8x128xbf16>,
    return
  }
  func.func @transform_0(%arg0: i32) -> (i32, i32, i32, i32) {
    %c0_i32 = arith.constant 0 : i32
    %c0_i32_0 = arith.constant 0 : i32
    %c0_i32_1 = arith.constant 0 : i32
    %c0_i32_2 = arith.constant 0 : i32
    return %arg0, %c0_i32, %c0_i32_0, %c0_i32_1 : i32, i32, i32, i32
  }
  func.func @transform_1(%arg0: i32) -> (i32, i32, i32, i32) {
    %c0_i32 = arith.constant 0 : i32
    %c0_i32_0 = arith.constant 0 : i32
    %c0_i32_1 = arith.constant 0 : i32
    %c0_i32_2 = arith.constant 0 : i32
    return %arg0, %c0_i32, %c0_i32_0, %c0_i32_1 : i32, i32, i32, i32
  }
  func.func @transform_2(%arg0: i32) -> (i32, i32, i32, i32) {
    %c0_i32 = arith.constant 0 : i32
    %c0_i32_0 = arith.constant 0 : i32
    %c0_i32_1 = arith.constant 0 : i32
    %c0_i32_2 = arith.constant 0 : i32
    return %arg0, %c0_i32, %c0_i32_0, %c0_i32_1 : i32, i32, i32, i32
  }
  func.func @transform_3(%arg0: i32) -> (i32, i32, i32, i32) {
    %c0_i32 = arith.constant 0 : i32
    %c0_i32_0 = arith.constant 0 : i32
    %c0_i32_1 = arith.constant 0 : i32
    %c0_i32_2 = arith.constant 0 : i32
    return %arg0, %c0_i32, %c0_i32_0, %c0_i32_1 : i32, i32, i32, i32
  }
  func.func @transform_4(%arg0: i32) -> (i32, i32, i32, i32) {
    %c0_i32 = arith.constant 0 : i32
    %c0_i32_0 = arith.constant 0 : i32
    %c0_i32_1 = arith.constant 0 : i32
    %c0_i32_2 = arith.constant 0 : i32
    %c0_i32_3 = arith.constant 0 : i32
    return %c0_i32, %c0_i32_0, %c0_i32_1, %c0_i32_2 : i32, i32, i32, i32
  }
  func.func @transform_5(%arg0: i32) -> (i32, i32, i32, i32) {
    %c0_i32 = arith.constant 0 : i32
    %c0_i32_0 = arith.constant 0 : i32
    %c0_i32_1 = arith.constant 0 : i32
    %c0_i32_2 = arith.constant 0 : i32
    %c0_i32_3 = arith.constant 0 : i32
    return %c0_i32, %c0_i32_0, %c0_i32_1, %c0_i32_2 : i32, i32, i32, i32
  }
  func.func @transform_6(%arg0: i32) -> (i32, i32, i32, i32) {
    %c0_i32 = arith.constant 0 : i32
    %c0_i32_0 = arith.constant 0 : i32
    %c0_i32_1 = arith.constant 0 : i32
    %c0_i32_2 = arith.constant 0 : i32
    %c0_i32_3 = arith.constant 0 : i32
    return %c0_i32, %c0_i32_0, %c0_i32_1, %c0_i32_2 : i32, i32, i32, i32
  }
  func.func @transform_7(%arg0: i32) -> (i32, i32, i32, i32) {
    %c0_i32 = arith.constant 0 : i32
    %c0_i32_0 = arith.constant 0 : i32
    %c0_i32_1 = arith.constant 0 : i32
    %c0_i32_2 = arith.constant 0 : i32
    %c0_i32_3 = arith.constant 0 : i32
    return %c0_i32, %c0_i32_0, %c0_i32_1, %c0_i32_2 : i32, i32, i32, i32
  }
  func.func @transform_8(%arg0: i32) -> (i32, i32) {
    %c0_i32 = arith.constant 0 : i32
    %c0_i32_0 = arith.constant 0 : i32
    %c0_i32_1 = arith.constant 0 : i32
    return %c0_i32, %c0_i32_0 : i32, i32
  }
  func.func @transform_9(%arg0: i32) -> (i32, i32) {
    %c0_i32 = arith.constant 0 : i32
    %c0_i32_0 = arith.constant 0 : i32
    %c0_i32_1 = arith.constant 0 : i32
    return %c0_i32, %c0_i32_0 : i32, i32
  }
  func.func @transform_10(%arg0: i32) -> (i32, i32, i32) {
    %c0_i32 = arith.constant 0 : i32
    %c0_i32_0 = arith.constant 0 : i32
    %c0_i32_1 = arith.constant 0 : i32
    %c0_i32_2 = arith.constant 0 : i32
    return %c0_i32, %c0_i32_0, %c0_i32_1 : i32, i32, i32
  }
  func.func @transform_11(%arg0: i32) -> (i32, i32) {
    %c0_i32 = arith.constant 0 : i32
    %c0_i32_0 = arith.constant 0 : i32
    %c0_i32_1 = arith.constant 0 : i32
    return %c0_i32, %c0_i32_0 : i32, i32
  }
  func.func @transform_12(%arg0: i32) -> (i32, i32, i32, i32) {
    %c0_i32 = arith.constant 0 : i32
    %c0_i32_0 = arith.constant 0 : i32
    %c0_i32_1 = arith.constant 0 : i32
    %c0_i32_2 = arith.constant 0 : i32
    return %arg0, %c0_i32, %c0_i32_0, %c0_i32_1 : i32, i32, i32, i32
  }
  func.func @transform_13(%arg0: i32) -> (i32, i32, i32) {
    %c0_i32 = arith.constant 0 : i32
    %c0_i32_0 = arith.constant 0 : i32
    %c0_i32_1 = arith.constant 0 : i32
    return %arg0, %c0_i32, %c0_i32_0 : i32, i32, i32
  }
  func.func @transform_14(%arg0: i32) -> (i32, i32, i32) {
    %c0_i32 = arith.constant 0 : i32
    %c0_i32_0 = arith.constant 0 : i32
    %c0_i32_1 = arith.constant 0 : i32
    return %arg0, %c0_i32, %c0_i32_0 : i32, i32, i32
  }
}

module attributes {stable_mosaic.version = 11 : i64} {
  func.func @_conv1x1_kernel(%arg0: i32, %arg1: memref<1x8x8x4xf32, #tpu.memory_space<vmem>>, %arg2: memref<4x128xbf16, #tpu.memory_space<vmem>>, %arg3: memref<1x8x8x128xf32, #tpu.memory_space<vmem>>, %arg4: memref<1x1x128xf32, #tpu.memory_space<vmem>>, %arg5: memref<1x1x128xf32, #tpu.memory_space<vmem>>) attributes {dimension_semantics = [#tpu.dimension_semantics<parallel>], iteration_bounds = array<i64: 2>, scalar_prefetch = 0 : i64, scratch_operands = 0 : i64, tpu.core_type = #tpu.core_type<tc>, window_params = [{transform_indices = @transform_0, window_bounds = array<i64: 1, 8, 8, 4>}, {pipeline_mode = #tpu.pipeline_mode<synchronous>, transform_indices = @transform_1, window_bounds = array<i64: 4, 128>}, {transform_indices = @transform_2, window_bounds = array<i64: 1, 8, 8, 128>}, {transform_indices = @transform_3, window_bounds = array<i64: 1, 1, 128>}, {transform_indices = @transform_4, window_bounds = array<i64: 1, 1, 128>}]} {
    %c0 = arith.constant 0 : index
    %c0_0 = arith.constant 0 : index
    %c0_1 = arith.constant 0 : index
    %c0_2 = arith.constant 0 : index
    %0 = vector.load %arg1[%c0, %c0_0, %c0_1, %c0_2] : memref<1x8x8x4xf32, #tpu.memory_space<vmem>>, vector<1x8x8x4xf32>
    %1 = vector.shape_cast %0 : vector<1x8x8x4xf32> to vector<64x4xf32>
    %2 = arith.truncf %1 : vector<64x4xf32> to vector<64x4xbf16>
    %c0_3 = arith.constant 0 : index
    %c0_4 = arith.constant 0 : index
    %3 = vector.load %arg2[%c0_3, %c0_4] : memref<4x128xbf16, #tpu.memory_space<vmem>>, vector<4x128xbf16>
    %cst = arith.constant dense<0.000000e+00> : vector<64x128xf32>
    %4 = tpu.matmul %2, %3, %cst {dimension_numbers = #tpu.dot_dimension_numbers<[1], [0], [0], [1], [0, 0, 1, 1], [], []>} : vector<64x4xbf16>, vector<4x128xbf16>, vector<64x128xf32> -> vector<64x128xf32>
    %cst_5 = arith.constant dense<0.000000e+00> : vector<128xf32>
    %5 = vector.multi_reduction <add>, %4, %cst_5 [0] : vector<64x128xf32> to vector<128xf32>
    %6 = vector.shape_cast %5 : vector<128xf32> to vector<1x1x128xf32>
    %c0_6 = arith.constant 0 : index
    %c0_7 = arith.constant 0 : index
    %c0_8 = arith.constant 0 : index
    %7 = vector.load %arg4[%c0_6, %c0_7, %c0_8] : memref<1x1x128xf32, #tpu.memory_space<vmem>>, vector<1x1x128xf32>
    tpu.vector_store %arg4[%c0_6, %c0_7, %c0_8], %6 {strides = array<i32>} : memref<1x1x128xf32, #tpu.memory_space<vmem>>, vector<1x1x128xf32>,
    %8 = arith.mulf %4, %4 : vector<64x128xf32>
    %cst_9 = arith.constant dense<0.000000e+00> : vector<128xf32>
    %9 = vector.multi_reduction <add>, %8, %cst_9 [0] : vector<64x128xf32> to vector<128xf32>
    %10 = vector.shape_cast %9 : vector<128xf32> to vector<1x1x128xf32>
    %c0_10 = arith.constant 0 : index
    %c0_11 = arith.constant 0 : index
    %c0_12 = arith.constant 0 : index
    %11 = vector.load %arg5[%c0_10, %c0_11, %c0_12] : memref<1x1x128xf32, #tpu.memory_space<vmem>>, vector<1x1x128xf32>
    tpu.vector_store %arg5[%c0_10, %c0_11, %c0_12], %10 {strides = array<i32>} : memref<1x1x128xf32, #tpu.memory_space<vmem>>, vector<1x1x128xf32>,
    %12 = vector.shape_cast %4 : vector<64x128xf32> to vector<1x8x8x128xf32>
    %c0_13 = arith.constant 0 : index
    %c0_14 = arith.constant 0 : index
    %c0_15 = arith.constant 0 : index
    %c0_16 = arith.constant 0 : index
    %13 = vector.load %arg3[%c0_13, %c0_14, %c0_15, %c0_16] : memref<1x8x8x128xf32, #tpu.memory_space<vmem>>, vector<1x8x8x128xf32>
    tpu.vector_store %arg3[%c0_13, %c0_14, %c0_15, %c0_16], %12 {strides = array<i32>} : memref<1x8x8x128xf32, #tpu.memory_space<vmem>>, vector<1x8x8x128xf32>,
    return
  }
  func.func @transform_0(%arg0: i32) -> (i32, i32, i32, i32) {
    %c0_i32 = arith.constant 0 : i32
    %c0_i32_0 = arith.constant 0 : i32
    %c0_i32_1 = arith.constant 0 : i32
    %c0_i32_2 = arith.constant 0 : i32
    return %arg0, %c0_i32, %c0_i32_0, %c0_i32_1 : i32, i32, i32, i32
  }
  func.func @transform_1(%arg0: i32) -> (i32, i32) {
    %c0_i32 = arith.constant 0 : i32
    %c0_i32_0 = arith.constant 0 : i32
    %c0_i32_1 = arith.constant 0 : i32
    return %c0_i32, %c0_i32_0 : i32, i32
  }
  func.func @transform_2(%arg0: i32) -> (i32, i32, i32, i32) {
    %c0_i32 = arith.constant 0 : i32
    %c0_i32_0 = arith.constant 0 : i32
    %c0_i32_1 = arith.constant 0 : i32
    %c0_i32_2 = arith.constant 0 : i32
    return %arg0, %c0_i32, %c0_i32_0, %c0_i32_1 : i32, i32, i32, i32
  }
  func.func @transform_3(%arg0: i32) -> (i32, i32, i32) {
    %c0_i32 = arith.constant 0 : i32
    %c0_i32_0 = arith.constant 0 : i32
    %c0_i32_1 = arith.constant 0 : i32
    return %arg0, %c0_i32, %c0_i32_0 : i32, i32, i32
  }
  func.func @transform_4(%arg0: i32) -> (i32, i32, i32) {
    %c0_i32 = arith.constant 0 : i32
    %c0_i32_0 = arith.constant 0 : i32
    %c0_i32_1 = arith.constant 0 : i32
    return %arg0, %c0_i32, %c0_i32_0 : i32, i32, i32
  }
}

module attributes {stable_mosaic.version = 11 : i64} {
  func.func @_fused_bn_relu_conv3x3_kernel(%arg0: i32, %arg1: memref<1x10x10x128xbf16, #tpu.memory_space<vmem>>, %arg2: memref<1x10x10x1xf32, #tpu.memory_space<vmem>>, %arg3: memref<1x128xf32, #tpu.memory_space<vmem>>, %arg4: memref<1x128xf32, #tpu.memory_space<vmem>>, %arg5: memref<9x128x128xbf16, #tpu.memory_space<vmem>>, %arg6: memref<1x128xf32, #tpu.memory_space<vmem>>, %arg7: memref<1x8x8x128xf32, #tpu.memory_space<vmem>>, %arg8: memref<1x128xf32, #tpu.memory_space<vmem>>, %arg9: memref<1x128xf32, #tpu.memory_space<vmem>>, %arg10: memref<1x8x8x128xf32, #tpu.memory_space<vmem>>, %arg11: memref<1x1x128xf32, #tpu.memory_space<vmem>>, %arg12: memref<1x1x128xf32, #tpu.memory_space<vmem>>) attributes {dimension_semantics = [#tpu.dimension_semantics<parallel>], iteration_bounds = array<i64: 2>, scalar_prefetch = 0 : i64, scratch_operands = 0 : i64, tpu.core_type = #tpu.core_type<tc>, window_params = [{transform_indices = @transform_0, window_bounds = array<i64: 1, 10, 10, 128>}, {pipeline_mode = #tpu.pipeline_mode<synchronous>, transform_indices = @transform_1, window_bounds = array<i64: 1, 10, 10, 1>}, {pipeline_mode = #tpu.pipeline_mode<synchronous>, transform_indices = @transform_2, window_bounds = array<i64: 1, 128>}, {pipeline_mode = #tpu.pipeline_mode<synchronous>, transform_indices = @transform_3, window_bounds = array<i64: 1, 128>}, {pipeline_mode = #tpu.pipeline_mode<synchronous>, transform_indices = @transform_4, window_bounds = array<i64: 9, 128, 128>}, {pipeline_mode = #tpu.pipeline_mode<synchronous>, transform_indices = @transform_5, window_bounds = array<i64: 1, 128>}, {transform_indices = @transform_6, window_bounds = array<i64: 1, 8, 8, 128>}, {pipeline_mode = #tpu.pipeline_mode<synchronous>, transform_indices = @transform_7, window_bounds = array<i64: 1, 128>}, {pipeline_mode = #tpu.pipeline_mode<synchronous>, transform_indices = @transform_8, window_bounds = array<i64: 1, 128>}, {transform_indices = @transform_9, window_bounds = array<i64: 1, 8, 8, 128>}, {transform_indices = @transform_10, window_bounds = array<i64: 1, 1, 128>}, {transform_indices = @transform_11, window_bounds = array<i64: 1, 1, 128>}]} {
    %c0 = arith.constant 0 : index
    %c0_0 = arith.constant 0 : index
    %0 = vector.load %arg3[%c0, %c0_0] : memref<1x128xf32, #tpu.memory_space<vmem>>, vector<1x128xf32>
    %1 = vector.shape_cast %0 : vector<1x128xf32> to vector<1x1x128xf32>
    %c0_1 = arith.constant 0 : index
    %c0_2 = arith.constant 0 : index
    %2 = vector.load %arg4[%c0_1, %c0_2] : memref<1x128xf32, #tpu.memory_space<vmem>>, vector<1x128xf32>
    %3 = vector.shape_cast %2 : vector<1x128xf32> to vector<1x1x128xf32>
    %cst = arith.constant 0.000000e+00 : f32
    %4 = vector.broadcast %cst : f32 to vector<64x128xf32>
    %c0_3 = arith.constant 0 : index
    %c0_4 = arith.constant 0 : index
    %c0_5 = arith.constant 0 : index
    %c0_6 = arith.constant 0 : index
    %5 = vector.load %arg1[%c0_3, %c0_4, %c0_5, %c0_6] : memref<1x10x10x128xbf16, #tpu.memory_space<vmem>>, vector<1x8x8x128xbf16>
    %6 = vector.shape_cast %5 : vector<1x8x8x128xbf16> to vector<8x8x128xbf16>
    %7 = arith.extf %6 : vector<8x8x128xbf16> to vector<8x8x128xf32>
    %c0_7 = arith.constant 0 : index
    %c0_8 = arith.constant 0 : index
    %c0_9 = arith.constant 0 : index
    %c0_10 = arith.constant 0 : index
    %8 = vector.load %arg2[%c0_7, %c0_8, %c0_9, %c0_10] : memref<1x10x10x1xf32, #tpu.memory_space<vmem>>, vector<1x8x8x1xf32>
    %9 = vector.shape_cast %8 : vector<1x8x8x1xf32> to vector<8x8x1xf32>
    %10 = vector.broadcast %1 : vector<1x1x128xf32> to vector<8x8x128xf32>
    %11 = arith.mulf %7, %10 : vector<8x8x128xf32>
    %12 = vector.broadcast %3 : vector<1x1x128xf32> to vector<8x8x128xf32>
    %13 = arith.addf %11, %12 : vector<8x8x128xf32>
    %cst_11 = arith.constant 0.000000e+00 : f32
    %14 = vector.broadcast %cst_11 : f32 to vector<8x8x128xf32>
    %15 = arith.maximumf %13, %14 : vector<8x8x128xf32>
    %16 = vector.broadcast %9 : vector<8x8x1xf32> to vector<8x8x128xf32>
    %17 = arith.mulf %15, %16 : vector<8x8x128xf32>
    %18 = vector.shape_cast %17 : vector<8x8x128xf32> to vector<64x128xf32>
    %19 = arith.truncf %18 : vector<64x128xf32> to vector<64x128xbf16>
    %c0_12 = arith.constant 0 : index
    %c0_13 = arith.constant 0 : index
    %c0_14 = arith.constant 0 : index
    %20 = vector.load %arg5[%c0_12, %c0_13, %c0_14] : memref<9x128x128xbf16, #tpu.memory_space<vmem>>, vector<1x128x128xbf16>
    %21 = vector.shape_cast %20 : vector<1x128x128xbf16> to vector<128x128xbf16>
    %cst_15 = arith.constant dense<0.000000e+00> : vector<64x128xf32>
    %22 = tpu.matmul %19, %21, %cst_15 {dimension_numbers = #tpu.dot_dimension_numbers<[1], [0], [0], [1], [0, 0, 1, 1], [], []>} : vector<64x128xbf16>, vector<128x128xbf16>, vector<64x128xf32> -> vector<64x128xf32>
    %23 = arith.addf %4, %22 : vector<64x128xf32>
    %c0_16 = arith.constant 0 : index
    %c0_17 = arith.constant 0 : index
    %c1 = arith.constant 1 : index
    %c0_18 = arith.constant 0 : index
    %24 = vector.load %arg1[%c0_16, %c0_17, %c1, %c0_18] : memref<1x10x10x128xbf16, #tpu.memory_space<vmem>>, vector<1x8x8x128xbf16>
    %25 = vector.shape_cast %24 : vector<1x8x8x128xbf16> to vector<8x8x128xbf16>
    %26 = arith.extf %25 : vector<8x8x128xbf16> to vector<8x8x128xf32>
    %c0_19 = arith.constant 0 : index
    %c0_20 = arith.constant 0 : index
    %c1_21 = arith.constant 1 : index
    %c0_22 = arith.constant 0 : index
    %27 = vector.load %arg2[%c0_19, %c0_20, %c1_21, %c0_22] : memref<1x10x10x1xf32, #tpu.memory_space<vmem>>, vector<1x8x8x1xf32>
    %28 = vector.shape_cast %27 : vector<1x8x8x1xf32> to vector<8x8x1xf32>
    %29 = vector.broadcast %1 : vector<1x1x128xf32> to vector<8x8x128xf32>
    %30 = arith.mulf %26, %29 : vector<8x8x128xf32>
    %31 = vector.broadcast %3 : vector<1x1x128xf32> to vector<8x8x128xf32>
    %32 = arith.addf %30, %31 : vector<8x8x128xf32>
    %cst_23 = arith.constant 0.000000e+00 : f32
    %33 = vector.broadcast %cst_23 : f32 to vector<8x8x128xf32>
    %34 = arith.maximumf %32, %33 : vector<8x8x128xf32>
    %35 = vector.broadcast %28 : vector<8x8x1xf32> to vector<8x8x128xf32>
    %36 = arith.mulf %34, %35 : vector<8x8x128xf32>
    %37 = vector.shape_cast %36 : vector<8x8x128xf32> to vector<64x128xf32>
    %38 = arith.truncf %37 : vector<64x128xf32> to vector<64x128xbf16>
    %c1_24 = arith.constant 1 : index
    %c0_25 = arith.constant 0 : index
    %c0_26 = arith.constant 0 : index
    %39 = vector.load %arg5[%c1_24, %c0_25, %c0_26] : memref<9x128x128xbf16, #tpu.memory_space<vmem>>, vector<1x128x128xbf16>
    %40 = vector.shape_cast %39 : vector<1x128x128xbf16> to vector<128x128xbf16>
    %cst_27 = arith.constant dense<0.000000e+00> : vector<64x128xf32>
    %41 = tpu.matmul %38, %40, %cst_27 {dimension_numbers = #tpu.dot_dimension_numbers<[1], [0], [0], [1], [0, 0, 1, 1], [], []>} : vector<64x128xbf16>, vector<128x128xbf16>, vector<64x128xf32> -> vector<64x128xf32>
    %42 = arith.addf %23, %41 : vector<64x128xf32>
    %c0_28 = arith.constant 0 : index
    %c0_29 = arith.constant 0 : index
    %c2 = arith.constant 2 : index
    %c0_30 = arith.constant 0 : index
    %43 = vector.load %arg1[%c0_28, %c0_29, %c2, %c0_30] : memref<1x10x10x128xbf16, #tpu.memory_space<vmem>>, vector<1x8x8x128xbf16>
    %44 = vector.shape_cast %43 : vector<1x8x8x128xbf16> to vector<8x8x128xbf16>
    %45 = arith.extf %44 : vector<8x8x128xbf16> to vector<8x8x128xf32>
    %c0_31 = arith.constant 0 : index
    %c0_32 = arith.constant 0 : index
    %c2_33 = arith.constant 2 : index
    %c0_34 = arith.constant 0 : index
    %46 = vector.load %arg2[%c0_31, %c0_32, %c2_33, %c0_34] : memref<1x10x10x1xf32, #tpu.memory_space<vmem>>, vector<1x8x8x1xf32>
    %47 = vector.shape_cast %46 : vector<1x8x8x1xf32> to vector<8x8x1xf32>
    %48 = vector.broadcast %1 : vector<1x1x128xf32> to vector<8x8x128xf32>
    %49 = arith.mulf %45, %48 : vector<8x8x128xf32>
    %50 = vector.broadcast %3 : vector<1x1x128xf32> to vector<8x8x128xf32>
    %51 = arith.addf %49, %50 : vector<8x8x128xf32>
    %cst_35 = arith.constant 0.000000e+00 : f32
    %52 = vector.broadcast %cst_35 : f32 to vector<8x8x128xf32>
    %53 = arith.maximumf %51, %52 : vector<8x8x128xf32>
    %54 = vector.broadcast %47 : vector<8x8x1xf32> to vector<8x8x128xf32>
    %55 = arith.mulf %53, %54 : vector<8x8x128xf32>
    %56 = vector.shape_cast %55 : vector<8x8x128xf32> to vector<64x128xf32>
    %57 = arith.truncf %56 : vector<64x128xf32> to vector<64x128xbf16>
    %c2_36 = arith.constant 2 : index
    %c0_37 = arith.constant 0 : index
    %c0_38 = arith.constant 0 : index
    %58 = vector.load %arg5[%c2_36, %c0_37, %c0_38] : memref<9x128x128xbf16, #tpu.memory_space<vmem>>, vector<1x128x128xbf16>
    %59 = vector.shape_cast %58 : vector<1x128x128xbf16> to vector<128x128xbf16>
    %cst_39 = arith.constant dense<0.000000e+00> : vector<64x128xf32>
    %60 = tpu.matmul %57, %59, %cst_39 {dimension_numbers = #tpu.dot_dimension_numbers<[1], [0], [0], [1], [0, 0, 1, 1], [], []>} : vector<64x128xbf16>, vector<128x128xbf16>, vector<64x128xf32> -> vector<64x128xf32>
    %61 = arith.addf %42, %60 : vector<64x128xf32>
    %c0_40 = arith.constant 0 : index
    %c1_41 = arith.constant 1 : index
    %c0_42 = arith.constant 0 : index
    %c0_43 = arith.constant 0 : index
    %62 = vector.load %arg1[%c0_40, %c1_41, %c0_42, %c0_43] : memref<1x10x10x128xbf16, #tpu.memory_space<vmem>>, vector<1x8x8x128xbf16>
    %63 = vector.shape_cast %62 : vector<1x8x8x128xbf16> to vector<8x8x128xbf16>
    %64 = arith.extf %63 : vector<8x8x128xbf16> to vector<8x8x128xf32>
    %c0_44 = arith.constant 0 : index
    %c1_45 = arith.constant 1 : index
    %c0_46 = arith.constant 0 : index
    %c0_47 = arith.constant 0 : index
    %65 = vector.load %arg2[%c0_44, %c1_45, %c0_46, %c0_47] : memref<1x10x10x1xf32, #tpu.memory_space<vmem>>, vector<1x8x8x1xf32>
    %66 = vector.shape_cast %65 : vector<1x8x8x1xf32> to vector<8x8x1xf32>
    %67 = vector.broadcast %1 : vector<1x1x128xf32> to vector<8x8x128xf32>
    %68 = arith.mulf %64, %67 : vector<8x8x128xf32>
    %69 = vector.broadcast %3 : vector<1x1x128xf32> to vector<8x8x128xf32>
    %70 = arith.addf %68, %69 : vector<8x8x128xf32>
    %cst_48 = arith.constant 0.000000e+00 : f32
    %71 = vector.broadcast %cst_48 : f32 to vector<8x8x128xf32>
    %72 = arith.maximumf %70, %71 : vector<8x8x128xf32>
    %73 = vector.broadcast %66 : vector<8x8x1xf32> to vector<8x8x128xf32>
    %74 = arith.mulf %72, %73 : vector<8x8x128xf32>
    %75 = vector.shape_cast %74 : vector<8x8x128xf32> to vector<64x128xf32>
    %76 = arith.truncf %75 : vector<64x128xf32> to vector<64x128xbf16>
    %c3 = arith.constant 3 : index
    %c0_49 = arith.constant 0 : index
    %c0_50 = arith.constant 0 : index
    %77 = vector.load %arg5[%c3, %c0_49, %c0_50] : memref<9x128x128xbf16, #tpu.memory_space<vmem>>, vector<1x128x128xbf16>
    %78 = vector.shape_cast %77 : vector<1x128x128xbf16> to vector<128x128xbf16>
    %cst_51 = arith.constant dense<0.000000e+00> : vector<64x128xf32>
    %79 = tpu.matmul %76, %78, %cst_51 {dimension_numbers = #tpu.dot_dimension_numbers<[1], [0], [0], [1], [0, 0, 1, 1], [], []>} : vector<64x128xbf16>, vector<128x128xbf16>, vector<64x128xf32> -> vector<64x128xf32>
    %80 = arith.addf %61, %79 : vector<64x128xf32>
    %c0_52 = arith.constant 0 : index
    %c1_53 = arith.constant 1 : index
    %c1_54 = arith.constant 1 : index
    %c0_55 = arith.constant 0 : index
    %81 = vector.load %arg1[%c0_52, %c1_53, %c1_54, %c0_55] : memref<1x10x10x128xbf16, #tpu.memory_space<vmem>>, vector<1x8x8x128xbf16>
    %82 = vector.shape_cast %81 : vector<1x8x8x128xbf16> to vector<8x8x128xbf16>
    %83 = arith.extf %82 : vector<8x8x128xbf16> to vector<8x8x128xf32>
    %c0_56 = arith.constant 0 : index
    %c1_57 = arith.constant 1 : index
    %c1_58 = arith.constant 1 : index
    %c0_59 = arith.constant 0 : index
    %84 = vector.load %arg2[%c0_56, %c1_57, %c1_58, %c0_59] : memref<1x10x10x1xf32, #tpu.memory_space<vmem>>, vector<1x8x8x1xf32>
    %85 = vector.shape_cast %84 : vector<1x8x8x1xf32> to vector<8x8x1xf32>
    %86 = vector.broadcast %1 : vector<1x1x128xf32> to vector<8x8x128xf32>
    %87 = arith.mulf %83, %86 : vector<8x8x128xf32>
    %88 = vector.broadcast %3 : vector<1x1x128xf32> to vector<8x8x128xf32>
    %89 = arith.addf %87, %88 : vector<8x8x128xf32>
    %cst_60 = arith.constant 0.000000e+00 : f32
    %90 = vector.broadcast %cst_60 : f32 to vector<8x8x128xf32>
    %91 = arith.maximumf %89, %90 : vector<8x8x128xf32>
    %92 = vector.broadcast %85 : vector<8x8x1xf32> to vector<8x8x128xf32>
    %93 = arith.mulf %91, %92 : vector<8x8x128xf32>
    %94 = vector.shape_cast %93 : vector<8x8x128xf32> to vector<64x128xf32>
    %95 = arith.truncf %94 : vector<64x128xf32> to vector<64x128xbf16>
    %c4 = arith.constant 4 : index
    %c0_61 = arith.constant 0 : index
    %c0_62 = arith.constant 0 : index
    %96 = vector.load %arg5[%c4, %c0_61, %c0_62] : memref<9x128x128xbf16, #tpu.memory_space<vmem>>, vector<1x128x128xbf16>
    %97 = vector.shape_cast %96 : vector<1x128x128xbf16> to vector<128x128xbf16>
    %cst_63 = arith.constant dense<0.000000e+00> : vector<64x128xf32>
    %98 = tpu.matmul %95, %97, %cst_63 {dimension_numbers = #tpu.dot_dimension_numbers<[1], [0], [0], [1], [0, 0, 1, 1], [], []>} : vector<64x128xbf16>, vector<128x128xbf16>, vector<64x128xf32> -> vector<64x128xf32>
    %99 = arith.addf %80, %98 : vector<64x128xf32>
    %c0_64 = arith.constant 0 : index
    %c1_65 = arith.constant 1 : index
    %c2_66 = arith.constant 2 : index
    %c0_67 = arith.constant 0 : index
    %100 = vector.load %arg1[%c0_64, %c1_65, %c2_66, %c0_67] : memref<1x10x10x128xbf16, #tpu.memory_space<vmem>>, vector<1x8x8x128xbf16>
    %101 = vector.shape_cast %100 : vector<1x8x8x128xbf16> to vector<8x8x128xbf16>
    %102 = arith.extf %101 : vector<8x8x128xbf16> to vector<8x8x128xf32>
    %c0_68 = arith.constant 0 : index
    %c1_69 = arith.constant 1 : index
    %c2_70 = arith.constant 2 : index
    %c0_71 = arith.constant 0 : index
    %103 = vector.load %arg2[%c0_68, %c1_69, %c2_70, %c0_71] : memref<1x10x10x1xf32, #tpu.memory_space<vmem>>, vector<1x8x8x1xf32>
    %104 = vector.shape_cast %103 : vector<1x8x8x1xf32> to vector<8x8x1xf32>
    %105 = vector.broadcast %1 : vector<1x1x128xf32> to vector<8x8x128xf32>
    %106 = arith.mulf %102, %105 : vector<8x8x128xf32>
    %107 = vector.broadcast %3 : vector<1x1x128xf32> to vector<8x8x128xf32>
    %108 = arith.addf %106, %107 : vector<8x8x128xf32>
    %cst_72 = arith.constant 0.000000e+00 : f32
    %109 = vector.broadcast %cst_72 : f32 to vector<8x8x128xf32>
    %110 = arith.maximumf %108, %109 : vector<8x8x128xf32>
    %111 = vector.broadcast %104 : vector<8x8x1xf32> to vector<8x8x128xf32>
    %112 = arith.mulf %110, %111 : vector<8x8x128xf32>
    %113 = vector.shape_cast %112 : vector<8x8x128xf32> to vector<64x128xf32>
    %114 = arith.truncf %113 : vector<64x128xf32> to vector<64x128xbf16>
    %c5 = arith.constant 5 : index
    %c0_73 = arith.constant 0 : index
    %c0_74 = arith.constant 0 : index
    %115 = vector.load %arg5[%c5, %c0_73, %c0_74] : memref<9x128x128xbf16, #tpu.memory_space<vmem>>, vector<1x128x128xbf16>
    %116 = vector.shape_cast %115 : vector<1x128x128xbf16> to vector<128x128xbf16>
    %cst_75 = arith.constant dense<0.000000e+00> : vector<64x128xf32>
    %117 = tpu.matmul %114, %116, %cst_75 {dimension_numbers = #tpu.dot_dimension_numbers<[1], [0], [0], [1], [0, 0, 1, 1], [], []>} : vector<64x128xbf16>, vector<128x128xbf16>, vector<64x128xf32> -> vector<64x128xf32>
    %118 = arith.addf %99, %117 : vector<64x128xf32>
    %c0_76 = arith.constant 0 : index
    %c2_77 = arith.constant 2 : index
    %c0_78 = arith.constant 0 : index
    %c0_79 = arith.constant 0 : index
    %119 = vector.load %arg1[%c0_76, %c2_77, %c0_78, %c0_79] : memref<1x10x10x128xbf16, #tpu.memory_space<vmem>>, vector<1x8x8x128xbf16>
    %120 = vector.shape_cast %119 : vector<1x8x8x128xbf16> to vector<8x8x128xbf16>
    %121 = arith.extf %120 : vector<8x8x128xbf16> to vector<8x8x128xf32>
    %c0_80 = arith.constant 0 : index
    %c2_81 = arith.constant 2 : index
    %c0_82 = arith.constant 0 : index
    %c0_83 = arith.constant 0 : index
    %122 = vector.load %arg2[%c0_80, %c2_81, %c0_82, %c0_83] : memref<1x10x10x1xf32, #tpu.memory_space<vmem>>, vector<1x8x8x1xf32>
    %123 = vector.shape_cast %122 : vector<1x8x8x1xf32> to vector<8x8x1xf32>
    %124 = vector.broadcast %1 : vector<1x1x128xf32> to vector<8x8x128xf32>
    %125 = arith.mulf %121, %124 : vector<8x8x128xf32>
    %126 = vector.broadcast %3 : vector<1x1x128xf32> to vector<8x8x128xf32>
    %127 = arith.addf %125, %126 : vector<8x8x128xf32>
    %cst_84 = arith.constant 0.000000e+00 : f32
    %128 = vector.broadcast %cst_84 : f32 to vector<8x8x128xf32>
    %129 = arith.maximumf %127, %128 : vector<8x8x128xf32>
    %130 = vector.broadcast %123 : vector<8x8x1xf32> to vector<8x8x128xf32>
    %131 = arith.mulf %129, %130 : vector<8x8x128xf32>
    %132 = vector.shape_cast %131 : vector<8x8x128xf32> to vector<64x128xf32>
    %133 = arith.truncf %132 : vector<64x128xf32> to vector<64x128xbf16>
    %c6 = arith.constant 6 : index
    %c0_85 = arith.constant 0 : index
    %c0_86 = arith.constant 0 : index
    %134 = vector.load %arg5[%c6, %c0_85, %c0_86] : memref<9x128x128xbf16, #tpu.memory_space<vmem>>, vector<1x128x128xbf16>
    %135 = vector.shape_cast %134 : vector<1x128x128xbf16> to vector<128x128xbf16>
    %cst_87 = arith.constant dense<0.000000e+00> : vector<64x128xf32>
    %136 = tpu.matmul %133, %135, %cst_87 {dimension_numbers = #tpu.dot_dimension_numbers<[1], [0], [0], [1], [0, 0, 1, 1], [], []>} : vector<64x128xbf16>, vector<128x128xbf16>, vector<64x128xf32> -> vector<64x128xf32>
    %137 = arith.addf %118, %136 : vector<64x128xf32>
    %c0_88 = arith.constant 0 : index
    %c2_89 = arith.constant 2 : index
    %c1_90 = arith.constant 1 : index
    %c0_91 = arith.constant 0 : index
    %138 = vector.load %arg1[%c0_88, %c2_89, %c1_90, %c0_91] : memref<1x10x10x128xbf16, #tpu.memory_space<vmem>>, vector<1x8x8x128xbf16>
    %139 = vector.shape_cast %138 : vector<1x8x8x128xbf16> to vector<8x8x128xbf16>
    %140 = arith.extf %139 : vector<8x8x128xbf16> to vector<8x8x128xf32>
    %c0_92 = arith.constant 0 : index
    %c2_93 = arith.constant 2 : index
    %c1_94 = arith.constant 1 : index
    %c0_95 = arith.constant 0 : index
    %141 = vector.load %arg2[%c0_92, %c2_93, %c1_94, %c0_95] : memref<1x10x10x1xf32, #tpu.memory_space<vmem>>, vector<1x8x8x1xf32>
    %142 = vector.shape_cast %141 : vector<1x8x8x1xf32> to vector<8x8x1xf32>
    %143 = vector.broadcast %1 : vector<1x1x128xf32> to vector<8x8x128xf32>
    %144 = arith.mulf %140, %143 : vector<8x8x128xf32>
    %145 = vector.broadcast %3 : vector<1x1x128xf32> to vector<8x8x128xf32>
    %146 = arith.addf %144, %145 : vector<8x8x128xf32>
    %cst_96 = arith.constant 0.000000e+00 : f32
    %147 = vector.broadcast %cst_96 : f32 to vector<8x8x128xf32>
    %148 = arith.maximumf %146, %147 : vector<8x8x128xf32>
    %149 = vector.broadcast %142 : vector<8x8x1xf32> to vector<8x8x128xf32>
    %150 = arith.mulf %148, %149 : vector<8x8x128xf32>
    %151 = vector.shape_cast %150 : vector<8x8x128xf32> to vector<64x128xf32>
    %152 = arith.truncf %151 : vector<64x128xf32> to vector<64x128xbf16>
    %c7 = arith.constant 7 : index
    %c0_97 = arith.constant 0 : index
    %c0_98 = arith.constant 0 : index
    %153 = vector.load %arg5[%c7, %c0_97, %c0_98] : memref<9x128x128xbf16, #tpu.memory_space<vmem>>, vector<1x128x128xbf16>
    %154 = vector.shape_cast %153 : vector<1x128x128xbf16> to vector<128x128xbf16>
    %cst_99 = arith.constant dense<0.000000e+00> : vector<64x128xf32>
    %155 = tpu.matmul %152, %154, %cst_99 {dimension_numbers = #tpu.dot_dimension_numbers<[1], [0], [0], [1], [0, 0, 1, 1], [], []>} : vector<64x128xbf16>, vector<128x128xbf16>, vector<64x128xf32> -> vector<64x128xf32>
    %156 = arith.addf %137, %155 : vector<64x128xf32>
    %c0_100 = arith.constant 0 : index
    %c2_101 = arith.constant 2 : index
    %c2_102 = arith.constant 2 : index
    %c0_103 = arith.constant 0 : index
    %157 = vector.load %arg1[%c0_100, %c2_101, %c2_102, %c0_103] : memref<1x10x10x128xbf16, #tpu.memory_space<vmem>>, vector<1x8x8x128xbf16>
    %158 = vector.shape_cast %157 : vector<1x8x8x128xbf16> to vector<8x8x128xbf16>
    %159 = arith.extf %158 : vector<8x8x128xbf16> to vector<8x8x128xf32>
    %c0_104 = arith.constant 0 : index
    %c2_105 = arith.constant 2 : index
    %c2_106 = arith.constant 2 : index
    %c0_107 = arith.constant 0 : index
    %160 = vector.load %arg2[%c0_104, %c2_105, %c2_106, %c0_107] : memref<1x10x10x1xf32, #tpu.memory_space<vmem>>, vector<1x8x8x1xf32>
    %161 = vector.shape_cast %160 : vector<1x8x8x1xf32> to vector<8x8x1xf32>
    %162 = vector.broadcast %1 : vector<1x1x128xf32> to vector<8x8x128xf32>
    %163 = arith.mulf %159, %162 : vector<8x8x128xf32>
    %164 = vector.broadcast %3 : vector<1x1x128xf32> to vector<8x8x128xf32>
    %165 = arith.addf %163, %164 : vector<8x8x128xf32>
    %cst_108 = arith.constant 0.000000e+00 : f32
    %166 = vector.broadcast %cst_108 : f32 to vector<8x8x128xf32>
    %167 = arith.maximumf %165, %166 : vector<8x8x128xf32>
    %168 = vector.broadcast %161 : vector<8x8x1xf32> to vector<8x8x128xf32>
    %169 = arith.mulf %167, %168 : vector<8x8x128xf32>
    %170 = vector.shape_cast %169 : vector<8x8x128xf32> to vector<64x128xf32>
    %171 = arith.truncf %170 : vector<64x128xf32> to vector<64x128xbf16>
    %c8 = arith.constant 8 : index
    %c0_109 = arith.constant 0 : index
    %c0_110 = arith.constant 0 : index
    %172 = vector.load %arg5[%c8, %c0_109, %c0_110] : memref<9x128x128xbf16, #tpu.memory_space<vmem>>, vector<1x128x128xbf16>
    %173 = vector.shape_cast %172 : vector<1x128x128xbf16> to vector<128x128xbf16>
    %cst_111 = arith.constant dense<0.000000e+00> : vector<64x128xf32>
    %174 = tpu.matmul %171, %173, %cst_111 {dimension_numbers = #tpu.dot_dimension_numbers<[1], [0], [0], [1], [0, 0, 1, 1], [], []>} : vector<64x128xbf16>, vector<128x128xbf16>, vector<64x128xf32> -> vector<64x128xf32>
    %175 = arith.addf %156, %174 : vector<64x128xf32>
    %c0_112 = arith.constant 0 : index
    %c0_113 = arith.constant 0 : index
    %176 = vector.load %arg6[%c0_112, %c0_113] : memref<1x128xf32, #tpu.memory_space<vmem>>, vector<1x128xf32>
    %177 = vector.broadcast %176 : vector<1x128xf32> to vector<64x128xf32>
    %178 = arith.addf %175, %177 : vector<64x128xf32>
    %cst_114 = arith.constant dense<0.000000e+00> : vector<128xf32>
    %179 = vector.multi_reduction <add>, %178, %cst_114 [0] : vector<64x128xf32> to vector<128xf32>
    %180 = vector.shape_cast %179 : vector<128xf32> to vector<1x1x128xf32>
    %c0_115 = arith.constant 0 : index
    %c0_116 = arith.constant 0 : index
    %c0_117 = arith.constant 0 : index
    %181 = vector.load %arg11[%c0_115, %c0_116, %c0_117] : memref<1x1x128xf32, #tpu.memory_space<vmem>>, vector<1x1x128xf32>
    tpu.vector_store %arg11[%c0_115, %c0_116, %c0_117], %180 {strides = array<i32>} : memref<1x1x128xf32, #tpu.memory_space<vmem>>, vector<1x1x128xf32>,
    %182 = arith.mulf %178, %178 : vector<64x128xf32>
    %cst_118 = arith.constant dense<0.000000e+00> : vector<128xf32>
    %183 = vector.multi_reduction <add>, %182, %cst_118 [0] : vector<64x128xf32> to vector<128xf32>
    %184 = vector.shape_cast %183 : vector<128xf32> to vector<1x1x128xf32>
    %c0_119 = arith.constant 0 : index
    %c0_120 = arith.constant 0 : index
    %c0_121 = arith.constant 0 : index
    %185 = vector.load %arg12[%c0_119, %c0_120, %c0_121] : memref<1x1x128xf32, #tpu.memory_space<vmem>>, vector<1x1x128xf32>
    tpu.vector_store %arg12[%c0_119, %c0_120, %c0_121], %184 {strides = array<i32>} : memref<1x1x128xf32, #tpu.memory_space<vmem>>, vector<1x1x128xf32>,
    %c0_122 = arith.constant 0 : index
    %c0_123 = arith.constant 0 : index
    %c0_124 = arith.constant 0 : index
    %c0_125 = arith.constant 0 : index
    %186 = vector.load %arg7[%c0_122, %c0_123, %c0_124, %c0_125] : memref<1x8x8x128xf32, #tpu.memory_space<vmem>>, vector<1x8x8x128xf32>
    %187 = vector.shape_cast %186 : vector<1x8x8x128xf32> to vector<64x128xf32>
    %c0_126 = arith.constant 0 : index
    %c0_127 = arith.constant 0 : index
    %188 = vector.load %arg8[%c0_126, %c0_127] : memref<1x128xf32, #tpu.memory_space<vmem>>, vector<1x128xf32>
    %189 = vector.broadcast %188 : vector<1x128xf32> to vector<64x128xf32>
    %190 = arith.mulf %187, %189 : vector<64x128xf32>
    %191 = arith.addf %178, %190 : vector<64x128xf32>
    %c0_128 = arith.constant 0 : index
    %c0_129 = arith.constant 0 : index
    %192 = vector.load %arg9[%c0_128, %c0_129] : memref<1x128xf32, #tpu.memory_space<vmem>>, vector<1x128xf32>
    %193 = vector.broadcast %192 : vector<1x128xf32> to vector<64x128xf32>
    %194 = arith.addf %191, %193 : vector<64x128xf32>
    %195 = vector.shape_cast %194 : vector<64x128xf32> to vector<1x8x8x128xf32>
    %c0_130 = arith.constant 0 : index
    %c0_131 = arith.constant 0 : index
    %c0_132 = arith.constant 0 : index
    %c0_133 = arith.constant 0 : index
    %196 = vector.load %arg10[%c0_130, %c0_131, %c0_132, %c0_133] : memref<1x8x8x128xf32, #tpu.memory_space<vmem>>, vector<1x8x8x128xf32>
    tpu.vector_store %arg10[%c0_130, %c0_131, %c0_132, %c0_133], %195 {strides = array<i32>} : memref<1x8x8x128xf32, #tpu.memory_space<vmem>>, vector<1x8x8x128xf32>,
    return
  }
  func.func @transform_0(%arg0: i32) -> (i32, i32, i32, i32) {
    %c0_i32 = arith.constant 0 : i32
    %c0_i32_0 = arith.constant 0 : i32
    %c0_i32_1 = arith.constant 0 : i32
    %c0_i32_2 = arith.constant 0 : i32
    return %arg0, %c0_i32, %c0_i32_0, %c0_i32_1 : i32, i32, i32, i32
  }
  func.func @transform_1(%arg0: i32) -> (i32, i32, i32, i32) {
    %c0_i32 = arith.constant 0 : i32
    %c0_i32_0 = arith.constant 0 : i32
    %c0_i32_1 = arith.constant 0 : i32
    %c0_i32_2 = arith.constant 0 : i32
    %c0_i32_3 = arith.constant 0 : i32
    return %c0_i32, %c0_i32_0, %c0_i32_1, %c0_i32_2 : i32, i32, i32, i32
  }
  func.func @transform_2(%arg0: i32) -> (i32, i32) {
    %c0_i32 = arith.constant 0 : i32
    %c0_i32_0 = arith.constant 0 : i32
    %c0_i32_1 = arith.constant 0 : i32
    return %c0_i32, %c0_i32_0 : i32, i32
  }
  func.func @transform_3(%arg0: i32) -> (i32, i32) {
    %c0_i32 = arith.constant 0 : i32
    %c0_i32_0 = arith.constant 0 : i32
    %c0_i32_1 = arith.constant 0 : i32
    return %c0_i32, %c0_i32_0 : i32, i32
  }
  func.func @transform_4(%arg0: i32) -> (i32, i32, i32) {
    %c0_i32 = arith.constant 0 : i32
    %c0_i32_0 = arith.constant 0 : i32
    %c0_i32_1 = arith.constant 0 : i32
    %c0_i32_2 = arith.constant 0 : i32
    return %c0_i32, %c0_i32_0, %c0_i32_1 : i32, i32, i32
  }
  func.func @transform_5(%arg0: i32) -> (i32, i32) {
    %c0_i32 = arith.constant 0 : i32
    %c0_i32_0 = arith.constant 0 : i32
    %c0_i32_1 = arith.constant 0 : i32
    return %c0_i32, %c0_i32_0 : i32, i32
  }
  func.func @transform_6(%arg0: i32) -> (i32, i32, i32, i32) {
    %c0_i32 = arith.constant 0 : i32
    %c0_i32_0 = arith.constant 0 : i32
    %c0_i32_1 = arith.constant 0 : i32
    %c0_i32_2 = arith.constant 0 : i32
    return %arg0, %c0_i32, %c0_i32_0, %c0_i32_1 : i32, i32, i32, i32
  }
  func.func @transform_7(%arg0: i32) -> (i32, i32) {
    %c0_i32 = arith.constant 0 : i32
    %c0_i32_0 = arith.constant 0 : i32
    %c0_i32_1 = arith.constant 0 : i32
    return %c0_i32, %c0_i32_0 : i32, i32
  }
  func.func @transform_8(%arg0: i32) -> (i32, i32) {
    %c0_i32 = arith.constant 0 : i32
    %c0_i32_0 = arith.constant 0 : i32
    %c0_i32_1 = arith.constant 0 : i32
    return %c0_i32, %c0_i32_0 : i32, i32
  }
  func.func @transform_9(%arg0: i32) -> (i32, i32, i32, i32) {
    %c0_i32 = arith.constant 0 : i32
    %c0_i32_0 = arith.constant 0 : i32
    %c0_i32_1 = arith.constant 0 : i32
    %c0_i32_2 = arith.constant 0 : i32
    return %arg0, %c0_i32, %c0_i32_0, %c0_i32_1 : i32, i32, i32, i32
  }
  func.func @transform_10(%arg0: i32) -> (i32, i32, i32) {
    %c0_i32 = arith.constant 0 : i32
    %c0_i32_0 = arith.constant 0 : i32
    %c0_i32_1 = arith.constant 0 : i32
    return %arg0, %c0_i32, %c0_i32_0 : i32, i32, i32
  }
  func.func @transform_11(%arg0: i32) -> (i32, i32, i32) {
    %c0_i32 = arith.constant 0 : i32
    %c0_i32_0 = arith.constant 0 : i32
    %c0_i32_1 = arith.constant 0 : i32
    return %arg0, %c0_i32, %c0_i32_0 : i32, i32, i32
  }
}

</mosaic_0001>

<llo_original>
// kernel: res_unet_down_block_forward.4
$region0: #{res_unet_down_block_forward.4}
  #allocation0 [shape = 'u32[]', space=smem, size = 0x4, offset = 0x4, fixed_abs, tag = 'smem constant byte address 0x4 - core index']
  #allocation1 [shape = 'u32[144,128]{1,0:T(1,128)}', space=vmem, size = 0x12000, scoped, tag = 'internal scratch']
  %s0 = inlined_call_operand.vmem [shape: f32[2,16,16,4], index: 0, kind: input, shape index: {}]
  %s1 = inlined_call_operand.vmem [shape: f32[2,1,4], index: 1, kind: output, shape index: {0}]
  %s2 = inlined_call_operand.vmem [shape: f32[2,1,4], index: 2, kind: output, shape index: {1}]
  %3 = xla_tuple %s1, %s2
  %s4 = sld [smem:[#allocation0]]
  $region45: #{res_unet_down_block_forward.4} parent=0
    _
  %s6 = ssub.s32 1, %s4
  %s7 = scalar_select 0, %s6, %s4
  loop: start=0, step=1, limit=4
  $region2: #{res_unet_down_block_forward.4} parent=0 // loop_pre_header
    _
  $region3: #{res_unet_down_block_forward.4} parent=0 // loop_header
    %s9 = sphi 0, %s13
    %p10 = scmp.ge.s32.totalorder %s9, 4
    %s19 = sphi 0, %s21
    %s22 = sphi 0, %s19
    %s23 = sphi 0, %s22
    %s39 = sphi 0, %s23
    %s45 = sphi 0, %s47
    %s48 = sphi 0, %s45
    %s49 = sphi 0, %s48
    %s65 = sphi 0, %s49
    %s71 = sphi 0, %s73
    %s74 = sphi 0, %s71
    %s75 = sphi 0, %s74
    %s91 = sphi 0, %s75
  $region4: #{res_unet_down_block_forward.4} parent=0 // loop_header_branch
    %12 = sbr.rel (%p10) target = $region8
  $region5: #{res_unet_down_block_forward.4} parent=0 // loop_body
    %s14 = ssub.s32 %s9, 1
    %s15 = ssub.s32 %s9, 2
    %s16 = sadd.s32 %s9, 1
    %s17 = ssub.s32 %s9, %s16
    %p18 = scmp.eq.s32.totalorder %s17, 0
    %s20 = sadd.s32 %s19, 1
    %s21 = scalar_select %p18, %s19, %s20
    %p24 = pneg %p18
    %p25 = scmp.eq.s32.totalorder %s9, 1
    %p26 = por %p24, %p25
    %p27 = scmp.ne.s32.totalorder %s19, %s22
    %p28 = scmp.eq.s32.totalorder %s9, 0
    %p29 = por %p27, %p28
    %p30 = scmp.ne.s32.totalorder %s19, %s22
    %p31 = scmp.eq.s32.totalorder %s14, 1
    %p32 = por %p30, %p31
    %p33 = scmp.ne.s32.totalorder %s22, %s23
    %p34 = scmp.eq.s32.totalorder %s14, 0
    %p35 = por %p33, %p34
    %p36 = scmp.ne.s32.totalorder %s22, %s23
    %p37 = scmp.eq.s32.totalorder %s15, 1
    %p38 = por %p36, %p37
    %p40 = scmp.ne.s32.totalorder %s23, %s39
    %p41 = scmp.eq.s32.totalorder %s15, 0
    %p42 = por %p40, %p41
    %s43 = ssub.s32 %s9, %s16
    %p44 = scmp.eq.s32.totalorder %s43, 0
    %s46 = sadd.s32 %s45, 1
    %s47 = scalar_select %p44, %s45, %s46
    %p50 = pneg %p44
    %p51 = scmp.eq.s32.totalorder %s9, 1
    %p52 = por %p50, %p51
    %p53 = scmp.ne.s32.totalorder %s45, %s48
    %p54 = scmp.eq.s32.totalorder %s9, 0
    %p55 = por %p53, %p54
    %p56 = scmp.ne.s32.totalorder %s45, %s48
    %p57 = scmp.eq.s32.totalorder %s14, 1
    %p58 = por %p56, %p57
    %p59 = scmp.ne.s32.totalorder %s48, %s49
    %p60 = scmp.eq.s32.totalorder %s14, 0
    %p61 = por %p59, %p60
    %p62 = scmp.ne.s32.totalorder %s48, %s49
    %p63 = scmp.eq.s32.totalorder %s15, 1
    %p64 = por %p62, %p63
    %p66 = scmp.ne.s32.totalorder %s49, %s65
    %p67 = scmp.eq.s32.totalorder %s15, 0
    %p68 = por %p66, %p67
    %s69 = ssub.s32 %s9, %s16
    %p70 = scmp.eq.s32.totalorder %s69, 0
    %s72 = sadd.s32 %s71, 1
    %s73 = scalar_select %p70, %s71, %s72
    %p76 = pneg %p70
    %p77 = scmp.eq.s32.totalorder %s9, 1
    %p78 = por %p76, %p77
    %p79 = scmp.ne.s32.totalorder %s71, %s74
    %p80 = scmp.eq.s32.totalorder %s9, 0
    %p81 = por %p79, %p80
    %p82 = scmp.ne.s32.totalorder %s71, %s74
    %p83 = scmp.eq.s32.totalorder %s14, 1
    %p84 = por %p82, %p83
    %p85 = scmp.ne.s32.totalorder %s74, %s75
    %p86 = scmp.eq.s32.totalorder %s14, 0
    %p87 = por %p85, %p86
    %p88 = scmp.ne.s32.totalorder %s74, %s75
    %p89 = scmp.eq.s32.totalorder %s15, 1
    %p90 = por %p88, %p89
    %p92 = scmp.ne.s32.totalorder %s75, %s91
    %p93 = scmp.eq.s32.totalorder %s15, 0
    %p94 = por %p92, %p93
    %p95 = scmp.le.s32.totalorder 1, %s9
    %p96 = scmp.lt.s32.totalorder %s9, 3
    %p97 = pnand %p95, %p96
    %p98 = pneg %p97
    // Predicated region
    $region9: #{res_unet_down_block_forward.4} parent=5 // pred_check
      _
    $region10: #{res_unet_down_block_forward.4} parent=5 // pred_check_branch
      %100 = sbr.rel (%p97) target = $region12
    $region11: #{res_unet_down_block_forward.4} parent=5 // pred_region
      %s101 = ssub.s32 %s9, 1
    $region12: #{res_unet_down_block_forward.4} parent=5 // pred_fallthru
      _
    %p102 = scmp.lt.s32.totalorder %s9, 2
    // Predicated region
    $region13: #{res_unet_down_block_forward.4} parent=5 // pred_check
      %p103 = pneg %p102
    $region14: #{res_unet_down_block_forward.4} parent=5 // pred_check_branch
      %105 = sbr.rel (%p103) target = $region16
    $region15: #{res_unet_down_block_forward.4} parent=5 // pred_region
      // Predicated region
      $region17: #{res_unet_down_block_forward.4} parent=15 // pred_check
        %p106 = pneg %p29
      $region18: #{res_unet_down_block_forward.4} parent=15 // pred_check_branch
        %108 = sbr.rel (%p106) target = $region20
      $region19: #{res_unet_down_block_forward.4} parent=15 // pred_region
        %p109 = scmp.lt.s32.totalorder %s9, 1
        %s110 = scalar_select %p109, %s9, 1
        %s111 = smul.addr %s110, 32
        %s112 = smul.addr %s111, 8
        %s113 = scalar_lea.vmem %s0, %s112
      $region20: #{res_unet_down_block_forward.4} parent=15 // pred_fallthru
        _
    $region16: #{res_unet_down_block_forward.4} parent=5 // pred_fallthru
      _
    %p114 = scmp.le.s32.totalorder 1, %s9
    %p115 = scmp.lt.s32.totalorder %s9, 3
    %p116 = pnand %p114, %p115
    %p117 = pneg %p116
    // Predicated region
    $region21: #{res_unet_down_block_forward.4} parent=5 // pred_check
      _
    $region22: #{res_unet_down_block_forward.4} parent=5 // pred_check_branch
      %119 = sbr.rel (%p116) target = $region24
    $region23: #{res_unet_down_block_forward.4} parent=5 // pred_region
      %s120 = ssub.s32 %s9, 1
      %p121 = scmp.lt.s32.totalorder %s14, 1
      %s122 = scalar_select %p121, %s14, 1
      %s123 = smul.addr %s122, 32
      %s124 = smul.addr %s123, 8
      %s125 = scalar_lea.vmem %s0, %s124
      %p126 = pneg %p35
      %p127 = pneg %p32
      %p128 = pneg %p61
      %p129 = pneg %p58
      %p130 = scmp.lt.s32.totalorder %s14, 1
      %s131 = scalar_select %p130, %s14, 1
      %s132 = scalar_lea.vmem %s1, %s131
      %p133 = pneg %p87
      %p134 = pneg %p84
      %p135 = scmp.lt.s32.totalorder %s14, 1
      %s136 = scalar_select %p135, %s14, 1
      %s137 = scalar_lea.vmem %s2, %s136
      %p138 = scmp.lt.s32.totalorder %s14, 1
      %s139 = scalar_select %p138, %s14, 1
      %s140 = smul.addr %s139, 32
      %s141 = smul.addr %s140, 8
      %s142 = scalar_lea.vmem %s0, %s141
      %p143 = scmp.lt.s32.totalorder %s14, 1
      %s144 = scalar_select %p143, %s14, 1
      %s145 = scalar_lea.vmem %s1, %s144
      %p146 = scmp.lt.s32.totalorder %s14, 1
      %s147 = scalar_select %p146, %s14, 1
      %s148 = scalar_lea.vmem %s2, %s147
      %v149 = vld [vmem:[%s142] sm:$0xff]
      %v150 = vld [vmem:[%s142 + $0x8] sm:$0xff]
      %v151 = vld [vmem:[%s142 + $0x10] sm:$0xff]
      %v152 = vld [vmem:[%s142 + $0x18] sm:$0xff]
      %v153 = vld [vmem:[%s142 + $0x20] sm:$0xff]
      %v154 = vld [vmem:[%s142 + $0x28] sm:$0xff]
      %v155 = vld [vmem:[%s142 + $0x30] sm:$0xff]
      %v156 = vld [vmem:[%s142 + $0x38] sm:$0xff]
      %v157 = vld [vmem:[%s142 + $0x40] sm:$0xff]
      %v158 = vld [vmem:[%s142 + $0x48] sm:$0xff]
      %v159 = vld [vmem:[%s142 + $0x50] sm:$0xff]
      %v160 = vld [vmem:[%s142 + $0x58] sm:$0xff]
      %v161 = vld [vmem:[%s142 + $0x60] sm:$0xff]
      %v162 = vld [vmem:[%s142 + $0x68] sm:$0xff]
      %v163 = vld [vmem:[%s142 + $0x70] sm:$0xff]
      %v164 = vld [vmem:[%s142 + $0x78] sm:$0xff]
      %v165 = vld [vmem:[%s142 + $0x80] sm:$0xff]
      %v166 = vld [vmem:[%s142 + $0x88] sm:$0xff]
      %v167 = vld [vmem:[%s142 + $0x90] sm:$0xff]
      %v168 = vld [vmem:[%s142 + $0x98] sm:$0xff]
      %v169 = vld [vmem:[%s142 + $0xa0] sm:$0xff]
      %v170 = vld [vmem:[%s142 + $0xa8] sm:$0xff]
      %v171 = vld [vmem:[%s142 + $0xb0] sm:$0xff]
      %v172 = vld [vmem:[%s142 + $0xb8] sm:$0xff]
      %v173 = vld [vmem:[%s142 + $0xc0] sm:$0xff]
      %v174 = vld [vmem:[%s142 + $0xc8] sm:$0xff]
      %v175 = vld [vmem:[%s142 + $0xd0] sm:$0xff]
      %v176 = vld [vmem:[%s142 + $0xd8] sm:$0xff]
      %v177 = vld [vmem:[%s142 + $0xe0] sm:$0xff]
      %v178 = vld [vmem:[%s142 + $0xe8] sm:$0xff]
      %v179 = vld [vmem:[%s142 + $0xf0] sm:$0xff]
      %v180 = vld [vmem:[%s142 + $0xf8] sm:$0xff]
      %vm181 = vcmask 31744
      %v182 = vsel %vm181, %v149, 0.0
      %v183 = vsel %vm181, %v150, 0.0
      %v184 = vadd.f32 %v182, %v183
      %v185 = vsel %vm181, %v151, 0.0
      %v186 = vadd.f32 %v184, %v185
      %v187 = vsel %vm181, %v152, 0.0
      %v188 = vadd.f32 %v186, %v187
      %v189 = vsel %vm181, %v153, 0.0
      %v190 = vadd.f32 %v188, %v189
      %v191 = vsel %vm181, %v154, 0.0
      %v192 = vadd.f32 %v190, %v191
      %v193 = vsel %vm181, %v155, 0.0
      %v194 = vadd.f32 %v192, %v193
      %v195 = vsel %vm181, %v156, 0.0
      %v196 = vadd.f32 %v194, %v195
      %v197 = vsel %vm181, %v157, 0.0
      %v198 = vadd.f32 %v196, %v197
      %v199 = vsel %vm181, %v158, 0.0
      %v200 = vadd.f32 %v198, %v199
      %v201 = vsel %vm181, %v159, 0.0
      %v202 = vadd.f32 %v200, %v201
      %v203 = vsel %vm181, %v160, 0.0
      %v204 = vadd.f32 %v202, %v203
      %v205 = vsel %vm181, %v161, 0.0
      %v206 = vadd.f32 %v204, %v205
      %v207 = vsel %vm181, %v162, 0.0
      %v208 = vadd.f32 %v206, %v207
      %v209 = vsel %vm181, %v163, 0.0
      %v210 = vadd.f32 %v208, %v209
      %v211 = vsel %vm181, %v164, 0.0
      %v212 = vadd.f32 %v210, %v211
      %v213 = vsel %vm181, %v165, 0.0
      %v214 = vadd.f32 %v212, %v213
      %v215 = vsel %vm181, %v166, 0.0
      %v216 = vadd.f32 %v214, %v215
      %v217 = vsel %vm181, %v167, 0.0
      %v218 = vadd.f32 %v216, %v217
      %v219 = vsel %vm181, %v168, 0.0
      %v220 = vadd.f32 %v218, %v219
      %v221 = vsel %vm181, %v169, 0.0
      %v222 = vadd.f32 %v220, %v221
      %v223 = vsel %vm181, %v170, 0.0
      %v224 = vadd.f32 %v222, %v223
      %v225 = vsel %vm181, %v171, 0.0
      %v226 = vadd.f32 %v224, %v225
      %v227 = vsel %vm181, %v172, 0.0
      %v228 = vadd.f32 %v226, %v227
      %v229 = vsel %vm181, %v173, 0.0
      %v230 = vadd.f32 %v228, %v229
      %v231 = vsel %vm181, %v174, 0.0
      %v232 = vadd.f32 %v230, %v231
      %v233 = vsel %vm181, %v175, 0.0
      %v234 = vadd.f32 %v232, %v233
      %v235 = vsel %vm181, %v176, 0.0
      %v236 = vadd.f32 %v234, %v235
      %v237 = vsel %vm181, %v177, 0.0
      %v238 = vadd.f32 %v236, %v237
      %v239 = vsel %vm181, %v178, 0.0
      %v240 = vadd.f32 %v238, %v239
      %v241 = vsel %vm181, %v179, 0.0
      %v242 = vadd.f32 %v240, %v241
      %v243 = vsel %vm181, %v180, 0.0
      %v244 = vadd.f32 %v242, %v243
      %v245 = vrot.slane %v244, 4
      %v246 = vadd.f32 %v244, %v245
      %v247 = vrot.slane %v246, 2
      %v248 = vadd.f32 %v246, %v247
      %v249 = vrot.slane %v248, 1
      %v250 = vadd.f32 %v248, %v249
      %vm251 = vcmask 24576
      %252 = vst.msk [vmem:[%s145] sm:$0x1] %vm251, %v250
      %v253 = vmul.f32 %v149, %v149
      %v254 = vmul.f32 %v150, %v150
      %v255 = vmul.f32 %v151, %v151
      %v256 = vmul.f32 %v152, %v152
      %v257 = vmul.f32 %v153, %v153
      %v258 = vmul.f32 %v154, %v154
      %v259 = vmul.f32 %v155, %v155
      %v260 = vmul.f32 %v156, %v156
      %v261 = vmul.f32 %v157, %v157
      %v262 = vmul.f32 %v158, %v158
      %v263 = vmul.f32 %v159, %v159
      %v264 = vmul.f32 %v160, %v160
      %v265 = vmul.f32 %v161, %v161
      %v266 = vmul.f32 %v162, %v162
      %v267 = vmul.f32 %v163, %v163
      %v268 = vmul.f32 %v164, %v164
      %v269 = vmul.f32 %v165, %v165
      %v270 = vmul.f32 %v166, %v166
      %v271 = vmul.f32 %v167, %v167
      %v272 = vmul.f32 %v168, %v168
      %v273 = vmul.f32 %v169, %v169
      %v274 = vmul.f32 %v170, %v170
      %v275 = vmul.f32 %v171, %v171
      %v276 = vmul.f32 %v172, %v172
      %v277 = vmul.f32 %v173, %v173
      %v278 = vmul.f32 %v174, %v174
      %v279 = vmul.f32 %v175, %v175
      %v280 = vmul.f32 %v176, %v176
      %v281 = vmul.f32 %v177, %v177
      %v282 = vmul.f32 %v178, %v178
      %v283 = vmul.f32 %v179, %v179
      %v284 = vmul.f32 %v180, %v180
      %v285 = vsel %vm181, %v253, 0.0
      %v286 = vsel %vm181, %v254, 0.0
      %v287 = vadd.f32 %v285, %v286
      %v288 = vsel %vm181, %v255, 0.0
      %v289 = vadd.f32 %v287, %v288
      %v290 = vsel %vm181, %v256, 0.0
      %v291 = vadd.f32 %v289, %v290
      %v292 = vsel %vm181, %v257, 0.0
      %v293 = vadd.f32 %v291, %v292
      %v294 = vsel %vm181, %v258, 0.0
      %v295 = vadd.f32 %v293, %v294
      %v296 = vsel %vm181, %v259, 0.0
      %v297 = vadd.f32 %v295, %v296
      %v298 = vsel %vm181, %v260, 0.0
      %v299 = vadd.f32 %v297, %v298
      %v300 = vsel %vm181, %v261, 0.0
      %v301 = vadd.f32 %v299, %v300
      %v302 = vsel %vm181, %v262, 0.0
      %v303 = vadd.f32 %v301, %v302
      %v304 = vsel %vm181, %v263, 0.0
      %v305 = vadd.f32 %v303, %v304
      %v306 = vsel %vm181, %v264, 0.0
      %v307 = vadd.f32 %v305, %v306
      %v308 = vsel %vm181, %v265, 0.0
      %v309 = vadd.f32 %v307, %v308
      %v310 = vsel %vm181, %v266, 0.0
      %v311 = vadd.f32 %v309, %v310
      %v312 = vsel %vm181, %v267, 0.0
      %v313 = vadd.f32 %v311, %v312
      %v314 = vsel %vm181, %v268, 0.0
      %v315 = vadd.f32 %v313, %v314
      %v316 = vsel %vm181, %v269, 0.0
      %v317 = vadd.f32 %v315, %v316
      %v318 = vsel %vm181, %v270, 0.0
      %v319 = vadd.f32 %v317, %v318
      %v320 = vsel %vm181, %v271, 0.0
      %v321 = vadd.f32 %v319, %v320
      %v322 = vsel %vm181, %v272, 0.0
      %v323 = vadd.f32 %v321, %v322
      %v324 = vsel %vm181, %v273, 0.0
      %v325 = vadd.f32 %v323, %v324
      %v326 = vsel %vm181, %v274, 0.0
      %v327 = vadd.f32 %v325, %v326
      %v328 = vsel %vm181, %v275, 0.0
      %v329 = vadd.f32 %v327, %v328
      %v330 = vsel %vm181, %v276, 0.0
      %v331 = vadd.f32 %v329, %v330
      %v332 = vsel %vm181, %v277, 0.0
      %v333 = vadd.f32 %v331, %v332
      %v334 = vsel %vm181, %v278, 0.0
      %v335 = vadd.f32 %v333, %v334
      %v336 = vsel %vm181, %v279, 0.0
      %v337 = vadd.f32 %v335, %v336
      %v338 = vsel %vm181, %v280, 0.0
      %v339 = vadd.f32 %v337, %v338
      %v340 = vsel %vm181, %v281, 0.0
      %v341 = vadd.f32 %v339, %v340
      %v342 = vsel %vm181, %v282, 0.0
      %v343 = vadd.f32 %v341, %v342
      %v344 = vsel %vm181, %v283, 0.0
      %v345 = vadd.f32 %v343, %v344
      %v346 = vsel %vm181, %v284, 0.0
      %v347 = vadd.f32 %v345, %v346
      %v348 = vrot.slane %v347, 4
      %v349 = vadd.f32 %v347, %v348
      %v350 = vrot.slane %v349, 2
      %v351 = vadd.f32 %v349, %v350
      %v352 = vrot.slane %v351, 1
      %v353 = vadd.f32 %v351, %v352
      %354 = vst.msk [vmem:[%s148] sm:$0x1] %vm251, %v353
      %p355 = scmp.lt.s32.totalorder %s14, 1
      %s356 = scalar_select %p355, %s14, 1
      %s357 = scalar_lea.vmem %s1, %s356
      %p358 = scmp.lt.s32.totalorder %s14, 1
      %s359 = scalar_select %p358, %s14, 1
      %s360 = scalar_lea.vmem %s2, %s359
      // Predicated region
      $region25: #{res_unet_down_block_forward.4} parent=23 // pred_check
        %p361 = pneg %p58
      $region26: #{res_unet_down_block_forward.4} parent=23 // pred_check_branch
        %363 = sbr.rel (%p361) target = $region28
      $region27: #{res_unet_down_block_forward.4} parent=23 // pred_region
        _
      $region28: #{res_unet_down_block_forward.4} parent=23 // pred_fallthru
        _
      // Predicated region
      $region29: #{res_unet_down_block_forward.4} parent=23 // pred_check
        %p364 = pneg %p84
      $region30: #{res_unet_down_block_forward.4} parent=23 // pred_check_branch
        %366 = sbr.rel (%p364) target = $region32
      $region31: #{res_unet_down_block_forward.4} parent=23 // pred_region
        _
      $region32: #{res_unet_down_block_forward.4} parent=23 // pred_fallthru
        _
    $region24: #{res_unet_down_block_forward.4} parent=5 // pred_fallthru
      _
    %p367 = scmp.le.s32.totalorder 2, %s9
    // Predicated region
    $region33: #{res_unet_down_block_forward.4} parent=5 // pred_check
      %p368 = pneg %p367
    $region34: #{res_unet_down_block_forward.4} parent=5 // pred_check_branch
      %370 = sbr.rel (%p368) target = $region36
    $region35: #{res_unet_down_block_forward.4} parent=5 // pred_region
      %s371 = ssub.s32 %s9, 2
      // Predicated region
      $region37: #{res_unet_down_block_forward.4} parent=35 // pred_check
        %p372 = pneg %p64
      $region38: #{res_unet_down_block_forward.4} parent=35 // pred_check_branch
        %374 = sbr.rel (%p372) target = $region40
      $region39: #{res_unet_down_block_forward.4} parent=35 // pred_region
        %p375 = scmp.lt.s32.totalorder %s15, 1
        %s376 = scalar_select %p375, %s15, 1
        %s377 = scalar_lea.vmem %s1, %s376
      $region40: #{res_unet_down_block_forward.4} parent=35 // pred_fallthru
        _
      // Predicated region
      $region41: #{res_unet_down_block_forward.4} parent=35 // pred_check
        %p378 = pneg %p90
      $region42: #{res_unet_down_block_forward.4} parent=35 // pred_check_branch
        %380 = sbr.rel (%p378) target = $region44
      $region43: #{res_unet_down_block_forward.4} parent=35 // pred_region
        %p381 = scmp.lt.s32.totalorder %s15, 1
        %s382 = scalar_select %p381, %s15, 1
        %s383 = scalar_lea.vmem %s2, %s382
      $region44: #{res_unet_down_block_forward.4} parent=35 // pred_fallthru
        _
    $region36: #{res_unet_down_block_forward.4} parent=5 // pred_fallthru
      _
  $region6: #{res_unet_down_block_forward.4} parent=0 // loop_footer
    %s13 = sadd.s32 1, %s9
  $region7: #{res_unet_down_block_forward.4} parent=0 // loop_footer_branch
    %8 = sbr.rel target = $region3
  $region8: #{res_unet_down_block_forward.4} parent=0 // loop_exit
    _

// kernel: res_unet_down_block_forward.5
$region0: #{res_unet_down_block_forward.5}
  #allocation0 [shape = 'u32[]', space=smem, size = 0x4, offset = 0x4, fixed_abs, tag = 'smem constant byte address 0x4 - core index']
  #allocation1 [shape = 'u32[144,128]{1,0:T(1,128)}', space=vmem, size = 0x12000, scoped, tag = 'internal scratch']
  %s0 = inlined_call_operand.vmem [shape: f32[2,8,8,4], index: 0, kind: input, shape index: {}]
  %s1 = inlined_call_operand.vmem [shape: bf16[4,128], index: 1, kind: input, shape index: {}]
  %s2 = inlined_call_operand.vmem [shape: f32[2,8,8,128], index: 2, kind: output, shape index: {0}]
  %s3 = inlined_call_operand.vmem [shape: f32[2,1,128], index: 3, kind: output, shape index: {1}]
  %s4 = inlined_call_operand.vmem [shape: f32[2,1,128], index: 4, kind: output, shape index: {2}]
  %5 = xla_tuple %s2, %s3, %s4
  %s6 = sld [smem:[#allocation0]]
  $region57: #{res_unet_down_block_forward.5} parent=0
    _
  %s8 = ssub.s32 1, %s6
  %s9 = scalar_select 0, %s8, %s6
  loop: start=0, step=1, limit=4
  $region2: #{res_unet_down_block_forward.5} parent=0 // loop_pre_header
    _
  $region3: #{res_unet_down_block_forward.5} parent=0 // loop_header
    %s11 = sphi 0, %s15
    %p12 = scmp.ge.s32.totalorder %s11, 4
    %s21 = sphi 0, %s23
    %s24 = sphi 0, %s21
    %s25 = sphi 0, %s24
    %s41 = sphi 0, %s25
    %s45 = sphi 0, %s45
    %s47 = sphi 0, %s45
    %s48 = sphi 0, %s47
    %s62 = sphi 0, %s48
    %s68 = sphi 0, %s70
    %s71 = sphi 0, %s68
    %s72 = sphi 0, %s71
    %s88 = sphi 0, %s72
    %s94 = sphi 0, %s96
    %s97 = sphi 0, %s94
    %s98 = sphi 0, %s97
    %s114 = sphi 0, %s98
    %s120 = sphi 0, %s122
    %s123 = sphi 0, %s120
    %s124 = sphi 0, %s123
    %s140 = sphi 0, %s124
  $region4: #{res_unet_down_block_forward.5} parent=0 // loop_header_branch
    %14 = sbr.rel (%p12) target = $region8
  $region5: #{res_unet_down_block_forward.5} parent=0 // loop_body
    %s16 = ssub.s32 %s11, 1
    %s17 = ssub.s32 %s11, 2
    %s18 = sadd.s32 %s11, 1
    %s19 = ssub.s32 %s11, %s18
    %p20 = scmp.eq.s32.totalorder %s19, 0
    %s22 = sadd.s32 %s21, 1
    %s23 = scalar_select %p20, %s21, %s22
    %p26 = pneg %p20
    %p27 = scmp.eq.s32.totalorder %s11, 1
    %p28 = por %p26, %p27
    %p29 = scmp.ne.s32.totalorder %s21, %s24
    %p30 = scmp.eq.s32.totalorder %s11, 0
    %p31 = por %p29, %p30
    %p32 = scmp.ne.s32.totalorder %s21, %s24
    %p33 = scmp.eq.s32.totalorder %s16, 1
    %p34 = por %p32, %p33
    %p35 = scmp.ne.s32.totalorder %s24, %s25
    %p36 = scmp.eq.s32.totalorder %s16, 0
    %p37 = por %p35, %p36
    %p38 = scmp.ne.s32.totalorder %s24, %s25
    %p39 = scmp.eq.s32.totalorder %s17, 1
    %p40 = por %p38, %p39
    %p42 = scmp.ne.s32.totalorder %s25, %s41
    %p43 = scmp.eq.s32.totalorder %s17, 0
    %p44 = por %p42, %p43
    %s46 = sadd.s32 %s45, 1
    %p49 = scmp.eq.s32.totalorder %s11, 1
    %p50 = scmp.ne.s32.totalorder %s45, %s47
    %p51 = scmp.eq.s32.totalorder %s11, 0
    %p52 = por %p50, %p51
    %p53 = scmp.ne.s32.totalorder %s45, %s47
    %p54 = scmp.eq.s32.totalorder %s16, 1
    %p55 = por %p53, %p54
    %p56 = scmp.ne.s32.totalorder %s47, %s48
    %p57 = scmp.eq.s32.totalorder %s16, 0
    %p58 = por %p56, %p57
    %p59 = scmp.ne.s32.totalorder %s47, %s48
    %p60 = scmp.eq.s32.totalorder %s17, 1
    %p61 = por %p59, %p60
    %p63 = scmp.ne.s32.totalorder %s48, %s62
    %p64 = scmp.eq.s32.totalorder %s17, 0
    %p65 = por %p63, %p64
    %s66 = ssub.s32 %s11, %s18
    %p67 = scmp.eq.s32.totalorder %s66, 0
    %s69 = sadd.s32 %s68, 1
    %s70 = scalar_select %p67, %s68, %s69
    %p73 = pneg %p67
    %p74 = scmp.eq.s32.totalorder %s11, 1
    %p75 = por %p73, %p74
    %p76 = scmp.ne.s32.totalorder %s68, %s71
    %p77 = scmp.eq.s32.totalorder %s11, 0
    %p78 = por %p76, %p77
    %p79 = scmp.ne.s32.totalorder %s68, %s71
    %p80 = scmp.eq.s32.totalorder %s16, 1
    %p81 = por %p79, %p80
    %p82 = scmp.ne.s32.totalorder %s71, %s72
    %p83 = scmp.eq.s32.totalorder %s16, 0
    %p84 = por %p82, %p83
    %p85 = scmp.ne.s32.totalorder %s71, %s72
    %p86 = scmp.eq.s32.totalorder %s17, 1
    %p87 = por %p85, %p86
    %p89 = scmp.ne.s32.totalorder %s72, %s88
    %p90 = scmp.eq.s32.totalorder %s17, 0
    %p91 = por %p89, %p90
    %s92 = ssub.s32 %s11, %s18
    %p93 = scmp.eq.s32.totalorder %s92, 0
    %s95 = sadd.s32 %s94, 1
    %s96 = scalar_select %p93, %s94, %s95
    %p99 = pneg %p93
    %p100 = scmp.eq.s32.totalorder %s11, 1
    %p101 = por %p99, %p100
    %p102 = scmp.ne.s32.totalorder %s94, %s97
    %p103 = scmp.eq.s32.totalorder %s11, 0
    %p104 = por %p102, %p103
    %p105 = scmp.ne.s32.totalorder %s94, %s97
    %p106 = scmp.eq.s32.totalorder %s16, 1
    %p107 = por %p105, %p106
    %p108 = scmp.ne.s32.totalorder %s97, %s98
    %p109 = scmp.eq.s32.totalorder %s16, 0
    %p110 = por %p108, %p109
    %p111 = scmp.ne.s32.totalorder %s97, %s98
    %p112 = scmp.eq.s32.totalorder %s17, 1
    %p113 = por %p111, %p112
    %p115 = scmp.ne.s32.totalorder %s98, %s114
    %p116 = scmp.eq.s32.totalorder %s17, 0
    %p117 = por %p115, %p116
    %s118 = ssub.s32 %s11, %s18
    %p119 = scmp.eq.s32.totalorder %s118, 0
    %s121 = sadd.s32 %s120, 1
    %s122 = scalar_select %p119, %s120, %s121
    %p125 = pneg %p119
    %p126 = scmp.eq.s32.totalorder %s11, 1
    %p127 = por %p125, %p126
    %p128 = scmp.ne.s32.totalorder %s120, %s123
    %p129 = scmp.eq.s32.totalorder %s11, 0
    %p130 = por %p128, %p129
    %p131 = scmp.ne.s32.totalorder %s120, %s123
    %p132 = scmp.eq.s32.totalorder %s16, 1
    %p133 = por %p131, %p132
    %p134 = scmp.ne.s32.totalorder %s123, %s124
    %p135 = scmp.eq.s32.totalorder %s16, 0
    %p136 = por %p134, %p135
    %p137 = scmp.ne.s32.totalorder %s123, %s124
    %p138 = scmp.eq.s32.totalorder %s17, 1
    %p139 = por %p137, %p138
    %p141 = scmp.ne.s32.totalorder %s124, %s140
    %p142 = scmp.eq.s32.totalorder %s17, 0
    %p143 = por %p141, %p142
    %p144 = scmp.le.s32.totalorder 1, %s11
    %p145 = scmp.lt.s32.totalorder %s11, 3
    %p146 = pnand %p144, %p145
    %p147 = pneg %p146
    // Predicated region
    $region9: #{res_unet_down_block_forward.5} parent=5 // pred_check
      _
    $region10: #{res_unet_down_block_forward.5} parent=5 // pred_check_branch
      %149 = sbr.rel (%p146) target = $region12
    $region11: #{res_unet_down_block_forward.5} parent=5 // pred_region
      %s150 = ssub.s32 %s11, 1
      // Predicated region
      $region13: #{res_unet_down_block_forward.5} parent=11 // pred_check
        %p151 = pneg %p58
      $region14: #{res_unet_down_block_forward.5} parent=11 // pred_check_branch
        %153 = sbr.rel (%p151) target = $region16
      $region15: #{res_unet_down_block_forward.5} parent=11 // pred_region
        _
      $region16: #{res_unet_down_block_forward.5} parent=11 // pred_fallthru
        _
    $region12: #{res_unet_down_block_forward.5} parent=5 // pred_fallthru
      _
    %p154 = scmp.lt.s32.totalorder %s11, 2
    // Predicated region
    $region17: #{res_unet_down_block_forward.5} parent=5 // pred_check
      %p155 = pneg %p154
    $region18: #{res_unet_down_block_forward.5} parent=5 // pred_check_branch
      %157 = sbr.rel (%p155) target = $region20
    $region19: #{res_unet_down_block_forward.5} parent=5 // pred_region
      // Predicated region
      $region21: #{res_unet_down_block_forward.5} parent=19 // pred_check
        %p158 = pneg %p31
      $region22: #{res_unet_down_block_forward.5} parent=19 // pred_check_branch
        %160 = sbr.rel (%p158) target = $region24
      $region23: #{res_unet_down_block_forward.5} parent=19 // pred_region
        %p161 = scmp.lt.s32.totalorder %s11, 1
        %s162 = scalar_select %p161, %s11, 1
        %s163 = smul.addr %s162, 8
        %s164 = smul.addr %s163, 8
        %s165 = scalar_lea.vmem %s0, %s164
      $region24: #{res_unet_down_block_forward.5} parent=19 // pred_fallthru
        _
    $region20: #{res_unet_down_block_forward.5} parent=5 // pred_fallthru
      _
    %p166 = scmp.le.s32.totalorder 1, %s11
    %p167 = scmp.lt.s32.totalorder %s11, 3
    %p168 = pnand %p166, %p167
    %p169 = pneg %p168
    // Predicated region
    $region25: #{res_unet_down_block_forward.5} parent=5 // pred_check
      _
    $region26: #{res_unet_down_block_forward.5} parent=5 // pred_check_branch
      %171 = sbr.rel (%p168) target = $region28
    $region27: #{res_unet_down_block_forward.5} parent=5 // pred_region
      %s172 = ssub.s32 %s11, 1
      %p173 = scmp.lt.s32.totalorder %s16, 1
      %s174 = scalar_select %p173, %s16, 1
      %s175 = smul.addr %s174, 8
      %s176 = smul.addr %s175, 8
      %s177 = scalar_lea.vmem %s0, %s176
      %p178 = pneg %p37
      %p179 = pneg %p34
      %p180 = pneg %p58
      %p181 = pneg %p55
      %p182 = pneg %p84
      %p183 = pneg %p81
      %p184 = scmp.lt.s32.totalorder %s16, 1
      %s185 = scalar_select %p184, %s16, 1
      %s186 = smul.addr %s185, 8
      %s187 = smul.addr %s186, 8
      %s188 = scalar_lea.vmem %s2, %s187
      %p189 = pneg %p110
      %p190 = pneg %p107
      %p191 = scmp.lt.s32.totalorder %s16, 1
      %s192 = scalar_select %p191, %s16, 1
      %s193 = scalar_lea.vmem %s3, %s192
      %p194 = pneg %p136
      %p195 = pneg %p133
      %p196 = scmp.lt.s32.totalorder %s16, 1
      %s197 = scalar_select %p196, %s16, 1
      %s198 = scalar_lea.vmem %s4, %s197
      %p199 = scmp.lt.s32.totalorder %s16, 1
      %s200 = scalar_select %p199, %s16, 1
      %s201 = smul.addr %s200, 8
      %s202 = smul.addr %s201, 8
      %s203 = scalar_lea.vmem %s0, %s202
      %p204 = scmp.lt.s32.totalorder %s16, 1
      %s205 = scalar_select %p204, %s16, 1
      %s206 = smul.addr %s205, 8
      %s207 = smul.addr %s206, 8
      %s208 = scalar_lea.vmem %s2, %s207
      %p209 = scmp.lt.s32.totalorder %s16, 1
      %s210 = scalar_select %p209, %s16, 1
      %s211 = scalar_lea.vmem %s3, %s210
      %p212 = scmp.lt.s32.totalorder %s16, 1
      %s213 = scalar_select %p212, %s16, 1
      %s214 = scalar_lea.vmem %s4, %s213
      %v216 = vld [vmem:[%s203] sm:$0xff]
      %v217 = vld [vmem:[%s203 + $0x8] sm:$0xff]
      %v218 = vld [vmem:[%s203 + $0x10] sm:$0xff]
      %v219 = vld [vmem:[%s203 + $0x18] sm:$0xff]
      %v220 = vld [vmem:[%s203 + $0x20] sm:$0xff]
      %v221 = vld [vmem:[%s203 + $0x28] sm:$0xff]
      %v222 = vld [vmem:[%s203 + $0x30] sm:$0xff]
      %v223 = vld [vmem:[%s203 + $0x38] sm:$0xff]
      %v224 = vpack.c.bf16 %v217, %v216
      %v225 = vpack.c.bf16 %v219, %v218
      %v226 = vpack.c.bf16 %v221, %v220
      %v227 = vpack.c.bf16 %v223, %v222
      %v228 = vld [vmem:[%s1] sm:$0x3]
      %vm229 = vcmask 31744
      %v231 = vsel %vm229, %v224, 0
      %v234 = vsel %vm229, %v225, 0
      %v237 = vsel %vm229, %v226, 0
      %v240 = vsel %vm229, %v227, 0
      %vm242 = vcmask 1041408
      %v244 = vsel %vm242, %v228, 0
      %246 = vmatprep.subr.bf16.mxu0 0
      %247 = vmatpush1.bf16.msra.mxu0 0
      %248 = vmatprep.subr.bf16.mxu0 0
      %249 = vmatpush1.bf16.msra.mxu0 0
      %250 = vmatprep.subr.bf16.mxu0 0
      %251 = vmatpush1.bf16.msra.mxu0 0
      %252 = vmatprep.subr.bf16.mxu0 0
      %253 = vmatpush1.bf16.msra.mxu0 0
      %254 = vmatprep.subr.bf16.mxu0 0
      %255 = vmatpush1.bf16.msra.mxu0 0
      %256 = vmatprep.subr.bf16.mxu0 0
      %257 = vmatpush1.bf16.msra.mxu0 0
      %258 = vmatprep.subr.bf16.mxu0 0
      %259 = vmatpush1.bf16.msra.mxu0 0
      %260 = vmatprep.subr.bf16.mxu0 0
      %261 = vmatpush1.bf16.msra.mxu0 %v244
      %262 = vmatprep.subr.bf16.mxu0 0
      %263 = vmatpush2.bf16.msra.mxu0 0
      %264 = vmatprep.subr.bf16.mxu0 0
      %265 = vmatpush2.bf16.msra.mxu0 0
      %266 = vmatprep.subr.bf16.mxu0 0
      %267 = vmatpush2.bf16.msra.mxu0 0
      %268 = vmatprep.subr.bf16.mxu0 0
      %269 = vmatpush2.bf16.msra.mxu0 0
      %270 = vmatprep.subr.bf16.mxu0 0
      %271 = vmatpush2.bf16.msra.mxu0 0
      %272 = vmatprep.subr.bf16.mxu0 0
      %273 = vmatpush2.bf16.msra.mxu0 0
      %274 = vmatprep.subr.bf16.mxu0 0
      %275 = vmatpush2.bf16.msra.mxu0 0
      %276 = vmatprep.subr.bf16.mxu0 0
      %277 = vmatpush2.bf16.msra.mxu0 0
      %278 = vmatprep.mubr.bf16.mxu0 0
      %279 = vmatmul.mubr.bf16.gmra.mxu0 %v231
      %v280 = vpop.f32.mrf.mxu0
      %v281 = vadd.f32 0.0, %v280
      %v282 = vpop.f32.mrf.mxu0
      %v283 = vpop.f32.mrf.mxu0
      %v284 = vadd.f32 0.0, %v283
      %v285 = vpop.f32.mrf.mxu0
      %286 = vmatprep.mubr.bf16.mxu0 0
      %287 = vmatmul.mubr.bf16.gmra.mxu0 %v234
      %v288 = vpop.f32.mrf.mxu0
      %v289 = vadd.f32 0.0, %v288
      %v290 = vpop.f32.mrf.mxu0
      %v291 = vpop.f32.mrf.mxu0
      %v292 = vadd.f32 0.0, %v291
      %v293 = vpop.f32.mrf.mxu0
      %294 = vmatprep.mubr.bf16.mxu0 0
      %295 = vmatmul.mubr.bf16.gmra.mxu0 %v237
      %v296 = vpop.f32.mrf.mxu0
      %v297 = vadd.f32 0.0, %v296
      %v298 = vpop.f32.mrf.mxu0
      %v299 = vpop.f32.mrf.mxu0
      %v300 = vadd.f32 0.0, %v299
      %v301 = vpop.f32.mrf.mxu0
      %302 = vmatprep.mubr.bf16.mxu0 0
      %303 = vmatmul.mubr.bf16.gmra.mxu0 %v240
      %v304 = vpop.f32.mrf.mxu0
      %v305 = vadd.f32 0.0, %v304
      %v306 = vpop.f32.mrf.mxu0
      %v307 = vpop.f32.mrf.mxu0
      %v308 = vadd.f32 0.0, %v307
      %v309 = vpop.f32.mrf.mxu0
      %310 = vdwg.mxu0
      %v311 = vadd.f32 %v281, %v284
      %v312 = vadd.f32 %v311, %v289
      %v313 = vadd.f32 %v312, %v292
      %v314 = vadd.f32 %v313, %v297
      %v315 = vadd.f32 %v314, %v300
      %v316 = vadd.f32 %v315, %v305
      %v317 = vadd.f32 %v316, %v308
      %v318 = vrot.slane %v317, 4
      %v319 = vadd.f32 %v317, %v318
      %v320 = vrot.slane %v319, 2
      %v321 = vadd.f32 %v319, %v320
      %v322 = vrot.slane %v321, 1
      %v323 = vadd.f32 %v321, %v322
      %324 = vst [vmem:[%s211] sm:$0x1] %v323
      %v325 = vmul.f32 %v281, %v281
      %v326 = vmul.f32 %v284, %v284
      %v327 = vmul.f32 %v289, %v289
      %v328 = vmul.f32 %v292, %v292
      %v329 = vmul.f32 %v297, %v297
      %v330 = vmul.f32 %v300, %v300
      %v331 = vmul.f32 %v305, %v305
      %v332 = vmul.f32 %v308, %v308
      %v333 = vadd.f32 %v325, %v326
      %v334 = vadd.f32 %v333, %v327
      %v335 = vadd.f32 %v334, %v328
      %v336 = vadd.f32 %v335, %v329
      %v337 = vadd.f32 %v336, %v330
      %v338 = vadd.f32 %v337, %v331
      %v339 = vadd.f32 %v338, %v332
      %v340 = vrot.slane %v339, 4
      %v341 = vadd.f32 %v339, %v340
      %v342 = vrot.slane %v341, 2
      %v343 = vadd.f32 %v341, %v342
      %v344 = vrot.slane %v343, 1
      %v345 = vadd.f32 %v343, %v344
      %346 = vst [vmem:[%s214] sm:$0x1] %v345
      %347 = vst [vmem:[%s208] sm:$0xff] %v281
      %348 = vst [vmem:[%s208 + $0x8] sm:$0xff] %v284
      %349 = vst [vmem:[%s208 + $0x10] sm:$0xff] %v289
      %350 = vst [vmem:[%s208 + $0x18] sm:$0xff] %v292
      %351 = vst [vmem:[%s208 + $0x20] sm:$0xff] %v297
      %352 = vst [vmem:[%s208 + $0x28] sm:$0xff] %v300
      %353 = vst [vmem:[%s208 + $0x30] sm:$0xff] %v305
      %354 = vst [vmem:[%s208 + $0x38] sm:$0xff] %v308
      %p355 = scmp.lt.s32.totalorder %s16, 1
      %s356 = scalar_select %p355, %s16, 1
      %s357 = smul.addr %s356, 8
      %s358 = smul.addr %s357, 8
      %s359 = scalar_lea.vmem %s2, %s358
      %p360 = scmp.lt.s32.totalorder %s16, 1
      %s361 = scalar_select %p360, %s16, 1
      %s362 = scalar_lea.vmem %s3, %s361
      %p363 = scmp.lt.s32.totalorder %s16, 1
      %s364 = scalar_select %p363, %s16, 1
      %s365 = scalar_lea.vmem %s4, %s364
      // Predicated region
      $region29: #{res_unet_down_block_forward.5} parent=27 // pred_check
        %p366 = pneg %p81
      $region30: #{res_unet_down_block_forward.5} parent=27 // pred_check_branch
        %368 = sbr.rel (%p366) target = $region32
      $region31: #{res_unet_down_block_forward.5} parent=27 // pred_region
        _
      $region32: #{res_unet_down_block_forward.5} parent=27 // pred_fallthru
        _
      // Predicated region
      $region33: #{res_unet_down_block_forward.5} parent=27 // pred_check
        %p369 = pneg %p107
      $region34: #{res_unet_down_block_forward.5} parent=27 // pred_check_branch
        %371 = sbr.rel (%p369) target = $region36
      $region35: #{res_unet_down_block_forward.5} parent=27 // pred_region
        _
      $region36: #{res_unet_down_block_forward.5} parent=27 // pred_fallthru
        _
      // Predicated region
      $region37: #{res_unet_down_block_forward.5} parent=27 // pred_check
        %p372 = pneg %p133
      $region38: #{res_unet_down_block_forward.5} parent=27 // pred_check_branch
        %374 = sbr.rel (%p372) target = $region40
      $region39: #{res_unet_down_block_forward.5} parent=27 // pred_region
        _
      $region40: #{res_unet_down_block_forward.5} parent=27 // pred_fallthru
        _
    $region28: #{res_unet_down_block_forward.5} parent=5 // pred_fallthru
      _
    %p375 = scmp.le.s32.totalorder 2, %s11
    // Predicated region
    $region41: #{res_unet_down_block_forward.5} parent=5 // pred_check
      %p376 = pneg %p375
    $region42: #{res_unet_down_block_forward.5} parent=5 // pred_check_branch
      %378 = sbr.rel (%p376) target = $region44
    $region43: #{res_unet_down_block_forward.5} parent=5 // pred_region
      %s379 = ssub.s32 %s11, 2
      // Predicated region
      $region45: #{res_unet_down_block_forward.5} parent=43 // pred_check
        %p380 = pneg %p87
      $region46: #{res_unet_down_block_forward.5} parent=43 // pred_check_branch
        %382 = sbr.rel (%p380) target = $region48
      $region47: #{res_unet_down_block_forward.5} parent=43 // pred_region
        %p383 = scmp.lt.s32.totalorder %s17, 1
        %s384 = scalar_select %p383, %s17, 1
        %s385 = smul.addr %s384, 8
        %s386 = smul.addr %s385, 8
        %s387 = scalar_lea.vmem %s2, %s386
      $region48: #{res_unet_down_block_forward.5} parent=43 // pred_fallthru
        _
      // Predicated region
      $region49: #{res_unet_down_block_forward.5} parent=43 // pred_check
        %p388 = pneg %p113
      $region50: #{res_unet_down_block_forward.5} parent=43 // pred_check_branch
        %390 = sbr.rel (%p388) target = $region52
      $region51: #{res_unet_down_block_forward.5} parent=43 // pred_region
        %p391 = scmp.lt.s32.totalorder %s17, 1
        %s392 = scalar_select %p391, %s17, 1
        %s393 = scalar_lea.vmem %s3, %s392
      $region52: #{res_unet_down_block_forward.5} parent=43 // pred_fallthru
        _
      // Predicated region
      $region53: #{res_unet_down_block_forward.5} parent=43 // pred_check
        %p394 = pneg %p139
      $region54: #{res_unet_down_block_forward.5} parent=43 // pred_check_branch
        %396 = sbr.rel (%p394) target = $region56
      $region55: #{res_unet_down_block_forward.5} parent=43 // pred_region
        %p397 = scmp.lt.s32.totalorder %s17, 1
        %s398 = scalar_select %p397, %s17, 1
        %s399 = scalar_lea.vmem %s4, %s398
      $region56: #{res_unet_down_block_forward.5} parent=43 // pred_fallthru
        _
    $region44: #{res_unet_down_block_forward.5} parent=5 // pred_fallthru
      _
  $region6: #{res_unet_down_block_forward.5} parent=0 // loop_footer
    %s15 = sadd.s32 1, %s11
  $region7: #{res_unet_down_block_forward.5} parent=0 // loop_footer_branch
    %10 = sbr.rel target = $region3
  $region8: #{res_unet_down_block_forward.5} parent=0 // loop_exit
    _

// kernel: res_unet_down_block_forward.6
$region0: #{res_unet_down_block_forward.6}
  #allocation0 [shape = 'u32[]', space=smem, size = 0x4, offset = 0x4, fixed_abs, tag = 'smem constant byte address 0x4 - core index']
  #allocation1 [shape = 'u32[144,128]{1,0:T(1,128)}', space=vmem, size = 0x12000, scoped, tag = 'internal scratch']
  %s0 = inlined_call_operand.vmem [shape: f32[2,9,9,4], index: 0, kind: input, shape index: {}]
  %s1 = inlined_call_operand.vmem [shape: f32[2,9,9,4], index: 1, kind: input, shape index: {}]
  %s2 = inlined_call_operand.vmem [shape: f32[2,9,9,4], index: 2, kind: input, shape index: {}]
  %s3 = inlined_call_operand.vmem [shape: f32[2,9,9,4], index: 3, kind: input, shape index: {}]
  %s4 = inlined_call_operand.vmem [shape: f32[1,9,9,1], index: 4, kind: input, shape index: {}]
  %s5 = inlined_call_operand.vmem [shape: f32[1,9,9,1], index: 5, kind: input, shape index: {}]
  %s6 = inlined_call_operand.vmem [shape: f32[1,9,9,1], index: 6, kind: input, shape index: {}]
  %s7 = inlined_call_operand.vmem [shape: f32[1,9,9,1], index: 7, kind: input, shape index: {}]
  %s8 = inlined_call_operand.vmem [shape: f32[1,4], index: 8, kind: input, shape index: {}]
  %s9 = inlined_call_operand.vmem [shape: f32[1,4], index: 9, kind: input, shape index: {}]
  %s10 = inlined_call_operand.vmem [shape: bf16[9,4,128], index: 10, kind: input, shape index: {}]
  %s11 = inlined_call_operand.vmem [shape: f32[1,128], index: 11, kind: input, shape index: {}]
  %s12 = inlined_call_operand.vmem [shape: bf16[2,8,8,128], index: 12, kind: output, shape index: {0}]
  %s13 = inlined_call_operand.vmem [shape: f32[2,1,128], index: 13, kind: output, shape index: {1}]
  %s14 = inlined_call_operand.vmem [shape: f32[2,1,128], index: 14, kind: output, shape index: {2}]
  %15 = xla_tuple %s12, %s13, %s14
  %s16 = sld [smem:[#allocation0]]
  $region97: #{res_unet_down_block_forward.6} parent=0
    _
  %s18 = ssub.s32 1, %s16
  %s19 = scalar_select 0, %s18, %s16
  loop: start=0, step=1, limit=4
  $region2: #{res_unet_down_block_forward.6} parent=0 // loop_pre_header
    _
  $region3: #{res_unet_down_block_forward.6} parent=0 // loop_header
    %s21 = sphi 0, %s25
    %p22 = scmp.ge.s32.totalorder %s21, 4
    %s31 = sphi 0, %s33
    %s34 = sphi 0, %s31
    %s35 = sphi 0, %s34
    %s51 = sphi 0, %s35
    %s57 = sphi 0, %s59
    %s60 = sphi 0, %s57
    %s61 = sphi 0, %s60
    %s77 = sphi 0, %s61
    %s83 = sphi 0, %s85
    %s86 = sphi 0, %s83
    %s87 = sphi 0, %s86
    %s103 = sphi 0, %s87
    %s109 = sphi 0, %s111
    %s112 = sphi 0, %s109
    %s113 = sphi 0, %s112
    %s129 = sphi 0, %s113
    %s133 = sphi 0, %s133
    %s135 = sphi 0, %s133
    %s136 = sphi 0, %s135
    %s150 = sphi 0, %s136
    %s154 = sphi 0, %s154
    %s156 = sphi 0, %s154
    %s157 = sphi 0, %s156
    %s171 = sphi 0, %s157
    %s175 = sphi 0, %s175
    %s177 = sphi 0, %s175
    %s178 = sphi 0, %s177
    %s192 = sphi 0, %s178
    %s196 = sphi 0, %s196
    %s198 = sphi 0, %s196
    %s199 = sphi 0, %s198
    %s213 = sphi 0, %s199
    %s217 = sphi 0, %s217
    %s219 = sphi 0, %s217
    %s220 = sphi 0, %s219
    %s234 = sphi 0, %s220
    %s238 = sphi 0, %s238
    %s240 = sphi 0, %s238
    %s241 = sphi 0, %s240
    %s255 = sphi 0, %s241
    %s259 = sphi 0, %s259
    %s261 = sphi 0, %s259
    %s262 = sphi 0, %s261
    %s276 = sphi 0, %s262
    %s280 = sphi 0, %s280
    %s282 = sphi 0, %s280
    %s283 = sphi 0, %s282
    %s297 = sphi 0, %s283
    %s303 = sphi 0, %s305
    %s306 = sphi 0, %s303
    %s307 = sphi 0, %s306
    %s323 = sphi 0, %s307
    %s329 = sphi 0, %s331
    %s332 = sphi 0, %s329
    %s333 = sphi 0, %s332
    %s349 = sphi 0, %s333
    %s355 = sphi 0, %s357
    %s358 = sphi 0, %s355
    %s359 = sphi 0, %s358
    %s375 = sphi 0, %s359
  $region4: #{res_unet_down_block_forward.6} parent=0 // loop_header_branch
    %24 = sbr.rel (%p22) target = $region8
  $region5: #{res_unet_down_block_forward.6} parent=0 // loop_body
    %s26 = ssub.s32 %s21, 1
    %s27 = ssub.s32 %s21, 2
    %s28 = sadd.s32 %s21, 1
    %s29 = ssub.s32 %s21, %s28
    %p30 = scmp.eq.s32.totalorder %s29, 0
    %s32 = sadd.s32 %s31, 1
    %s33 = scalar_select %p30, %s31, %s32
    %p36 = pneg %p30
    %p37 = scmp.eq.s32.totalorder %s21, 1
    %p38 = por %p36, %p37
    %p39 = scmp.ne.s32.totalorder %s31, %s34
    %p40 = scmp.eq.s32.totalorder %s21, 0
    %p41 = por %p39, %p40
    %p42 = scmp.ne.s32.totalorder %s31, %s34
    %p43 = scmp.eq.s32.totalorder %s26, 1
    %p44 = por %p42, %p43
    %p45 = scmp.ne.s32.totalorder %s34, %s35
    %p46 = scmp.eq.s32.totalorder %s26, 0
    %p47 = por %p45, %p46
    %p48 = scmp.ne.s32.totalorder %s34, %s35
    %p49 = scmp.eq.s32.totalorder %s27, 1
    %p50 = por %p48, %p49
    %p52 = scmp.ne.s32.totalorder %s35, %s51
    %p53 = scmp.eq.s32.totalorder %s27, 0
    %p54 = por %p52, %p53
    %s55 = ssub.s32 %s21, %s28
    %p56 = scmp.eq.s32.totalorder %s55, 0
    %s58 = sadd.s32 %s57, 1
    %s59 = scalar_select %p56, %s57, %s58
    %p62 = pneg %p56
    %p63 = scmp.eq.s32.totalorder %s21, 1
    %p64 = por %p62, %p63
    %p65 = scmp.ne.s32.totalorder %s57, %s60
    %p66 = scmp.eq.s32.totalorder %s21, 0
    %p67 = por %p65, %p66
    %p68 = scmp.ne.s32.totalorder %s57, %s60
    %p69 = scmp.eq.s32.totalorder %s26, 1
    %p70 = por %p68, %p69
    %p71 = scmp.ne.s32.totalorder %s60, %s61
    %p72 = scmp.eq.s32.totalorder %s26, 0
    %p73 = por %p71, %p72
    %p74 = scmp.ne.s32.totalorder %s60, %s61
    %p75 = scmp.eq.s32.totalorder %s27, 1
    %p76 = por %p74, %p75
    %p78 = scmp.ne.s32.totalorder %s61, %s77
    %p79 = scmp.eq.s32.totalorder %s27, 0
    %p80 = por %p78, %p79
    %s81 = ssub.s32 %s21, %s28
    %p82 = scmp.eq.s32.totalorder %s81, 0
    %s84 = sadd.s32 %s83, 1
    %s85 = scalar_select %p82, %s83, %s84
    %p88 = pneg %p82
    %p89 = scmp.eq.s32.totalorder %s21, 1
    %p90 = por %p88, %p89
    %p91 = scmp.ne.s32.totalorder %s83, %s86
    %p92 = scmp.eq.s32.totalorder %s21, 0
    %p93 = por %p91, %p92
    %p94 = scmp.ne.s32.totalorder %s83, %s86
    %p95 = scmp.eq.s32.totalorder %s26, 1
    %p96 = por %p94, %p95
    %p97 = scmp.ne.s32.totalorder %s86, %s87
    %p98 = scmp.eq.s32.totalorder %s26, 0
    %p99 = por %p97, %p98
    %p100 = scmp.ne.s32.totalorder %s86, %s87
    %p101 = scmp.eq.s32.totalorder %s27, 1
    %p102 = por %p100, %p101
    %p104 = scmp.ne.s32.totalorder %s87, %s103
    %p105 = scmp.eq.s32.totalorder %s27, 0
    %p106 = por %p104, %p105
    %s107 = ssub.s32 %s21, %s28
    %p108 = scmp.eq.s32.totalorder %s107, 0
    %s110 = sadd.s32 %s109, 1
    %s111 = scalar_select %p108, %s109, %s110
    %p114 = pneg %p108
    %p115 = scmp.eq.s32.totalorder %s21, 1
    %p116 = por %p114, %p115
    %p117 = scmp.ne.s32.totalorder %s109, %s112
    %p118 = scmp.eq.s32.totalorder %s21, 0
    %p119 = por %p117, %p118
    %p120 = scmp.ne.s32.totalorder %s109, %s112
    %p121 = scmp.eq.s32.totalorder %s26, 1
    %p122 = por %p120, %p121
    %p123 = scmp.ne.s32.totalorder %s112, %s113
    %p124 = scmp.eq.s32.totalorder %s26, 0
    %p125 = por %p123, %p124
    %p126 = scmp.ne.s32.totalorder %s112, %s113
    %p127 = scmp.eq.s32.totalorder %s27, 1
    %p128 = por %p126, %p127
    %p130 = scmp.ne.s32.totalorder %s113, %s129
    %p131 = scmp.eq.s32.totalorder %s27, 0
    %p132 = por %p130, %p131
    %s134 = sadd.s32 %s133, 1
    %p137 = scmp.eq.s32.totalorder %s21, 1
    %p138 = scmp.ne.s32.totalorder %s133, %s135
    %p139 = scmp.eq.s32.totalorder %s21, 0
    %p140 = por %p138, %p139
    %p141 = scmp.ne.s32.totalorder %s133, %s135
    %p142 = scmp.eq.s32.totalorder %s26, 1
    %p143 = por %p141, %p142
    %p144 = scmp.ne.s32.totalorder %s135, %s136
    %p145 = scmp.eq.s32.totalorder %s26, 0
    %p146 = por %p144, %p145
    %p147 = scmp.ne.s32.totalorder %s135, %s136
    %p148 = scmp.eq.s32.totalorder %s27, 1
    %p149 = por %p147, %p148
    %p151 = scmp.ne.s32.totalorder %s136, %s150
    %p152 = scmp.eq.s32.totalorder %s27, 0
    %p153 = por %p151, %p152
    %s155 = sadd.s32 %s154, 1
    %p158 = scmp.eq.s32.totalorder %s21, 1
    %p159 = scmp.ne.s32.totalorder %s154, %s156
    %p160 = scmp.eq.s32.totalorder %s21, 0
    %p161 = por %p159, %p160
    %p162 = scmp.ne.s32.totalorder %s154, %s156
    %p163 = scmp.eq.s32.totalorder %s26, 1
    %p164 = por %p162, %p163
    %p165 = scmp.ne.s32.totalorder %s156, %s157
    %p166 = scmp.eq.s32.totalorder %s26, 0
    %p167 = por %p165, %p166
    %p168 = scmp.ne.s32.totalorder %s156, %s157
    %p169 = scmp.eq.s32.totalorder %s27, 1
    %p170 = por %p168, %p169
    %p172 = scmp.ne.s32.totalorder %s157, %s171
    %p173 = scmp.eq.s32.totalorder %s27, 0
    %p174 = por %p172, %p173
    %s176 = sadd.s32 %s175, 1
    %p179 = scmp.eq.s32.totalorder %s21, 1
    %p180 = scmp.ne.s32.totalorder %s175, %s177
    %p181 = scmp.eq.s32.totalorder %s21, 0
    %p182 = por %p180, %p181
    %p183 = scmp.ne.s32.totalorder %s175, %s177
    %p184 = scmp.eq.s32.totalorder %s26, 1
    %p185 = por %p183, %p184
    %p186 = scmp.ne.s32.totalorder %s177, %s178
    %p187 = scmp.eq.s32.totalorder %s26, 0
    %p188 = por %p186, %p187
    %p189 = scmp.ne.s32.totalorder %s177, %s178
    %p190 = scmp.eq.s32.totalorder %s27, 1
    %p191 = por %p189, %p190
    %p193 = scmp.ne.s32.totalorder %s178, %s192
    %p194 = scmp.eq.s32.totalorder %s27, 0
    %p195 = por %p193, %p194
    %s197 = sadd.s32 %s196, 1
    %p200 = scmp.eq.s32.totalorder %s21, 1
    %p201 = scmp.ne.s32.totalorder %s196, %s198
    %p202 = scmp.eq.s32.totalorder %s21, 0
    %p203 = por %p201, %p202
    %p204 = scmp.ne.s32.totalorder %s196, %s198
    %p205 = scmp.eq.s32.totalorder %s26, 1
    %p206 = por %p204, %p205
    %p207 = scmp.ne.s32.totalorder %s198, %s199
    %p208 = scmp.eq.s32.totalorder %s26, 0
    %p209 = por %p207, %p208
    %p210 = scmp.ne.s32.totalorder %s198, %s199
    %p211 = scmp.eq.s32.totalorder %s27, 1
    %p212 = por %p210, %p211
    %p214 = scmp.ne.s32.totalorder %s199, %s213
    %p215 = scmp.eq.s32.totalorder %s27, 0
    %p216 = por %p214, %p215
    %s218 = sadd.s32 %s217, 1
    %p221 = scmp.eq.s32.totalorder %s21, 1
    %p222 = scmp.ne.s32.totalorder %s217, %s219
    %p223 = scmp.eq.s32.totalorder %s21, 0
    %p224 = por %p222, %p223
    %p225 = scmp.ne.s32.totalorder %s217, %s219
    %p226 = scmp.eq.s32.totalorder %s26, 1
    %p227 = por %p225, %p226
    %p228 = scmp.ne.s32.totalorder %s219, %s220
    %p229 = scmp.eq.s32.totalorder %s26, 0
    %p230 = por %p228, %p229
    %p231 = scmp.ne.s32.totalorder %s219, %s220
    %p232 = scmp.eq.s32.totalorder %s27, 1
    %p233 = por %p231, %p232
    %p235 = scmp.ne.s32.totalorder %s220, %s234
    %p236 = scmp.eq.s32.totalorder %s27, 0
    %p237 = por %p235, %p236
    %s239 = sadd.s32 %s238, 1
    %p242 = scmp.eq.s32.totalorder %s21, 1
    %p243 = scmp.ne.s32.totalorder %s238, %s240
    %p244 = scmp.eq.s32.totalorder %s21, 0
    %p245 = por %p243, %p244
    %p246 = scmp.ne.s32.totalorder %s238, %s240
    %p247 = scmp.eq.s32.totalorder %s26, 1
    %p248 = por %p246, %p247
    %p249 = scmp.ne.s32.totalorder %s240, %s241
    %p250 = scmp.eq.s32.totalorder %s26, 0
    %p251 = por %p249, %p250
    %p252 = scmp.ne.s32.totalorder %s240, %s241
    %p253 = scmp.eq.s32.totalorder %s27, 1
    %p254 = por %p252, %p253
    %p256 = scmp.ne.s32.totalorder %s241, %s255
    %p257 = scmp.eq.s32.totalorder %s27, 0
    %p258 = por %p256, %p257
    %s260 = sadd.s32 %s259, 1
    %p263 = scmp.eq.s32.totalorder %s21, 1
    %p264 = scmp.ne.s32.totalorder %s259, %s261
    %p265 = scmp.eq.s32.totalorder %s21, 0
    %p266 = por %p264, %p265
    %p267 = scmp.ne.s32.totalorder %s259, %s261
    %p268 = scmp.eq.s32.totalorder %s26, 1
    %p269 = por %p267, %p268
    %p270 = scmp.ne.s32.totalorder %s261, %s262
    %p271 = scmp.eq.s32.totalorder %s26, 0
    %p272 = por %p270, %p271
    %p273 = scmp.ne.s32.totalorder %s261, %s262
    %p274 = scmp.eq.s32.totalorder %s27, 1
    %p275 = por %p273, %p274
    %p277 = scmp.ne.s32.totalorder %s262, %s276
    %p278 = scmp.eq.s32.totalorder %s27, 0
    %p279 = por %p277, %p278
    %s281 = sadd.s32 %s280, 1
    %p284 = scmp.eq.s32.totalorder %s21, 1
    %p285 = scmp.ne.s32.totalorder %s280, %s282
    %p286 = scmp.eq.s32.totalorder %s21, 0
    %p287 = por %p285, %p286
    %p288 = scmp.ne.s32.totalorder %s280, %s282
    %p289 = scmp.eq.s32.totalorder %s26, 1
    %p290 = por %p288, %p289
    %p291 = scmp.ne.s32.totalorder %s282, %s283
    %p292 = scmp.eq.s32.totalorder %s26, 0
    %p293 = por %p291, %p292
    %p294 = scmp.ne.s32.totalorder %s282, %s283
    %p295 = scmp.eq.s32.totalorder %s27, 1
    %p296 = por %p294, %p295
    %p298 = scmp.ne.s32.totalorder %s283, %s297
    %p299 = scmp.eq.s32.totalorder %s27, 0
    %p300 = por %p298, %p299
    %s301 = ssub.s32 %s21, %s28
    %p302 = scmp.eq.s32.totalorder %s301, 0
    %s304 = sadd.s32 %s303, 1
    %s305 = scalar_select %p302, %s303, %s304
    %p308 = pneg %p302
    %p309 = scmp.eq.s32.totalorder %s21, 1
    %p310 = por %p308, %p309
    %p311 = scmp.ne.s32.totalorder %s303, %s306
    %p312 = scmp.eq.s32.totalorder %s21, 0
    %p313 = por %p311, %p312
    %p314 = scmp.ne.s32.totalorder %s303, %s306
    %p315 = scmp.eq.s32.totalorder %s26, 1
    %p316 = por %p314, %p315
    %p317 = scmp.ne.s32.totalorder %s306, %s307
    %p318 = scmp.eq.s32.totalorder %s26, 0
    %p319 = por %p317, %p318
    %p320 = scmp.ne.s32.totalorder %s306, %s307
    %p321 = scmp.eq.s32.totalorder %s27, 1
    %p322 = por %p320, %p321
    %p324 = scmp.ne.s32.totalorder %s307, %s323
    %p325 = scmp.eq.s32.totalorder %s27, 0
    %p326 = por %p324, %p325
    %s327 = ssub.s32 %s21, %s28
    %p328 = scmp.eq.s32.totalorder %s327, 0
    %s330 = sadd.s32 %s329, 1
    %s331 = scalar_select %p328, %s329, %s330
    %p334 = pneg %p328
    %p335 = scmp.eq.s32.totalorder %s21, 1
    %p336 = por %p334, %p335
    %p337 = scmp.ne.s32.totalorder %s329, %s332
    %p338 = scmp.eq.s32.totalorder %s21, 0
    %p339 = por %p337, %p338
    %p340 = scmp.ne.s32.totalorder %s329, %s332
    %p341 = scmp.eq.s32.totalorder %s26, 1
    %p342 = por %p340, %p341
    %p343 = scmp.ne.s32.totalorder %s332, %s333
    %p344 = scmp.eq.s32.totalorder %s26, 0
    %p345 = por %p343, %p344
    %p346 = scmp.ne.s32.totalorder %s332, %s333
    %p347 = scmp.eq.s32.totalorder %s27, 1
    %p348 = por %p346, %p347
    %p350 = scmp.ne.s32.totalorder %s333, %s349
    %p351 = scmp.eq.s32.totalorder %s27, 0
    %p352 = por %p350, %p351
    %s353 = ssub.s32 %s21, %s28
    %p354 = scmp.eq.s32.totalorder %s353, 0
    %s356 = sadd.s32 %s355, 1
    %s357 = scalar_select %p354, %s355, %s356
    %p360 = pneg %p354
    %p361 = scmp.eq.s32.totalorder %s21, 1
    %p362 = por %p360, %p361
    %p363 = scmp.ne.s32.totalorder %s355, %s358
    %p364 = scmp.eq.s32.totalorder %s21, 0
    %p365 = por %p363, %p364
    %p366 = scmp.ne.s32.totalorder %s355, %s358
    %p367 = scmp.eq.s32.totalorder %s26, 1
    %p368 = por %p366, %p367
    %p369 = scmp.ne.s32.totalorder %s358, %s359
    %p370 = scmp.eq.s32.totalorder %s26, 0
    %p371 = por %p369, %p370
    %p372 = scmp.ne.s32.totalorder %s358, %s359
    %p373 = scmp.eq.s32.totalorder %s27, 1
    %p374 = por %p372, %p373
    %p376 = scmp.ne.s32.totalorder %s359, %s375
    %p377 = scmp.eq.s32.totalorder %s27, 0
    %p378 = por %p376, %p377
    %p379 = scmp.le.s32.totalorder 1, %s21
    %p380 = scmp.lt.s32.totalorder %s21, 3
    %p381 = pnand %p379, %p380
    %p382 = pneg %p381
    // Predicated region
    $region9: #{res_unet_down_block_forward.6} parent=5 // pred_check
      _
    $region10: #{res_unet_down_block_forward.6} parent=5 // pred_check_branch
      %384 = sbr.rel (%p381) target = $region12
    $region11: #{res_unet_down_block_forward.6} parent=5 // pred_region
      %s385 = ssub.s32 %s21, 1
      // Predicated region
      $region13: #{res_unet_down_block_forward.6} parent=11 // pred_check
        %p386 = pneg %p146
      $region14: #{res_unet_down_block_forward.6} parent=11 // pred_check_branch
        %388 = sbr.rel (%p386) target = $region16
      $region15: #{res_unet_down_block_forward.6} parent=11 // pred_region
        _
      $region16: #{res_unet_down_block_forward.6} parent=11 // pred_fallthru
        _
      // Predicated region
      $region17: #{res_unet_down_block_forward.6} parent=11 // pred_check
        %p389 = pneg %p167
      $region18: #{res_unet_down_block_forward.6} parent=11 // pred_check_branch
        %391 = sbr.rel (%p389) target = $region20
      $region19: #{res_unet_down_block_forward.6} parent=11 // pred_region
        _
      $region20: #{res_unet_down_block_forward.6} parent=11 // pred_fallthru
        _
      // Predicated region
      $region21: #{res_unet_down_block_forward.6} parent=11 // pred_check
        %p392 = pneg %p188
      $region22: #{res_unet_down_block_forward.6} parent=11 // pred_check_branch
        %394 = sbr.rel (%p392) target = $region24
      $region23: #{res_unet_down_block_forward.6} parent=11 // pred_region
        _
      $region24: #{res_unet_down_block_forward.6} parent=11 // pred_fallthru
        _
      // Predicated region
      $region25: #{res_unet_down_block_forward.6} parent=11 // pred_check
        %p395 = pneg %p209
      $region26: #{res_unet_down_block_forward.6} parent=11 // pred_check_branch
        %397 = sbr.rel (%p395) target = $region28
      $region27: #{res_unet_down_block_forward.6} parent=11 // pred_region
        _
      $region28: #{res_unet_down_block_forward.6} parent=11 // pred_fallthru
        _
      // Predicated region
      $region29: #{res_unet_down_block_forward.6} parent=11 // pred_check
        %p398 = pneg %p230
      $region30: #{res_unet_down_block_forward.6} parent=11 // pred_check_branch
        %400 = sbr.rel (%p398) target = $region32
      $region31: #{res_unet_down_block_forward.6} parent=11 // pred_region
        _
      $region32: #{res_unet_down_block_forward.6} parent=11 // pred_fallthru
        _
      // Predicated region
      $region33: #{res_unet_down_block_forward.6} parent=11 // pred_check
        %p401 = pneg %p251
      $region34: #{res_unet_down_block_forward.6} parent=11 // pred_check_branch
        %403 = sbr.rel (%p401) target = $region36
      $region35: #{res_unet_down_block_forward.6} parent=11 // pred_region
        _
      $region36: #{res_unet_down_block_forward.6} parent=11 // pred_fallthru
        _
      // Predicated region
      $region37: #{res_unet_down_block_forward.6} parent=11 // pred_check
        %p404 = pneg %p272
      $region38: #{res_unet_down_block_forward.6} parent=11 // pred_check_branch
        %406 = sbr.rel (%p404) target = $region40
      $region39: #{res_unet_down_block_forward.6} parent=11 // pred_region
        _
      $region40: #{res_unet_down_block_forward.6} parent=11 // pred_fallthru
        _
      // Predicated region
      $region41: #{res_unet_down_block_forward.6} parent=11 // pred_check
        %p407 = pneg %p293
      $region42: #{res_unet_down_block_forward.6} parent=11 // pred_check_branch
        %409 = sbr.rel (%p407) target = $region44
      $region43: #{res_unet_down_block_forward.6} parent=11 // pred_region
        _
      $region44: #{res_unet_down_block_forward.6} parent=11 // pred_fallthru
        _
    $region12: #{res_unet_down_block_forward.6} parent=5 // pred_fallthru
      _
    %p410 = scmp.lt.s32.totalorder %s21, 2
    // Predicated region
    $region45: #{res_unet_down_block_forward.6} parent=5 // pred_check
      %p411 = pneg %p410
    $region46: #{res_unet_down_block_forward.6} parent=5 // pred_check_branch
      %413 = sbr.rel (%p411) target = $region48
    $region47: #{res_unet_down_block_forward.6} parent=5 // pred_region
      // Predicated region
      $region49: #{res_unet_down_block_forward.6} parent=47 // pred_check
        %p414 = pneg %p41
      $region50: #{res_unet_down_block_forward.6} parent=47 // pred_check_branch
        %416 = sbr.rel (%p414) target = $region52
      $region51: #{res_unet_down_block_forward.6} parent=47 // pred_region
        %p417 = scmp.lt.s32.totalorder %s21, 1
        %s418 = scalar_select %p417, %s21, 1
        %s419 = smul.addr %s418, 18
        %s420 = smul.addr %s419, 8
        %s421 = scalar_lea.vmem %s0, %s420
      $region52: #{res_unet_down_block_forward.6} parent=47 // pred_fallthru
        _
      // Predicated region
      $region53: #{res_unet_down_block_forward.6} parent=47 // pred_check
        %p422 = pneg %p67
      $region54: #{res_unet_down_block_forward.6} parent=47 // pred_check_branch
        %424 = sbr.rel (%p422) target = $region56
      $region55: #{res_unet_down_block_forward.6} parent=47 // pred_region
        %p425 = scmp.lt.s32.totalorder %s21, 1
        %s426 = scalar_select %p425, %s21, 1
        %s427 = smul.addr %s426, 18
        %s428 = smul.addr %s427, 8
        %s429 = scalar_lea.vmem %s1, %s428
      $region56: #{res_unet_down_block_forward.6} parent=47 // pred_fallthru
        _
      // Predicated region
      $region57: #{res_unet_down_block_forward.6} parent=47 // pred_check
        %p430 = pneg %p93
      $region58: #{res_unet_down_block_forward.6} parent=47 // pred_check_branch
        %432 = sbr.rel (%p430) target = $region60
      $region59: #{res_unet_down_block_forward.6} parent=47 // pred_region
        %p433 = scmp.lt.s32.totalorder %s21, 1
        %s434 = scalar_select %p433, %s21, 1
        %s435 = smul.addr %s434, 18
        %s436 = smul.addr %s435, 8
        %s437 = scalar_lea.vmem %s2, %s436
      $region60: #{res_unet_down_block_forward.6} parent=47 // pred_fallthru
        _
      // Predicated region
      $region61: #{res_unet_down_block_forward.6} parent=47 // pred_check
        %p438 = pneg %p119
      $region62: #{res_unet_down_block_forward.6} parent=47 // pred_check_branch
        %440 = sbr.rel (%p438) target = $region64
      $region63: #{res_unet_down_block_forward.6} parent=47 // pred_region
        %p441 = scmp.lt.s32.totalorder %s21, 1
        %s442 = scalar_select %p441, %s21, 1
        %s443 = smul.addr %s442, 18
        %s444 = smul.addr %s443, 8
        %s445 = scalar_lea.vmem %s3, %s444
      $region64: #{res_unet_down_block_forward.6} parent=47 // pred_fallthru
        _
    $region48: #{res_unet_down_block_forward.6} parent=5 // pred_fallthru
      _
    %p446 = scmp.le.s32.totalorder 1, %s21
    %p447 = scmp.lt.s32.totalorder %s21, 3
    %p448 = pnand %p446, %p447
    %p449 = pneg %p448
    // Predicated region
    $region65: #{res_unet_down_block_forward.6} parent=5 // pred_check
      _
    $region66: #{res_unet_down_block_forward.6} parent=5 // pred_check_branch
      %451 = sbr.rel (%p448) target = $region68
    $region67: #{res_unet_down_block_forward.6} parent=5 // pred_region
      %s452 = ssub.s32 %s21, 1
      %p453 = scmp.lt.s32.totalorder %s26, 1
      %s454 = scalar_select %p453, %s26, 1
      %s455 = smul.addr %s454, 18
      %s456 = smul.addr %s455, 8
      %s457 = scalar_lea.vmem %s0, %s456
      %p458 = pneg %p47
      %p459 = pneg %p44
      %p460 = scmp.lt.s32.totalorder %s26, 1
      %s461 = scalar_select %p460, %s26, 1
      %s462 = smul.addr %s461, 18
      %s463 = smul.addr %s462, 8
      %s464 = scalar_lea.vmem %s1, %s463
      %p465 = pneg %p73
      %p466 = pneg %p70
      %p467 = scmp.lt.s32.totalorder %s26, 1
      %s468 = scalar_select %p467, %s26, 1
      %s469 = smul.addr %s468, 18
      %s470 = smul.addr %s469, 8
      %s471 = scalar_lea.vmem %s2, %s470
      %p472 = pneg %p99
      %p473 = pneg %p96
      %p474 = scmp.lt.s32.totalorder %s26, 1
      %s475 = scalar_select %p474, %s26, 1
      %s476 = smul.addr %s475, 18
      %s477 = smul.addr %s476, 8
      %s478 = scalar_lea.vmem %s3, %s477
      %p479 = pneg %p125
      %p480 = pneg %p122
      %p481 = pneg %p146
      %p482 = pneg %p143
      %p483 = pneg %p167
      %p484 = pneg %p164
      %p485 = pneg %p188
      %p486 = pneg %p185
      %p487 = pneg %p209
      %p488 = pneg %p206
      %p489 = pneg %p230
      %p490 = pneg %p227
      %p491 = pneg %p251
      %p492 = pneg %p248
      %p493 = pneg %p272
      %p494 = pneg %p269
      %p495 = pneg %p293
      %p496 = pneg %p290
      %p497 = pneg %p319
      %p498 = pneg %p316
      %p499 = scmp.lt.s32.totalorder %s26, 1
      %s500 = scalar_select %p499, %s26, 1
      %s501 = smul.addr %s500, 8
      %s502 = smul.addr %s501, 4
      %s503 = scalar_lea.vmem %s12, %s502
      %p504 = pneg %p345
      %p505 = pneg %p342
      %p506 = scmp.lt.s32.totalorder %s26, 1
      %s507 = scalar_select %p506, %s26, 1
      %s508 = scalar_lea.vmem %s13, %s507
      %p509 = pneg %p371
      %p510 = pneg %p368
      %p511 = scmp.lt.s32.totalorder %s26, 1
      %s512 = scalar_select %p511, %s26, 1
      %s513 = scalar_lea.vmem %s14, %s512
      %p514 = scmp.lt.s32.totalorder %s26, 1
      %s515 = scalar_select %p514, %s26, 1
      %s516 = smul.addr %s515, 18
      %s517 = smul.addr %s516, 8
      %s518 = scalar_lea.vmem %s0, %s517
      %p519 = scmp.lt.s32.totalorder %s26, 1
      %s520 = scalar_select %p519, %s26, 1
      %s521 = smul.addr %s520, 18
      %s522 = smul.addr %s521, 8
      %s523 = scalar_lea.vmem %s1, %s522
      %p524 = scmp.lt.s32.totalorder %s26, 1
      %s525 = scalar_select %p524, %s26, 1
      %s526 = smul.addr %s525, 18
      %s527 = smul.addr %s526, 8
      %s528 = scalar_lea.vmem %s2, %s527
      %p529 = scmp.lt.s32.totalorder %s26, 1
      %s530 = scalar_select %p529, %s26, 1
      %s531 = smul.addr %s530, 18
      %s532 = smul.addr %s531, 8
      %s533 = scalar_lea.vmem %s3, %s532
      %p534 = scmp.lt.s32.totalorder %s26, 1
      %s535 = scalar_select %p534, %s26, 1
      %s536 = smul.addr %s535, 8
      %s537 = smul.addr %s536, 4
      %s538 = scalar_lea.vmem %s12, %s537
      %p539 = scmp.lt.s32.totalorder %s26, 1
      %s540 = scalar_select %p539, %s26, 1
      %s541 = scalar_lea.vmem %s13, %s540
      %p542 = scmp.lt.s32.totalorder %s26, 1
      %s543 = scalar_select %p542, %s26, 1
      %s544 = scalar_lea.vmem %s14, %s543
      %v546 = vld [vmem:[%s8] sm:$0x1]
      %v547 = vld [vmem:[%s9] sm:$0x1]
      %v548 = vld [vmem:[%s518] sm:$0xff]
      %v549 = vld [vmem:[%s518 + $0x10] sm:$0xff]
      %v550 = vld [vmem:[%s518 + $0x20] sm:$0xff]
      %v551 = vld [vmem:[%s518 + $0x30] sm:$0xff]
      %v552 = vld [vmem:[%s518 + $0x40] sm:$0xff]
      %v553 = vld [vmem:[%s518 + $0x50] sm:$0xff]
      %v554 = vld [vmem:[%s518 + $0x60] sm:$0xff]
      %v555 = vld [vmem:[%s518 + $0x70] sm:$0xff]
      %v556 = vld [vmem:[%s4] sm:$0xff]
      %v557 = vld [vmem:[%s4 + $0x10] sm:$0xff]
      %v558 = vld [vmem:[%s4 + $0x20] sm:$0xff]
      %v559 = vld [vmem:[%s4 + $0x30] sm:$0xff]
      %v560 = vld [vmem:[%s4 + $0x40] sm:$0xff]
      %v561 = vld [vmem:[%s4 + $0x50] sm:$0xff]
      %v562 = vld [vmem:[%s4 + $0x60] sm:$0xff]
      %v563 = vld [vmem:[%s4 + $0x70] sm:$0xff]
      %v565 = vlaneseq
      %v566 = vshrl.u32 %v565, 7
      %v567 = vsub.s32 0, %v566
      %v568 = vrot.slane %v546, %v567
      %v570 = vmul.f32 %v548, %v568
      %v571 = vmul.f32 %v549, %v568
      %v572 = vmul.f32 %v550, %v568
      %v573 = vmul.f32 %v551, %v568
      %v574 = vmul.f32 %v552, %v568
      %v575 = vmul.f32 %v553, %v568
      %v576 = vmul.f32 %v554, %v568
      %v577 = vmul.f32 %v555, %v568
      %v579 = vlaneseq
      %v580 = vshrl.u32 %v579, 7
      %v581 = vsub.s32 0, %v580
      %v582 = vrot.slane %v547, %v581
      %v584 = vadd.f32 %v570, %v582
      %v585 = vadd.f32 %v571, %v582
      %v586 = vadd.f32 %v572, %v582
      %v587 = vadd.f32 %v573, %v582
      %v588 = vadd.f32 %v574, %v582
      %v589 = vadd.f32 %v575, %v582
      %v590 = vadd.f32 %v576, %v582
      %v591 = vadd.f32 %v577, %v582
      %v592 = vmax.f32 %v584, 0.0
      %v593 = vmax.f32 %v585, 0.0
      %v594 = vmax.f32 %v586, 0.0
      %v595 = vmax.f32 %v587, 0.0
      %v596 = vmax.f32 %v588, 0.0
      %v597 = vmax.f32 %v589, 0.0
      %v598 = vmax.f32 %v590, 0.0
      %v599 = vmax.f32 %v591, 0.0
      %601 = vset.pattern.permute.xlu0 0
      %602 = vperm.xlu0 %601, %v556
      %v603 = vpop.permute.xlu0 %602
      %606 = vset.pattern.permute.xlu0 0
      %607 = vperm.xlu0 %606, %v557
      %v608 = vpop.permute.xlu0 %607
      %611 = vset.pattern.permute.xlu0 0
      %612 = vperm.xlu0 %611, %v558
      %v613 = vpop.permute.xlu0 %612
      %616 = vset.pattern.permute.xlu0 0
      %617 = vperm.xlu0 %616, %v559
      %v618 = vpop.permute.xlu0 %617
      %621 = vset.pattern.permute.xlu0 0
      %622 = vperm.xlu0 %621, %v560
      %v623 = vpop.permute.xlu0 %622
      %626 = vset.pattern.permute.xlu0 0
      %627 = vperm.xlu0 %626, %v561
      %v628 = vpop.permute.xlu0 %627
      %631 = vset.pattern.permute.xlu0 0
      %632 = vperm.xlu0 %631, %v562
      %v633 = vpop.permute.xlu0 %632
      %636 = vset.pattern.permute.xlu0 0
      %637 = vperm.xlu0 %636, %v563
      %v638 = vpop.permute.xlu0 %637
      %v640 = vmul.f32 %v592, %v603
      %v641 = vmul.f32 %v593, %v608
      %v642 = vmul.f32 %v594, %v613
      %v643 = vmul.f32 %v595, %v618
      %v644 = vmul.f32 %v596, %v623
      %v645 = vmul.f32 %v597, %v628
      %v646 = vmul.f32 %v598, %v633
      %v647 = vmul.f32 %v599, %v638
      %v648 = vpack.c.bf16 %v641, %v640
      %v649 = vpack.c.bf16 %v643, %v642
      %v650 = vpack.c.bf16 %v645, %v644
      %v651 = vpack.c.bf16 %v647, %v646
      %v652 = vld [vmem:[%s10] sm:$0x3]
      %v653 = vld [vmem:[%s523] sm:$0xff]
      %v654 = vld [vmem:[%s523 + $0x10] sm:$0xff]
      %v655 = vld [vmem:[%s523 + $0x20] sm:$0xff]
      %v656 = vld [vmem:[%s523 + $0x30] sm:$0xff]
      %v657 = vld [vmem:[%s523 + $0x40] sm:$0xff]
      %v658 = vld [vmem:[%s523 + $0x50] sm:$0xff]
      %v659 = vld [vmem:[%s523 + $0x60] sm:$0xff]
      %v660 = vld [vmem:[%s523 + $0x70] sm:$0xff]
      %v661 = vld [vmem:[%s5] sm:$0xff]
      %v662 = vld [vmem:[%s5 + $0x10] sm:$0xff]
      %v663 = vld [vmem:[%s5 + $0x20] sm:$0xff]
      %v664 = vld [vmem:[%s5 + $0x30] sm:$0xff]
      %v665 = vld [vmem:[%s5 + $0x40] sm:$0xff]
      %v666 = vld [vmem:[%s5 + $0x50] sm:$0xff]
      %v667 = vld [vmem:[%s5 + $0x60] sm:$0xff]
      %v668 = vld [vmem:[%s5 + $0x70] sm:$0xff]
      %v669 = vmul.f32 %v653, %v568
      %v670 = vmul.f32 %v654, %v568
      %v671 = vmul.f32 %v655, %v568
      %v672 = vmul.f32 %v656, %v568
      %v673 = vmul.f32 %v657, %v568
      %v674 = vmul.f32 %v658, %v568
      %v675 = vmul.f32 %v659, %v568
      %v676 = vmul.f32 %v660, %v568
      %v677 = vadd.f32 %v669, %v582
      %v678 = vadd.f32 %v670, %v582
      %v679 = vadd.f32 %v671, %v582
      %v680 = vadd.f32 %v672, %v582
      %v681 = vadd.f32 %v673, %v582
      %v682 = vadd.f32 %v674, %v582
      %v683 = vadd.f32 %v675, %v582
      %v684 = vadd.f32 %v676, %v582
      %v685 = vmax.f32 %v677, 0.0
      %v686 = vmax.f32 %v678, 0.0
      %v687 = vmax.f32 %v679, 0.0
      %v688 = vmax.f32 %v680, 0.0
      %v689 = vmax.f32 %v681, 0.0
      %v690 = vmax.f32 %v682, 0.0
      %v691 = vmax.f32 %v683, 0.0
      %v692 = vmax.f32 %v684, 0.0
      %694 = vset.pattern.permute.xlu0 0
      %695 = vperm.xlu0 %694, %v661
      %v696 = vpop.permute.xlu0 %695
      %699 = vset.pattern.permute.xlu0 0
      %700 = vperm.xlu0 %699, %v662
      %v701 = vpop.permute.xlu0 %700
      %704 = vset.pattern.permute.xlu0 0
      %705 = vperm.xlu0 %704, %v663
      %v706 = vpop.permute.xlu0 %705
      %709 = vset.pattern.permute.xlu0 0
      %710 = vperm.xlu0 %709, %v664
      %v711 = vpop.permute.xlu0 %710
      %714 = vset.pattern.permute.xlu0 0
      %715 = vperm.xlu0 %714, %v665
      %v716 = vpop.permute.xlu0 %715
      %719 = vset.pattern.permute.xlu0 0
      %720 = vperm.xlu0 %719, %v666
      %v721 = vpop.permute.xlu0 %720
      %724 = vset.pattern.permute.xlu0 0
      %725 = vperm.xlu0 %724, %v667
      %v726 = vpop.permute.xlu0 %725
      %729 = vset.pattern.permute.xlu0 0
      %730 = vperm.xlu0 %729, %v668
      %v731 = vpop.permute.xlu0 %730
      %v733 = vmul.f32 %v685, %v696
      %v734 = vmul.f32 %v686, %v701
      %v735 = vmul.f32 %v687, %v706
      %v736 = vmul.f32 %v688, %v711
      %v737 = vmul.f32 %v689, %v716
      %v738 = vmul.f32 %v690, %v721
      %v739 = vmul.f32 %v691, %v726
      %v740 = vmul.f32 %v692, %v731
      %v741 = vpack.c.bf16 %v734, %v733
      %v742 = vpack.c.bf16 %v736, %v735
      %v743 = vpack.c.bf16 %v738, %v737
      %v744 = vpack.c.bf16 %v740, %v739
      %s745 = scalar_lea.vmem %s10, 2
      %v746 = vld [vmem:[%s745] sm:$0x3]
      %vm747 = vcmask 31744
      %v749 = vsel %vm747, %v741, 0
      %v752 = vsel %vm747, %v742, 0
      %v755 = vsel %vm747, %v743, 0
      %v758 = vsel %vm747, %v744, 0
      %vm760 = vcmask 1041408
      %v762 = vsel %vm760, %v746, 0
      %764 = vmatprep.subr.bf16.mxu0 0
      %765 = vmatpush1.bf16.msra.mxu0 0
      %766 = vmatprep.subr.bf16.mxu0 0
      %767 = vmatpush1.bf16.msra.mxu0 0
      %768 = vmatprep.subr.bf16.mxu0 0
      %769 = vmatpush1.bf16.msra.mxu0 0
      %770 = vmatprep.subr.bf16.mxu0 0
      %771 = vmatpush1.bf16.msra.mxu0 0
      %772 = vmatprep.subr.bf16.mxu0 0
      %773 = vmatpush1.bf16.msra.mxu0 0
      %774 = vmatprep.subr.bf16.mxu0 0
      %775 = vmatpush1.bf16.msra.mxu0 0
      %776 = vmatprep.subr.bf16.mxu0 0
      %777 = vmatpush1.bf16.msra.mxu0 0
      %778 = vmatprep.subr.bf16.mxu0 0
      %779 = vmatpush1.bf16.msra.mxu0 %v762
      %780 = vmatprep.subr.bf16.mxu0 0
      %781 = vmatpush2.bf16.msra.mxu0 0
      %782 = vmatprep.subr.bf16.mxu0 0
      %783 = vmatpush2.bf16.msra.mxu0 0
      %784 = vmatprep.subr.bf16.mxu0 0
      %785 = vmatpush2.bf16.msra.mxu0 0
      %786 = vmatprep.subr.bf16.mxu0 0
      %787 = vmatpush2.bf16.msra.mxu0 0
      %788 = vmatprep.subr.bf16.mxu0 0
      %789 = vmatpush2.bf16.msra.mxu0 0
      %790 = vmatprep.subr.bf16.mxu0 0
      %791 = vmatpush2.bf16.msra.mxu0 0
      %792 = vmatprep.subr.bf16.mxu0 0
      %793 = vmatpush2.bf16.msra.mxu0 0
      %794 = vmatprep.subr.bf16.mxu0 0
      %795 = vmatpush2.bf16.msra.mxu0 0
      %796 = vmatprep.mubr.bf16.mxu0 0
      %797 = vmatmul.mubr.bf16.gmra.mxu0 %v749
      %v798 = vpop.f32.mrf.mxu0
      %v799 = vadd.f32 0.0, %v798
      %v800 = vpop.f32.mrf.mxu0
      %v801 = vpop.f32.mrf.mxu0
      %v802 = vadd.f32 0.0, %v801
      %v803 = vpop.f32.mrf.mxu0
      %804 = vmatprep.mubr.bf16.mxu0 0
      %805 = vmatmul.mubr.bf16.gmra.mxu0 %v752
      %v806 = vpop.f32.mrf.mxu0
      %v807 = vadd.f32 0.0, %v806
      %v808 = vpop.f32.mrf.mxu0
      %v809 = vpop.f32.mrf.mxu0
      %v810 = vadd.f32 0.0, %v809
      %v811 = vpop.f32.mrf.mxu0
      %812 = vmatprep.mubr.bf16.mxu0 0
      %813 = vmatmul.mubr.bf16.gmra.mxu0 %v755
      %v814 = vpop.f32.mrf.mxu0
      %v815 = vadd.f32 0.0, %v814
      %v816 = vpop.f32.mrf.mxu0
      %v817 = vpop.f32.mrf.mxu0
      %v818 = vadd.f32 0.0, %v817
      %v819 = vpop.f32.mrf.mxu0
      %820 = vmatprep.mubr.bf16.mxu0 0
      %821 = vmatmul.mubr.bf16.gmra.mxu0 %v758
      %v822 = vpop.f32.mrf.mxu0
      %v823 = vadd.f32 0.0, %v822
      %v824 = vpop.f32.mrf.mxu0
      %v825 = vpop.f32.mrf.mxu0
      %v826 = vadd.f32 0.0, %v825
      %v827 = vpop.f32.mrf.mxu0
      %828 = vdwg.mxu0
      %v830 = vsel %vm747, %v648, 0
      %v833 = vsel %vm747, %v649, 0
      %v836 = vsel %vm747, %v650, 0
      %v839 = vsel %vm747, %v651, 0
      %v842 = vsel %vm760, %v652, 0
      %844 = vmatprep.subr.bf16.mxu0 0
      %845 = vmatpush1.bf16.msra.mxu0 0
      %846 = vmatprep.subr.bf16.mxu0 0
      %847 = vmatpush1.bf16.msra.mxu0 0
      %848 = vmatprep.subr.bf16.mxu0 0
      %849 = vmatpush1.bf16.msra.mxu0 0
      %850 = vmatprep.subr.bf16.mxu0 0
      %851 = vmatpush1.bf16.msra.mxu0 0
      %852 = vmatprep.subr.bf16.mxu0 0
      %853 = vmatpush1.bf16.msra.mxu0 0
      %854 = vmatprep.subr.bf16.mxu0 0
      %855 = vmatpush1.bf16.msra.mxu0 0
      %856 = vmatprep.subr.bf16.mxu0 0
      %857 = vmatpush1.bf16.msra.mxu0 0
      %858 = vmatprep.subr.bf16.mxu0 0
      %859 = vmatpush1.bf16.msra.mxu0 %v842
      %860 = vmatprep.subr.bf16.mxu0 0
      %861 = vmatpush2.bf16.msra.mxu0 0
      %862 = vmatprep.subr.bf16.mxu0 0
      %863 = vmatpush2.bf16.msra.mxu0 0
      %864 = vmatprep.subr.bf16.mxu0 0
      %865 = vmatpush2.bf16.msra.mxu0 0
      %866 = vmatprep.subr.bf16.mxu0 0
      %867 = vmatpush2.bf16.msra.mxu0 0
      %868 = vmatprep.subr.bf16.mxu0 0
      %869 = vmatpush2.bf16.msra.mxu0 0
      %870 = vmatprep.subr.bf16.mxu0 0
      %871 = vmatpush2.bf16.msra.mxu0 0
      %872 = vmatprep.subr.bf16.mxu0 0
      %873 = vmatpush2.bf16.msra.mxu0 0
      %874 = vmatprep.subr.bf16.mxu0 0
      %875 = vmatpush2.bf16.msra.mxu0 0
      %876 = vmatprep.mubr.bf16.mxu0 0
      %877 = vmatmul.mubr.bf16.gmra.mxu0 %v830
      %v878 = vpop.f32.mrf.mxu0
      %v879 = vadd.f32 %v799, %v878
      %v880 = vpop.f32.mrf.mxu0
      %v881 = vpop.f32.mrf.mxu0
      %v882 = vadd.f32 %v802, %v881
      %v883 = vpop.f32.mrf.mxu0
      %884 = vmatprep.mubr.bf16.mxu0 0
      %885 = vmatmul.mubr.bf16.gmra.mxu0 %v833
      %v886 = vpop.f32.mrf.mxu0
      %v887 = vadd.f32 %v807, %v886
      %v888 = vpop.f32.mrf.mxu0
      %v889 = vpop.f32.mrf.mxu0
      %v890 = vadd.f32 %v810, %v889
      %v891 = vpop.f32.mrf.mxu0
      %892 = vmatprep.mubr.bf16.mxu0 0
      %893 = vmatmul.mubr.bf16.gmra.mxu0 %v836
      %v894 = vpop.f32.mrf.mxu0
      %v895 = vadd.f32 %v815, %v894
      %v896 = vpop.f32.mrf.mxu0
      %v897 = vpop.f32.mrf.mxu0
      %v898 = vadd.f32 %v818, %v897
      %v899 = vpop.f32.mrf.mxu0
      %900 = vmatprep.mubr.bf16.mxu0 0
      %901 = vmatmul.mubr.bf16.gmra.mxu0 %v839
      %v902 = vpop.f32.mrf.mxu0
      %v903 = vadd.f32 %v823, %v902
      %v904 = vpop.f32.mrf.mxu0
      %v905 = vpop.f32.mrf.mxu0
      %v906 = vadd.f32 %v826, %v905
      %v907 = vpop.f32.mrf.mxu0
      %908 = vdwg.mxu0
      %v909 = vld [vmem:[%s518 + $0x1] sm:$0xff]
      %v910 = vld [vmem:[%s518 + $0x11] sm:$0xff]
      %v911 = vld [vmem:[%s518 + $0x21] sm:$0xff]
      %v912 = vld [vmem:[%s518 + $0x31] sm:$0xff]
      %v913 = vld [vmem:[%s518 + $0x41] sm:$0xff]
      %v914 = vld [vmem:[%s518 + $0x51] sm:$0xff]
      %v915 = vld [vmem:[%s518 + $0x61] sm:$0xff]
      %v916 = vld [vmem:[%s518 + $0x71] sm:$0xff]
      %v917 = vld [vmem:[%s4 + $0x1] sm:$0xff]
      %v918 = vld [vmem:[%s4 + $0x11] sm:$0xff]
      %v919 = vld [vmem:[%s4 + $0x21] sm:$0xff]
      %v920 = vld [vmem:[%s4 + $0x31] sm:$0xff]
      %v921 = vld [vmem:[%s4 + $0x41] sm:$0xff]
      %v922 = vld [vmem:[%s4 + $0x51] sm:$0xff]
      %v923 = vld [vmem:[%s4 + $0x61] sm:$0xff]
      %v924 = vld [vmem:[%s4 + $0x71] sm:$0xff]
      %v925 = vmul.f32 %v909, %v568
      %v926 = vmul.f32 %v910, %v568
      %v927 = vmul.f32 %v911, %v568
      %v928 = vmul.f32 %v912, %v568
      %v929 = vmul.f32 %v913, %v568
      %v930 = vmul.f32 %v914, %v568
      %v931 = vmul.f32 %v915, %v568
      %v932 = vmul.f32 %v916, %v568
      %v933 = vadd.f32 %v925, %v582
      %v934 = vadd.f32 %v926, %v582
      %v935 = vadd.f32 %v927, %v582
      %v936 = vadd.f32 %v928, %v582
      %v937 = vadd.f32 %v929, %v582
      %v938 = vadd.f32 %v930, %v582
      %v939 = vadd.f32 %v931, %v582
      %v940 = vadd.f32 %v932, %v582
      %v941 = vmax.f32 %v933, 0.0
      %v942 = vmax.f32 %v934, 0.0
      %v943 = vmax.f32 %v935, 0.0
      %v944 = vmax.f32 %v936, 0.0
      %v945 = vmax.f32 %v937, 0.0
      %v946 = vmax.f32 %v938, 0.0
      %v947 = vmax.f32 %v939, 0.0
      %v948 = vmax.f32 %v940, 0.0
      %950 = vset.pattern.permute.xlu0 0
      %951 = vperm.xlu0 %950, %v917
      %v952 = vpop.permute.xlu0 %951
      %955 = vset.pattern.permute.xlu0 0
      %956 = vperm.xlu0 %955, %v918
      %v957 = vpop.permute.xlu0 %956
      %960 = vset.pattern.permute.xlu0 0
      %961 = vperm.xlu0 %960, %v919
      %v962 = vpop.permute.xlu0 %961
      %965 = vset.pattern.permute.xlu0 0
      %966 = vperm.xlu0 %965, %v920
      %v967 = vpop.permute.xlu0 %966
      %970 = vset.pattern.permute.xlu0 0
      %971 = vperm.xlu0 %970, %v921
      %v972 = vpop.permute.xlu0 %971
      %975 = vset.pattern.permute.xlu0 0
      %976 = vperm.xlu0 %975, %v922
      %v977 = vpop.permute.xlu0 %976
      %980 = vset.pattern.permute.xlu0 0
      %981 = vperm.xlu0 %980, %v923
      %v982 = vpop.permute.xlu0 %981
      %985 = vset.pattern.permute.xlu0 0
      %986 = vperm.xlu0 %985, %v924
      %v987 = vpop.permute.xlu0 %986
      %v989 = vmul.f32 %v941, %v952
      %v990 = vmul.f32 %v942, %v957
      %v991 = vmul.f32 %v943, %v962
      %v992 = vmul.f32 %v944, %v967
      %v993 = vmul.f32 %v945, %v972
      %v994 = vmul.f32 %v946, %v977
      %v995 = vmul.f32 %v947, %v982
      %v996 = vmul.f32 %v948, %v987
      %v997 = vpack.c.bf16 %v990, %v989
      %v998 = vpack.c.bf16 %v992, %v991
      %v999 = vpack.c.bf16 %v994, %v993
      %v1000 = vpack.c.bf16 %v996, %v995
      %s1001 = scalar_lea.vmem %s10, 4
      %v1002 = vld [vmem:[%s1001] sm:$0x3]
      %v1004 = vsel %vm747, %v997, 0
      %v1007 = vsel %vm747, %v998, 0
      %v1010 = vsel %vm747, %v999, 0
      %v1013 = vsel %vm747, %v1000, 0
      %v1016 = vsel %vm760, %v1002, 0
      %1018 = vmatprep.subr.bf16.mxu0 0
      %1019 = vmatpush1.bf16.msra.mxu0 0
      %1020 = vmatprep.subr.bf16.mxu0 0
      %1021 = vmatpush1.bf16.msra.mxu0 0
      %1022 = vmatprep.subr.bf16.mxu0 0
      %1023 = vmatpush1.bf16.msra.mxu0 0
      %1024 = vmatprep.subr.bf16.mxu0 0
      %1025 = vmatpush1.bf16.msra.mxu0 0
      %1026 = vmatprep.subr.bf16.mxu0 0
      %1027 = vmatpush1.bf16.msra.mxu0 0
      %1028 = vmatprep.subr.bf16.mxu0 0
      %1029 = vmatpush1.bf16.msra.mxu0 0
      %1030 = vmatprep.subr.bf16.mxu0 0
      %1031 = vmatpush1.bf16.msra.mxu0 0
      %1032 = vmatprep.subr.bf16.mxu0 0
      %1033 = vmatpush1.bf16.msra.mxu0 %v1016
      %1034 = vmatprep.subr.bf16.mxu0 0
      %1035 = vmatpush2.bf16.msra.mxu0 0
      %1036 = vmatprep.subr.bf16.mxu0 0
      %1037 = vmatpush2.bf16.msra.mxu0 0
      %1038 = vmatprep.subr.bf16.mxu0 0
      %1039 = vmatpush2.bf16.msra.mxu0 0
      %1040 = vmatprep.subr.bf16.mxu0 0
      %1041 = vmatpush2.bf16.msra.mxu0 0
      %1042 = vmatprep.subr.bf16.mxu0 0
      %1043 = vmatpush2.bf16.msra.mxu0 0
      %1044 = vmatprep.subr.bf16.mxu0 0
      %1045 = vmatpush2.bf16.msra.mxu0 0
      %1046 = vmatprep.subr.bf16.mxu0 0
      %1047 = vmatpush2.bf16.msra.mxu0 0
      %1048 = vmatprep.subr.bf16.mxu0 0
      %1049 = vmatpush2.bf16.msra.mxu0 0
      %1050 = vmatprep.mubr.bf16.mxu0 0
      %1051 = vmatmul.mubr.bf16.gmra.mxu0 %v1004
      %v1052 = vpop.f32.mrf.mxu0
      %v1053 = vadd.f32 0.0, %v1052
      %v1054 = vpop.f32.mrf.mxu0
      %v1055 = vpop.f32.mrf.mxu0
      %v1056 = vadd.f32 0.0, %v1055
      %v1057 = vpop.f32.mrf.mxu0
      %1058 = vmatprep.mubr.bf16.mxu0 0
      %1059 = vmatmul.mubr.bf16.gmra.mxu0 %v1007
      %v1060 = vpop.f32.mrf.mxu0
      %v1061 = vadd.f32 0.0, %v1060
      %v1062 = vpop.f32.mrf.mxu0
      %v1063 = vpop.f32.mrf.mxu0
      %v1064 = vadd.f32 0.0, %v1063
      %v1065 = vpop.f32.mrf.mxu0
      %1066 = vmatprep.mubr.bf16.mxu0 0
      %1067 = vmatmul.mubr.bf16.gmra.mxu0 %v1010
      %v1068 = vpop.f32.mrf.mxu0
      %v1069 = vadd.f32 0.0, %v1068
      %v1070 = vpop.f32.mrf.mxu0
      %v1071 = vpop.f32.mrf.mxu0
      %v1072 = vadd.f32 0.0, %v1071
      %v1073 = vpop.f32.mrf.mxu0
      %1074 = vmatprep.mubr.bf16.mxu0 0
      %1075 = vmatmul.mubr.bf16.gmra.mxu0 %v1013
      %v1076 = vpop.f32.mrf.mxu0
      %v1077 = vadd.f32 0.0, %v1076
      %v1078 = vpop.f32.mrf.mxu0
      %v1079 = vpop.f32.mrf.mxu0
      %v1080 = vadd.f32 0.0, %v1079
      %v1081 = vpop.f32.mrf.mxu0
      %1082 = vdwg.mxu0
      %v1083 = vadd.f32 %v879, %v1053
      %v1084 = vadd.f32 %v882, %v1056
      %v1085 = vadd.f32 %v887, %v1061
      %v1086 = vadd.f32 %v890, %v1064
      %v1087 = vadd.f32 %v895, %v1069
      %v1088 = vadd.f32 %v898, %v1072
      %v1089 = vadd.f32 %v903, %v1077
      %v1090 = vadd.f32 %v906, %v1080
      %v1091 = vld [vmem:[%s528] sm:$0xff]
      %v1092 = vld [vmem:[%s528 + $0x10] sm:$0xff]
      %v1093 = vld [vmem:[%s528 + $0x20] sm:$0xff]
      %v1094 = vld [vmem:[%s528 + $0x30] sm:$0xff]
      %v1095 = vld [vmem:[%s528 + $0x40] sm:$0xff]
      %v1096 = vld [vmem:[%s528 + $0x50] sm:$0xff]
      %v1097 = vld [vmem:[%s528 + $0x60] sm:$0xff]
      %v1098 = vld [vmem:[%s528 + $0x70] sm:$0xff]
      %v1099 = vld [vmem:[%s6] sm:$0xff]
      %v1100 = vld [vmem:[%s6 + $0x10] sm:$0xff]
      %v1101 = vld [vmem:[%s6 + $0x20] sm:$0xff]
      %v1102 = vld [vmem:[%s6 + $0x30] sm:$0xff]
      %v1103 = vld [vmem:[%s6 + $0x40] sm:$0xff]
      %v1104 = vld [vmem:[%s6 + $0x50] sm:$0xff]
      %v1105 = vld [vmem:[%s6 + $0x60] sm:$0xff]
      %v1106 = vld [vmem:[%s6 + $0x70] sm:$0xff]
      %v1107 = vmul.f32 %v1091, %v568
      %v1108 = vmul.f32 %v1092, %v568
      %v1109 = vmul.f32 %v1093, %v568
      %v1110 = vmul.f32 %v1094, %v568
      %v1111 = vmul.f32 %v1095, %v568
      %v1112 = vmul.f32 %v1096, %v568
      %v1113 = vmul.f32 %v1097, %v568
      %v1114 = vmul.f32 %v1098, %v568
      %v1115 = vadd.f32 %v1107, %v582
      %v1116 = vadd.f32 %v1108, %v582
      %v1117 = vadd.f32 %v1109, %v582
      %v1118 = vadd.f32 %v1110, %v582
      %v1119 = vadd.f32 %v1111, %v582
      %v1120 = vadd.f32 %v1112, %v582
      %v1121 = vadd.f32 %v1113, %v582
      %v1122 = vadd.f32 %v1114, %v582
      %v1123 = vmax.f32 %v1115, 0.0
      %v1124 = vmax.f32 %v1116, 0.0
      %v1125 = vmax.f32 %v1117, 0.0
      %v1126 = vmax.f32 %v1118, 0.0
      %v1127 = vmax.f32 %v1119, 0.0
      %v1128 = vmax.f32 %v1120, 0.0
      %v1129 = vmax.f32 %v1121, 0.0
      %v1130 = vmax.f32 %v1122, 0.0
      %1132 = vset.pattern.permute.xlu0 0
      %1133 = vperm.xlu0 %1132, %v1099
      %v1134 = vpop.permute.xlu0 %1133
      %1137 = vset.pattern.permute.xlu0 0
      %1138 = vperm.xlu0 %1137, %v1100
      %v1139 = vpop.permute.xlu0 %1138
      %1142 = vset.pattern.permute.xlu0 0
      %1143 = vperm.xlu0 %1142, %v1101
      %v1144 = vpop.permute.xlu0 %1143
      %1147 = vset.pattern.permute.xlu0 0
      %1148 = vperm.xlu0 %1147, %v1102
      %v1149 = vpop.permute.xlu0 %1148
      %1152 = vset.pattern.permute.xlu0 0
      %1153 = vperm.xlu0 %1152, %v1103
      %v1154 = vpop.permute.xlu0 %1153
      %1157 = vset.pattern.permute.xlu0 0
      %1158 = vperm.xlu0 %1157, %v1104
      %v1159 = vpop.permute.xlu0 %1158
      %1162 = vset.pattern.permute.xlu0 0
      %1163 = vperm.xlu0 %1162, %v1105
      %v1164 = vpop.permute.xlu0 %1163
      %1167 = vset.pattern.permute.xlu0 0
      %1168 = vperm.xlu0 %1167, %v1106
      %v1169 = vpop.permute.xlu0 %1168
      %v1171 = vmul.f32 %v1123, %v1134
      %v1172 = vmul.f32 %v1124, %v1139
      %v1173 = vmul.f32 %v1125, %v1144
      %v1174 = vmul.f32 %v1126, %v1149
      %v1175 = vmul.f32 %v1127, %v1154
      %v1176 = vmul.f32 %v1128, %v1159
      %v1177 = vmul.f32 %v1129, %v1164
      %v1178 = vmul.f32 %v1130, %v1169
      %v1179 = vpack.c.bf16 %v1172, %v1171
      %v1180 = vpack.c.bf16 %v1174, %v1173
      %v1181 = vpack.c.bf16 %v1176, %v1175
      %v1182 = vpack.c.bf16 %v1178, %v1177
      %s1183 = scalar_lea.vmem %s10, 6
      %v1184 = vld [vmem:[%s1183] sm:$0x3]
      %v1186 = vsel %vm747, %v1179, 0
      %v1189 = vsel %vm747, %v1180, 0
      %v1192 = vsel %vm747, %v1181, 0
      %v1195 = vsel %vm747, %v1182, 0
      %v1198 = vsel %vm760, %v1184, 0
      %1200 = vmatprep.subr.bf16.mxu0 0
      %1201 = vmatpush1.bf16.msra.mxu0 0
      %1202 = vmatprep.subr.bf16.mxu0 0
      %1203 = vmatpush1.bf16.msra.mxu0 0
      %1204 = vmatprep.subr.bf16.mxu0 0
      %1205 = vmatpush1.bf16.msra.mxu0 0
      %1206 = vmatprep.subr.bf16.mxu0 0
      %1207 = vmatpush1.bf16.msra.mxu0 0
      %1208 = vmatprep.subr.bf16.mxu0 0
      %1209 = vmatpush1.bf16.msra.mxu0 0
      %1210 = vmatprep.subr.bf16.mxu0 0
      %1211 = vmatpush1.bf16.msra.mxu0 0
      %1212 = vmatprep.subr.bf16.mxu0 0
      %1213 = vmatpush1.bf16.msra.mxu0 0
      %1214 = vmatprep.subr.bf16.mxu0 0
      %1215 = vmatpush1.bf16.msra.mxu0 %v1198
      %1216 = vmatprep.subr.bf16.mxu0 0
      %1217 = vmatpush2.bf16.msra.mxu0 0
      %1218 = vmatprep.subr.bf16.mxu0 0
      %1219 = vmatpush2.bf16.msra.mxu0 0
      %1220 = vmatprep.subr.bf16.mxu0 0
      %1221 = vmatpush2.bf16.msra.mxu0 0
      %1222 = vmatprep.subr.bf16.mxu0 0
      %1223 = vmatpush2.bf16.msra.mxu0 0
      %1224 = vmatprep.subr.bf16.mxu0 0
      %1225 = vmatpush2.bf16.msra.mxu0 0
      %1226 = vmatprep.subr.bf16.mxu0 0
      %1227 = vmatpush2.bf16.msra.mxu0 0
      %1228 = vmatprep.subr.bf16.mxu0 0
      %1229 = vmatpush2.bf16.msra.mxu0 0
      %1230 = vmatprep.subr.bf16.mxu0 0
      %1231 = vmatpush2.bf16.msra.mxu0 0
      %1232 = vmatprep.mubr.bf16.mxu0 0
      %1233 = vmatmul.mubr.bf16.gmra.mxu0 %v1186
      %v1234 = vpop.f32.mrf.mxu0
      %v1235 = vadd.f32 0.0, %v1234
      %v1236 = vpop.f32.mrf.mxu0
      %v1237 = vpop.f32.mrf.mxu0
      %v1238 = vadd.f32 0.0, %v1237
      %v1239 = vpop.f32.mrf.mxu0
      %1240 = vmatprep.mubr.bf16.mxu0 0
      %1241 = vmatmul.mubr.bf16.gmra.mxu0 %v1189
      %v1242 = vpop.f32.mrf.mxu0
      %v1243 = vadd.f32 0.0, %v1242
      %v1244 = vpop.f32.mrf.mxu0
      %v1245 = vpop.f32.mrf.mxu0
      %v1246 = vadd.f32 0.0, %v1245
      %v1247 = vpop.f32.mrf.mxu0
      %1248 = vmatprep.mubr.bf16.mxu0 0
      %1249 = vmatmul.mubr.bf16.gmra.mxu0 %v1192
      %v1250 = vpop.f32.mrf.mxu0
      %v1251 = vadd.f32 0.0, %v1250
      %v1252 = vpop.f32.mrf.mxu0
      %v1253 = vpop.f32.mrf.mxu0
      %v1254 = vadd.f32 0.0, %v1253
      %v1255 = vpop.f32.mrf.mxu0
      %1256 = vmatprep.mubr.bf16.mxu0 0
      %1257 = vmatmul.mubr.bf16.gmra.mxu0 %v1195
      %v1258 = vpop.f32.mrf.mxu0
      %v1259 = vadd.f32 0.0, %v1258
      %v1260 = vpop.f32.mrf.mxu0
      %v1261 = vpop.f32.mrf.mxu0
      %v1262 = vadd.f32 0.0, %v1261
      %v1263 = vpop.f32.mrf.mxu0
      %1264 = vdwg.mxu0
      %v1265 = vadd.f32 %v1083, %v1235
      %v1266 = vadd.f32 %v1084, %v1238
      %v1267 = vadd.f32 %v1085, %v1243
      %v1268 = vadd.f32 %v1086, %v1246
      %v1269 = vadd.f32 %v1087, %v1251
      %v1270 = vadd.f32 %v1088, %v1254
      %v1271 = vadd.f32 %v1089, %v1259
      %v1272 = vadd.f32 %v1090, %v1262
      %v1273 = vld [vmem:[%s533] sm:$0xff]
      %v1274 = vld [vmem:[%s533 + $0x10] sm:$0xff]
      %v1275 = vld [vmem:[%s533 + $0x20] sm:$0xff]
      %v1276 = vld [vmem:[%s533 + $0x30] sm:$0xff]
      %v1277 = vld [vmem:[%s533 + $0x40] sm:$0xff]
      %v1278 = vld [vmem:[%s533 + $0x50] sm:$0xff]
      %v1279 = vld [vmem:[%s533 + $0x60] sm:$0xff]
      %v1280 = vld [vmem:[%s533 + $0x70] sm:$0xff]
      %v1281 = vld [vmem:[%s7] sm:$0xff]
      %v1282 = vld [vmem:[%s7 + $0x10] sm:$0xff]
      %v1283 = vld [vmem:[%s7 + $0x20] sm:$0xff]
      %v1284 = vld [vmem:[%s7 + $0x30] sm:$0xff]
      %v1285 = vld [vmem:[%s7 + $0x40] sm:$0xff]
      %v1286 = vld [vmem:[%s7 + $0x50] sm:$0xff]
      %v1287 = vld [vmem:[%s7 + $0x60] sm:$0xff]
      %v1288 = vld [vmem:[%s7 + $0x70] sm:$0xff]
      %v1289 = vmul.f32 %v1273, %v568
      %v1290 = vmul.f32 %v1274, %v568
      %v1291 = vmul.f32 %v1275, %v568
      %v1292 = vmul.f32 %v1276, %v568
      %v1293 = vmul.f32 %v1277, %v568
      %v1294 = vmul.f32 %v1278, %v568
      %v1295 = vmul.f32 %v1279, %v568
      %v1296 = vmul.f32 %v1280, %v568
      %v1297 = vadd.f32 %v1289, %v582
      %v1298 = vadd.f32 %v1290, %v582
      %v1299 = vadd.f32 %v1291, %v582
      %v1300 = vadd.f32 %v1292, %v582
      %v1301 = vadd.f32 %v1293, %v582
      %v1302 = vadd.f32 %v1294, %v582
      %v1303 = vadd.f32 %v1295, %v582
      %v1304 = vadd.f32 %v1296, %v582
      %v1305 = vmax.f32 %v1297, 0.0
      %v1306 = vmax.f32 %v1298, 0.0
      %v1307 = vmax.f32 %v1299, 0.0
      %v1308 = vmax.f32 %v1300, 0.0
      %v1309 = vmax.f32 %v1301, 0.0
      %v1310 = vmax.f32 %v1302, 0.0
      %v1311 = vmax.f32 %v1303, 0.0
      %v1312 = vmax.f32 %v1304, 0.0
      %1314 = vset.pattern.permute.xlu0 0
      %1315 = vperm.xlu0 %1314, %v1281
      %v1316 = vpop.permute.xlu0 %1315
      %1319 = vset.pattern.permute.xlu0 0
      %1320 = vperm.xlu0 %1319, %v1282
      %v1321 = vpop.permute.xlu0 %1320
      %1324 = vset.pattern.permute.xlu0 0
      %1325 = vperm.xlu0 %1324, %v1283
      %v1326 = vpop.permute.xlu0 %1325
      %1329 = vset.pattern.permute.xlu0 0
      %1330 = vperm.xlu0 %1329, %v1284
      %v1331 = vpop.permute.xlu0 %1330
      %1334 = vset.pattern.permute.xlu0 0
      %1335 = vperm.xlu0 %1334, %v1285
      %v1336 = vpop.permute.xlu0 %1335
      %1339 = vset.pattern.permute.xlu0 0
      %1340 = vperm.xlu0 %1339, %v1286
      %v1341 = vpop.permute.xlu0 %1340
      %1344 = vset.pattern.permute.xlu0 0
      %1345 = vperm.xlu0 %1344, %v1287
      %v1346 = vpop.permute.xlu0 %1345
      %1349 = vset.pattern.permute.xlu0 0
      %1350 = vperm.xlu0 %1349, %v1288
      %v1351 = vpop.permute.xlu0 %1350
      %v1353 = vmul.f32 %v1305, %v1316
      %v1354 = vmul.f32 %v1306, %v1321
      %v1355 = vmul.f32 %v1307, %v1326
      %v1356 = vmul.f32 %v1308, %v1331
      %v1357 = vmul.f32 %v1309, %v1336
      %v1358 = vmul.f32 %v1310, %v1341
      %v1359 = vmul.f32 %v1311, %v1346
      %v1360 = vmul.f32 %v1312, %v1351
      %v1361 = vpack.c.bf16 %v1354, %v1353
      %v1362 = vpack.c.bf16 %v1356, %v1355
      %v1363 = vpack.c.bf16 %v1358, %v1357
      %v1364 = vpack.c.bf16 %v1360, %v1359
      %s1365 = scalar_lea.vmem %s10, 8
      %v1366 = vld [vmem:[%s1365] sm:$0x3]
      %v1368 = vsel %vm747, %v1361, 0
      %v1371 = vsel %vm747, %v1362, 0
      %v1374 = vsel %vm747, %v1363, 0
      %v1377 = vsel %vm747, %v1364, 0
      %v1380 = vsel %vm760, %v1366, 0
      %1382 = vmatprep.subr.bf16.mxu0 0
      %1383 = vmatpush1.bf16.msra.mxu0 0
      %1384 = vmatprep.subr.bf16.mxu0 0
      %1385 = vmatpush1.bf16.msra.mxu0 0
      %1386 = vmatprep.subr.bf16.mxu0 0
      %1387 = vmatpush1.bf16.msra.mxu0 0
      %1388 = vmatprep.subr.bf16.mxu0 0
      %1389 = vmatpush1.bf16.msra.mxu0 0
      %1390 = vmatprep.subr.bf16.mxu0 0
      %1391 = vmatpush1.bf16.msra.mxu0 0
      %1392 = vmatprep.subr.bf16.mxu0 0
      %1393 = vmatpush1.bf16.msra.mxu0 0
      %1394 = vmatprep.subr.bf16.mxu0 0
      %1395 = vmatpush1.bf16.msra.mxu0 0
      %1396 = vmatprep.subr.bf16.mxu0 0
      %1397 = vmatpush1.bf16.msra.mxu0 %v1380
      %1398 = vmatprep.subr.bf16.mxu0 0
      %1399 = vmatpush2.bf16.msra.mxu0 0
      %1400 = vmatprep.subr.bf16.mxu0 0
      %1401 = vmatpush2.bf16.msra.mxu0 0
      %1402 = vmatprep.subr.bf16.mxu0 0
      %1403 = vmatpush2.bf16.msra.mxu0 0
      %1404 = vmatprep.subr.bf16.mxu0 0
      %1405 = vmatpush2.bf16.msra.mxu0 0
      %1406 = vmatprep.subr.bf16.mxu0 0
      %1407 = vmatpush2.bf16.msra.mxu0 0
      %1408 = vmatprep.subr.bf16.mxu0 0
      %1409 = vmatpush2.bf16.msra.mxu0 0
      %1410 = vmatprep.subr.bf16.mxu0 0
      %1411 = vmatpush2.bf16.msra.mxu0 0
      %1412 = vmatprep.subr.bf16.mxu0 0
      %1413 = vmatpush2.bf16.msra.mxu0 0
      %1414 = vmatprep.mubr.bf16.mxu0 0
      %1415 = vmatmul.mubr.bf16.gmra.mxu0 %v1368
      %v1416 = vpop.f32.mrf.mxu0
      %v1417 = vadd.f32 0.0, %v1416
      %v1418 = vpop.f32.mrf.mxu0
      %v1419 = vpop.f32.mrf.mxu0
      %v1420 = vadd.f32 0.0, %v1419
      %v1421 = vpop.f32.mrf.mxu0
      %1422 = vmatprep.mubr.bf16.mxu0 0
      %1423 = vmatmul.mubr.bf16.gmra.mxu0 %v1371
      %v1424 = vpop.f32.mrf.mxu0
      %v1425 = vadd.f32 0.0, %v1424
      %v1426 = vpop.f32.mrf.mxu0
      %v1427 = vpop.f32.mrf.mxu0
      %v1428 = vadd.f32 0.0, %v1427
      %v1429 = vpop.f32.mrf.mxu0
      %1430 = vmatprep.mubr.bf16.mxu0 0
      %1431 = vmatmul.mubr.bf16.gmra.mxu0 %v1374
      %v1432 = vpop.f32.mrf.mxu0
      %v1433 = vadd.f32 0.0, %v1432
      %v1434 = vpop.f32.mrf.mxu0
      %v1435 = vpop.f32.mrf.mxu0
      %v1436 = vadd.f32 0.0, %v1435
      %v1437 = vpop.f32.mrf.mxu0
      %1438 = vmatprep.mubr.bf16.mxu0 0
      %1439 = vmatmul.mubr.bf16.gmra.mxu0 %v1377
      %v1440 = vpop.f32.mrf.mxu0
      %v1441 = vadd.f32 0.0, %v1440
      %v1442 = vpop.f32.mrf.mxu0
      %v1443 = vpop.f32.mrf.mxu0
      %v1444 = vadd.f32 0.0, %v1443
      %v1445 = vpop.f32.mrf.mxu0
      %1446 = vdwg.mxu0
      %v1447 = vadd.f32 %v1265, %v1417
      %v1448 = vadd.f32 %v1266, %v1420
      %v1449 = vadd.f32 %v1267, %v1425
      %v1450 = vadd.f32 %v1268, %v1428
      %v1451 = vadd.f32 %v1269, %v1433
      %v1452 = vadd.f32 %v1270, %v1436
      %v1453 = vadd.f32 %v1271, %v1441
      %v1454 = vadd.f32 %v1272, %v1444
      %v1455 = vld [vmem:[%s528 + $0x1] sm:$0xff]
      %v1456 = vld [vmem:[%s528 + $0x11] sm:$0xff]
      %v1457 = vld [vmem:[%s528 + $0x21] sm:$0xff]
      %v1458 = vld [vmem:[%s528 + $0x31] sm:$0xff]
      %v1459 = vld [vmem:[%s528 + $0x41] sm:$0xff]
      %v1460 = vld [vmem:[%s528 + $0x51] sm:$0xff]
      %v1461 = vld [vmem:[%s528 + $0x61] sm:$0xff]
      %v1462 = vld [vmem:[%s528 + $0x71] sm:$0xff]
      %v1463 = vld [vmem:[%s6 + $0x1] sm:$0xff]
      %v1464 = vld [vmem:[%s6 + $0x11] sm:$0xff]
      %v1465 = vld [vmem:[%s6 + $0x21] sm:$0xff]
      %v1466 = vld [vmem:[%s6 + $0x31] sm:$0xff]
      %v1467 = vld [vmem:[%s6 + $0x41] sm:$0xff]
      %v1468 = vld [vmem:[%s6 + $0x51] sm:$0xff]
      %v1469 = vld [vmem:[%s6 + $0x61] sm:$0xff]
      %v1470 = vld [vmem:[%s6 + $0x71] sm:$0xff]
      %v1471 = vmul.f32 %v1455, %v568
      %v1472 = vmul.f32 %v1456, %v568
      %v1473 = vmul.f32 %v1457, %v568
      %v1474 = vmul.f32 %v1458, %v568
      %v1475 = vmul.f32 %v1459, %v568
      %v1476 = vmul.f32 %v1460, %v568
      %v1477 = vmul.f32 %v1461, %v568
      %v1478 = vmul.f32 %v1462, %v568
      %v1479 = vadd.f32 %v1471, %v582
      %v1480 = vadd.f32 %v1472, %v582
      %v1481 = vadd.f32 %v1473, %v582
      %v1482 = vadd.f32 %v1474, %v582
      %v1483 = vadd.f32 %v1475, %v582
      %v1484 = vadd.f32 %v1476, %v582
      %v1485 = vadd.f32 %v1477, %v582
      %v1486 = vadd.f32 %v1478, %v582
      %v1487 = vmax.f32 %v1479, 0.0
      %v1488 = vmax.f32 %v1480, 0.0
      %v1489 = vmax.f32 %v1481, 0.0
      %v1490 = vmax.f32 %v1482, 0.0
      %v1491 = vmax.f32 %v1483, 0.0
      %v1492 = vmax.f32 %v1484, 0.0
      %v1493 = vmax.f32 %v1485, 0.0
      %v1494 = vmax.f32 %v1486, 0.0
      %1496 = vset.pattern.permute.xlu0 0
      %1497 = vperm.xlu0 %1496, %v1463
      %v1498 = vpop.permute.xlu0 %1497
      %1501 = vset.pattern.permute.xlu0 0
      %1502 = vperm.xlu0 %1501, %v1464
      %v1503 = vpop.permute.xlu0 %1502
      %1506 = vset.pattern.permute.xlu0 0
      %1507 = vperm.xlu0 %1506, %v1465
      %v1508 = vpop.permute.xlu0 %1507
      %1511 = vset.pattern.permute.xlu0 0
      %1512 = vperm.xlu0 %1511, %v1466
      %v1513 = vpop.permute.xlu0 %1512
      %1516 = vset.pattern.permute.xlu0 0
      %1517 = vperm.xlu0 %1516, %v1467
      %v1518 = vpop.permute.xlu0 %1517
      %1521 = vset.pattern.permute.xlu0 0
      %1522 = vperm.xlu0 %1521, %v1468
      %v1523 = vpop.permute.xlu0 %1522
      %1526 = vset.pattern.permute.xlu0 0
      %1527 = vperm.xlu0 %1526, %v1469
      %v1528 = vpop.permute.xlu0 %1527
      %1531 = vset.pattern.permute.xlu0 0
      %1532 = vperm.xlu0 %1531, %v1470
      %v1533 = vpop.permute.xlu0 %1532
      %v1535 = vmul.f32 %v1487, %v1498
      %v1536 = vmul.f32 %v1488, %v1503
      %v1537 = vmul.f32 %v1489, %v1508
      %v1538 = vmul.f32 %v1490, %v1513
      %v1539 = vmul.f32 %v1491, %v1518
      %v1540 = vmul.f32 %v1492, %v1523
      %v1541 = vmul.f32 %v1493, %v1528
      %v1542 = vmul.f32 %v1494, %v1533
      %v1543 = vpack.c.bf16 %v1536, %v1535
      %v1544 = vpack.c.bf16 %v1538, %v1537
      %v1545 = vpack.c.bf16 %v1540, %v1539
      %v1546 = vpack.c.bf16 %v1542, %v1541
      %s1547 = scalar_lea.vmem %s10, 10
      %v1548 = vld [vmem:[%s1547] sm:$0x3]
      %v1550 = vsel %vm747, %v1543, 0
      %v1553 = vsel %vm747, %v1544, 0
      %v1556 = vsel %vm747, %v1545, 0
      %v1559 = vsel %vm747, %v1546, 0
      %v1562 = vsel %vm760, %v1548, 0
      %1564 = vmatprep.subr.bf16.mxu0 0
      %1565 = vmatpush1.bf16.msra.mxu0 0
      %1566 = vmatprep.subr.bf16.mxu0 0
      %1567 = vmatpush1.bf16.msra.mxu0 0
      %1568 = vmatprep.subr.bf16.mxu0 0
      %1569 = vmatpush1.bf16.msra.mxu0 0
      %1570 = vmatprep.subr.bf16.mxu0 0
      %1571 = vmatpush1.bf16.msra.mxu0 0
      %1572 = vmatprep.subr.bf16.mxu0 0
      %1573 = vmatpush1.bf16.msra.mxu0 0
      %1574 = vmatprep.subr.bf16.mxu0 0
      %1575 = vmatpush1.bf16.msra.mxu0 0
      %1576 = vmatprep.subr.bf16.mxu0 0
      %1577 = vmatpush1.bf16.msra.mxu0 0
      %1578 = vmatprep.subr.bf16.mxu0 0
      %1579 = vmatpush1.bf16.msra.mxu0 %v1562
      %1580 = vmatprep.subr.bf16.mxu0 0
      %1581 = vmatpush2.bf16.msra.mxu0 0
      %1582 = vmatprep.subr.bf16.mxu0 0
      %1583 = vmatpush2.bf16.msra.mxu0 0
      %1584 = vmatprep.subr.bf16.mxu0 0
      %1585 = vmatpush2.bf16.msra.mxu0 0
      %1586 = vmatprep.subr.bf16.mxu0 0
      %1587 = vmatpush2.bf16.msra.mxu0 0
      %1588 = vmatprep.subr.bf16.mxu0 0
      %1589 = vmatpush2.bf16.msra.mxu0 0
      %1590 = vmatprep.subr.bf16.mxu0 0
      %1591 = vmatpush2.bf16.msra.mxu0 0
      %1592 = vmatprep.subr.bf16.mxu0 0
      %1593 = vmatpush2.bf16.msra.mxu0 0
      %1594 = vmatprep.subr.bf16.mxu0 0
      %1595 = vmatpush2.bf16.msra.mxu0 0
      %1596 = vmatprep.mubr.bf16.mxu0 0
      %1597 = vmatmul.mubr.bf16.gmra.mxu0 %v1550
      %v1598 = vpop.f32.mrf.mxu0
      %v1599 = vadd.f32 0.0, %v1598
      %v1600 = vpop.f32.mrf.mxu0
      %v1601 = vpop.f32.mrf.mxu0
      %v1602 = vadd.f32 0.0, %v1601
      %v1603 = vpop.f32.mrf.mxu0
      %1604 = vmatprep.mubr.bf16.mxu0 0
      %1605 = vmatmul.mubr.bf16.gmra.mxu0 %v1553
      %v1606 = vpop.f32.mrf.mxu0
      %v1607 = vadd.f32 0.0, %v1606
      %v1608 = vpop.f32.mrf.mxu0
      %v1609 = vpop.f32.mrf.mxu0
      %v1610 = vadd.f32 0.0, %v1609
      %v1611 = vpop.f32.mrf.mxu0
      %1612 = vmatprep.mubr.bf16.mxu0 0
      %1613 = vmatmul.mubr.bf16.gmra.mxu0 %v1556
      %v1614 = vpop.f32.mrf.mxu0
      %v1615 = vadd.f32 0.0, %v1614
      %v1616 = vpop.f32.mrf.mxu0
      %v1617 = vpop.f32.mrf.mxu0
      %v1618 = vadd.f32 0.0, %v1617
      %v1619 = vpop.f32.mrf.mxu0
      %1620 = vmatprep.mubr.bf16.mxu0 0
      %1621 = vmatmul.mubr.bf16.gmra.mxu0 %v1559
      %v1622 = vpop.f32.mrf.mxu0
      %v1623 = vadd.f32 0.0, %v1622
      %v1624 = vpop.f32.mrf.mxu0
      %v1625 = vpop.f32.mrf.mxu0
      %v1626 = vadd.f32 0.0, %v1625
      %v1627 = vpop.f32.mrf.mxu0
      %1628 = vdwg.mxu0
      %v1629 = vadd.f32 %v1447, %v1599
      %v1630 = vadd.f32 %v1448, %v1602
      %v1631 = vadd.f32 %v1449, %v1607
      %v1632 = vadd.f32 %v1450, %v1610
      %v1633 = vadd.f32 %v1451, %v1615
      %v1634 = vadd.f32 %v1452, %v1618
      %v1635 = vadd.f32 %v1453, %v1623
      %v1636 = vadd.f32 %v1454, %v1626
      %s1637 = scalar_lea.vmem %s518, 16
      %v1638 = vld [vmem:[%s1637] sm:$0xff]
      %v1639 = vld [vmem:[%s1637 + $0x10] sm:$0xff]
      %v1640 = vld [vmem:[%s1637 + $0x20] sm:$0xff]
      %v1641 = vld [vmem:[%s1637 + $0x30] sm:$0xff]
      %v1642 = vld [vmem:[%s1637 + $0x40] sm:$0xff]
      %v1643 = vld [vmem:[%s1637 + $0x50] sm:$0xff]
      %v1644 = vld [vmem:[%s1637 + $0x60] sm:$0xff]
      %v1645 = vld [vmem:[%s1637 + $0x70] sm:$0xff]
      %s1646 = scalar_lea.vmem %s4, 16
      %v1647 = vld [vmem:[%s1646] sm:$0xff]
      %v1648 = vld [vmem:[%s1646 + $0x10] sm:$0xff]
      %v1649 = vld [vmem:[%s1646 + $0x20] sm:$0xff]
      %v1650 = vld [vmem:[%s1646 + $0x30] sm:$0xff]
      %v1651 = vld [vmem:[%s1646 + $0x40] sm:$0xff]
      %v1652 = vld [vmem:[%s1646 + $0x50] sm:$0xff]
      %v1653 = vld [vmem:[%s1646 + $0x60] sm:$0xff]
      %v1654 = vld [vmem:[%s1646 + $0x70] sm:$0xff]
      %v1655 = vmul.f32 %v1638, %v568
      %v1656 = vmul.f32 %v1639, %v568
      %v1657 = vmul.f32 %v1640, %v568
      %v1658 = vmul.f32 %v1641, %v568
      %v1659 = vmul.f32 %v1642, %v568
      %v1660 = vmul.f32 %v1643, %v568
      %v1661 = vmul.f32 %v1644, %v568
      %v1662 = vmul.f32 %v1645, %v568
      %v1663 = vadd.f32 %v1655, %v582
      %v1664 = vadd.f32 %v1656, %v582
      %v1665 = vadd.f32 %v1657, %v582
      %v1666 = vadd.f32 %v1658, %v582
      %v1667 = vadd.f32 %v1659, %v582
      %v1668 = vadd.f32 %v1660, %v582
      %v1669 = vadd.f32 %v1661, %v582
      %v1670 = vadd.f32 %v1662, %v582
      %v1671 = vmax.f32 %v1663, 0.0
      %v1672 = vmax.f32 %v1664, 0.0
      %v1673 = vmax.f32 %v1665, 0.0
      %v1674 = vmax.f32 %v1666, 0.0
      %v1675 = vmax.f32 %v1667, 0.0
      %v1676 = vmax.f32 %v1668, 0.0
      %v1677 = vmax.f32 %v1669, 0.0
      %v1678 = vmax.f32 %v1670, 0.0
      %1680 = vset.pattern.permute.xlu0 0
      %1681 = vperm.xlu0 %1680, %v1647
      %v1682 = vpop.permute.xlu0 %1681
      %1685 = vset.pattern.permute.xlu0 0
      %1686 = vperm.xlu0 %1685, %v1648
      %v1687 = vpop.permute.xlu0 %1686
      %1690 = vset.pattern.permute.xlu0 0
      %1691 = vperm.xlu0 %1690, %v1649
      %v1692 = vpop.permute.xlu0 %1691
      %1695 = vset.pattern.permute.xlu0 0
      %1696 = vperm.xlu0 %1695, %v1650
      %v1697 = vpop.permute.xlu0 %1696
      %1700 = vset.pattern.permute.xlu0 0
      %1701 = vperm.xlu0 %1700, %v1651
      %v1702 = vpop.permute.xlu0 %1701
      %1705 = vset.pattern.permute.xlu0 0
      %1706 = vperm.xlu0 %1705, %v1652
      %v1707 = vpop.permute.xlu0 %1706
      %1710 = vset.pattern.permute.xlu0 0
      %1711 = vperm.xlu0 %1710, %v1653
      %v1712 = vpop.permute.xlu0 %1711
      %1715 = vset.pattern.permute.xlu0 0
      %1716 = vperm.xlu0 %1715, %v1654
      %v1717 = vpop.permute.xlu0 %1716
      %v1719 = vmul.f32 %v1671, %v1682
      %v1720 = vmul.f32 %v1672, %v1687
      %v1721 = vmul.f32 %v1673, %v1692
      %v1722 = vmul.f32 %v1674, %v1697
      %v1723 = vmul.f32 %v1675, %v1702
      %v1724 = vmul.f32 %v1676, %v1707
      %v1725 = vmul.f32 %v1677, %v1712
      %v1726 = vmul.f32 %v1678, %v1717
      %v1727 = vpack.c.bf16 %v1720, %v1719
      %v1728 = vpack.c.bf16 %v1722, %v1721
      %v1729 = vpack.c.bf16 %v1724, %v1723
      %v1730 = vpack.c.bf16 %v1726, %v1725
      %s1731 = scalar_lea.vmem %s10, 12
      %v1732 = vld [vmem:[%s1731] sm:$0x3]
      %v1734 = vsel %vm747, %v1727, 0
      %v1737 = vsel %vm747, %v1728, 0
      %v1740 = vsel %vm747, %v1729, 0
      %v1743 = vsel %vm747, %v1730, 0
      %v1746 = vsel %vm760, %v1732, 0
      %1748 = vmatprep.subr.bf16.mxu0 0
      %1749 = vmatpush1.bf16.msra.mxu0 0
      %1750 = vmatprep.subr.bf16.mxu0 0
      %1751 = vmatpush1.bf16.msra.mxu0 0
      %1752 = vmatprep.subr.bf16.mxu0 0
      %1753 = vmatpush1.bf16.msra.mxu0 0
      %1754 = vmatprep.subr.bf16.mxu0 0
      %1755 = vmatpush1.bf16.msra.mxu0 0
      %1756 = vmatprep.subr.bf16.mxu0 0
      %1757 = vmatpush1.bf16.msra.mxu0 0
      %1758 = vmatprep.subr.bf16.mxu0 0
      %1759 = vmatpush1.bf16.msra.mxu0 0
      %1760 = vmatprep.subr.bf16.mxu0 0
      %1761 = vmatpush1.bf16.msra.mxu0 0
      %1762 = vmatprep.subr.bf16.mxu0 0
      %1763 = vmatpush1.bf16.msra.mxu0 %v1746
      %1764 = vmatprep.subr.bf16.mxu0 0
      %1765 = vmatpush2.bf16.msra.mxu0 0
      %1766 = vmatprep.subr.bf16.mxu0 0
      %1767 = vmatpush2.bf16.msra.mxu0 0
      %1768 = vmatprep.subr.bf16.mxu0 0
      %1769 = vmatpush2.bf16.msra.mxu0 0
      %1770 = vmatprep.subr.bf16.mxu0 0
      %1771 = vmatpush2.bf16.msra.mxu0 0
      %1772 = vmatprep.subr.bf16.mxu0 0
      %1773 = vmatpush2.bf16.msra.mxu0 0
      %1774 = vmatprep.subr.bf16.mxu0 0
      %1775 = vmatpush2.bf16.msra.mxu0 0
      %1776 = vmatprep.subr.bf16.mxu0 0
      %1777 = vmatpush2.bf16.msra.mxu0 0
      %1778 = vmatprep.subr.bf16.mxu0 0
      %1779 = vmatpush2.bf16.msra.mxu0 0
      %1780 = vmatprep.mubr.bf16.mxu0 0
      %1781 = vmatmul.mubr.bf16.gmra.mxu0 %v1734
      %v1782 = vpop.f32.mrf.mxu0
      %v1783 = vadd.f32 0.0, %v1782
      %v1784 = vpop.f32.mrf.mxu0
      %v1785 = vpop.f32.mrf.mxu0
      %v1786 = vadd.f32 0.0, %v1785
      %v1787 = vpop.f32.mrf.mxu0
      %1788 = vmatprep.mubr.bf16.mxu0 0
      %1789 = vmatmul.mubr.bf16.gmra.mxu0 %v1737
      %v1790 = vpop.f32.mrf.mxu0
      %v1791 = vadd.f32 0.0, %v1790
      %v1792 = vpop.f32.mrf.mxu0
      %v1793 = vpop.f32.mrf.mxu0
      %v1794 = vadd.f32 0.0, %v1793
      %v1795 = vpop.f32.mrf.mxu0
      %1796 = vmatprep.mubr.bf16.mxu0 0
      %1797 = vmatmul.mubr.bf16.gmra.mxu0 %v1740
      %v1798 = vpop.f32.mrf.mxu0
      %v1799 = vadd.f32 0.0, %v1798
      %v1800 = vpop.f32.mrf.mxu0
      %v1801 = vpop.f32.mrf.mxu0
      %v1802 = vadd.f32 0.0, %v1801
      %v1803 = vpop.f32.mrf.mxu0
      %1804 = vmatprep.mubr.bf16.mxu0 0
      %1805 = vmatmul.mubr.bf16.gmra.mxu0 %v1743
      %v1806 = vpop.f32.mrf.mxu0
      %v1807 = vadd.f32 0.0, %v1806
      %v1808 = vpop.f32.mrf.mxu0
      %v1809 = vpop.f32.mrf.mxu0
      %v1810 = vadd.f32 0.0, %v1809
      %v1811 = vpop.f32.mrf.mxu0
      %1812 = vdwg.mxu0
      %v1813 = vadd.f32 %v1629, %v1783
      %v1814 = vadd.f32 %v1630, %v1786
      %v1815 = vadd.f32 %v1631, %v1791
      %v1816 = vadd.f32 %v1632, %v1794
      %v1817 = vadd.f32 %v1633, %v1799
      %v1818 = vadd.f32 %v1634, %v1802
      %v1819 = vadd.f32 %v1635, %v1807
      %v1820 = vadd.f32 %v1636, %v1810
      %s1821 = scalar_lea.vmem %s523, 16
      %v1822 = vld [vmem:[%s1821] sm:$0xff]
      %v1823 = vld [vmem:[%s1821 + $0x10] sm:$0xff]
      %v1824 = vld [vmem:[%s1821 + $0x20] sm:$0xff]
      %v1825 = vld [vmem:[%s1821 + $0x30] sm:$0xff]
      %v1826 = vld [vmem:[%s1821 + $0x40] sm:$0xff]
      %v1827 = vld [vmem:[%s1821 + $0x50] sm:$0xff]
      %v1828 = vld [vmem:[%s1821 + $0x60] sm:$0xff]
      %v1829 = vld [vmem:[%s1821 + $0x70] sm:$0xff]
      %s1830 = scalar_lea.vmem %s5, 16
      %v1831 = vld [vmem:[%s1830] sm:$0xff]
      %v1832 = vld [vmem:[%s1830 + $0x10] sm:$0xff]
      %v1833 = vld [vmem:[%s1830 + $0x20] sm:$0xff]
      %v1834 = vld [vmem:[%s1830 + $0x30] sm:$0xff]
      %v1835 = vld [vmem:[%s1830 + $0x40] sm:$0xff]
      %v1836 = vld [vmem:[%s1830 + $0x50] sm:$0xff]
      %v1837 = vld [vmem:[%s1830 + $0x60] sm:$0xff]
      %v1838 = vld [vmem:[%s1830 + $0x70] sm:$0xff]
      %v1839 = vmul.f32 %v1822, %v568
      %v1840 = vmul.f32 %v1823, %v568
      %v1841 = vmul.f32 %v1824, %v568
      %v1842 = vmul.f32 %v1825, %v568
      %v1843 = vmul.f32 %v1826, %v568
      %v1844 = vmul.f32 %v1827, %v568
      %v1845 = vmul.f32 %v1828, %v568
      %v1846 = vmul.f32 %v1829, %v568
      %v1847 = vadd.f32 %v1839, %v582
      %v1848 = vadd.f32 %v1840, %v582
      %v1849 = vadd.f32 %v1841, %v582
      %v1850 = vadd.f32 %v1842, %v582
      %v1851 = vadd.f32 %v1843, %v582
      %v1852 = vadd.f32 %v1844, %v582
      %v1853 = vadd.f32 %v1845, %v582
      %v1854 = vadd.f32 %v1846, %v582
      %v1855 = vmax.f32 %v1847, 0.0
      %v1856 = vmax.f32 %v1848, 0.0
      %v1857 = vmax.f32 %v1849, 0.0
      %v1858 = vmax.f32 %v1850, 0.0
      %v1859 = vmax.f32 %v1851, 0.0
      %v1860 = vmax.f32 %v1852, 0.0
      %v1861 = vmax.f32 %v1853, 0.0
      %v1862 = vmax.f32 %v1854, 0.0
      %1864 = vset.pattern.permute.xlu0 0
      %1865 = vperm.xlu0 %1864, %v1831
      %v1866 = vpop.permute.xlu0 %1865
      %1869 = vset.pattern.permute.xlu0 0
      %1870 = vperm.xlu0 %1869, %v1832
      %v1871 = vpop.permute.xlu0 %1870
      %1874 = vset.pattern.permute.xlu0 0
      %1875 = vperm.xlu0 %1874, %v1833
      %v1876 = vpop.permute.xlu0 %1875
      %1879 = vset.pattern.permute.xlu0 0
      %1880 = vperm.xlu0 %1879, %v1834
      %v1881 = vpop.permute.xlu0 %1880
      %1884 = vset.pattern.permute.xlu0 0
      %1885 = vperm.xlu0 %1884, %v1835
      %v1886 = vpop.permute.xlu0 %1885
      %1889 = vset.pattern.permute.xlu0 0
      %1890 = vperm.xlu0 %1889, %v1836
      %v1891 = vpop.permute.xlu0 %1890
      %1894 = vset.pattern.permute.xlu0 0
      %1895 = vperm.xlu0 %1894, %v1837
      %v1896 = vpop.permute.xlu0 %1895
      %1899 = vset.pattern.permute.xlu0 0
      %1900 = vperm.xlu0 %1899, %v1838
      %v1901 = vpop.permute.xlu0 %1900
      %v1903 = vmul.f32 %v1855, %v1866
      %v1904 = vmul.f32 %v1856, %v1871
      %v1905 = vmul.f32 %v1857, %v1876
      %v1906 = vmul.f32 %v1858, %v1881
      %v1907 = vmul.f32 %v1859, %v1886
      %v1908 = vmul.f32 %v1860, %v1891
      %v1909 = vmul.f32 %v1861, %v1896
      %v1910 = vmul.f32 %v1862, %v1901
      %v1911 = vpack.c.bf16 %v1904, %v1903
      %v1912 = vpack.c.bf16 %v1906, %v1905
      %v1913 = vpack.c.bf16 %v1908, %v1907
      %v1914 = vpack.c.bf16 %v1910, %v1909
      %s1915 = scalar_lea.vmem %s10, 14
      %v1916 = vld [vmem:[%s1915] sm:$0x3]
      %v1918 = vsel %vm747, %v1911, 0
      %v1921 = vsel %vm747, %v1912, 0
      %v1924 = vsel %vm747, %v1913, 0
      %v1927 = vsel %vm747, %v1914, 0
      %v1930 = vsel %vm760, %v1916, 0
      %1932 = vmatprep.subr.bf16.mxu0 0
      %1933 = vmatpush1.bf16.msra.mxu0 0
      %1934 = vmatprep.subr.bf16.mxu0 0
      %1935 = vmatpush1.bf16.msra.mxu0 0
      %1936 = vmatprep.subr.bf16.mxu0 0
      %1937 = vmatpush1.bf16.msra.mxu0 0
      %1938 = vmatprep.subr.bf16.mxu0 0
      %1939 = vmatpush1.bf16.msra.mxu0 0
      %1940 = vmatprep.subr.bf16.mxu0 0
      %1941 = vmatpush1.bf16.msra.mxu0 0
      %1942 = vmatprep.subr.bf16.mxu0 0
      %1943 = vmatpush1.bf16.msra.mxu0 0
      %1944 = vmatprep.subr.bf16.mxu0 0
      %1945 = vmatpush1.bf16.msra.mxu0 0
      %1946 = vmatprep.subr.bf16.mxu0 0
      %1947 = vmatpush1.bf16.msra.mxu0 %v1930
      %1948 = vmatprep.subr.bf16.mxu0 0
      %1949 = vmatpush2.bf16.msra.mxu0 0
      %1950 = vmatprep.subr.bf16.mxu0 0
      %1951 = vmatpush2.bf16.msra.mxu0 0
      %1952 = vmatprep.subr.bf16.mxu0 0
      %1953 = vmatpush2.bf16.msra.mxu0 0
      %1954 = vmatprep.subr.bf16.mxu0 0
      %1955 = vmatpush2.bf16.msra.mxu0 0
      %1956 = vmatprep.subr.bf16.mxu0 0
      %1957 = vmatpush2.bf16.msra.mxu0 0
      %1958 = vmatprep.subr.bf16.mxu0 0
      %1959 = vmatpush2.bf16.msra.mxu0 0
      %1960 = vmatprep.subr.bf16.mxu0 0
      %1961 = vmatpush2.bf16.msra.mxu0 0
      %1962 = vmatprep.subr.bf16.mxu0 0
      %1963 = vmatpush2.bf16.msra.mxu0 0
      %1964 = vmatprep.mubr.bf16.mxu0 0
      %1965 = vmatmul.mubr.bf16.gmra.mxu0 %v1918
      %v1966 = vpop.f32.mrf.mxu0
      %v1967 = vadd.f32 0.0, %v1966
      %v1968 = vpop.f32.mrf.mxu0
      %v1969 = vpop.f32.mrf.mxu0
      %v1970 = vadd.f32 0.0, %v1969
      %v1971 = vpop.f32.mrf.mxu0
      %1972 = vmatprep.mubr.bf16.mxu0 0
      %1973 = vmatmul.mubr.bf16.gmra.mxu0 %v1921
      %v1974 = vpop.f32.mrf.mxu0
      %v1975 = vadd.f32 0.0, %v1974
      %v1976 = vpop.f32.mrf.mxu0
      %v1977 = vpop.f32.mrf.mxu0
      %v1978 = vadd.f32 0.0, %v1977
      %v1979 = vpop.f32.mrf.mxu0
      %1980 = vmatprep.mubr.bf16.mxu0 0
      %1981 = vmatmul.mubr.bf16.gmra.mxu0 %v1924
      %v1982 = vpop.f32.mrf.mxu0
      %v1983 = vadd.f32 0.0, %v1982
      %v1984 = vpop.f32.mrf.mxu0
      %v1985 = vpop.f32.mrf.mxu0
      %v1986 = vadd.f32 0.0, %v1985
      %v1987 = vpop.f32.mrf.mxu0
      %1988 = vmatprep.mubr.bf16.mxu0 0
      %1989 = vmatmul.mubr.bf16.gmra.mxu0 %v1927
      %v1990 = vpop.f32.mrf.mxu0
      %v1991 = vadd.f32 0.0, %v1990
      %v1992 = vpop.f32.mrf.mxu0
      %v1993 = vpop.f32.mrf.mxu0
      %v1994 = vadd.f32 0.0, %v1993
      %v1995 = vpop.f32.mrf.mxu0
      %1996 = vdwg.mxu0
      %v1997 = vadd.f32 %v1813, %v1967
      %v1998 = vadd.f32 %v1814, %v1970
      %v1999 = vadd.f32 %v1815, %v1975
      %v2000 = vadd.f32 %v1816, %v1978
      %v2001 = vadd.f32 %v1817, %v1983
      %v2002 = vadd.f32 %v1818, %v1986
      %v2003 = vadd.f32 %v1819, %v1991
      %v2004 = vadd.f32 %v1820, %v1994
      %v2005 = vld [vmem:[%s1637 + $0x1] sm:$0xff]
      %v2006 = vld [vmem:[%s1637 + $0x11] sm:$0xff]
      %v2007 = vld [vmem:[%s1637 + $0x21] sm:$0xff]
      %v2008 = vld [vmem:[%s1637 + $0x31] sm:$0xff]
      %v2009 = vld [vmem:[%s1637 + $0x41] sm:$0xff]
      %v2010 = vld [vmem:[%s1637 + $0x51] sm:$0xff]
      %v2011 = vld [vmem:[%s1637 + $0x61] sm:$0xff]
      %v2012 = vld [vmem:[%s1637 + $0x71] sm:$0xff]
      %v2013 = vld [vmem:[%s1646 + $0x1] sm:$0xff]
      %v2014 = vld [vmem:[%s1646 + $0x11] sm:$0xff]
      %v2015 = vld [vmem:[%s1646 + $0x21] sm:$0xff]
      %v2016 = vld [vmem:[%s1646 + $0x31] sm:$0xff]
      %v2017 = vld [vmem:[%s1646 + $0x41] sm:$0xff]
      %v2018 = vld [vmem:[%s1646 + $0x51] sm:$0xff]
      %v2019 = vld [vmem:[%s1646 + $0x61] sm:$0xff]
      %v2020 = vld [vmem:[%s1646 + $0x71] sm:$0xff]
      %v2021 = vmul.f32 %v2005, %v568
      %v2022 = vmul.f32 %v2006, %v568
      %v2023 = vmul.f32 %v2007, %v568
      %v2024 = vmul.f32 %v2008, %v568
      %v2025 = vmul.f32 %v2009, %v568
      %v2026 = vmul.f32 %v2010, %v568
      %v2027 = vmul.f32 %v2011, %v568
      %v2028 = vmul.f32 %v2012, %v568
      %v2029 = vadd.f32 %v2021, %v582
      %v2030 = vadd.f32 %v2022, %v582
      %v2031 = vadd.f32 %v2023, %v582
      %v2032 = vadd.f32 %v2024, %v582
      %v2033 = vadd.f32 %v2025, %v582
      %v2034 = vadd.f32 %v2026, %v582
      %v2035 = vadd.f32 %v2027, %v582
      %v2036 = vadd.f32 %v2028, %v582
      %v2037 = vmax.f32 %v2029, 0.0
      %v2038 = vmax.f32 %v2030, 0.0
      %v2039 = vmax.f32 %v2031, 0.0
      %v2040 = vmax.f32 %v2032, 0.0
      %v2041 = vmax.f32 %v2033, 0.0
      %v2042 = vmax.f32 %v2034, 0.0
      %v2043 = vmax.f32 %v2035, 0.0
      %v2044 = vmax.f32 %v2036, 0.0
      %2046 = vset.pattern.permute.xlu0 0
      %2047 = vperm.xlu0 %2046, %v2013
      %v2048 = vpop.permute.xlu0 %2047
      %2051 = vset.pattern.permute.xlu0 0
      %2052 = vperm.xlu0 %2051, %v2014
      %v2053 = vpop.permute.xlu0 %2052
      %2056 = vset.pattern.permute.xlu0 0
      %2057 = vperm.xlu0 %2056, %v2015
      %v2058 = vpop.permute.xlu0 %2057
      %2061 = vset.pattern.permute.xlu0 0
      %2062 = vperm.xlu0 %2061, %v2016
      %v2063 = vpop.permute.xlu0 %2062
      %2066 = vset.pattern.permute.xlu0 0
      %2067 = vperm.xlu0 %2066, %v2017
      %v2068 = vpop.permute.xlu0 %2067
      %2071 = vset.pattern.permute.xlu0 0
      %2072 = vperm.xlu0 %2071, %v2018
      %v2073 = vpop.permute.xlu0 %2072
      %2076 = vset.pattern.permute.xlu0 0
      %2077 = vperm.xlu0 %2076, %v2019
      %v2078 = vpop.permute.xlu0 %2077
      %2081 = vset.pattern.permute.xlu0 0
      %2082 = vperm.xlu0 %2081, %v2020
      %v2083 = vpop.permute.xlu0 %2082
      %v2085 = vmul.f32 %v2037, %v2048
      %v2086 = vmul.f32 %v2038, %v2053
      %v2087 = vmul.f32 %v2039, %v2058
      %v2088 = vmul.f32 %v2040, %v2063
      %v2089 = vmul.f32 %v2041, %v2068
      %v2090 = vmul.f32 %v2042, %v2073
      %v2091 = vmul.f32 %v2043, %v2078
      %v2092 = vmul.f32 %v2044, %v2083
      %v2093 = vpack.c.bf16 %v2086, %v2085
      %v2094 = vpack.c.bf16 %v2088, %v2087
      %v2095 = vpack.c.bf16 %v2090, %v2089
      %v2096 = vpack.c.bf16 %v2092, %v2091
      %s2097 = scalar_lea.vmem %s10, 16
      %v2098 = vld [vmem:[%s2097] sm:$0x3]
      %v2100 = vsel %vm747, %v2093, 0
      %v2103 = vsel %vm747, %v2094, 0
      %v2106 = vsel %vm747, %v2095, 0
      %v2109 = vsel %vm747, %v2096, 0
      %v2112 = vsel %vm760, %v2098, 0
      %2114 = vmatprep.subr.bf16.mxu0 0
      %2115 = vmatpush1.bf16.msra.mxu0 0
      %2116 = vmatprep.subr.bf16.mxu0 0
      %2117 = vmatpush1.bf16.msra.mxu0 0
      %2118 = vmatprep.subr.bf16.mxu0 0
      %2119 = vmatpush1.bf16.msra.mxu0 0
      %2120 = vmatprep.subr.bf16.mxu0 0
      %2121 = vmatpush1.bf16.msra.mxu0 0
      %2122 = vmatprep.subr.bf16.mxu0 0
      %2123 = vmatpush1.bf16.msra.mxu0 0
      %2124 = vmatprep.subr.bf16.mxu0 0
      %2125 = vmatpush1.bf16.msra.mxu0 0
      %2126 = vmatprep.subr.bf16.mxu0 0
      %2127 = vmatpush1.bf16.msra.mxu0 0
      %2128 = vmatprep.subr.bf16.mxu0 0
      %2129 = vmatpush1.bf16.msra.mxu0 %v2112
      %2130 = vmatprep.subr.bf16.mxu0 0
      %2131 = vmatpush2.bf16.msra.mxu0 0
      %2132 = vmatprep.subr.bf16.mxu0 0
      %2133 = vmatpush2.bf16.msra.mxu0 0
      %2134 = vmatprep.subr.bf16.mxu0 0
      %2135 = vmatpush2.bf16.msra.mxu0 0
      %2136 = vmatprep.subr.bf16.mxu0 0
      %2137 = vmatpush2.bf16.msra.mxu0 0
      %2138 = vmatprep.subr.bf16.mxu0 0
      %2139 = vmatpush2.bf16.msra.mxu0 0
      %2140 = vmatprep.subr.bf16.mxu0 0
      %2141 = vmatpush2.bf16.msra.mxu0 0
      %2142 = vmatprep.subr.bf16.mxu0 0
      %2143 = vmatpush2.bf16.msra.mxu0 0
      %2144 = vmatprep.subr.bf16.mxu0 0
      %2145 = vmatpush2.bf16.msra.mxu0 0
      %2146 = vmatprep.mubr.bf16.mxu0 0
      %2147 = vmatmul.mubr.bf16.gmra.mxu0 %v2100
      %v2148 = vpop.f32.mrf.mxu0
      %v2149 = vadd.f32 0.0, %v2148
      %v2150 = vpop.f32.mrf.mxu0
      %v2151 = vpop.f32.mrf.mxu0
      %v2152 = vadd.f32 0.0, %v2151
      %v2153 = vpop.f32.mrf.mxu0
      %2154 = vmatprep.mubr.bf16.mxu0 0
      %2155 = vmatmul.mubr.bf16.gmra.mxu0 %v2103
      %v2156 = vpop.f32.mrf.mxu0
      %v2157 = vadd.f32 0.0, %v2156
      %v2158 = vpop.f32.mrf.mxu0
      %v2159 = vpop.f32.mrf.mxu0
      %v2160 = vadd.f32 0.0, %v2159
      %v2161 = vpop.f32.mrf.mxu0
      %2162 = vmatprep.mubr.bf16.mxu0 0
      %2163 = vmatmul.mubr.bf16.gmra.mxu0 %v2106
      %v2164 = vpop.f32.mrf.mxu0
      %v2165 = vadd.f32 0.0, %v2164
      %v2166 = vpop.f32.mrf.mxu0
      %v2167 = vpop.f32.mrf.mxu0
      %v2168 = vadd.f32 0.0, %v2167
      %v2169 = vpop.f32.mrf.mxu0
      %2170 = vmatprep.mubr.bf16.mxu0 0
      %2171 = vmatmul.mubr.bf16.gmra.mxu0 %v2109
      %v2172 = vpop.f32.mrf.mxu0
      %v2173 = vadd.f32 0.0, %v2172
      %v2174 = vpop.f32.mrf.mxu0
      %v2175 = vpop.f32.mrf.mxu0
      %v2176 = vadd.f32 0.0, %v2175
      %v2177 = vpop.f32.mrf.mxu0
      %2178 = vdwg.mxu0
      %v2179 = vadd.f32 %v1997, %v2149
      %v2180 = vadd.f32 %v1998, %v2152
      %v2181 = vadd.f32 %v1999, %v2157
      %v2182 = vadd.f32 %v2000, %v2160
      %v2183 = vadd.f32 %v2001, %v2165
      %v2184 = vadd.f32 %v2002, %v2168
      %v2185 = vadd.f32 %v2003, %v2173
      %v2186 = vadd.f32 %v2004, %v2176
      %v2187 = vld [vmem:[%s11] sm:$0x1]
      %v2189 = vlaneseq
      %v2190 = vshrl.u32 %v2189, 7
      %v2191 = vsub.s32 0, %v2190
      %v2192 = vrot.slane %v2187, %v2191
      %v2194 = vadd.f32 %v2179, %v2192
      %v2195 = vadd.f32 %v2180, %v2192
      %v2196 = vadd.f32 %v2181, %v2192
      %v2197 = vadd.f32 %v2182, %v2192
      %v2198 = vadd.f32 %v2183, %v2192
      %v2199 = vadd.f32 %v2184, %v2192
      %v2200 = vadd.f32 %v2185, %v2192
      %v2201 = vadd.f32 %v2186, %v2192
      %v2202 = vadd.f32 %v2194, %v2195
      %v2203 = vadd.f32 %v2202, %v2196
      %v2204 = vadd.f32 %v2203, %v2197
      %v2205 = vadd.f32 %v2204, %v2198
      %v2206 = vadd.f32 %v2205, %v2199
      %v2207 = vadd.f32 %v2206, %v2200
      %v2208 = vadd.f32 %v2207, %v2201
      %v2209 = vrot.slane %v2208, 4
      %v2210 = vadd.f32 %v2208, %v2209
      %v2211 = vrot.slane %v2210, 2
      %v2212 = vadd.f32 %v2210, %v2211
      %v2213 = vrot.slane %v2212, 1
      %v2214 = vadd.f32 %v2212, %v2213
      %2215 = vst [vmem:[%s541] sm:$0x1] %v2214
      %v2216 = vmul.f32 %v2194, %v2194
      %v2217 = vmul.f32 %v2195, %v2195
      %v2218 = vmul.f32 %v2196, %v2196
      %v2219 = vmul.f32 %v2197, %v2197
      %v2220 = vmul.f32 %v2198, %v2198
      %v2221 = vmul.f32 %v2199, %v2199
      %v2222 = vmul.f32 %v2200, %v2200
      %v2223 = vmul.f32 %v2201, %v2201
      %v2224 = vadd.f32 %v2216, %v2217
      %v2225 = vadd.f32 %v2224, %v2218
      %v2226 = vadd.f32 %v2225, %v2219
      %v2227 = vadd.f32 %v2226, %v2220
      %v2228 = vadd.f32 %v2227, %v2221
      %v2229 = vadd.f32 %v2228, %v2222
      %v2230 = vadd.f32 %v2229, %v2223
      %v2231 = vrot.slane %v2230, 4
      %v2232 = vadd.f32 %v2230, %v2231
      %v2233 = vrot.slane %v2232, 2
      %v2234 = vadd.f32 %v2232, %v2233
      %v2235 = vrot.slane %v2234, 1
      %v2236 = vadd.f32 %v2234, %v2235
      %2237 = vst [vmem:[%s544] sm:$0x1] %v2236
      %v2238 = vpack.c.bf16 %v2194, %v2194
      %v2239 = vpack.c.bf16 %v2195, %v2195
      %v2240 = vpack.c.bf16 %v2196, %v2196
      %v2241 = vpack.c.bf16 %v2197, %v2197
      %v2242 = vpack.c.bf16 %v2198, %v2198
      %v2243 = vpack.c.bf16 %v2199, %v2199
      %v2244 = vpack.c.bf16 %v2200, %v2200
      %v2245 = vpack.c.bf16 %v2201, %v2201
      %2246 = vst [vmem:[%s538] sm:$0xf] %v2238
      %2247 = vst [vmem:[%s538 + $0x4] sm:$0xf] %v2239
      %2248 = vst [vmem:[%s538 + $0x8] sm:$0xf] %v2240
      %2249 = vst [vmem:[%s538 + $0xc] sm:$0xf] %v2241
      %2250 = vst [vmem:[%s538 + $0x10] sm:$0xf] %v2242
      %2251 = vst [vmem:[%s538 + $0x14] sm:$0xf] %v2243
      %2252 = vst [vmem:[%s538 + $0x18] sm:$0xf] %v2244
      %2253 = vst [vmem:[%s538 + $0x1c] sm:$0xf] %v2245
      %p2254 = scmp.lt.s32.totalorder %s26, 1
      %s2255 = scalar_select %p2254, %s26, 1
      %s2256 = smul.addr %s2255, 8
      %s2257 = smul.addr %s2256, 4
      %s2258 = scalar_lea.vmem %s12, %s2257
      %p2259 = scmp.lt.s32.totalorder %s26, 1
      %s2260 = scalar_select %p2259, %s26, 1
      %s2261 = scalar_lea.vmem %s13, %s2260
      %p2262 = scmp.lt.s32.totalorder %s26, 1
      %s2263 = scalar_select %p2262, %s26, 1
      %s2264 = scalar_lea.vmem %s14, %s2263
      // Predicated region
      $region69: #{res_unet_down_block_forward.6} parent=67 // pred_check
        %p2265 = pneg %p316
      $region70: #{res_unet_down_block_forward.6} parent=67 // pred_check_branch
        %2267 = sbr.rel (%p2265) target = $region72
      $region71: #{res_unet_down_block_forward.6} parent=67 // pred_region
        _
      $region72: #{res_unet_down_block_forward.6} parent=67 // pred_fallthru
        _
      // Predicated region
      $region73: #{res_unet_down_block_forward.6} parent=67 // pred_check
        %p2268 = pneg %p342
      $region74: #{res_unet_down_block_forward.6} parent=67 // pred_check_branch
        %2270 = sbr.rel (%p2268) target = $region76
      $region75: #{res_unet_down_block_forward.6} parent=67 // pred_region
        _
      $region76: #{res_unet_down_block_forward.6} parent=67 // pred_fallthru
        _
      // Predicated region
      $region77: #{res_unet_down_block_forward.6} parent=67 // pred_check
        %p2271 = pneg %p368
      $region78: #{res_unet_down_block_forward.6} parent=67 // pred_check_branch
        %2273 = sbr.rel (%p2271) target = $region80
      $region79: #{res_unet_down_block_forward.6} parent=67 // pred_region
        _
      $region80: #{res_unet_down_block_forward.6} parent=67 // pred_fallthru
        _
    $region68: #{res_unet_down_block_forward.6} parent=5 // pred_fallthru
      _
    %p2274 = scmp.le.s32.totalorder 2, %s21
    // Predicated region
    $region81: #{res_unet_down_block_forward.6} parent=5 // pred_check
      %p2275 = pneg %p2274
    $region82: #{res_unet_down_block_forward.6} parent=5 // pred_check_branch
      %2277 = sbr.rel (%p2275) target = $region84
    $region83: #{res_unet_down_block_forward.6} parent=5 // pred_region
      %s2278 = ssub.s32 %s21, 2
      // Predicated region
      $region85: #{res_unet_down_block_forward.6} parent=83 // pred_check
        %p2279 = pneg %p322
      $region86: #{res_unet_down_block_forward.6} parent=83 // pred_check_branch
        %2281 = sbr.rel (%p2279) target = $region88
      $region87: #{res_unet_down_block_forward.6} parent=83 // pred_region
        %p2282 = scmp.lt.s32.totalorder %s27, 1
        %s2283 = scalar_select %p2282, %s27, 1
        %s2284 = smul.addr %s2283, 8
        %s2285 = smul.addr %s2284, 4
        %s2286 = scalar_lea.vmem %s12, %s2285
      $region88: #{res_unet_down_block_forward.6} parent=83 // pred_fallthru
        _
      // Predicated region
      $region89: #{res_unet_down_block_forward.6} parent=83 // pred_check
        %p2287 = pneg %p348
      $region90: #{res_unet_down_block_forward.6} parent=83 // pred_check_branch
        %2289 = sbr.rel (%p2287) target = $region92
      $region91: #{res_unet_down_block_forward.6} parent=83 // pred_region
        %p2290 = scmp.lt.s32.totalorder %s27, 1
        %s2291 = scalar_select %p2290, %s27, 1
        %s2292 = scalar_lea.vmem %s13, %s2291
      $region92: #{res_unet_down_block_forward.6} parent=83 // pred_fallthru
        _
      // Predicated region
      $region93: #{res_unet_down_block_forward.6} parent=83 // pred_check
        %p2293 = pneg %p374
      $region94: #{res_unet_down_block_forward.6} parent=83 // pred_check_branch
        %2295 = sbr.rel (%p2293) target = $region96
      $region95: #{res_unet_down_block_forward.6} parent=83 // pred_region
        %p2296 = scmp.lt.s32.totalorder %s27, 1
        %s2297 = scalar_select %p2296, %s27, 1
        %s2298 = scalar_lea.vmem %s14, %s2297
      $region96: #{res_unet_down_block_forward.6} parent=83 // pred_fallthru
        _
    $region84: #{res_unet_down_block_forward.6} parent=5 // pred_fallthru
      _
  $region6: #{res_unet_down_block_forward.6} parent=0 // loop_footer
    %s25 = sadd.s32 1, %s21
  $region7: #{res_unet_down_block_forward.6} parent=0 // loop_footer_branch
    %20 = sbr.rel target = $region3
  $region8: #{res_unet_down_block_forward.6} parent=0 // loop_exit
    _

// kernel: res_unet_down_block_forward.7
$region0: #{res_unet_down_block_forward.7}
  #allocation0 [shape = 'u32[]', space=smem, size = 0x4, offset = 0x4, fixed_abs, tag = 'smem constant byte address 0x4 - core index']
  #allocation1 [shape = 'u32[144,128]{1,0:T(1,128)}', space=vmem, size = 0x12000, scoped, tag = 'internal scratch']
  %s0 = inlined_call_operand.vmem [shape: bf16[2,10,10,128], index: 0, kind: input, shape index: {}]
  %s1 = inlined_call_operand.vmem [shape: f32[1,10,10,1], index: 1, kind: input, shape index: {}]
  %s2 = inlined_call_operand.vmem [shape: f32[1,128], index: 2, kind: input, shape index: {}]
  %s3 = inlined_call_operand.vmem [shape: f32[1,128], index: 3, kind: input, shape index: {}]
  %s4 = inlined_call_operand.vmem [shape: bf16[9,128,128], index: 4, kind: input, shape index: {}]
  %s5 = inlined_call_operand.vmem [shape: f32[1,128], index: 5, kind: input, shape index: {}]
  %s6 = inlined_call_operand.vmem [shape: f32[2,8,8,128], index: 6, kind: input, shape index: {}]
  %s7 = inlined_call_operand.vmem [shape: f32[1,128], index: 7, kind: input, shape index: {}]
  %s8 = inlined_call_operand.vmem [shape: f32[1,128], index: 8, kind: input, shape index: {}]
  %s9 = inlined_call_operand.vmem [shape: f32[2,8,8,128], index: 9, kind: output, shape index: {0}]
  %s10 = inlined_call_operand.hbm [shape: f32[2,1,128], index: 10, kind: output, shape index: {1}]
  %s11 = inlined_call_operand.hbm [shape: f32[2,1,128], index: 11, kind: output, shape index: {2}]
  %12 = xla_tuple %s9, %s10, %s11
  %s13 = sld [smem:[#allocation0]]
  $region85: #{res_unet_down_block_forward.7} parent=0
    _
  %s15 = ssub.s32 1, %s13
  %s16 = scalar_select 0, %s15, %s13
  $region1: #{res_unet_down_block_forward.7} parent=0
    #allocation2 [shape = 'u8[1024]{0}', space=vmem, size = 0x400, scoped, tag = 'output window, operand 1']
    #allocation3 [shape = 's32[2]{0}', space=sflag, size = 0x8, scoped, tag = 'scoped memory for res_unet_down_block_forward.7']
    #allocation4 [shape = 'u8[1024]{0}', space=vmem, size = 0x400, scoped, tag = 'output window, operand 2']
    #allocation5 [shape = 's32[2]{0}', space=sflag, size = 0x8, scoped, tag = 'scoped memory for res_unet_down_block_forward.7']
    %17 = vsyncpa [#allocation3], 0
    %s18 = scalar_lea.sflag [#allocation3], 1
    %19 = vsyncpa %s18, 0
    %20 = vsyncpa [#allocation5], 0
    %s21 = scalar_lea.sflag [#allocation5], 1
    %22 = vsyncpa %s21, 0
    loop: start=0, step=1, limit=4
    $region2: #{res_unet_down_block_forward.7} parent=1 // loop_pre_header
      _
    $region3: #{res_unet_down_block_forward.7} parent=1 // loop_header
      %s24 = sphi 0, %s28
      %p25 = scmp.ge.s32.totalorder %s24, 4
      %s34 = sphi 0, %s36
      %s37 = sphi 0, %s34
      %s38 = sphi 0, %s37
      %s54 = sphi 0, %s38
      %s58 = sphi 0, %s58
      %s60 = sphi 0, %s58
      %s61 = sphi 0, %s60
      %s75 = sphi 0, %s61
      %s79 = sphi 0, %s79
      %s81 = sphi 0, %s79
      %s82 = sphi 0, %s81
      %s96 = sphi 0, %s82
      %s100 = sphi 0, %s100
      %s102 = sphi 0, %s100
      %s103 = sphi 0, %s102
      %s117 = sphi 0, %s103
      %s121 = sphi 0, %s121
      %s123 = sphi 0, %s121
      %s124 = sphi 0, %s123
      %s138 = sphi 0, %s124
      %s142 = sphi 0, %s142
      %s144 = sphi 0, %s142
      %s145 = sphi 0, %s144
      %s159 = sphi 0, %s145
      %s165 = sphi 0, %s167
      %s168 = sphi 0, %s165
      %s169 = sphi 0, %s168
      %s185 = sphi 0, %s169
      %s189 = sphi 0, %s189
      %s191 = sphi 0, %s189
      %s192 = sphi 0, %s191
      %s206 = sphi 0, %s192
      %s210 = sphi 0, %s210
      %s212 = sphi 0, %s210
      %s213 = sphi 0, %s212
      %s227 = sphi 0, %s213
      %s233 = sphi 0, %s235
      %s236 = sphi 0, %s233
      %s237 = sphi 0, %s236
      %s253 = sphi 0, %s237
      %s259 = sphi 0, %s261
      %s262 = sphi 0, %s259
      %s263 = sphi 0, %s262
      %s279 = sphi 0, %s263
      %s285 = sphi 0, %s287
      %s288 = sphi 0, %s285
      %s289 = sphi 0, %s288
      %s305 = sphi 0, %s289
    $region4: #{res_unet_down_block_forward.7} parent=1 // loop_header_branch
      %27 = sbr.rel (%p25) target = $region8
    $region5: #{res_unet_down_block_forward.7} parent=1 // loop_body
      %s29 = ssub.s32 %s24, 1
      %s30 = ssub.s32 %s24, 2
      %s31 = sadd.s32 %s24, 1
      %s32 = ssub.s32 %s24, %s31
      %p33 = scmp.eq.s32.totalorder %s32, 0
      %s35 = sadd.s32 %s34, 1
      %s36 = scalar_select %p33, %s34, %s35
      %p39 = pneg %p33
      %p40 = scmp.eq.s32.totalorder %s24, 1
      %p41 = por %p39, %p40
      %p42 = scmp.ne.s32.totalorder %s34, %s37
      %p43 = scmp.eq.s32.totalorder %s24, 0
      %p44 = por %p42, %p43
      %p45 = scmp.ne.s32.totalorder %s34, %s37
      %p46 = scmp.eq.s32.totalorder %s29, 1
      %p47 = por %p45, %p46
      %p48 = scmp.ne.s32.totalorder %s37, %s38
      %p49 = scmp.eq.s32.totalorder %s29, 0
      %p50 = por %p48, %p49
      %p51 = scmp.ne.s32.totalorder %s37, %s38
      %p52 = scmp.eq.s32.totalorder %s30, 1
      %p53 = por %p51, %p52
      %p55 = scmp.ne.s32.totalorder %s38, %s54
      %p56 = scmp.eq.s32.totalorder %s30, 0
      %p57 = por %p55, %p56
      %s59 = sadd.s32 %s58, 1
      %p62 = scmp.eq.s32.totalorder %s24, 1
      %p63 = scmp.ne.s32.totalorder %s58, %s60
      %p64 = scmp.eq.s32.totalorder %s24, 0
      %p65 = por %p63, %p64
      %p66 = scmp.ne.s32.totalorder %s58, %s60
      %p67 = scmp.eq.s32.totalorder %s29, 1
      %p68 = por %p66, %p67
      %p69 = scmp.ne.s32.totalorder %s60, %s61
      %p70 = scmp.eq.s32.totalorder %s29, 0
      %p71 = por %p69, %p70
      %p72 = scmp.ne.s32.totalorder %s60, %s61
      %p73 = scmp.eq.s32.totalorder %s30, 1
      %p74 = por %p72, %p73
      %p76 = scmp.ne.s32.totalorder %s61, %s75
      %p77 = scmp.eq.s32.totalorder %s30, 0
      %p78 = por %p76, %p77
      %s80 = sadd.s32 %s79, 1
      %p83 = scmp.eq.s32.totalorder %s24, 1
      %p84 = scmp.ne.s32.totalorder %s79, %s81
      %p85 = scmp.eq.s32.totalorder %s24, 0
      %p86 = por %p84, %p85
      %p87 = scmp.ne.s32.totalorder %s79, %s81
      %p88 = scmp.eq.s32.totalorder %s29, 1
      %p89 = por %p87, %p88
      %p90 = scmp.ne.s32.totalorder %s81, %s82
      %p91 = scmp.eq.s32.totalorder %s29, 0
      %p92 = por %p90, %p91
      %p93 = scmp.ne.s32.totalorder %s81, %s82
      %p94 = scmp.eq.s32.totalorder %s30, 1
      %p95 = por %p93, %p94
      %p97 = scmp.ne.s32.totalorder %s82, %s96
      %p98 = scmp.eq.s32.totalorder %s30, 0
      %p99 = por %p97, %p98
      %s101 = sadd.s32 %s100, 1
      %p104 = scmp.eq.s32.totalorder %s24, 1
      %p105 = scmp.ne.s32.totalorder %s100, %s102
      %p106 = scmp.eq.s32.totalorder %s24, 0
      %p107 = por %p105, %p106
      %p108 = scmp.ne.s32.totalorder %s100, %s102
      %p109 = scmp.eq.s32.totalorder %s29, 1
      %p110 = por %p108, %p109
      %p111 = scmp.ne.s32.totalorder %s102, %s103
      %p112 = scmp.eq.s32.totalorder %s29, 0
      %p113 = por %p111, %p112
      %p114 = scmp.ne.s32.totalorder %s102, %s103
      %p115 = scmp.eq.s32.totalorder %s30, 1
      %p116 = por %p114, %p115
      %p118 = scmp.ne.s32.totalorder %s103, %s117
      %p119 = scmp.eq.s32.totalorder %s30, 0
      %p120 = por %p118, %p119
      %s122 = sadd.s32 %s121, 1
      %p125 = scmp.eq.s32.totalorder %s24, 1
      %p126 = scmp.ne.s32.totalorder %s121, %s123
      %p127 = scmp.eq.s32.totalorder %s24, 0
      %p128 = por %p126, %p127
      %p129 = scmp.ne.s32.totalorder %s121, %s123
      %p130 = scmp.eq.s32.totalorder %s29, 1
      %p131 = por %p129, %p130
      %p132 = scmp.ne.s32.totalorder %s123, %s124
      %p133 = scmp.eq.s32.totalorder %s29, 0
      %p134 = por %p132, %p133
      %p135 = scmp.ne.s32.totalorder %s123, %s124
      %p136 = scmp.eq.s32.totalorder %s30, 1
      %p137 = por %p135, %p136
      %p139 = scmp.ne.s32.totalorder %s124, %s138
      %p140 = scmp.eq.s32.totalorder %s30, 0
      %p141 = por %p139, %p140
      %s143 = sadd.s32 %s142, 1
      %p146 = scmp.eq.s32.totalorder %s24, 1
      %p147 = scmp.ne.s32.totalorder %s142, %s144
      %p148 = scmp.eq.s32.totalorder %s24, 0
      %p149 = por %p147, %p148
      %p150 = scmp.ne.s32.totalorder %s142, %s144
      %p151 = scmp.eq.s32.totalorder %s29, 1
      %p152 = por %p150, %p151
      %p153 = scmp.ne.s32.totalorder %s144, %s145
      %p154 = scmp.eq.s32.totalorder %s29, 0
      %p155 = por %p153, %p154
      %p156 = scmp.ne.s32.totalorder %s144, %s145
      %p157 = scmp.eq.s32.totalorder %s30, 1
      %p158 = por %p156, %p157
      %p160 = scmp.ne.s32.totalorder %s145, %s159
      %p161 = scmp.eq.s32.totalorder %s30, 0
      %p162 = por %p160, %p161
      %s163 = ssub.s32 %s24, %s31
      %p164 = scmp.eq.s32.totalorder %s163, 0
      %s166 = sadd.s32 %s165, 1
      %s167 = scalar_select %p164, %s165, %s166
      %p170 = pneg %p164
      %p171 = scmp.eq.s32.totalorder %s24, 1
      %p172 = por %p170, %p171
      %p173 = scmp.ne.s32.totalorder %s165, %s168
      %p174 = scmp.eq.s32.totalorder %s24, 0
      %p175 = por %p173, %p174
      %p176 = scmp.ne.s32.totalorder %s165, %s168
      %p177 = scmp.eq.s32.totalorder %s29, 1
      %p178 = por %p176, %p177
      %p179 = scmp.ne.s32.totalorder %s168, %s169
      %p180 = scmp.eq.s32.totalorder %s29, 0
      %p181 = por %p179, %p180
      %p182 = scmp.ne.s32.totalorder %s168, %s169
      %p183 = scmp.eq.s32.totalorder %s30, 1
      %p184 = por %p182, %p183
      %p186 = scmp.ne.s32.totalorder %s169, %s185
      %p187 = scmp.eq.s32.totalorder %s30, 0
      %p188 = por %p186, %p187
      %s190 = sadd.s32 %s189, 1
      %p193 = scmp.eq.s32.totalorder %s24, 1
      %p194 = scmp.ne.s32.totalorder %s189, %s191
      %p195 = scmp.eq.s32.totalorder %s24, 0
      %p196 = por %p194, %p195
      %p197 = scmp.ne.s32.totalorder %s189, %s191
      %p198 = scmp.eq.s32.totalorder %s29, 1
      %p199 = por %p197, %p198
      %p200 = scmp.ne.s32.totalorder %s191, %s192
      %p201 = scmp.eq.s32.totalorder %s29, 0
      %p202 = por %p200, %p201
      %p203 = scmp.ne.s32.totalorder %s191, %s192
      %p204 = scmp.eq.s32.totalorder %s30, 1
      %p205 = por %p203, %p204
      %p207 = scmp.ne.s32.totalorder %s192, %s206
      %p208 = scmp.eq.s32.totalorder %s30, 0
      %p209 = por %p207, %p208
      %s211 = sadd.s32 %s210, 1
      %p214 = scmp.eq.s32.totalorder %s24, 1
      %p215 = scmp.ne.s32.totalorder %s210, %s212
      %p216 = scmp.eq.s32.totalorder %s24, 0
      %p217 = por %p215, %p216
      %p218 = scmp.ne.s32.totalorder %s210, %s212
      %p219 = scmp.eq.s32.totalorder %s29, 1
      %p220 = por %p218, %p219
      %p221 = scmp.ne.s32.totalorder %s212, %s213
      %p222 = scmp.eq.s32.totalorder %s29, 0
      %p223 = por %p221, %p222
      %p224 = scmp.ne.s32.totalorder %s212, %s213
      %p225 = scmp.eq.s32.totalorder %s30, 1
      %p226 = por %p224, %p225
      %p228 = scmp.ne.s32.totalorder %s213, %s227
      %p229 = scmp.eq.s32.totalorder %s30, 0
      %p230 = por %p228, %p229
      %s231 = ssub.s32 %s24, %s31
      %p232 = scmp.eq.s32.totalorder %s231, 0
      %s234 = sadd.s32 %s233, 1
      %s235 = scalar_select %p232, %s233, %s234
      %p238 = pneg %p232
      %p239 = scmp.eq.s32.totalorder %s24, 1
      %p240 = por %p238, %p239
      %p241 = scmp.ne.s32.totalorder %s233, %s236
      %p242 = scmp.eq.s32.totalorder %s24, 0
      %p243 = por %p241, %p242
      %p244 = scmp.ne.s32.totalorder %s233, %s236
      %p245 = scmp.eq.s32.totalorder %s29, 1
      %p246 = por %p244, %p245
      %p247 = scmp.ne.s32.totalorder %s236, %s237
      %p248 = scmp.eq.s32.totalorder %s29, 0
      %p249 = por %p247, %p248
      %p250 = scmp.ne.s32.totalorder %s236, %s237
      %p251 = scmp.eq.s32.totalorder %s30, 1
      %p252 = por %p250, %p251
      %p254 = scmp.ne.s32.totalorder %s237, %s253
      %p255 = scmp.eq.s32.totalorder %s30, 0
      %p256 = por %p254, %p255
      %s257 = ssub.s32 %s24, %s31
      %p258 = scmp.eq.s32.totalorder %s257, 0
      %s260 = sadd.s32 %s259, 1
      %s261 = scalar_select %p258, %s259, %s260
      %p264 = pneg %p258
      %p265 = scmp.eq.s32.totalorder %s24, 1
      %p266 = por %p264, %p265
      %p267 = scmp.ne.s32.totalorder %s259, %s262
      %p268 = scmp.eq.s32.totalorder %s24, 0
      %p269 = por %p267, %p268
      %p270 = scmp.ne.s32.totalorder %s259, %s262
      %p271 = scmp.eq.s32.totalorder %s29, 1
      %p272 = por %p270, %p271
      %p273 = scmp.ne.s32.totalorder %s262, %s263
      %p274 = scmp.eq.s32.totalorder %s29, 0
      %p275 = por %p273, %p274
      %p276 = scmp.ne.s32.totalorder %s262, %s263
      %p277 = scmp.eq.s32.totalorder %s30, 1
      %p278 = por %p276, %p277
      %p280 = scmp.ne.s32.totalorder %s263, %s279
      %p281 = scmp.eq.s32.totalorder %s30, 0
      %p282 = por %p280, %p281
      %s283 = ssub.s32 %s24, %s31
      %p284 = scmp.eq.s32.totalorder %s283, 0
      %s286 = sadd.s32 %s285, 1
      %s287 = scalar_select %p284, %s285, %s286
      %p290 = pneg %p284
      %p291 = scmp.eq.s32.totalorder %s24, 1
      %p292 = por %p290, %p291
      %p293 = scmp.ne.s32.totalorder %s285, %s288
      %p294 = scmp.eq.s32.totalorder %s24, 0
      %p295 = por %p293, %p294
      %p296 = scmp.ne.s32.totalorder %s285, %s288
      %p297 = scmp.eq.s32.totalorder %s29, 1
      %p298 = por %p296, %p297
      %p299 = scmp.ne.s32.totalorder %s288, %s289
      %p300 = scmp.eq.s32.totalorder %s29, 0
      %p301 = por %p299, %p300
      %p302 = scmp.ne.s32.totalorder %s288, %s289
      %p303 = scmp.eq.s32.totalorder %s30, 1
      %p304 = por %p302, %p303
      %p306 = scmp.ne.s32.totalorder %s289, %s305
      %p307 = scmp.eq.s32.totalorder %s30, 0
      %p308 = por %p306, %p307
      %p309 = scmp.le.s32.totalorder 1, %s24
      %p310 = scmp.lt.s32.totalorder %s24, 3
      %p311 = pnand %p309, %p310
      %p312 = pneg %p311
      // Predicated region
      $region9: #{res_unet_down_block_forward.7} parent=5 // pred_check
        _
      $region10: #{res_unet_down_block_forward.7} parent=5 // pred_check_branch
        %314 = sbr.rel (%p311) target = $region12
      $region11: #{res_unet_down_block_forward.7} parent=5 // pred_region
        %s315 = ssub.s32 %s24, 1
        // Predicated region
        $region13: #{res_unet_down_block_forward.7} parent=11 // pred_check
          %p316 = pneg %p71
        $region14: #{res_unet_down_block_forward.7} parent=11 // pred_check_branch
          %318 = sbr.rel (%p316) target = $region16
        $region15: #{res_unet_down_block_forward.7} parent=11 // pred_region
          _
        $region16: #{res_unet_down_block_forward.7} parent=11 // pred_fallthru
          _
        // Predicated region
        $region17: #{res_unet_down_block_forward.7} parent=11 // pred_check
          %p319 = pneg %p92
        $region18: #{res_unet_down_block_forward.7} parent=11 // pred_check_branch
          %321 = sbr.rel (%p319) target = $region20
        $region19: #{res_unet_down_block_forward.7} parent=11 // pred_region
          _
        $region20: #{res_unet_down_block_forward.7} parent=11 // pred_fallthru
          _
        // Predicated region
        $region21: #{res_unet_down_block_forward.7} parent=11 // pred_check
          %p322 = pneg %p113
        $region22: #{res_unet_down_block_forward.7} parent=11 // pred_check_branch
          %324 = sbr.rel (%p322) target = $region24
        $region23: #{res_unet_down_block_forward.7} parent=11 // pred_region
          _
        $region24: #{res_unet_down_block_forward.7} parent=11 // pred_fallthru
          _
        // Predicated region
        $region25: #{res_unet_down_block_forward.7} parent=11 // pred_check
          %p325 = pneg %p134
        $region26: #{res_unet_down_block_forward.7} parent=11 // pred_check_branch
          %327 = sbr.rel (%p325) target = $region28
        $region27: #{res_unet_down_block_forward.7} parent=11 // pred_region
          _
        $region28: #{res_unet_down_block_forward.7} parent=11 // pred_fallthru
          _
        // Predicated region
        $region29: #{res_unet_down_block_forward.7} parent=11 // pred_check
          %p328 = pneg %p155
        $region30: #{res_unet_down_block_forward.7} parent=11 // pred_check_branch
          %330 = sbr.rel (%p328) target = $region32
        $region31: #{res_unet_down_block_forward.7} parent=11 // pred_region
          _
        $region32: #{res_unet_down_block_forward.7} parent=11 // pred_fallthru
          _
        // Predicated region
        $region33: #{res_unet_down_block_forward.7} parent=11 // pred_check
          %p331 = pneg %p202
        $region34: #{res_unet_down_block_forward.7} parent=11 // pred_check_branch
          %333 = sbr.rel (%p331) target = $region36
        $region35: #{res_unet_down_block_forward.7} parent=11 // pred_region
          _
        $region36: #{res_unet_down_block_forward.7} parent=11 // pred_fallthru
          _
        // Predicated region
        $region37: #{res_unet_down_block_forward.7} parent=11 // pred_check
          %p334 = pneg %p223
        $region38: #{res_unet_down_block_forward.7} parent=11 // pred_check_branch
          %336 = sbr.rel (%p334) target = $region40
        $region39: #{res_unet_down_block_forward.7} parent=11 // pred_region
          _
        $region40: #{res_unet_down_block_forward.7} parent=11 // pred_fallthru
          _
      $region12: #{res_unet_down_block_forward.7} parent=5 // pred_fallthru
        _
      %p337 = scmp.lt.s32.totalorder %s24, 2
      // Predicated region
      $region41: #{res_unet_down_block_forward.7} parent=5 // pred_check
        %p338 = pneg %p337
      $region42: #{res_unet_down_block_forward.7} parent=5 // pred_check_branch
        %340 = sbr.rel (%p338) target = $region44
      $region43: #{res_unet_down_block_forward.7} parent=5 // pred_region
        // Predicated region
        $region45: #{res_unet_down_block_forward.7} parent=43 // pred_check
          %p341 = pneg %p44
        $region46: #{res_unet_down_block_forward.7} parent=43 // pred_check_branch
          %343 = sbr.rel (%p341) target = $region48
        $region47: #{res_unet_down_block_forward.7} parent=43 // pred_region
          %p344 = scmp.lt.s32.totalorder %s24, 1
          %s345 = scalar_select %p344, %s24, 1
          %s346 = smul.addr %s345, 20
          %s347 = smul.addr %s346, 4
          %s348 = scalar_lea.vmem %s0, %s347
        $region48: #{res_unet_down_block_forward.7} parent=43 // pred_fallthru
          _
        // Predicated region
        $region49: #{res_unet_down_block_forward.7} parent=43 // pred_check
          %p349 = pneg %p175
        $region50: #{res_unet_down_block_forward.7} parent=43 // pred_check_branch
          %351 = sbr.rel (%p349) target = $region52
        $region51: #{res_unet_down_block_forward.7} parent=43 // pred_region
          %p352 = scmp.lt.s32.totalorder %s24, 1
          %s353 = scalar_select %p352, %s24, 1
          %s354 = smul.addr %s353, 8
          %s355 = smul.addr %s354, 8
          %s356 = scalar_lea.vmem %s6, %s355
        $region52: #{res_unet_down_block_forward.7} parent=43 // pred_fallthru
          _
      $region44: #{res_unet_down_block_forward.7} parent=5 // pred_fallthru
        _
      %p357 = scmp.le.s32.totalorder 1, %s24
      %p358 = scmp.lt.s32.totalorder %s24, 3
      %p359 = pnand %p357, %p358
      %p360 = pneg %p359
      // Predicated region
      $region53: #{res_unet_down_block_forward.7} parent=5 // pred_check
        _
      $region54: #{res_unet_down_block_forward.7} parent=5 // pred_check_branch
        %362 = sbr.rel (%p359) target = $region56
      $region55: #{res_unet_down_block_forward.7} parent=5 // pred_region
        %s363 = ssub.s32 %s24, 1
        %p364 = scmp.lt.s32.totalorder %s29, 1
        %s365 = scalar_select %p364, %s29, 1
        %s366 = smul.addr %s365, 20
        %s367 = smul.addr %s366, 4
        %s368 = scalar_lea.vmem %s0, %s367
        %p369 = pneg %p50
        %p370 = pneg %p47
        %p371 = pneg %p71
        %p372 = pneg %p68
        %p373 = pneg %p92
        %p374 = pneg %p89
        %p375 = pneg %p113
        %p376 = pneg %p110
        %p377 = pneg %p134
        %p378 = pneg %p131
        %p379 = pneg %p155
        %p380 = pneg %p152
        %p381 = scmp.lt.s32.totalorder %s29, 1
        %s382 = scalar_select %p381, %s29, 1
        %s383 = smul.addr %s382, 8
        %s384 = smul.addr %s383, 8
        %s385 = scalar_lea.vmem %s6, %s384
        %p386 = pneg %p181
        %p387 = pneg %p178
        %p388 = pneg %p202
        %p389 = pneg %p199
        %p390 = pneg %p223
        %p391 = pneg %p220
        %p392 = pneg %p249
        %p393 = pneg %p246
        %p394 = scmp.lt.s32.totalorder %s29, 1
        %s395 = scalar_select %p394, %s29, 1
        %s396 = smul.addr %s395, 8
        %s397 = smul.addr %s396, 8
        %s398 = scalar_lea.vmem %s9, %s397
        %p399 = pneg %p275
        %p400 = pneg %p272
        %s401 = sand.u32 %s262, 1
        %s402 = scalar_lea.sflag [#allocation3], %s401
        %s403 = sand.u32 %s262, 1
        %s404 = scalar_lea.vmem [#allocation2], %s403
        %p405 = pneg %p301
        %p406 = pneg %p298
        %s407 = sand.u32 %s288, 1
        %s408 = scalar_lea.sflag [#allocation5], %s407
        %s409 = sand.u32 %s288, 1
        %s410 = scalar_lea.vmem [#allocation4], %s409
        %p411 = scmp.lt.s32.totalorder %s29, 1
        %s412 = scalar_select %p411, %s29, 1
        %s413 = smul.addr %s412, 20
        %s414 = smul.addr %s413, 4
        %s415 = scalar_lea.vmem %s0, %s414
        %p416 = scmp.lt.s32.totalorder %s29, 1
        %s417 = scalar_select %p416, %s29, 1
        %s418 = smul.addr %s417, 8
        %s419 = smul.addr %s418, 8
        %s420 = scalar_lea.vmem %s6, %s419
        %p421 = scmp.lt.s32.totalorder %s29, 1
        %s422 = scalar_select %p421, %s29, 1
        %s423 = smul.addr %s422, 8
        %s424 = smul.addr %s423, 8
        %s425 = scalar_lea.vmem %s9, %s424
        %v427 = vld [vmem:[%s2] sm:$0x1]
        %v428 = vld [vmem:[%s3] sm:$0x1]
        %v429 = vld [vmem:[%s415] sm:$0xf]
        %v430 = vld [vmem:[%s415 + $0x8] sm:$0xf]
        %v431 = vld [vmem:[%s415 + $0x10] sm:$0xf]
        %v432 = vld [vmem:[%s415 + $0x18] sm:$0xf]
        %v433 = vld [vmem:[%s415 + $0x20] sm:$0xf]
        %v434 = vld [vmem:[%s415 + $0x28] sm:$0xf]
        %v435 = vld [vmem:[%s415 + $0x30] sm:$0xf]
        %v436 = vld [vmem:[%s415 + $0x38] sm:$0xf]
        %v437 = vunpack.c.l.bf16 %v429
        %v438 = vunpack.c.l.bf16 %v430
        %v439 = vunpack.c.l.bf16 %v431
        %v440 = vunpack.c.l.bf16 %v432
        %v441 = vunpack.c.l.bf16 %v433
        %v442 = vunpack.c.l.bf16 %v434
        %v443 = vunpack.c.l.bf16 %v435
        %v444 = vunpack.c.l.bf16 %v436
        %v445 = vld [vmem:[%s1] sm:$0xff]
        %v446 = vld [vmem:[%s1 + $0x10] sm:$0xff]
        %v447 = vld [vmem:[%s1 + $0x20] sm:$0xff]
        %v448 = vld [vmem:[%s1 + $0x30] sm:$0xff]
        %v449 = vld [vmem:[%s1 + $0x40] sm:$0xff]
        %v450 = vld [vmem:[%s1 + $0x50] sm:$0xff]
        %v451 = vld [vmem:[%s1 + $0x60] sm:$0xff]
        %v452 = vld [vmem:[%s1 + $0x70] sm:$0xff]
        %v454 = vlaneseq
        %v455 = vshrl.u32 %v454, 7
        %v456 = vsub.s32 0, %v455
        %v457 = vrot.slane %v427, %v456
        %v459 = vmul.f32 %v437, %v457
        %v460 = vmul.f32 %v438, %v457
        %v461 = vmul.f32 %v439, %v457
        %v462 = vmul.f32 %v440, %v457
        %v463 = vmul.f32 %v441, %v457
        %v464 = vmul.f32 %v442, %v457
        %v465 = vmul.f32 %v443, %v457
        %v466 = vmul.f32 %v444, %v457
        %v468 = vlaneseq
        %v469 = vshrl.u32 %v468, 7
        %v470 = vsub.s32 0, %v469
        %v471 = vrot.slane %v428, %v470
        %v473 = vadd.f32 %v459, %v471
        %v474 = vadd.f32 %v460, %v471
        %v475 = vadd.f32 %v461, %v471
        %v476 = vadd.f32 %v462, %v471
        %v477 = vadd.f32 %v463, %v471
        %v478 = vadd.f32 %v464, %v471
        %v479 = vadd.f32 %v465, %v471
        %v480 = vadd.f32 %v466, %v471
        %v481 = vmax.f32 %v473, 0.0
        %v482 = vmax.f32 %v474, 0.0
        %v483 = vmax.f32 %v475, 0.0
        %v484 = vmax.f32 %v476, 0.0
        %v485 = vmax.f32 %v477, 0.0
        %v486 = vmax.f32 %v478, 0.0
        %v487 = vmax.f32 %v479, 0.0
        %v488 = vmax.f32 %v480, 0.0
        %490 = vset.pattern.permute.xlu0 0
        %491 = vperm.xlu0 %490, %v445
        %v492 = vpop.permute.xlu0 %491
        %495 = vset.pattern.permute.xlu0 0
        %496 = vperm.xlu0 %495, %v446
        %v497 = vpop.permute.xlu0 %496
        %500 = vset.pattern.permute.xlu0 0
        %501 = vperm.xlu0 %500, %v447
        %v502 = vpop.permute.xlu0 %501
        %505 = vset.pattern.permute.xlu0 0
        %506 = vperm.xlu0 %505, %v448
        %v507 = vpop.permute.xlu0 %506
        %510 = vset.pattern.permute.xlu0 0
        %511 = vperm.xlu0 %510, %v449
        %v512 = vpop.permute.xlu0 %511
        %515 = vset.pattern.permute.xlu0 0
        %516 = vperm.xlu0 %515, %v450
        %v517 = vpop.permute.xlu0 %516
        %520 = vset.pattern.permute.xlu0 0
        %521 = vperm.xlu0 %520, %v451
        %v522 = vpop.permute.xlu0 %521
        %525 = vset.pattern.permute.xlu0 0
        %526 = vperm.xlu0 %525, %v452
        %v527 = vpop.permute.xlu0 %526
        %v529 = vmul.f32 %v481, %v492
        %v530 = vmul.f32 %v482, %v497
        %v531 = vmul.f32 %v483, %v502
        %v532 = vmul.f32 %v484, %v507
        %v533 = vmul.f32 %v485, %v512
        %v534 = vmul.f32 %v486, %v517
        %v535 = vmul.f32 %v487, %v522
        %v536 = vmul.f32 %v488, %v527
        %v537 = vpack.c.bf16 %v530, %v529
        %v538 = vpack.c.bf16 %v532, %v531
        %v539 = vpack.c.bf16 %v534, %v533
        %v540 = vpack.c.bf16 %v536, %v535
        %v541 = vld [vmem:[%s4] sm:$0xf]
        %v542 = vld [vmem:[%s4 + $0x4] sm:$0xf]
        %v543 = vld [vmem:[%s4 + $0x8] sm:$0xf]
        %v544 = vld [vmem:[%s4 + $0xc] sm:$0xf]
        %v545 = vld [vmem:[%s4 + $0x10] sm:$0xf]
        %v546 = vld [vmem:[%s4 + $0x14] sm:$0xf]
        %v547 = vld [vmem:[%s4 + $0x18] sm:$0xf]
        %v548 = vld [vmem:[%s4 + $0x1c] sm:$0xf]
        %v549 = vld [vmem:[%s4 + $0x20] sm:$0xf]
        %v550 = vld [vmem:[%s4 + $0x24] sm:$0xf]
        %v551 = vld [vmem:[%s4 + $0x28] sm:$0xf]
        %v552 = vld [vmem:[%s4 + $0x2c] sm:$0xf]
        %v553 = vld [vmem:[%s4 + $0x30] sm:$0xf]
        %v554 = vld [vmem:[%s4 + $0x34] sm:$0xf]
        %v555 = vld [vmem:[%s4 + $0x38] sm:$0xf]
        %v556 = vld [vmem:[%s4 + $0x3c] sm:$0xf]
        %v557 = vld [vmem:[%s415] sm:$0xf]
        %v558 = vld [vmem:[%s415 + $0x4] sm:$0x1]
        %v559 = vld [vmem:[%s415 + $0x8] sm:$0xf]
        %v560 = vld [vmem:[%s415 + $0xc] sm:$0x1]
        %v561 = vld [vmem:[%s415 + $0x10] sm:$0xf]
        %v562 = vld [vmem:[%s415 + $0x14] sm:$0x1]
        %v563 = vld [vmem:[%s415 + $0x18] sm:$0xf]
        %v564 = vld [vmem:[%s415 + $0x1c] sm:$0x1]
        %v565 = vld [vmem:[%s415 + $0x20] sm:$0xf]
        %v566 = vld [vmem:[%s415 + $0x24] sm:$0x1]
        %v567 = vld [vmem:[%s415 + $0x28] sm:$0xf]
        %v568 = vld [vmem:[%s415 + $0x2c] sm:$0x1]
        %v569 = vld [vmem:[%s415 + $0x30] sm:$0xf]
        %v570 = vld [vmem:[%s415 + $0x34] sm:$0x1]
        %v571 = vld [vmem:[%s415 + $0x38] sm:$0xf]
        %v572 = vld [vmem:[%s415 + $0x3c] sm:$0x1]
        %v573 = vunpack.c.l.bf16 %v557
        %v574 = vunpack.c.l.bf16 %v558
        %v575 = vunpack.c.l.bf16 %v559
        %v576 = vunpack.c.l.bf16 %v560
        %v577 = vunpack.c.l.bf16 %v561
        %v578 = vunpack.c.l.bf16 %v562
        %v579 = vunpack.c.l.bf16 %v563
        %v580 = vunpack.c.l.bf16 %v564
        %v581 = vunpack.c.l.bf16 %v565
        %v582 = vunpack.c.l.bf16 %v566
        %v583 = vunpack.c.l.bf16 %v567
        %v584 = vunpack.c.l.bf16 %v568
        %v585 = vunpack.c.l.bf16 %v569
        %v586 = vunpack.c.l.bf16 %v570
        %v587 = vunpack.c.l.bf16 %v571
        %v588 = vunpack.c.l.bf16 %v572
        %v589 = vld [vmem:[%s1 + $0x1] sm:$0xff]
        %v590 = vld [vmem:[%s1 + $0x11] sm:$0xff]
        %v591 = vld [vmem:[%s1 + $0x21] sm:$0xff]
        %v592 = vld [vmem:[%s1 + $0x31] sm:$0xff]
        %v593 = vld [vmem:[%s1 + $0x41] sm:$0xff]
        %v594 = vld [vmem:[%s1 + $0x51] sm:$0xff]
        %v595 = vld [vmem:[%s1 + $0x61] sm:$0xff]
        %v596 = vld [vmem:[%s1 + $0x71] sm:$0xff]
        %v597 = vmul.f32 %v573, %v457
        %v598 = vmul.f32 %v574, %v457
        %v599 = vmul.f32 %v575, %v457
        %v600 = vmul.f32 %v576, %v457
        %v601 = vmul.f32 %v577, %v457
        %v602 = vmul.f32 %v578, %v457
        %v603 = vmul.f32 %v579, %v457
        %v604 = vmul.f32 %v580, %v457
        %v605 = vmul.f32 %v581, %v457
        %v606 = vmul.f32 %v582, %v457
        %v607 = vmul.f32 %v583, %v457
        %v608 = vmul.f32 %v584, %v457
        %v609 = vmul.f32 %v585, %v457
        %v610 = vmul.f32 %v586, %v457
        %v611 = vmul.f32 %v587, %v457
        %v612 = vmul.f32 %v588, %v457
        %v613 = vadd.f32 %v597, %v471
        %v614 = vadd.f32 %v598, %v471
        %v615 = vadd.f32 %v599, %v471
        %v616 = vadd.f32 %v600, %v471
        %v617 = vadd.f32 %v601, %v471
        %v618 = vadd.f32 %v602, %v471
        %v619 = vadd.f32 %v603, %v471
        %v620 = vadd.f32 %v604, %v471
        %v621 = vadd.f32 %v605, %v471
        %v622 = vadd.f32 %v606, %v471
        %v623 = vadd.f32 %v607, %v471
        %v624 = vadd.f32 %v608, %v471
        %v625 = vadd.f32 %v609, %v471
        %v626 = vadd.f32 %v610, %v471
        %v627 = vadd.f32 %v611, %v471
        %v628 = vadd.f32 %v612, %v471
        %v629 = vmax.f32 %v613, 0.0
        %v630 = vmax.f32 %v614, 0.0
        %v631 = vmax.f32 %v615, 0.0
        %v632 = vmax.f32 %v616, 0.0
        %v633 = vmax.f32 %v617, 0.0
        %v634 = vmax.f32 %v618, 0.0
        %v635 = vmax.f32 %v619, 0.0
        %v636 = vmax.f32 %v620, 0.0
        %v637 = vmax.f32 %v621, 0.0
        %v638 = vmax.f32 %v622, 0.0
        %v639 = vmax.f32 %v623, 0.0
        %v640 = vmax.f32 %v624, 0.0
        %v641 = vmax.f32 %v625, 0.0
        %v642 = vmax.f32 %v626, 0.0
        %v643 = vmax.f32 %v627, 0.0
        %v644 = vmax.f32 %v628, 0.0
        %646 = vset.pattern.permute.xlu0 0
        %647 = vperm.xlu0 %646, %v589
        %v648 = vpop.permute.xlu0 %647
        %650 = vset.pattern.permute.xlu0 0
        %651 = vperm.xlu0 %650, %v590
        %v652 = vpop.permute.xlu0 %651
        %654 = vset.pattern.permute.xlu0 0
        %655 = vperm.xlu0 %654, %v591
        %v656 = vpop.permute.xlu0 %655
        %658 = vset.pattern.permute.xlu0 0
        %659 = vperm.xlu0 %658, %v592
        %v660 = vpop.permute.xlu0 %659
        %662 = vset.pattern.permute.xlu0 0
        %663 = vperm.xlu0 %662, %v593
        %v664 = vpop.permute.xlu0 %663
        %666 = vset.pattern.permute.xlu0 0
        %667 = vperm.xlu0 %666, %v594
        %v668 = vpop.permute.xlu0 %667
        %670 = vset.pattern.permute.xlu0 0
        %671 = vperm.xlu0 %670, %v595
        %v672 = vpop.permute.xlu0 %671
        %674 = vset.pattern.permute.xlu0 0
        %675 = vperm.xlu0 %674, %v596
        %v676 = vpop.permute.xlu0 %675
        %v677 = vrot.slane %v648, 7
        %v678 = vrot.slane %v652, 7
        %v679 = vrot.slane %v656, 7
        %v680 = vrot.slane %v660, 7
        %v681 = vrot.slane %v664, 7
        %v682 = vrot.slane %v668, 7
        %v683 = vrot.slane %v672, 7
        %v684 = vrot.slane %v676, 7
        %v693 = vmul.f32 %v629, %v677
        %v694 = vmul.f32 %v630, %v677
        %v695 = vmul.f32 %v631, %v678
        %v696 = vmul.f32 %v632, %v678
        %v697 = vmul.f32 %v633, %v679
        %v698 = vmul.f32 %v634, %v679
        %v699 = vmul.f32 %v635, %v680
        %v700 = vmul.f32 %v636, %v680
        %v701 = vmul.f32 %v637, %v681
        %v702 = vmul.f32 %v638, %v681
        %v703 = vmul.f32 %v639, %v682
        %v704 = vmul.f32 %v640, %v682
        %v705 = vmul.f32 %v641, %v683
        %v706 = vmul.f32 %v642, %v683
        %v707 = vmul.f32 %v643, %v684
        %v708 = vmul.f32 %v644, %v684
        %vm725 = vcmask 1046528
        %v726 = vrot.slane %v693, 1
        %v727 = vrot.slane %v694, 1
        %v728 = vsel %vm725, %v726, %v727
        %v729 = vrot.slane %v695, 1
        %v730 = vrot.slane %v696, 1
        %v731 = vsel %vm725, %v729, %v730
        %v732 = vrot.slane %v697, 1
        %v733 = vrot.slane %v698, 1
        %v734 = vsel %vm725, %v732, %v733
        %v735 = vrot.slane %v699, 1
        %v736 = vrot.slane %v700, 1
        %v737 = vsel %vm725, %v735, %v736
        %v738 = vrot.slane %v701, 1
        %v739 = vrot.slane %v702, 1
        %v740 = vsel %vm725, %v738, %v739
        %v741 = vrot.slane %v703, 1
        %v742 = vrot.slane %v704, 1
        %v743 = vsel %vm725, %v741, %v742
        %v744 = vrot.slane %v705, 1
        %v745 = vrot.slane %v706, 1
        %v746 = vsel %vm725, %v744, %v745
        %v747 = vrot.slane %v707, 1
        %v748 = vrot.slane %v708, 1
        %v749 = vsel %vm725, %v747, %v748
        %v758 = vpack.c.bf16 %v731, %v728
        %v759 = vpack.c.bf16 %v737, %v734
        %v760 = vpack.c.bf16 %v743, %v740
        %v761 = vpack.c.bf16 %v749, %v746
        %s762 = scalar_lea.vmem %s4, 64
        %v763 = vld [vmem:[%s762] sm:$0xf]
        %v764 = vld [vmem:[%s762 + $0x4] sm:$0xf]
        %v765 = vld [vmem:[%s762 + $0x8] sm:$0xf]
        %v766 = vld [vmem:[%s762 + $0xc] sm:$0xf]
        %v767 = vld [vmem:[%s762 + $0x10] sm:$0xf]
        %v768 = vld [vmem:[%s762 + $0x14] sm:$0xf]
        %v769 = vld [vmem:[%s762 + $0x18] sm:$0xf]
        %v770 = vld [vmem:[%s762 + $0x1c] sm:$0xf]
        %v771 = vld [vmem:[%s762 + $0x20] sm:$0xf]
        %v772 = vld [vmem:[%s762 + $0x24] sm:$0xf]
        %v773 = vld [vmem:[%s762 + $0x28] sm:$0xf]
        %v774 = vld [vmem:[%s762 + $0x2c] sm:$0xf]
        %v775 = vld [vmem:[%s762 + $0x30] sm:$0xf]
        %v776 = vld [vmem:[%s762 + $0x34] sm:$0xf]
        %v777 = vld [vmem:[%s762 + $0x38] sm:$0xf]
        %v778 = vld [vmem:[%s762 + $0x3c] sm:$0xf]
        %v795 = vunpack.c.l.b16 %v763
        %v796 = vunpack.c.l.b16 %v764
        %v797 = vunpack.c.l.b16 %v765
        %v798 = vunpack.c.l.b16 %v766
        %v799 = vunpack.c.l.b16 %v767
        %v800 = vunpack.c.l.b16 %v768
        %v801 = vunpack.c.l.b16 %v769
        %v802 = vunpack.c.l.b16 %v770
        %v803 = vunpack.c.l.b16 %v771
        %v804 = vunpack.c.l.b16 %v772
        %v805 = vunpack.c.l.b16 %v773
        %v806 = vunpack.c.l.b16 %v774
        %v807 = vunpack.c.l.b16 %v775
        %v808 = vunpack.c.l.b16 %v776
        %v809 = vunpack.c.l.b16 %v777
        %v810 = vunpack.c.l.b16 %v778
        %v811 = vpack.c.b16 %v796, %v795
        %v812 = vpack.c.b16 %v798, %v797
        %v813 = vpack.c.b16 %v800, %v799
        %v814 = vpack.c.b16 %v802, %v801
        %v815 = vpack.c.b16 %v804, %v803
        %v816 = vpack.c.b16 %v806, %v805
        %v817 = vpack.c.b16 %v808, %v807
        %v818 = vpack.c.b16 %v810, %v809
        %827 = vmatprep.subr.bf16.mxu0 0
        %828 = vmatpush1.bf16.msra.mxu0 %v818
        %829 = vmatprep.subr.bf16.mxu0 0
        %830 = vmatpush1.bf16.msra.mxu0 %v817
        %831 = vmatprep.subr.bf16.mxu0 0
        %832 = vmatpush1.bf16.msra.mxu0 %v816
        %833 = vmatprep.subr.bf16.mxu0 0
        %834 = vmatpush1.bf16.msra.mxu0 %v815
        %835 = vmatprep.subr.bf16.mxu0 0
        %836 = vmatpush1.bf16.msra.mxu0 %v814
        %837 = vmatprep.subr.bf16.mxu0 0
        %838 = vmatpush1.bf16.msra.mxu0 %v813
        %839 = vmatprep.subr.bf16.mxu0 0
        %840 = vmatpush1.bf16.msra.mxu0 %v812
        %841 = vmatprep.subr.bf16.mxu0 0
        %842 = vmatpush1.bf16.msra.mxu0 %v811
        %843 = vmatprep.subr.bf16.mxu0 0
        %844 = vmatpush2.bf16.msra.mxu0 0
        %845 = vmatprep.subr.bf16.mxu0 0
        %846 = vmatpush2.bf16.msra.mxu0 0
        %847 = vmatprep.subr.bf16.mxu0 0
        %848 = vmatpush2.bf16.msra.mxu0 0
        %849 = vmatprep.subr.bf16.mxu0 0
        %850 = vmatpush2.bf16.msra.mxu0 0
        %851 = vmatprep.subr.bf16.mxu0 0
        %852 = vmatpush2.bf16.msra.mxu0 0
        %853 = vmatprep.subr.bf16.mxu0 0
        %854 = vmatpush2.bf16.msra.mxu0 0
        %855 = vmatprep.subr.bf16.mxu0 0
        %856 = vmatpush2.bf16.msra.mxu0 0
        %857 = vmatprep.subr.bf16.mxu0 0
        %858 = vmatpush2.bf16.msra.mxu0 0
        %859 = vmatprep.mubr.bf16.mxu0 0
        %860 = vmatmul.mubr.bf16.gmra.mxu0 %v758
        %v861 = vpop.f32.mrf.mxu0
        %v862 = vadd.f32 0.0, %v861
        %v863 = vpop.f32.mrf.mxu0
        %v864 = vpop.f32.mrf.mxu0
        %v865 = vadd.f32 0.0, %v864
        %v866 = vpop.f32.mrf.mxu0
        %867 = vmatprep.mubr.bf16.mxu0 0
        %868 = vmatmul.mubr.bf16.gmra.mxu0 %v759
        %v869 = vpop.f32.mrf.mxu0
        %v870 = vadd.f32 0.0, %v869
        %v871 = vpop.f32.mrf.mxu0
        %v872 = vpop.f32.mrf.mxu0
        %v873 = vadd.f32 0.0, %v872
        %v874 = vpop.f32.mrf.mxu0
        %875 = vmatprep.mubr.bf16.mxu0 0
        %876 = vmatmul.mubr.bf16.gmra.mxu0 %v760
        %v877 = vpop.f32.mrf.mxu0
        %v878 = vadd.f32 0.0, %v877
        %v879 = vpop.f32.mrf.mxu0
        %v880 = vpop.f32.mrf.mxu0
        %v881 = vadd.f32 0.0, %v880
        %v882 = vpop.f32.mrf.mxu0
        %883 = vmatprep.mubr.bf16.mxu0 0
        %884 = vmatmul.mubr.bf16.gmra.mxu0 %v761
        %v885 = vpop.f32.mrf.mxu0
        %v886 = vadd.f32 0.0, %v885
        %v887 = vpop.f32.mrf.mxu0
        %v888 = vpop.f32.mrf.mxu0
        %v889 = vadd.f32 0.0, %v888
        %v890 = vpop.f32.mrf.mxu0
        %891 = vdwg.mxu0
        %v908 = vunpack.c.l.b16 %v541
        %v909 = vunpack.c.l.b16 %v542
        %v910 = vunpack.c.l.b16 %v543
        %v911 = vunpack.c.l.b16 %v544
        %v912 = vunpack.c.l.b16 %v545
        %v913 = vunpack.c.l.b16 %v546
        %v914 = vunpack.c.l.b16 %v547
        %v915 = vunpack.c.l.b16 %v548
        %v916 = vunpack.c.l.b16 %v549
        %v917 = vunpack.c.l.b16 %v550
        %v918 = vunpack.c.l.b16 %v551
        %v919 = vunpack.c.l.b16 %v552
        %v920 = vunpack.c.l.b16 %v553
        %v921 = vunpack.c.l.b16 %v554
        %v922 = vunpack.c.l.b16 %v555
        %v923 = vunpack.c.l.b16 %v556
        %v924 = vpack.c.b16 %v909, %v908
        %v925 = vpack.c.b16 %v911, %v910
        %v926 = vpack.c.b16 %v913, %v912
        %v927 = vpack.c.b16 %v915, %v914
        %v928 = vpack.c.b16 %v917, %v916
        %v929 = vpack.c.b16 %v919, %v918
        %v930 = vpack.c.b16 %v921, %v920
        %v931 = vpack.c.b16 %v923, %v922
        %940 = vmatprep.subr.bf16.mxu0 0
        %941 = vmatpush1.bf16.msra.mxu0 %v931
        %942 = vmatprep.subr.bf16.mxu0 0
        %943 = vmatpush1.bf16.msra.mxu0 %v930
        %944 = vmatprep.subr.bf16.mxu0 0
        %945 = vmatpush1.bf16.msra.mxu0 %v929
        %946 = vmatprep.subr.bf16.mxu0 0
        %947 = vmatpush1.bf16.msra.mxu0 %v928
        %948 = vmatprep.subr.bf16.mxu0 0
        %949 = vmatpush1.bf16.msra.mxu0 %v927
        %950 = vmatprep.subr.bf16.mxu0 0
        %951 = vmatpush1.bf16.msra.mxu0 %v926
        %952 = vmatprep.subr.bf16.mxu0 0
        %953 = vmatpush1.bf16.msra.mxu0 %v925
        %954 = vmatprep.subr.bf16.mxu0 0
        %955 = vmatpush1.bf16.msra.mxu0 %v924
        %956 = vmatprep.subr.bf16.mxu0 0
        %957 = vmatpush2.bf16.msra.mxu0 0
        %958 = vmatprep.subr.bf16.mxu0 0
        %959 = vmatpush2.bf16.msra.mxu0 0
        %960 = vmatprep.subr.bf16.mxu0 0
        %961 = vmatpush2.bf16.msra.mxu0 0
        %962 = vmatprep.subr.bf16.mxu0 0
        %963 = vmatpush2.bf16.msra.mxu0 0
        %964 = vmatprep.subr.bf16.mxu0 0
        %965 = vmatpush2.bf16.msra.mxu0 0
        %966 = vmatprep.subr.bf16.mxu0 0
        %967 = vmatpush2.bf16.msra.mxu0 0
        %968 = vmatprep.subr.bf16.mxu0 0
        %969 = vmatpush2.bf16.msra.mxu0 0
        %970 = vmatprep.subr.bf16.mxu0 0
        %971 = vmatpush2.bf16.msra.mxu0 0
        %972 = vmatprep.mubr.bf16.mxu0 0
        %973 = vmatmul.mubr.bf16.gmra.mxu0 %v537
        %v974 = vpop.f32.mrf.mxu0
        %v975 = vadd.f32 %v862, %v974
        %v976 = vpop.f32.mrf.mxu0
        %v977 = vpop.f32.mrf.mxu0
        %v978 = vadd.f32 %v865, %v977
        %v979 = vpop.f32.mrf.mxu0
        %980 = vmatprep.mubr.bf16.mxu0 0
        %981 = vmatmul.mubr.bf16.gmra.mxu0 %v538
        %v982 = vpop.f32.mrf.mxu0
        %v983 = vadd.f32 %v870, %v982
        %v984 = vpop.f32.mrf.mxu0
        %v985 = vpop.f32.mrf.mxu0
        %v986 = vadd.f32 %v873, %v985
        %v987 = vpop.f32.mrf.mxu0
        %988 = vmatprep.mubr.bf16.mxu0 0
        %989 = vmatmul.mubr.bf16.gmra.mxu0 %v539
        %v990 = vpop.f32.mrf.mxu0
        %v991 = vadd.f32 %v878, %v990
        %v992 = vpop.f32.mrf.mxu0
        %v993 = vpop.f32.mrf.mxu0
        %v994 = vadd.f32 %v881, %v993
        %v995 = vpop.f32.mrf.mxu0
        %996 = vmatprep.mubr.bf16.mxu0 0
        %997 = vmatmul.mubr.bf16.gmra.mxu0 %v540
        %v998 = vpop.f32.mrf.mxu0
        %v999 = vadd.f32 %v886, %v998
        %v1000 = vpop.f32.mrf.mxu0
        %v1001 = vpop.f32.mrf.mxu0
        %v1002 = vadd.f32 %v889, %v1001
        %v1003 = vpop.f32.mrf.mxu0
        %1004 = vdwg.mxu0
        %v1005 = vld [vmem:[%s415] sm:$0xe]
        %v1006 = vld [vmem:[%s415 + $0x8] sm:$0xe]
        %v1007 = vld [vmem:[%s415 + $0x10] sm:$0xe]
        %v1008 = vld [vmem:[%s415 + $0x18] sm:$0xe]
        %v1009 = vld [vmem:[%s415 + $0x20] sm:$0xe]
        %v1010 = vld [vmem:[%s415 + $0x28] sm:$0xe]
        %v1011 = vld [vmem:[%s415 + $0x30] sm:$0xe]
        %v1012 = vld [vmem:[%s415 + $0x38] sm:$0xe]
        %v1013 = vunpack.c.l.bf16 %v1005
        %v1014 = vunpack.c.l.bf16 %v1006
        %v1015 = vunpack.c.l.bf16 %v1007
        %v1016 = vunpack.c.l.bf16 %v1008
        %v1017 = vunpack.c.l.bf16 %v1009
        %v1018 = vunpack.c.l.bf16 %v1010
        %v1019 = vunpack.c.l.bf16 %v1011
        %v1020 = vunpack.c.l.bf16 %v1012
        %v1021 = vld [vmem:[%s1 + $0x2] sm:$0xff]
        %v1022 = vld [vmem:[%s1 + $0x12] sm:$0xff]
        %v1023 = vld [vmem:[%s1 + $0x22] sm:$0xff]
        %v1024 = vld [vmem:[%s1 + $0x32] sm:$0xff]
        %v1025 = vld [vmem:[%s1 + $0x42] sm:$0xff]
        %v1026 = vld [vmem:[%s1 + $0x52] sm:$0xff]
        %v1027 = vld [vmem:[%s1 + $0x62] sm:$0xff]
        %v1028 = vld [vmem:[%s1 + $0x72] sm:$0xff]
        %v1029 = vmul.f32 %v1013, %v457
        %v1030 = vmul.f32 %v1014, %v457
        %v1031 = vmul.f32 %v1015, %v457
        %v1032 = vmul.f32 %v1016, %v457
        %v1033 = vmul.f32 %v1017, %v457
        %v1034 = vmul.f32 %v1018, %v457
        %v1035 = vmul.f32 %v1019, %v457
        %v1036 = vmul.f32 %v1020, %v457
        %v1037 = vadd.f32 %v1029, %v471
        %v1038 = vadd.f32 %v1030, %v471
        %v1039 = vadd.f32 %v1031, %v471
        %v1040 = vadd.f32 %v1032, %v471
        %v1041 = vadd.f32 %v1033, %v471
        %v1042 = vadd.f32 %v1034, %v471
        %v1043 = vadd.f32 %v1035, %v471
        %v1044 = vadd.f32 %v1036, %v471
        %v1045 = vmax.f32 %v1037, 0.0
        %v1046 = vmax.f32 %v1038, 0.0
        %v1047 = vmax.f32 %v1039, 0.0
        %v1048 = vmax.f32 %v1040, 0.0
        %v1049 = vmax.f32 %v1041, 0.0
        %v1050 = vmax.f32 %v1042, 0.0
        %v1051 = vmax.f32 %v1043, 0.0
        %v1052 = vmax.f32 %v1044, 0.0
        %1054 = vset.pattern.permute.xlu0 0
        %1055 = vperm.xlu0 %1054, %v1021
        %v1056 = vpop.permute.xlu0 %1055
        %1058 = vset.pattern.permute.xlu0 0
        %1059 = vperm.xlu0 %1058, %v1022
        %v1060 = vpop.permute.xlu0 %1059
        %1062 = vset.pattern.permute.xlu0 0
        %1063 = vperm.xlu0 %1062, %v1023
        %v1064 = vpop.permute.xlu0 %1063
        %1066 = vset.pattern.permute.xlu0 0
        %1067 = vperm.xlu0 %1066, %v1024
        %v1068 = vpop.permute.xlu0 %1067
        %1070 = vset.pattern.permute.xlu0 0
        %1071 = vperm.xlu0 %1070, %v1025
        %v1072 = vpop.permute.xlu0 %1071
        %1074 = vset.pattern.permute.xlu0 0
        %1075 = vperm.xlu0 %1074, %v1026
        %v1076 = vpop.permute.xlu0 %1075
        %1078 = vset.pattern.permute.xlu0 0
        %1079 = vperm.xlu0 %1078, %v1027
        %v1080 = vpop.permute.xlu0 %1079
        %1082 = vset.pattern.permute.xlu0 0
        %1083 = vperm.xlu0 %1082, %v1028
        %v1084 = vpop.permute.xlu0 %1083
        %v1085 = vrot.slane %v1056, 6
        %v1086 = vrot.slane %v1060, 6
        %v1087 = vrot.slane %v1064, 6
        %v1088 = vrot.slane %v1068, 6
        %v1089 = vrot.slane %v1072, 6
        %v1090 = vrot.slane %v1076, 6
        %v1091 = vrot.slane %v1080, 6
        %v1092 = vrot.slane %v1084, 6
        %v1101 = vmul.f32 %v1045, %v1085
        %v1102 = vmul.f32 %v630, %v1085
        %v1103 = vmul.f32 %v1046, %v1086
        %v1104 = vmul.f32 %v632, %v1086
        %v1105 = vmul.f32 %v1047, %v1087
        %v1106 = vmul.f32 %v634, %v1087
        %v1107 = vmul.f32 %v1048, %v1088
        %v1108 = vmul.f32 %v636, %v1088
        %v1109 = vmul.f32 %v1049, %v1089
        %v1110 = vmul.f32 %v638, %v1089
        %v1111 = vmul.f32 %v1050, %v1090
        %v1112 = vmul.f32 %v640, %v1090
        %v1113 = vmul.f32 %v1051, %v1091
        %v1114 = vmul.f32 %v642, %v1091
        %v1115 = vmul.f32 %v1052, %v1092
        %v1116 = vmul.f32 %v644, %v1092
        %vm1133 = vcmask 1045504
        %v1134 = vrot.slane %v1101, 2
        %v1135 = vrot.slane %v1102, 2
        %v1136 = vsel %vm1133, %v1134, %v1135
        %v1137 = vrot.slane %v1103, 2
        %v1138 = vrot.slane %v1104, 2
        %v1139 = vsel %vm1133, %v1137, %v1138
        %v1140 = vrot.slane %v1105, 2
        %v1141 = vrot.slane %v1106, 2
        %v1142 = vsel %vm1133, %v1140, %v1141
        %v1143 = vrot.slane %v1107, 2
        %v1144 = vrot.slane %v1108, 2
        %v1145 = vsel %vm1133, %v1143, %v1144
        %v1146 = vrot.slane %v1109, 2
        %v1147 = vrot.slane %v1110, 2
        %v1148 = vsel %vm1133, %v1146, %v1147
        %v1149 = vrot.slane %v1111, 2
        %v1150 = vrot.slane %v1112, 2
        %v1151 = vsel %vm1133, %v1149, %v1150
        %v1152 = vrot.slane %v1113, 2
        %v1153 = vrot.slane %v1114, 2
        %v1154 = vsel %vm1133, %v1152, %v1153
        %v1155 = vrot.slane %v1115, 2
        %v1156 = vrot.slane %v1116, 2
        %v1157 = vsel %vm1133, %v1155, %v1156
        %v1166 = vpack.c.bf16 %v1139, %v1136
        %v1167 = vpack.c.bf16 %v1145, %v1142
        %v1168 = vpack.c.bf16 %v1151, %v1148
        %v1169 = vpack.c.bf16 %v1157, %v1154
        %s1170 = scalar_lea.vmem %s4, 128
        %v1171 = vld [vmem:[%s1170] sm:$0xf]
        %v1172 = vld [vmem:[%s1170 + $0x4] sm:$0xf]
        %v1173 = vld [vmem:[%s1170 + $0x8] sm:$0xf]
        %v1174 = vld [vmem:[%s1170 + $0xc] sm:$0xf]
        %v1175 = vld [vmem:[%s1170 + $0x10] sm:$0xf]
        %v1176 = vld [vmem:[%s1170 + $0x14] sm:$0xf]
        %v1177 = vld [vmem:[%s1170 + $0x18] sm:$0xf]
        %v1178 = vld [vmem:[%s1170 + $0x1c] sm:$0xf]
        %v1179 = vld [vmem:[%s1170 + $0x20] sm:$0xf]
        %v1180 = vld [vmem:[%s1170 + $0x24] sm:$0xf]
        %v1181 = vld [vmem:[%s1170 + $0x28] sm:$0xf]
        %v1182 = vld [vmem:[%s1170 + $0x2c] sm:$0xf]
        %v1183 = vld [vmem:[%s1170 + $0x30] sm:$0xf]
        %v1184 = vld [vmem:[%s1170 + $0x34] sm:$0xf]
        %v1185 = vld [vmem:[%s1170 + $0x38] sm:$0xf]
        %v1186 = vld [vmem:[%s1170 + $0x3c] sm:$0xf]
        %v1203 = vunpack.c.l.b16 %v1171
        %v1204 = vunpack.c.l.b16 %v1172
        %v1205 = vunpack.c.l.b16 %v1173
        %v1206 = vunpack.c.l.b16 %v1174
        %v1207 = vunpack.c.l.b16 %v1175
        %v1208 = vunpack.c.l.b16 %v1176
        %v1209 = vunpack.c.l.b16 %v1177
        %v1210 = vunpack.c.l.b16 %v1178
        %v1211 = vunpack.c.l.b16 %v1179
        %v1212 = vunpack.c.l.b16 %v1180
        %v1213 = vunpack.c.l.b16 %v1181
        %v1214 = vunpack.c.l.b16 %v1182
        %v1215 = vunpack.c.l.b16 %v1183
        %v1216 = vunpack.c.l.b16 %v1184
        %v1217 = vunpack.c.l.b16 %v1185
        %v1218 = vunpack.c.l.b16 %v1186
        %v1219 = vpack.c.b16 %v1204, %v1203
        %v1220 = vpack.c.b16 %v1206, %v1205
        %v1221 = vpack.c.b16 %v1208, %v1207
        %v1222 = vpack.c.b16 %v1210, %v1209
        %v1223 = vpack.c.b16 %v1212, %v1211
        %v1224 = vpack.c.b16 %v1214, %v1213
        %v1225 = vpack.c.b16 %v1216, %v1215
        %v1226 = vpack.c.b16 %v1218, %v1217
        %1235 = vmatprep.subr.bf16.mxu0 0
        %1236 = vmatpush1.bf16.msra.mxu0 %v1226
        %1237 = vmatprep.subr.bf16.mxu0 0
        %1238 = vmatpush1.bf16.msra.mxu0 %v1225
        %1239 = vmatprep.subr.bf16.mxu0 0
        %1240 = vmatpush1.bf16.msra.mxu0 %v1224
        %1241 = vmatprep.subr.bf16.mxu0 0
        %1242 = vmatpush1.bf16.msra.mxu0 %v1223
        %1243 = vmatprep.subr.bf16.mxu0 0
        %1244 = vmatpush1.bf16.msra.mxu0 %v1222
        %1245 = vmatprep.subr.bf16.mxu0 0
        %1246 = vmatpush1.bf16.msra.mxu0 %v1221
        %1247 = vmatprep.subr.bf16.mxu0 0
        %1248 = vmatpush1.bf16.msra.mxu0 %v1220
        %1249 = vmatprep.subr.bf16.mxu0 0
        %1250 = vmatpush1.bf16.msra.mxu0 %v1219
        %1251 = vmatprep.subr.bf16.mxu0 0
        %1252 = vmatpush2.bf16.msra.mxu0 0
        %1253 = vmatprep.subr.bf16.mxu0 0
        %1254 = vmatpush2.bf16.msra.mxu0 0
        %1255 = vmatprep.subr.bf16.mxu0 0
        %1256 = vmatpush2.bf16.msra.mxu0 0
        %1257 = vmatprep.subr.bf16.mxu0 0
        %1258 = vmatpush2.bf16.msra.mxu0 0
        %1259 = vmatprep.subr.bf16.mxu0 0
        %1260 = vmatpush2.bf16.msra.mxu0 0
        %1261 = vmatprep.subr.bf16.mxu0 0
        %1262 = vmatpush2.bf16.msra.mxu0 0
        %1263 = vmatprep.subr.bf16.mxu0 0
        %1264 = vmatpush2.bf16.msra.mxu0 0
        %1265 = vmatprep.subr.bf16.mxu0 0
        %1266 = vmatpush2.bf16.msra.mxu0 0
        %1267 = vmatprep.mubr.bf16.mxu0 0
        %1268 = vmatmul.mubr.bf16.gmra.mxu0 %v1166
        %v1269 = vpop.f32.mrf.mxu0
        %v1270 = vadd.f32 0.0, %v1269
        %v1271 = vpop.f32.mrf.mxu0
        %v1272 = vpop.f32.mrf.mxu0
        %v1273 = vadd.f32 0.0, %v1272
        %v1274 = vpop.f32.mrf.mxu0
        %1275 = vmatprep.mubr.bf16.mxu0 0
        %1276 = vmatmul.mubr.bf16.gmra.mxu0 %v1167
        %v1277 = vpop.f32.mrf.mxu0
        %v1278 = vadd.f32 0.0, %v1277
        %v1279 = vpop.f32.mrf.mxu0
        %v1280 = vpop.f32.mrf.mxu0
        %v1281 = vadd.f32 0.0, %v1280
        %v1282 = vpop.f32.mrf.mxu0
        %1283 = vmatprep.mubr.bf16.mxu0 0
        %1284 = vmatmul.mubr.bf16.gmra.mxu0 %v1168
        %v1285 = vpop.f32.mrf.mxu0
        %v1286 = vadd.f32 0.0, %v1285
        %v1287 = vpop.f32.mrf.mxu0
        %v1288 = vpop.f32.mrf.mxu0
        %v1289 = vadd.f32 0.0, %v1288
        %v1290 = vpop.f32.mrf.mxu0
        %1291 = vmatprep.mubr.bf16.mxu0 0
        %1292 = vmatmul.mubr.bf16.gmra.mxu0 %v1169
        %v1293 = vpop.f32.mrf.mxu0
        %v1294 = vadd.f32 0.0, %v1293
        %v1295 = vpop.f32.mrf.mxu0
        %v1296 = vpop.f32.mrf.mxu0
        %v1297 = vadd.f32 0.0, %v1296
        %v1298 = vpop.f32.mrf.mxu0
        %1299 = vdwg.mxu0
        %v1300 = vadd.f32 %v975, %v1270
        %v1301 = vadd.f32 %v978, %v1273
        %v1302 = vadd.f32 %v983, %v1278
        %v1303 = vadd.f32 %v986, %v1281
        %v1304 = vadd.f32 %v991, %v1286
        %v1305 = vadd.f32 %v994, %v1289
        %v1306 = vadd.f32 %v999, %v1294
        %v1307 = vadd.f32 %v1002, %v1297
        %s1308 = scalar_lea.vmem %s415, 8
        %v1309 = vld [vmem:[%s1308] sm:$0xf]
        %v1310 = vld [vmem:[%s1308 + $0x8] sm:$0xf]
        %v1311 = vld [vmem:[%s1308 + $0x10] sm:$0xf]
        %v1312 = vld [vmem:[%s1308 + $0x18] sm:$0xf]
        %v1313 = vld [vmem:[%s1308 + $0x20] sm:$0xf]
        %v1314 = vld [vmem:[%s1308 + $0x28] sm:$0xf]
        %v1315 = vld [vmem:[%s1308 + $0x30] sm:$0xf]
        %v1316 = vld [vmem:[%s1308 + $0x38] sm:$0xf]
        %v1317 = vunpack.c.l.bf16 %v1309
        %v1318 = vunpack.c.l.bf16 %v1310
        %v1319 = vunpack.c.l.bf16 %v1311
        %v1320 = vunpack.c.l.bf16 %v1312
        %v1321 = vunpack.c.l.bf16 %v1313
        %v1322 = vunpack.c.l.bf16 %v1314
        %v1323 = vunpack.c.l.bf16 %v1315
        %v1324 = vunpack.c.l.bf16 %v1316
        %s1325 = scalar_lea.vmem %s1, 16
        %v1326 = vld [vmem:[%s1325] sm:$0xff]
        %v1327 = vld [vmem:[%s1325 + $0x10] sm:$0xff]
        %v1328 = vld [vmem:[%s1325 + $0x20] sm:$0xff]
        %v1329 = vld [vmem:[%s1325 + $0x30] sm:$0xff]
        %v1330 = vld [vmem:[%s1325 + $0x40] sm:$0xff]
        %v1331 = vld [vmem:[%s1325 + $0x50] sm:$0xff]
        %v1332 = vld [vmem:[%s1325 + $0x60] sm:$0xff]
        %v1333 = vld [vmem:[%s1325 + $0x70] sm:$0xff]
        %v1334 = vmul.f32 %v1317, %v457
        %v1335 = vmul.f32 %v1318, %v457
        %v1336 = vmul.f32 %v1319, %v457
        %v1337 = vmul.f32 %v1320, %v457
        %v1338 = vmul.f32 %v1321, %v457
        %v1339 = vmul.f32 %v1322, %v457
        %v1340 = vmul.f32 %v1323, %v457
        %v1341 = vmul.f32 %v1324, %v457
        %v1342 = vadd.f32 %v1334, %v471
        %v1343 = vadd.f32 %v1335, %v471
        %v1344 = vadd.f32 %v1336, %v471
        %v1345 = vadd.f32 %v1337, %v471
        %v1346 = vadd.f32 %v1338, %v471
        %v1347 = vadd.f32 %v1339, %v471
        %v1348 = vadd.f32 %v1340, %v471
        %v1349 = vadd.f32 %v1341, %v471
        %v1350 = vmax.f32 %v1342, 0.0
        %v1351 = vmax.f32 %v1343, 0.0
        %v1352 = vmax.f32 %v1344, 0.0
        %v1353 = vmax.f32 %v1345, 0.0
        %v1354 = vmax.f32 %v1346, 0.0
        %v1355 = vmax.f32 %v1347, 0.0
        %v1356 = vmax.f32 %v1348, 0.0
        %v1357 = vmax.f32 %v1349, 0.0
        %1359 = vset.pattern.permute.xlu0 0
        %1360 = vperm.xlu0 %1359, %v1326
        %v1361 = vpop.permute.xlu0 %1360
        %1364 = vset.pattern.permute.xlu0 0
        %1365 = vperm.xlu0 %1364, %v1327
        %v1366 = vpop.permute.xlu0 %1365
        %1369 = vset.pattern.permute.xlu0 0
        %1370 = vperm.xlu0 %1369, %v1328
        %v1371 = vpop.permute.xlu0 %1370
        %1374 = vset.pattern.permute.xlu0 0
        %1375 = vperm.xlu0 %1374, %v1329
        %v1376 = vpop.permute.xlu0 %1375
        %1379 = vset.pattern.permute.xlu0 0
        %1380 = vperm.xlu0 %1379, %v1330
        %v1381 = vpop.permute.xlu0 %1380
        %1384 = vset.pattern.permute.xlu0 0
        %1385 = vperm.xlu0 %1384, %v1331
        %v1386 = vpop.permute.xlu0 %1385
        %1389 = vset.pattern.permute.xlu0 0
        %1390 = vperm.xlu0 %1389, %v1332
        %v1391 = vpop.permute.xlu0 %1390
        %1394 = vset.pattern.permute.xlu0 0
        %1395 = vperm.xlu0 %1394, %v1333
        %v1396 = vpop.permute.xlu0 %1395
        %v1398 = vmul.f32 %v1350, %v1361
        %v1399 = vmul.f32 %v1351, %v1366
        %v1400 = vmul.f32 %v1352, %v1371
        %v1401 = vmul.f32 %v1353, %v1376
        %v1402 = vmul.f32 %v1354, %v1381
        %v1403 = vmul.f32 %v1355, %v1386
        %v1404 = vmul.f32 %v1356, %v1391
        %v1405 = vmul.f32 %v1357, %v1396
        %v1406 = vpack.c.bf16 %v1399, %v1398
        %v1407 = vpack.c.bf16 %v1401, %v1400
        %v1408 = vpack.c.bf16 %v1403, %v1402
        %v1409 = vpack.c.bf16 %v1405, %v1404
        %s1410 = scalar_lea.vmem %s4, 192
        %v1411 = vld [vmem:[%s1410] sm:$0xf]
        %v1412 = vld [vmem:[%s1410 + $0x4] sm:$0xf]
        %v1413 = vld [vmem:[%s1410 + $0x8] sm:$0xf]
        %v1414 = vld [vmem:[%s1410 + $0xc] sm:$0xf]
        %v1415 = vld [vmem:[%s1410 + $0x10] sm:$0xf]
        %v1416 = vld [vmem:[%s1410 + $0x14] sm:$0xf]
        %v1417 = vld [vmem:[%s1410 + $0x18] sm:$0xf]
        %v1418 = vld [vmem:[%s1410 + $0x1c] sm:$0xf]
        %v1419 = vld [vmem:[%s1410 + $0x20] sm:$0xf]
        %v1420 = vld [vmem:[%s1410 + $0x24] sm:$0xf]
        %v1421 = vld [vmem:[%s1410 + $0x28] sm:$0xf]
        %v1422 = vld [vmem:[%s1410 + $0x2c] sm:$0xf]
        %v1423 = vld [vmem:[%s1410 + $0x30] sm:$0xf]
        %v1424 = vld [vmem:[%s1410 + $0x34] sm:$0xf]
        %v1425 = vld [vmem:[%s1410 + $0x38] sm:$0xf]
        %v1426 = vld [vmem:[%s1410 + $0x3c] sm:$0xf]
        %v1443 = vunpack.c.l.b16 %v1411
        %v1444 = vunpack.c.l.b16 %v1412
        %v1445 = vunpack.c.l.b16 %v1413
        %v1446 = vunpack.c.l.b16 %v1414
        %v1447 = vunpack.c.l.b16 %v1415
        %v1448 = vunpack.c.l.b16 %v1416
        %v1449 = vunpack.c.l.b16 %v1417
        %v1450 = vunpack.c.l.b16 %v1418
        %v1451 = vunpack.c.l.b16 %v1419
        %v1452 = vunpack.c.l.b16 %v1420
        %v1453 = vunpack.c.l.b16 %v1421
        %v1454 = vunpack.c.l.b16 %v1422
        %v1455 = vunpack.c.l.b16 %v1423
        %v1456 = vunpack.c.l.b16 %v1424
        %v1457 = vunpack.c.l.b16 %v1425
        %v1458 = vunpack.c.l.b16 %v1426
        %v1459 = vpack.c.b16 %v1444, %v1443
        %v1460 = vpack.c.b16 %v1446, %v1445
        %v1461 = vpack.c.b16 %v1448, %v1447
        %v1462 = vpack.c.b16 %v1450, %v1449
        %v1463 = vpack.c.b16 %v1452, %v1451
        %v1464 = vpack.c.b16 %v1454, %v1453
        %v1465 = vpack.c.b16 %v1456, %v1455
        %v1466 = vpack.c.b16 %v1458, %v1457
        %1475 = vmatprep.subr.bf16.mxu0 0
        %1476 = vmatpush1.bf16.msra.mxu0 %v1466
        %1477 = vmatprep.subr.bf16.mxu0 0
        %1478 = vmatpush1.bf16.msra.mxu0 %v1465
        %1479 = vmatprep.subr.bf16.mxu0 0
        %1480 = vmatpush1.bf16.msra.mxu0 %v1464
        %1481 = vmatprep.subr.bf16.mxu0 0
        %1482 = vmatpush1.bf16.msra.mxu0 %v1463
        %1483 = vmatprep.subr.bf16.mxu0 0
        %1484 = vmatpush1.bf16.msra.mxu0 %v1462
        %1485 = vmatprep.subr.bf16.mxu0 0
        %1486 = vmatpush1.bf16.msra.mxu0 %v1461
        %1487 = vmatprep.subr.bf16.mxu0 0
        %1488 = vmatpush1.bf16.msra.mxu0 %v1460
        %1489 = vmatprep.subr.bf16.mxu0 0
        %1490 = vmatpush1.bf16.msra.mxu0 %v1459
        %1491 = vmatprep.subr.bf16.mxu0 0
        %1492 = vmatpush2.bf16.msra.mxu0 0
        %1493 = vmatprep.subr.bf16.mxu0 0
        %1494 = vmatpush2.bf16.msra.mxu0 0
        %1495 = vmatprep.subr.bf16.mxu0 0
        %1496 = vmatpush2.bf16.msra.mxu0 0
        %1497 = vmatprep.subr.bf16.mxu0 0
        %1498 = vmatpush2.bf16.msra.mxu0 0
        %1499 = vmatprep.subr.bf16.mxu0 0
        %1500 = vmatpush2.bf16.msra.mxu0 0
        %1501 = vmatprep.subr.bf16.mxu0 0
        %1502 = vmatpush2.bf16.msra.mxu0 0
        %1503 = vmatprep.subr.bf16.mxu0 0
        %1504 = vmatpush2.bf16.msra.mxu0 0
        %1505 = vmatprep.subr.bf16.mxu0 0
        %1506 = vmatpush2.bf16.msra.mxu0 0
        %1507 = vmatprep.mubr.bf16.mxu0 0
        %1508 = vmatmul.mubr.bf16.gmra.mxu0 %v1406
        %v1509 = vpop.f32.mrf.mxu0
        %v1510 = vadd.f32 0.0, %v1509
        %v1511 = vpop.f32.mrf.mxu0
        %v1512 = vpop.f32.mrf.mxu0
        %v1513 = vadd.f32 0.0, %v1512
        %v1514 = vpop.f32.mrf.mxu0
        %1515 = vmatprep.mubr.bf16.mxu0 0
        %1516 = vmatmul.mubr.bf16.gmra.mxu0 %v1407
        %v1517 = vpop.f32.mrf.mxu0
        %v1518 = vadd.f32 0.0, %v1517
        %v1519 = vpop.f32.mrf.mxu0
        %v1520 = vpop.f32.mrf.mxu0
        %v1521 = vadd.f32 0.0, %v1520
        %v1522 = vpop.f32.mrf.mxu0
        %1523 = vmatprep.mubr.bf16.mxu0 0
        %1524 = vmatmul.mubr.bf16.gmra.mxu0 %v1408
        %v1525 = vpop.f32.mrf.mxu0
        %v1526 = vadd.f32 0.0, %v1525
        %v1527 = vpop.f32.mrf.mxu0
        %v1528 = vpop.f32.mrf.mxu0
        %v1529 = vadd.f32 0.0, %v1528
        %v1530 = vpop.f32.mrf.mxu0
        %1531 = vmatprep.mubr.bf16.mxu0 0
        %1532 = vmatmul.mubr.bf16.gmra.mxu0 %v1409
        %v1533 = vpop.f32.mrf.mxu0
        %v1534 = vadd.f32 0.0, %v1533
        %v1535 = vpop.f32.mrf.mxu0
        %v1536 = vpop.f32.mrf.mxu0
        %v1537 = vadd.f32 0.0, %v1536
        %v1538 = vpop.f32.mrf.mxu0
        %1539 = vdwg.mxu0
        %v1540 = vadd.f32 %v1300, %v1510
        %v1541 = vadd.f32 %v1301, %v1513
        %v1542 = vadd.f32 %v1302, %v1518
        %v1543 = vadd.f32 %v1303, %v1521
        %v1544 = vadd.f32 %v1304, %v1526
        %v1545 = vadd.f32 %v1305, %v1529
        %v1546 = vadd.f32 %v1306, %v1534
        %v1547 = vadd.f32 %v1307, %v1537
        %v1548 = vld [vmem:[%s1308] sm:$0xf]
        %v1549 = vld [vmem:[%s1308 + $0x4] sm:$0x1]
        %v1550 = vld [vmem:[%s1308 + $0x8] sm:$0xf]
        %v1551 = vld [vmem:[%s1308 + $0xc] sm:$0x1]
        %v1552 = vld [vmem:[%s1308 + $0x10] sm:$0xf]
        %v1553 = vld [vmem:[%s1308 + $0x14] sm:$0x1]
        %v1554 = vld [vmem:[%s1308 + $0x18] sm:$0xf]
        %v1555 = vld [vmem:[%s1308 + $0x1c] sm:$0x1]
        %v1556 = vld [vmem:[%s1308 + $0x20] sm:$0xf]
        %v1557 = vld [vmem:[%s1308 + $0x24] sm:$0x1]
        %v1558 = vld [vmem:[%s1308 + $0x28] sm:$0xf]
        %v1559 = vld [vmem:[%s1308 + $0x2c] sm:$0x1]
        %v1560 = vld [vmem:[%s1308 + $0x30] sm:$0xf]
        %v1561 = vld [vmem:[%s1308 + $0x34] sm:$0x1]
        %v1562 = vld [vmem:[%s1308 + $0x38] sm:$0xf]
        %v1563 = vld [vmem:[%s1308 + $0x3c] sm:$0x1]
        %v1564 = vunpack.c.l.bf16 %v1548
        %v1565 = vunpack.c.l.bf16 %v1549
        %v1566 = vunpack.c.l.bf16 %v1550
        %v1567 = vunpack.c.l.bf16 %v1551
        %v1568 = vunpack.c.l.bf16 %v1552
        %v1569 = vunpack.c.l.bf16 %v1553
        %v1570 = vunpack.c.l.bf16 %v1554
        %v1571 = vunpack.c.l.bf16 %v1555
        %v1572 = vunpack.c.l.bf16 %v1556
        %v1573 = vunpack.c.l.bf16 %v1557
        %v1574 = vunpack.c.l.bf16 %v1558
        %v1575 = vunpack.c.l.bf16 %v1559
        %v1576 = vunpack.c.l.bf16 %v1560
        %v1577 = vunpack.c.l.bf16 %v1561
        %v1578 = vunpack.c.l.bf16 %v1562
        %v1579 = vunpack.c.l.bf16 %v1563
        %v1580 = vld [vmem:[%s1325 + $0x1] sm:$0xff]
        %v1581 = vld [vmem:[%s1325 + $0x11] sm:$0xff]
        %v1582 = vld [vmem:[%s1325 + $0x21] sm:$0xff]
        %v1583 = vld [vmem:[%s1325 + $0x31] sm:$0xff]
        %v1584 = vld [vmem:[%s1325 + $0x41] sm:$0xff]
        %v1585 = vld [vmem:[%s1325 + $0x51] sm:$0xff]
        %v1586 = vld [vmem:[%s1325 + $0x61] sm:$0xff]
        %v1587 = vld [vmem:[%s1325 + $0x71] sm:$0xff]
        %v1588 = vmul.f32 %v1564, %v457
        %v1589 = vmul.f32 %v1565, %v457
        %v1590 = vmul.f32 %v1566, %v457
        %v1591 = vmul.f32 %v1567, %v457
        %v1592 = vmul.f32 %v1568, %v457
        %v1593 = vmul.f32 %v1569, %v457
        %v1594 = vmul.f32 %v1570, %v457
        %v1595 = vmul.f32 %v1571, %v457
        %v1596 = vmul.f32 %v1572, %v457
        %v1597 = vmul.f32 %v1573, %v457
        %v1598 = vmul.f32 %v1574, %v457
        %v1599 = vmul.f32 %v1575, %v457
        %v1600 = vmul.f32 %v1576, %v457
        %v1601 = vmul.f32 %v1577, %v457
        %v1602 = vmul.f32 %v1578, %v457
        %v1603 = vmul.f32 %v1579, %v457
        %v1604 = vadd.f32 %v1588, %v471
        %v1605 = vadd.f32 %v1589, %v471
        %v1606 = vadd.f32 %v1590, %v471
        %v1607 = vadd.f32 %v1591, %v471
        %v1608 = vadd.f32 %v1592, %v471
        %v1609 = vadd.f32 %v1593, %v471
        %v1610 = vadd.f32 %v1594, %v471
        %v1611 = vadd.f32 %v1595, %v471
        %v1612 = vadd.f32 %v1596, %v471
        %v1613 = vadd.f32 %v1597, %v471
        %v1614 = vadd.f32 %v1598, %v471
        %v1615 = vadd.f32 %v1599, %v471
        %v1616 = vadd.f32 %v1600, %v471
        %v1617 = vadd.f32 %v1601, %v471
        %v1618 = vadd.f32 %v1602, %v471
        %v1619 = vadd.f32 %v1603, %v471
        %v1620 = vmax.f32 %v1604, 0.0
        %v1621 = vmax.f32 %v1605, 0.0
        %v1622 = vmax.f32 %v1606, 0.0
        %v1623 = vmax.f32 %v1607, 0.0
        %v1624 = vmax.f32 %v1608, 0.0
        %v1625 = vmax.f32 %v1609, 0.0
        %v1626 = vmax.f32 %v1610, 0.0
        %v1627 = vmax.f32 %v1611, 0.0
        %v1628 = vmax.f32 %v1612, 0.0
        %v1629 = vmax.f32 %v1613, 0.0
        %v1630 = vmax.f32 %v1614, 0.0
        %v1631 = vmax.f32 %v1615, 0.0
        %v1632 = vmax.f32 %v1616, 0.0
        %v1633 = vmax.f32 %v1617, 0.0
        %v1634 = vmax.f32 %v1618, 0.0
        %v1635 = vmax.f32 %v1619, 0.0
        %1637 = vset.pattern.permute.xlu0 0
        %1638 = vperm.xlu0 %1637, %v1580
        %v1639 = vpop.permute.xlu0 %1638
        %1641 = vset.pattern.permute.xlu0 0
        %1642 = vperm.xlu0 %1641, %v1581
        %v1643 = vpop.permute.xlu0 %1642
        %1645 = vset.pattern.permute.xlu0 0
        %1646 = vperm.xlu0 %1645, %v1582
        %v1647 = vpop.permute.xlu0 %1646
        %1649 = vset.pattern.permute.xlu0 0
        %1650 = vperm.xlu0 %1649, %v1583
        %v1651 = vpop.permute.xlu0 %1650
        %1653 = vset.pattern.permute.xlu0 0
        %1654 = vperm.xlu0 %1653, %v1584
        %v1655 = vpop.permute.xlu0 %1654
        %1657 = vset.pattern.permute.xlu0 0
        %1658 = vperm.xlu0 %1657, %v1585
        %v1659 = vpop.permute.xlu0 %1658
        %1661 = vset.pattern.permute.xlu0 0
        %1662 = vperm.xlu0 %1661, %v1586
        %v1663 = vpop.permute.xlu0 %1662
        %1665 = vset.pattern.permute.xlu0 0
        %1666 = vperm.xlu0 %1665, %v1587
        %v1667 = vpop.permute.xlu0 %1666
        %v1668 = vrot.slane %v1639, 7
        %v1669 = vrot.slane %v1643, 7
        %v1670 = vrot.slane %v1647, 7
        %v1671 = vrot.slane %v1651, 7
        %v1672 = vrot.slane %v1655, 7
        %v1673 = vrot.slane %v1659, 7
        %v1674 = vrot.slane %v1663, 7
        %v1675 = vrot.slane %v1667, 7
        %v1684 = vmul.f32 %v1620, %v1668
        %v1685 = vmul.f32 %v1621, %v1668
        %v1686 = vmul.f32 %v1622, %v1669
        %v1687 = vmul.f32 %v1623, %v1669
        %v1688 = vmul.f32 %v1624, %v1670
        %v1689 = vmul.f32 %v1625, %v1670
        %v1690 = vmul.f32 %v1626, %v1671
        %v1691 = vmul.f32 %v1627, %v1671
        %v1692 = vmul.f32 %v1628, %v1672
        %v1693 = vmul.f32 %v1629, %v1672
        %v1694 = vmul.f32 %v1630, %v1673
        %v1695 = vmul.f32 %v1631, %v1673
        %v1696 = vmul.f32 %v1632, %v1674
        %v1697 = vmul.f32 %v1633, %v1674
        %v1698 = vmul.f32 %v1634, %v1675
        %v1699 = vmul.f32 %v1635, %v1675
        %v1716 = vrot.slane %v1684, 1
        %v1717 = vrot.slane %v1685, 1
        %v1718 = vsel %vm725, %v1716, %v1717
        %v1719 = vrot.slane %v1686, 1
        %v1720 = vrot.slane %v1687, 1
        %v1721 = vsel %vm725, %v1719, %v1720
        %v1722 = vrot.slane %v1688, 1
        %v1723 = vrot.slane %v1689, 1
        %v1724 = vsel %vm725, %v1722, %v1723
        %v1725 = vrot.slane %v1690, 1
        %v1726 = vrot.slane %v1691, 1
        %v1727 = vsel %vm725, %v1725, %v1726
        %v1728 = vrot.slane %v1692, 1
        %v1729 = vrot.slane %v1693, 1
        %v1730 = vsel %vm725, %v1728, %v1729
        %v1731 = vrot.slane %v1694, 1
        %v1732 = vrot.slane %v1695, 1
        %v1733 = vsel %vm725, %v1731, %v1732
        %v1734 = vrot.slane %v1696, 1
        %v1735 = vrot.slane %v1697, 1
        %v1736 = vsel %vm725, %v1734, %v1735
        %v1737 = vrot.slane %v1698, 1
        %v1738 = vrot.slane %v1699, 1
        %v1739 = vsel %vm725, %v1737, %v1738
        %v1748 = vpack.c.bf16 %v1721, %v1718
        %v1749 = vpack.c.bf16 %v1727, %v1724
        %v1750 = vpack.c.bf16 %v1733, %v1730
        %v1751 = vpack.c.bf16 %v1739, %v1736
        %s1752 = scalar_lea.vmem %s4, 256
        %v1753 = vld [vmem:[%s1752] sm:$0xf]
        %v1754 = vld [vmem:[%s1752 + $0x4] sm:$0xf]
        %v1755 = vld [vmem:[%s1752 + $0x8] sm:$0xf]
        %v1756 = vld [vmem:[%s1752 + $0xc] sm:$0xf]
        %v1757 = vld [vmem:[%s1752 + $0x10] sm:$0xf]
        %v1758 = vld [vmem:[%s1752 + $0x14] sm:$0xf]
        %v1759 = vld [vmem:[%s1752 + $0x18] sm:$0xf]
        %v1760 = vld [vmem:[%s1752 + $0x1c] sm:$0xf]
        %v1761 = vld [vmem:[%s1752 + $0x20] sm:$0xf]
        %v1762 = vld [vmem:[%s1752 + $0x24] sm:$0xf]
        %v1763 = vld [vmem:[%s1752 + $0x28] sm:$0xf]
        %v1764 = vld [vmem:[%s1752 + $0x2c] sm:$0xf]
        %v1765 = vld [vmem:[%s1752 + $0x30] sm:$0xf]
        %v1766 = vld [vmem:[%s1752 + $0x34] sm:$0xf]
        %v1767 = vld [vmem:[%s1752 + $0x38] sm:$0xf]
        %v1768 = vld [vmem:[%s1752 + $0x3c] sm:$0xf]
        %v1785 = vunpack.c.l.b16 %v1753
        %v1786 = vunpack.c.l.b16 %v1754
        %v1787 = vunpack.c.l.b16 %v1755
        %v1788 = vunpack.c.l.b16 %v1756
        %v1789 = vunpack.c.l.b16 %v1757
        %v1790 = vunpack.c.l.b16 %v1758
        %v1791 = vunpack.c.l.b16 %v1759
        %v1792 = vunpack.c.l.b16 %v1760
        %v1793 = vunpack.c.l.b16 %v1761
        %v1794 = vunpack.c.l.b16 %v1762
        %v1795 = vunpack.c.l.b16 %v1763
        %v1796 = vunpack.c.l.b16 %v1764
        %v1797 = vunpack.c.l.b16 %v1765
        %v1798 = vunpack.c.l.b16 %v1766
        %v1799 = vunpack.c.l.b16 %v1767
        %v1800 = vunpack.c.l.b16 %v1768
        %v1801 = vpack.c.b16 %v1786, %v1785
        %v1802 = vpack.c.b16 %v1788, %v1787
        %v1803 = vpack.c.b16 %v1790, %v1789
        %v1804 = vpack.c.b16 %v1792, %v1791
        %v1805 = vpack.c.b16 %v1794, %v1793
        %v1806 = vpack.c.b16 %v1796, %v1795
        %v1807 = vpack.c.b16 %v1798, %v1797
        %v1808 = vpack.c.b16 %v1800, %v1799
        %1817 = vmatprep.subr.bf16.mxu0 0
        %1818 = vmatpush1.bf16.msra.mxu0 %v1808
        %1819 = vmatprep.subr.bf16.mxu0 0
        %1820 = vmatpush1.bf16.msra.mxu0 %v1807
        %1821 = vmatprep.subr.bf16.mxu0 0
        %1822 = vmatpush1.bf16.msra.mxu0 %v1806
        %1823 = vmatprep.subr.bf16.mxu0 0
        %1824 = vmatpush1.bf16.msra.mxu0 %v1805
        %1825 = vmatprep.subr.bf16.mxu0 0
        %1826 = vmatpush1.bf16.msra.mxu0 %v1804
        %1827 = vmatprep.subr.bf16.mxu0 0
        %1828 = vmatpush1.bf16.msra.mxu0 %v1803
        %1829 = vmatprep.subr.bf16.mxu0 0
        %1830 = vmatpush1.bf16.msra.mxu0 %v1802
        %1831 = vmatprep.subr.bf16.mxu0 0
        %1832 = vmatpush1.bf16.msra.mxu0 %v1801
        %1833 = vmatprep.subr.bf16.mxu0 0
        %1834 = vmatpush2.bf16.msra.mxu0 0
        %1835 = vmatprep.subr.bf16.mxu0 0
        %1836 = vmatpush2.bf16.msra.mxu0 0
        %1837 = vmatprep.subr.bf16.mxu0 0
        %1838 = vmatpush2.bf16.msra.mxu0 0
        %1839 = vmatprep.subr.bf16.mxu0 0
        %1840 = vmatpush2.bf16.msra.mxu0 0
        %1841 = vmatprep.subr.bf16.mxu0 0
        %1842 = vmatpush2.bf16.msra.mxu0 0
        %1843 = vmatprep.subr.bf16.mxu0 0
        %1844 = vmatpush2.bf16.msra.mxu0 0
        %1845 = vmatprep.subr.bf16.mxu0 0
        %1846 = vmatpush2.bf16.msra.mxu0 0
        %1847 = vmatprep.subr.bf16.mxu0 0
        %1848 = vmatpush2.bf16.msra.mxu0 0
        %1849 = vmatprep.mubr.bf16.mxu0 0
        %1850 = vmatmul.mubr.bf16.gmra.mxu0 %v1748
        %v1851 = vpop.f32.mrf.mxu0
        %v1852 = vadd.f32 0.0, %v1851
        %v1853 = vpop.f32.mrf.mxu0
        %v1854 = vpop.f32.mrf.mxu0
        %v1855 = vadd.f32 0.0, %v1854
        %v1856 = vpop.f32.mrf.mxu0
        %1857 = vmatprep.mubr.bf16.mxu0 0
        %1858 = vmatmul.mubr.bf16.gmra.mxu0 %v1749
        %v1859 = vpop.f32.mrf.mxu0
        %v1860 = vadd.f32 0.0, %v1859
        %v1861 = vpop.f32.mrf.mxu0
        %v1862 = vpop.f32.mrf.mxu0
        %v1863 = vadd.f32 0.0, %v1862
        %v1864 = vpop.f32.mrf.mxu0
        %1865 = vmatprep.mubr.bf16.mxu0 0
        %1866 = vmatmul.mubr.bf16.gmra.mxu0 %v1750
        %v1867 = vpop.f32.mrf.mxu0
        %v1868 = vadd.f32 0.0, %v1867
        %v1869 = vpop.f32.mrf.mxu0
        %v1870 = vpop.f32.mrf.mxu0
        %v1871 = vadd.f32 0.0, %v1870
        %v1872 = vpop.f32.mrf.mxu0
        %1873 = vmatprep.mubr.bf16.mxu0 0
        %1874 = vmatmul.mubr.bf16.gmra.mxu0 %v1751
        %v1875 = vpop.f32.mrf.mxu0
        %v1876 = vadd.f32 0.0, %v1875
        %v1877 = vpop.f32.mrf.mxu0
        %v1878 = vpop.f32.mrf.mxu0
        %v1879 = vadd.f32 0.0, %v1878
        %v1880 = vpop.f32.mrf.mxu0
        %1881 = vdwg.mxu0
        %v1882 = vadd.f32 %v1540, %v1852
        %v1883 = vadd.f32 %v1541, %v1855
        %v1884 = vadd.f32 %v1542, %v1860
        %v1885 = vadd.f32 %v1543, %v1863
        %v1886 = vadd.f32 %v1544, %v1868
        %v1887 = vadd.f32 %v1545, %v1871
        %v1888 = vadd.f32 %v1546, %v1876
        %v1889 = vadd.f32 %v1547, %v1879
        %v1890 = vld [vmem:[%s1308] sm:$0xe]
        %v1891 = vld [vmem:[%s1308 + $0x8] sm:$0xe]
        %v1892 = vld [vmem:[%s1308 + $0x10] sm:$0xe]
        %v1893 = vld [vmem:[%s1308 + $0x18] sm:$0xe]
        %v1894 = vld [vmem:[%s1308 + $0x20] sm:$0xe]
        %v1895 = vld [vmem:[%s1308 + $0x28] sm:$0xe]
        %v1896 = vld [vmem:[%s1308 + $0x30] sm:$0xe]
        %v1897 = vld [vmem:[%s1308 + $0x38] sm:$0xe]
        %v1898 = vunpack.c.l.bf16 %v1890
        %v1899 = vunpack.c.l.bf16 %v1891
        %v1900 = vunpack.c.l.bf16 %v1892
        %v1901 = vunpack.c.l.bf16 %v1893
        %v1902 = vunpack.c.l.bf16 %v1894
        %v1903 = vunpack.c.l.bf16 %v1895
        %v1904 = vunpack.c.l.bf16 %v1896
        %v1905 = vunpack.c.l.bf16 %v1897
        %v1906 = vld [vmem:[%s1325 + $0x2] sm:$0xff]
        %v1907 = vld [vmem:[%s1325 + $0x12] sm:$0xff]
        %v1908 = vld [vmem:[%s1325 + $0x22] sm:$0xff]
        %v1909 = vld [vmem:[%s1325 + $0x32] sm:$0xff]
        %v1910 = vld [vmem:[%s1325 + $0x42] sm:$0xff]
        %v1911 = vld [vmem:[%s1325 + $0x52] sm:$0xff]
        %v1912 = vld [vmem:[%s1325 + $0x62] sm:$0xff]
        %v1913 = vld [vmem:[%s1325 + $0x72] sm:$0xff]
        %v1914 = vmul.f32 %v1898, %v457
        %v1915 = vmul.f32 %v1899, %v457
        %v1916 = vmul.f32 %v1900, %v457
        %v1917 = vmul.f32 %v1901, %v457
        %v1918 = vmul.f32 %v1902, %v457
        %v1919 = vmul.f32 %v1903, %v457
        %v1920 = vmul.f32 %v1904, %v457
        %v1921 = vmul.f32 %v1905, %v457
        %v1922 = vadd.f32 %v1914, %v471
        %v1923 = vadd.f32 %v1915, %v471
        %v1924 = vadd.f32 %v1916, %v471
        %v1925 = vadd.f32 %v1917, %v471
        %v1926 = vadd.f32 %v1918, %v471
        %v1927 = vadd.f32 %v1919, %v471
        %v1928 = vadd.f32 %v1920, %v471
        %v1929 = vadd.f32 %v1921, %v471
        %v1930 = vmax.f32 %v1922, 0.0
        %v1931 = vmax.f32 %v1923, 0.0
        %v1932 = vmax.f32 %v1924, 0.0
        %v1933 = vmax.f32 %v1925, 0.0
        %v1934 = vmax.f32 %v1926, 0.0
        %v1935 = vmax.f32 %v1927, 0.0
        %v1936 = vmax.f32 %v1928, 0.0
        %v1937 = vmax.f32 %v1929, 0.0
        %1939 = vset.pattern.permute.xlu0 0
        %1940 = vperm.xlu0 %1939, %v1906
        %v1941 = vpop.permute.xlu0 %1940
        %1943 = vset.pattern.permute.xlu0 0
        %1944 = vperm.xlu0 %1943, %v1907
        %v1945 = vpop.permute.xlu0 %1944
        %1947 = vset.pattern.permute.xlu0 0
        %1948 = vperm.xlu0 %1947, %v1908
        %v1949 = vpop.permute.xlu0 %1948
        %1951 = vset.pattern.permute.xlu0 0
        %1952 = vperm.xlu0 %1951, %v1909
        %v1953 = vpop.permute.xlu0 %1952
        %1955 = vset.pattern.permute.xlu0 0
        %1956 = vperm.xlu0 %1955, %v1910
        %v1957 = vpop.permute.xlu0 %1956
        %1959 = vset.pattern.permute.xlu0 0
        %1960 = vperm.xlu0 %1959, %v1911
        %v1961 = vpop.permute.xlu0 %1960
        %1963 = vset.pattern.permute.xlu0 0
        %1964 = vperm.xlu0 %1963, %v1912
        %v1965 = vpop.permute.xlu0 %1964
        %1967 = vset.pattern.permute.xlu0 0
        %1968 = vperm.xlu0 %1967, %v1913
        %v1969 = vpop.permute.xlu0 %1968
        %v1970 = vrot.slane %v1941, 6
        %v1971 = vrot.slane %v1945, 6
        %v1972 = vrot.slane %v1949, 6
        %v1973 = vrot.slane %v1953, 6
        %v1974 = vrot.slane %v1957, 6
        %v1975 = vrot.slane %v1961, 6
        %v1976 = vrot.slane %v1965, 6
        %v1977 = vrot.slane %v1969, 6
        %v1986 = vmul.f32 %v1930, %v1970
        %v1987 = vmul.f32 %v1621, %v1970
        %v1988 = vmul.f32 %v1931, %v1971
        %v1989 = vmul.f32 %v1623, %v1971
        %v1990 = vmul.f32 %v1932, %v1972
        %v1991 = vmul.f32 %v1625, %v1972
        %v1992 = vmul.f32 %v1933, %v1973
        %v1993 = vmul.f32 %v1627, %v1973
        %v1994 = vmul.f32 %v1934, %v1974
        %v1995 = vmul.f32 %v1629, %v1974
        %v1996 = vmul.f32 %v1935, %v1975
        %v1997 = vmul.f32 %v1631, %v1975
        %v1998 = vmul.f32 %v1936, %v1976
        %v1999 = vmul.f32 %v1633, %v1976
        %v2000 = vmul.f32 %v1937, %v1977
        %v2001 = vmul.f32 %v1635, %v1977
        %v2018 = vrot.slane %v1986, 2
        %v2019 = vrot.slane %v1987, 2
        %v2020 = vsel %vm1133, %v2018, %v2019
        %v2021 = vrot.slane %v1988, 2
        %v2022 = vrot.slane %v1989, 2
        %v2023 = vsel %vm1133, %v2021, %v2022
        %v2024 = vrot.slane %v1990, 2
        %v2025 = vrot.slane %v1991, 2
        %v2026 = vsel %vm1133, %v2024, %v2025
        %v2027 = vrot.slane %v1992, 2
        %v2028 = vrot.slane %v1993, 2
        %v2029 = vsel %vm1133, %v2027, %v2028
        %v2030 = vrot.slane %v1994, 2
        %v2031 = vrot.slane %v1995, 2
        %v2032 = vsel %vm1133, %v2030, %v2031
        %v2033 = vrot.slane %v1996, 2
        %v2034 = vrot.slane %v1997, 2
        %v2035 = vsel %vm1133, %v2033, %v2034
        %v2036 = vrot.slane %v1998, 2
        %v2037 = vrot.slane %v1999, 2
        %v2038 = vsel %vm1133, %v2036, %v2037
        %v2039 = vrot.slane %v2000, 2
        %v2040 = vrot.slane %v2001, 2
        %v2041 = vsel %vm1133, %v2039, %v2040
        %v2050 = vpack.c.bf16 %v2023, %v2020
        %v2051 = vpack.c.bf16 %v2029, %v2026
        %v2052 = vpack.c.bf16 %v2035, %v2032
        %v2053 = vpack.c.bf16 %v2041, %v2038
        %s2054 = scalar_lea.vmem %s4, 320
        %v2055 = vld [vmem:[%s2054] sm:$0xf]
        %v2056 = vld [vmem:[%s2054 + $0x4] sm:$0xf]
        %v2057 = vld [vmem:[%s2054 + $0x8] sm:$0xf]
        %v2058 = vld [vmem:[%s2054 + $0xc] sm:$0xf]
        %v2059 = vld [vmem:[%s2054 + $0x10] sm:$0xf]
        %v2060 = vld [vmem:[%s2054 + $0x14] sm:$0xf]
        %v2061 = vld [vmem:[%s2054 + $0x18] sm:$0xf]
        %v2062 = vld [vmem:[%s2054 + $0x1c] sm:$0xf]
        %v2063 = vld [vmem:[%s2054 + $0x20] sm:$0xf]
        %v2064 = vld [vmem:[%s2054 + $0x24] sm:$0xf]
        %v2065 = vld [vmem:[%s2054 + $0x28] sm:$0xf]
        %v2066 = vld [vmem:[%s2054 + $0x2c] sm:$0xf]
        %v2067 = vld [vmem:[%s2054 + $0x30] sm:$0xf]
        %v2068 = vld [vmem:[%s2054 + $0x34] sm:$0xf]
        %v2069 = vld [vmem:[%s2054 + $0x38] sm:$0xf]
        %v2070 = vld [vmem:[%s2054 + $0x3c] sm:$0xf]
        %v2087 = vunpack.c.l.b16 %v2055
        %v2088 = vunpack.c.l.b16 %v2056
        %v2089 = vunpack.c.l.b16 %v2057
        %v2090 = vunpack.c.l.b16 %v2058
        %v2091 = vunpack.c.l.b16 %v2059
        %v2092 = vunpack.c.l.b16 %v2060
        %v2093 = vunpack.c.l.b16 %v2061
        %v2094 = vunpack.c.l.b16 %v2062
        %v2095 = vunpack.c.l.b16 %v2063
        %v2096 = vunpack.c.l.b16 %v2064
        %v2097 = vunpack.c.l.b16 %v2065
        %v2098 = vunpack.c.l.b16 %v2066
        %v2099 = vunpack.c.l.b16 %v2067
        %v2100 = vunpack.c.l.b16 %v2068
        %v2101 = vunpack.c.l.b16 %v2069
        %v2102 = vunpack.c.l.b16 %v2070
        %v2103 = vpack.c.b16 %v2088, %v2087
        %v2104 = vpack.c.b16 %v2090, %v2089
        %v2105 = vpack.c.b16 %v2092, %v2091
        %v2106 = vpack.c.b16 %v2094, %v2093
        %v2107 = vpack.c.b16 %v2096, %v2095
        %v2108 = vpack.c.b16 %v2098, %v2097
        %v2109 = vpack.c.b16 %v2100, %v2099
        %v2110 = vpack.c.b16 %v2102, %v2101
        %2119 = vmatprep.subr.bf16.mxu0 0
        %2120 = vmatpush1.bf16.msra.mxu0 %v2110
        %2121 = vmatprep.subr.bf16.mxu0 0
        %2122 = vmatpush1.bf16.msra.mxu0 %v2109
        %2123 = vmatprep.subr.bf16.mxu0 0
        %2124 = vmatpush1.bf16.msra.mxu0 %v2108
        %2125 = vmatprep.subr.bf16.mxu0 0
        %2126 = vmatpush1.bf16.msra.mxu0 %v2107
        %2127 = vmatprep.subr.bf16.mxu0 0
        %2128 = vmatpush1.bf16.msra.mxu0 %v2106
        %2129 = vmatprep.subr.bf16.mxu0 0
        %2130 = vmatpush1.bf16.msra.mxu0 %v2105
        %2131 = vmatprep.subr.bf16.mxu0 0
        %2132 = vmatpush1.bf16.msra.mxu0 %v2104
        %2133 = vmatprep.subr.bf16.mxu0 0
        %2134 = vmatpush1.bf16.msra.mxu0 %v2103
        %2135 = vmatprep.subr.bf16.mxu0 0
        %2136 = vmatpush2.bf16.msra.mxu0 0
        %2137 = vmatprep.subr.bf16.mxu0 0
        %2138 = vmatpush2.bf16.msra.mxu0 0
        %2139 = vmatprep.subr.bf16.mxu0 0
        %2140 = vmatpush2.bf16.msra.mxu0 0
        %2141 = vmatprep.subr.bf16.mxu0 0
        %2142 = vmatpush2.bf16.msra.mxu0 0
        %2143 = vmatprep.subr.bf16.mxu0 0
        %2144 = vmatpush2.bf16.msra.mxu0 0
        %2145 = vmatprep.subr.bf16.mxu0 0
        %2146 = vmatpush2.bf16.msra.mxu0 0
        %2147 = vmatprep.subr.bf16.mxu0 0
        %2148 = vmatpush2.bf16.msra.mxu0 0
        %2149 = vmatprep.subr.bf16.mxu0 0
        %2150 = vmatpush2.bf16.msra.mxu0 0
        %2151 = vmatprep.mubr.bf16.mxu0 0
        %2152 = vmatmul.mubr.bf16.gmra.mxu0 %v2050
        %v2153 = vpop.f32.mrf.mxu0
        %v2154 = vadd.f32 0.0, %v2153
        %v2155 = vpop.f32.mrf.mxu0
        %v2156 = vpop.f32.mrf.mxu0
        %v2157 = vadd.f32 0.0, %v2156
        %v2158 = vpop.f32.mrf.mxu0
        %2159 = vmatprep.mubr.bf16.mxu0 0
        %2160 = vmatmul.mubr.bf16.gmra.mxu0 %v2051
        %v2161 = vpop.f32.mrf.mxu0
        %v2162 = vadd.f32 0.0, %v2161
        %v2163 = vpop.f32.mrf.mxu0
        %v2164 = vpop.f32.mrf.mxu0
        %v2165 = vadd.f32 0.0, %v2164
        %v2166 = vpop.f32.mrf.mxu0
        %2167 = vmatprep.mubr.bf16.mxu0 0
        %2168 = vmatmul.mubr.bf16.gmra.mxu0 %v2052
        %v2169 = vpop.f32.mrf.mxu0
        %v2170 = vadd.f32 0.0, %v2169
        %v2171 = vpop.f32.mrf.mxu0
        %v2172 = vpop.f32.mrf.mxu0
        %v2173 = vadd.f32 0.0, %v2172
        %v2174 = vpop.f32.mrf.mxu0
        %2175 = vmatprep.mubr.bf16.mxu0 0
        %2176 = vmatmul.mubr.bf16.gmra.mxu0 %v2053
        %v2177 = vpop.f32.mrf.mxu0
        %v2178 = vadd.f32 0.0, %v2177
        %v2179 = vpop.f32.mrf.mxu0
        %v2180 = vpop.f32.mrf.mxu0
        %v2181 = vadd.f32 0.0, %v2180
        %v2182 = vpop.f32.mrf.mxu0
        %2183 = vdwg.mxu0
        %v2184 = vadd.f32 %v1882, %v2154
        %v2185 = vadd.f32 %v1883, %v2157
        %v2186 = vadd.f32 %v1884, %v2162
        %v2187 = vadd.f32 %v1885, %v2165
        %v2188 = vadd.f32 %v1886, %v2170
        %v2189 = vadd.f32 %v1887, %v2173
        %v2190 = vadd.f32 %v1888, %v2178
        %v2191 = vadd.f32 %v1889, %v2181
        %s2192 = scalar_lea.vmem %s415, 16
        %v2193 = vld [vmem:[%s2192] sm:$0xf]
        %v2194 = vld [vmem:[%s2192 + $0x8] sm:$0xf]
        %v2195 = vld [vmem:[%s2192 + $0x10] sm:$0xf]
        %v2196 = vld [vmem:[%s2192 + $0x18] sm:$0xf]
        %v2197 = vld [vmem:[%s2192 + $0x20] sm:$0xf]
        %v2198 = vld [vmem:[%s2192 + $0x28] sm:$0xf]
        %v2199 = vld [vmem:[%s2192 + $0x30] sm:$0xf]
        %v2200 = vld [vmem:[%s2192 + $0x38] sm:$0xf]
        %v2201 = vunpack.c.l.bf16 %v2193
        %v2202 = vunpack.c.l.bf16 %v2194
        %v2203 = vunpack.c.l.bf16 %v2195
        %v2204 = vunpack.c.l.bf16 %v2196
        %v2205 = vunpack.c.l.bf16 %v2197
        %v2206 = vunpack.c.l.bf16 %v2198
        %v2207 = vunpack.c.l.bf16 %v2199
        %v2208 = vunpack.c.l.bf16 %v2200
        %s2209 = scalar_lea.vmem %s1, 32
        %v2210 = vld [vmem:[%s2209] sm:$0xff]
        %v2211 = vld [vmem:[%s2209 + $0x10] sm:$0xff]
        %v2212 = vld [vmem:[%s2209 + $0x20] sm:$0xff]
        %v2213 = vld [vmem:[%s2209 + $0x30] sm:$0xff]
        %v2214 = vld [vmem:[%s2209 + $0x40] sm:$0xff]
        %v2215 = vld [vmem:[%s2209 + $0x50] sm:$0xff]
        %v2216 = vld [vmem:[%s2209 + $0x60] sm:$0xff]
        %v2217 = vld [vmem:[%s2209 + $0x70] sm:$0xff]
        %v2218 = vmul.f32 %v2201, %v457
        %v2219 = vmul.f32 %v2202, %v457
        %v2220 = vmul.f32 %v2203, %v457
        %v2221 = vmul.f32 %v2204, %v457
        %v2222 = vmul.f32 %v2205, %v457
        %v2223 = vmul.f32 %v2206, %v457
        %v2224 = vmul.f32 %v2207, %v457
        %v2225 = vmul.f32 %v2208, %v457
        %v2226 = vadd.f32 %v2218, %v471
        %v2227 = vadd.f32 %v2219, %v471
        %v2228 = vadd.f32 %v2220, %v471
        %v2229 = vadd.f32 %v2221, %v471
        %v2230 = vadd.f32 %v2222, %v471
        %v2231 = vadd.f32 %v2223, %v471
        %v2232 = vadd.f32 %v2224, %v471
        %v2233 = vadd.f32 %v2225, %v471
        %v2234 = vmax.f32 %v2226, 0.0
        %v2235 = vmax.f32 %v2227, 0.0
        %v2236 = vmax.f32 %v2228, 0.0
        %v2237 = vmax.f32 %v2229, 0.0
        %v2238 = vmax.f32 %v2230, 0.0
        %v2239 = vmax.f32 %v2231, 0.0
        %v2240 = vmax.f32 %v2232, 0.0
        %v2241 = vmax.f32 %v2233, 0.0
        %2243 = vset.pattern.permute.xlu0 0
        %2244 = vperm.xlu0 %2243, %v2210
        %v2245 = vpop.permute.xlu0 %2244
        %2248 = vset.pattern.permute.xlu0 0
        %2249 = vperm.xlu0 %2248, %v2211
        %v2250 = vpop.permute.xlu0 %2249
        %2253 = vset.pattern.permute.xlu0 0
        %2254 = vperm.xlu0 %2253, %v2212
        %v2255 = vpop.permute.xlu0 %2254
        %2258 = vset.pattern.permute.xlu0 0
        %2259 = vperm.xlu0 %2258, %v2213
        %v2260 = vpop.permute.xlu0 %2259
        %2263 = vset.pattern.permute.xlu0 0
        %2264 = vperm.xlu0 %2263, %v2214
        %v2265 = vpop.permute.xlu0 %2264
        %2268 = vset.pattern.permute.xlu0 0
        %2269 = vperm.xlu0 %2268, %v2215
        %v2270 = vpop.permute.xlu0 %2269
        %2273 = vset.pattern.permute.xlu0 0
        %2274 = vperm.xlu0 %2273, %v2216
        %v2275 = vpop.permute.xlu0 %2274
        %2278 = vset.pattern.permute.xlu0 0
        %2279 = vperm.xlu0 %2278, %v2217
        %v2280 = vpop.permute.xlu0 %2279
        %v2282 = vmul.f32 %v2234, %v2245
        %v2283 = vmul.f32 %v2235, %v2250
        %v2284 = vmul.f32 %v2236, %v2255
        %v2285 = vmul.f32 %v2237, %v2260
        %v2286 = vmul.f32 %v2238, %v2265
        %v2287 = vmul.f32 %v2239, %v2270
        %v2288 = vmul.f32 %v2240, %v2275
        %v2289 = vmul.f32 %v2241, %v2280
        %v2290 = vpack.c.bf16 %v2283, %v2282
        %v2291 = vpack.c.bf16 %v2285, %v2284
        %v2292 = vpack.c.bf16 %v2287, %v2286
        %v2293 = vpack.c.bf16 %v2289, %v2288
        %s2294 = scalar_lea.vmem %s4, 384
        %v2295 = vld [vmem:[%s2294] sm:$0xf]
        %v2296 = vld [vmem:[%s2294 + $0x4] sm:$0xf]
        %v2297 = vld [vmem:[%s2294 + $0x8] sm:$0xf]
        %v2298 = vld [vmem:[%s2294 + $0xc] sm:$0xf]
        %v2299 = vld [vmem:[%s2294 + $0x10] sm:$0xf]
        %v2300 = vld [vmem:[%s2294 + $0x14] sm:$0xf]
        %v2301 = vld [vmem:[%s2294 + $0x18] sm:$0xf]
        %v2302 = vld [vmem:[%s2294 + $0x1c] sm:$0xf]
        %v2303 = vld [vmem:[%s2294 + $0x20] sm:$0xf]
        %v2304 = vld [vmem:[%s2294 + $0x24] sm:$0xf]
        %v2305 = vld [vmem:[%s2294 + $0x28] sm:$0xf]
        %v2306 = vld [vmem:[%s2294 + $0x2c] sm:$0xf]
        %v2307 = vld [vmem:[%s2294 + $0x30] sm:$0xf]
        %v2308 = vld [vmem:[%s2294 + $0x34] sm:$0xf]
        %v2309 = vld [vmem:[%s2294 + $0x38] sm:$0xf]
        %v2310 = vld [vmem:[%s2294 + $0x3c] sm:$0xf]
        %v2327 = vunpack.c.l.b16 %v2295
        %v2328 = vunpack.c.l.b16 %v2296
        %v2329 = vunpack.c.l.b16 %v2297
        %v2330 = vunpack.c.l.b16 %v2298
        %v2331 = vunpack.c.l.b16 %v2299
        %v2332 = vunpack.c.l.b16 %v2300
        %v2333 = vunpack.c.l.b16 %v2301
        %v2334 = vunpack.c.l.b16 %v2302
        %v2335 = vunpack.c.l.b16 %v2303
        %v2336 = vunpack.c.l.b16 %v2304
        %v2337 = vunpack.c.l.b16 %v2305
        %v2338 = vunpack.c.l.b16 %v2306
        %v2339 = vunpack.c.l.b16 %v2307
        %v2340 = vunpack.c.l.b16 %v2308
        %v2341 = vunpack.c.l.b16 %v2309
        %v2342 = vunpack.c.l.b16 %v2310
        %v2343 = vpack.c.b16 %v2328, %v2327
        %v2344 = vpack.c.b16 %v2330, %v2329
        %v2345 = vpack.c.b16 %v2332, %v2331
        %v2346 = vpack.c.b16 %v2334, %v2333
        %v2347 = vpack.c.b16 %v2336, %v2335
        %v2348 = vpack.c.b16 %v2338, %v2337
        %v2349 = vpack.c.b16 %v2340, %v2339
        %v2350 = vpack.c.b16 %v2342, %v2341
        %2359 = vmatprep.subr.bf16.mxu0 0
        %2360 = vmatpush1.bf16.msra.mxu0 %v2350
        %2361 = vmatprep.subr.bf16.mxu0 0
        %2362 = vmatpush1.bf16.msra.mxu0 %v2349
        %2363 = vmatprep.subr.bf16.mxu0 0
        %2364 = vmatpush1.bf16.msra.mxu0 %v2348
        %2365 = vmatprep.subr.bf16.mxu0 0
        %2366 = vmatpush1.bf16.msra.mxu0 %v2347
        %2367 = vmatprep.subr.bf16.mxu0 0
        %2368 = vmatpush1.bf16.msra.mxu0 %v2346
        %2369 = vmatprep.subr.bf16.mxu0 0
        %2370 = vmatpush1.bf16.msra.mxu0 %v2345
        %2371 = vmatprep.subr.bf16.mxu0 0
        %2372 = vmatpush1.bf16.msra.mxu0 %v2344
        %2373 = vmatprep.subr.bf16.mxu0 0
        %2374 = vmatpush1.bf16.msra.mxu0 %v2343
        %2375 = vmatprep.subr.bf16.mxu0 0
        %2376 = vmatpush2.bf16.msra.mxu0 0
        %2377 = vmatprep.subr.bf16.mxu0 0
        %2378 = vmatpush2.bf16.msra.mxu0 0
        %2379 = vmatprep.subr.bf16.mxu0 0
        %2380 = vmatpush2.bf16.msra.mxu0 0
        %2381 = vmatprep.subr.bf16.mxu0 0
        %2382 = vmatpush2.bf16.msra.mxu0 0
        %2383 = vmatprep.subr.bf16.mxu0 0
        %2384 = vmatpush2.bf16.msra.mxu0 0
        %2385 = vmatprep.subr.bf16.mxu0 0
        %2386 = vmatpush2.bf16.msra.mxu0 0
        %2387 = vmatprep.subr.bf16.mxu0 0
        %2388 = vmatpush2.bf16.msra.mxu0 0
        %2389 = vmatprep.subr.bf16.mxu0 0
        %2390 = vmatpush2.bf16.msra.mxu0 0
        %2391 = vmatprep.mubr.bf16.mxu0 0
        %2392 = vmatmul.mubr.bf16.gmra.mxu0 %v2290
        %v2393 = vpop.f32.mrf.mxu0
        %v2394 = vadd.f32 0.0, %v2393
        %v2395 = vpop.f32.mrf.mxu0
        %v2396 = vpop.f32.mrf.mxu0
        %v2397 = vadd.f32 0.0, %v2396
        %v2398 = vpop.f32.mrf.mxu0
        %2399 = vmatprep.mubr.bf16.mxu0 0
        %2400 = vmatmul.mubr.bf16.gmra.mxu0 %v2291
        %v2401 = vpop.f32.mrf.mxu0
        %v2402 = vadd.f32 0.0, %v2401
        %v2403 = vpop.f32.mrf.mxu0
        %v2404 = vpop.f32.mrf.mxu0
        %v2405 = vadd.f32 0.0, %v2404
        %v2406 = vpop.f32.mrf.mxu0
        %2407 = vmatprep.mubr.bf16.mxu0 0
        %2408 = vmatmul.mubr.bf16.gmra.mxu0 %v2292
        %v2409 = vpop.f32.mrf.mxu0
        %v2410 = vadd.f32 0.0, %v2409
        %v2411 = vpop.f32.mrf.mxu0
        %v2412 = vpop.f32.mrf.mxu0
        %v2413 = vadd.f32 0.0, %v2412
        %v2414 = vpop.f32.mrf.mxu0
        %2415 = vmatprep.mubr.bf16.mxu0 0
        %2416 = vmatmul.mubr.bf16.gmra.mxu0 %v2293
        %v2417 = vpop.f32.mrf.mxu0
        %v2418 = vadd.f32 0.0, %v2417
        %v2419 = vpop.f32.mrf.mxu0
        %v2420 = vpop.f32.mrf.mxu0
        %v2421 = vadd.f32 0.0, %v2420
        %v2422 = vpop.f32.mrf.mxu0
        %2423 = vdwg.mxu0
        %v2424 = vadd.f32 %v2184, %v2394
        %v2425 = vadd.f32 %v2185, %v2397
        %v2426 = vadd.f32 %v2186, %v2402
        %v2427 = vadd.f32 %v2187, %v2405
        %v2428 = vadd.f32 %v2188, %v2410
        %v2429 = vadd.f32 %v2189, %v2413
        %v2430 = vadd.f32 %v2190, %v2418
        %v2431 = vadd.f32 %v2191, %v2421
        %v2432 = vld [vmem:[%s2192] sm:$0xf]
        %v2433 = vld [vmem:[%s2192 + $0x4] sm:$0x1]
        %v2434 = vld [vmem:[%s2192 + $0x8] sm:$0xf]
        %v2435 = vld [vmem:[%s2192 + $0xc] sm:$0x1]
        %v2436 = vld [vmem:[%s2192 + $0x10] sm:$0xf]
        %v2437 = vld [vmem:[%s2192 + $0x14] sm:$0x1]
        %v2438 = vld [vmem:[%s2192 + $0x18] sm:$0xf]
        %v2439 = vld [vmem:[%s2192 + $0x1c] sm:$0x1]
        %v2440 = vld [vmem:[%s2192 + $0x20] sm:$0xf]
        %v2441 = vld [vmem:[%s2192 + $0x24] sm:$0x1]
        %v2442 = vld [vmem:[%s2192 + $0x28] sm:$0xf]
        %v2443 = vld [vmem:[%s2192 + $0x2c] sm:$0x1]
        %v2444 = vld [vmem:[%s2192 + $0x30] sm:$0xf]
        %v2445 = vld [vmem:[%s2192 + $0x34] sm:$0x1]
        %v2446 = vld [vmem:[%s2192 + $0x38] sm:$0xf]
        %v2447 = vld [vmem:[%s2192 + $0x3c] sm:$0x1]
        %v2448 = vunpack.c.l.bf16 %v2432
        %v2449 = vunpack.c.l.bf16 %v2433
        %v2450 = vunpack.c.l.bf16 %v2434
        %v2451 = vunpack.c.l.bf16 %v2435
        %v2452 = vunpack.c.l.bf16 %v2436
        %v2453 = vunpack.c.l.bf16 %v2437
        %v2454 = vunpack.c.l.bf16 %v2438
        %v2455 = vunpack.c.l.bf16 %v2439
        %v2456 = vunpack.c.l.bf16 %v2440
        %v2457 = vunpack.c.l.bf16 %v2441
        %v2458 = vunpack.c.l.bf16 %v2442
        %v2459 = vunpack.c.l.bf16 %v2443
        %v2460 = vunpack.c.l.bf16 %v2444
        %v2461 = vunpack.c.l.bf16 %v2445
        %v2462 = vunpack.c.l.bf16 %v2446
        %v2463 = vunpack.c.l.bf16 %v2447
        %v2464 = vld [vmem:[%s2209 + $0x1] sm:$0xff]
        %v2465 = vld [vmem:[%s2209 + $0x11] sm:$0xff]
        %v2466 = vld [vmem:[%s2209 + $0x21] sm:$0xff]
        %v2467 = vld [vmem:[%s2209 + $0x31] sm:$0xff]
        %v2468 = vld [vmem:[%s2209 + $0x41] sm:$0xff]
        %v2469 = vld [vmem:[%s2209 + $0x51] sm:$0xff]
        %v2470 = vld [vmem:[%s2209 + $0x61] sm:$0xff]
        %v2471 = vld [vmem:[%s2209 + $0x71] sm:$0xff]
        %v2472 = vmul.f32 %v2448, %v457
        %v2473 = vmul.f32 %v2449, %v457
        %v2474 = vmul.f32 %v2450, %v457
        %v2475 = vmul.f32 %v2451, %v457
        %v2476 = vmul.f32 %v2452, %v457
        %v2477 = vmul.f32 %v2453, %v457
        %v2478 = vmul.f32 %v2454, %v457
        %v2479 = vmul.f32 %v2455, %v457
        %v2480 = vmul.f32 %v2456, %v457
        %v2481 = vmul.f32 %v2457, %v457
        %v2482 = vmul.f32 %v2458, %v457
        %v2483 = vmul.f32 %v2459, %v457
        %v2484 = vmul.f32 %v2460, %v457
        %v2485 = vmul.f32 %v2461, %v457
        %v2486 = vmul.f32 %v2462, %v457
        %v2487 = vmul.f32 %v2463, %v457
        %v2488 = vadd.f32 %v2472, %v471
        %v2489 = vadd.f32 %v2473, %v471
        %v2490 = vadd.f32 %v2474, %v471
        %v2491 = vadd.f32 %v2475, %v471
        %v2492 = vadd.f32 %v2476, %v471
        %v2493 = vadd.f32 %v2477, %v471
        %v2494 = vadd.f32 %v2478, %v471
        %v2495 = vadd.f32 %v2479, %v471
        %v2496 = vadd.f32 %v2480, %v471
        %v2497 = vadd.f32 %v2481, %v471
        %v2498 = vadd.f32 %v2482, %v471
        %v2499 = vadd.f32 %v2483, %v471
        %v2500 = vadd.f32 %v2484, %v471
        %v2501 = vadd.f32 %v2485, %v471
        %v2502 = vadd.f32 %v2486, %v471
        %v2503 = vadd.f32 %v2487, %v471
        %v2504 = vmax.f32 %v2488, 0.0
        %v2505 = vmax.f32 %v2489, 0.0
        %v2506 = vmax.f32 %v2490, 0.0
        %v2507 = vmax.f32 %v2491, 0.0
        %v2508 = vmax.f32 %v2492, 0.0
        %v2509 = vmax.f32 %v2493, 0.0
        %v2510 = vmax.f32 %v2494, 0.0
        %v2511 = vmax.f32 %v2495, 0.0
        %v2512 = vmax.f32 %v2496, 0.0
        %v2513 = vmax.f32 %v2497, 0.0
        %v2514 = vmax.f32 %v2498, 0.0
        %v2515 = vmax.f32 %v2499, 0.0
        %v2516 = vmax.f32 %v2500, 0.0
        %v2517 = vmax.f32 %v2501, 0.0
        %v2518 = vmax.f32 %v2502, 0.0
        %v2519 = vmax.f32 %v2503, 0.0
        %2521 = vset.pattern.permute.xlu0 0
        %2522 = vperm.xlu0 %2521, %v2464
        %v2523 = vpop.permute.xlu0 %2522
        %2525 = vset.pattern.permute.xlu0 0
        %2526 = vperm.xlu0 %2525, %v2465
        %v2527 = vpop.permute.xlu0 %2526
        %2529 = vset.pattern.permute.xlu0 0
        %2530 = vperm.xlu0 %2529, %v2466
        %v2531 = vpop.permute.xlu0 %2530
        %2533 = vset.pattern.permute.xlu0 0
        %2534 = vperm.xlu0 %2533, %v2467
        %v2535 = vpop.permute.xlu0 %2534
        %2537 = vset.pattern.permute.xlu0 0
        %2538 = vperm.xlu0 %2537, %v2468
        %v2539 = vpop.permute.xlu0 %2538
        %2541 = vset.pattern.permute.xlu0 0
        %2542 = vperm.xlu0 %2541, %v2469
        %v2543 = vpop.permute.xlu0 %2542
        %2545 = vset.pattern.permute.xlu0 0
        %2546 = vperm.xlu0 %2545, %v2470
        %v2547 = vpop.permute.xlu0 %2546
        %2549 = vset.pattern.permute.xlu0 0
        %2550 = vperm.xlu0 %2549, %v2471
        %v2551 = vpop.permute.xlu0 %2550
        %v2552 = vrot.slane %v2523, 7
        %v2553 = vrot.slane %v2527, 7
        %v2554 = vrot.slane %v2531, 7
        %v2555 = vrot.slane %v2535, 7
        %v2556 = vrot.slane %v2539, 7
        %v2557 = vrot.slane %v2543, 7
        %v2558 = vrot.slane %v2547, 7
        %v2559 = vrot.slane %v2551, 7
        %v2568 = vmul.f32 %v2504, %v2552
        %v2569 = vmul.f32 %v2505, %v2552
        %v2570 = vmul.f32 %v2506, %v2553
        %v2571 = vmul.f32 %v2507, %v2553
        %v2572 = vmul.f32 %v2508, %v2554
        %v2573 = vmul.f32 %v2509, %v2554
        %v2574 = vmul.f32 %v2510, %v2555
        %v2575 = vmul.f32 %v2511, %v2555
        %v2576 = vmul.f32 %v2512, %v2556
        %v2577 = vmul.f32 %v2513, %v2556
        %v2578 = vmul.f32 %v2514, %v2557
        %v2579 = vmul.f32 %v2515, %v2557
        %v2580 = vmul.f32 %v2516, %v2558
        %v2581 = vmul.f32 %v2517, %v2558
        %v2582 = vmul.f32 %v2518, %v2559
        %v2583 = vmul.f32 %v2519, %v2559
        %v2600 = vrot.slane %v2568, 1
        %v2601 = vrot.slane %v2569, 1
        %v2602 = vsel %vm725, %v2600, %v2601
        %v2603 = vrot.slane %v2570, 1
        %v2604 = vrot.slane %v2571, 1
        %v2605 = vsel %vm725, %v2603, %v2604
        %v2606 = vrot.slane %v2572, 1
        %v2607 = vrot.slane %v2573, 1
        %v2608 = vsel %vm725, %v2606, %v2607
        %v2609 = vrot.slane %v2574, 1
        %v2610 = vrot.slane %v2575, 1
        %v2611 = vsel %vm725, %v2609, %v2610
        %v2612 = vrot.slane %v2576, 1
        %v2613 = vrot.slane %v2577, 1
        %v2614 = vsel %vm725, %v2612, %v2613
        %v2615 = vrot.slane %v2578, 1
        %v2616 = vrot.slane %v2579, 1
        %v2617 = vsel %vm725, %v2615, %v2616
        %v2618 = vrot.slane %v2580, 1
        %v2619 = vrot.slane %v2581, 1
        %v2620 = vsel %vm725, %v2618, %v2619
        %v2621 = vrot.slane %v2582, 1
        %v2622 = vrot.slane %v2583, 1
        %v2623 = vsel %vm725, %v2621, %v2622
        %v2632 = vpack.c.bf16 %v2605, %v2602
        %v2633 = vpack.c.bf16 %v2611, %v2608
        %v2634 = vpack.c.bf16 %v2617, %v2614
        %v2635 = vpack.c.bf16 %v2623, %v2620
        %s2636 = scalar_lea.vmem %s4, 448
        %v2637 = vld [vmem:[%s2636] sm:$0xf]
        %v2638 = vld [vmem:[%s2636 + $0x4] sm:$0xf]
        %v2639 = vld [vmem:[%s2636 + $0x8] sm:$0xf]
        %v2640 = vld [vmem:[%s2636 + $0xc] sm:$0xf]
        %v2641 = vld [vmem:[%s2636 + $0x10] sm:$0xf]
        %v2642 = vld [vmem:[%s2636 + $0x14] sm:$0xf]
        %v2643 = vld [vmem:[%s2636 + $0x18] sm:$0xf]
        %v2644 = vld [vmem:[%s2636 + $0x1c] sm:$0xf]
        %v2645 = vld [vmem:[%s2636 + $0x20] sm:$0xf]
        %v2646 = vld [vmem:[%s2636 + $0x24] sm:$0xf]
        %v2647 = vld [vmem:[%s2636 + $0x28] sm:$0xf]
        %v2648 = vld [vmem:[%s2636 + $0x2c] sm:$0xf]
        %v2649 = vld [vmem:[%s2636 + $0x30] sm:$0xf]
        %v2650 = vld [vmem:[%s2636 + $0x34] sm:$0xf]
        %v2651 = vld [vmem:[%s2636 + $0x38] sm:$0xf]
        %v2652 = vld [vmem:[%s2636 + $0x3c] sm:$0xf]
        %v2669 = vunpack.c.l.b16 %v2637
        %v2670 = vunpack.c.l.b16 %v2638
        %v2671 = vunpack.c.l.b16 %v2639
        %v2672 = vunpack.c.l.b16 %v2640
        %v2673 = vunpack.c.l.b16 %v2641
        %v2674 = vunpack.c.l.b16 %v2642
        %v2675 = vunpack.c.l.b16 %v2643
        %v2676 = vunpack.c.l.b16 %v2644
        %v2677 = vunpack.c.l.b16 %v2645
        %v2678 = vunpack.c.l.b16 %v2646
        %v2679 = vunpack.c.l.b16 %v2647
        %v2680 = vunpack.c.l.b16 %v2648
        %v2681 = vunpack.c.l.b16 %v2649
        %v2682 = vunpack.c.l.b16 %v2650
        %v2683 = vunpack.c.l.b16 %v2651
        %v2684 = vunpack.c.l.b16 %v2652
        %v2685 = vpack.c.b16 %v2670, %v2669
        %v2686 = vpack.c.b16 %v2672, %v2671
        %v2687 = vpack.c.b16 %v2674, %v2673
        %v2688 = vpack.c.b16 %v2676, %v2675
        %v2689 = vpack.c.b16 %v2678, %v2677
        %v2690 = vpack.c.b16 %v2680, %v2679
        %v2691 = vpack.c.b16 %v2682, %v2681
        %v2692 = vpack.c.b16 %v2684, %v2683
        %2701 = vmatprep.subr.bf16.mxu0 0
        %2702 = vmatpush1.bf16.msra.mxu0 %v2692
        %2703 = vmatprep.subr.bf16.mxu0 0
        %2704 = vmatpush1.bf16.msra.mxu0 %v2691
        %2705 = vmatprep.subr.bf16.mxu0 0
        %2706 = vmatpush1.bf16.msra.mxu0 %v2690
        %2707 = vmatprep.subr.bf16.mxu0 0
        %2708 = vmatpush1.bf16.msra.mxu0 %v2689
        %2709 = vmatprep.subr.bf16.mxu0 0
        %2710 = vmatpush1.bf16.msra.mxu0 %v2688
        %2711 = vmatprep.subr.bf16.mxu0 0
        %2712 = vmatpush1.bf16.msra.mxu0 %v2687
        %2713 = vmatprep.subr.bf16.mxu0 0
        %2714 = vmatpush1.bf16.msra.mxu0 %v2686
        %2715 = vmatprep.subr.bf16.mxu0 0
        %2716 = vmatpush1.bf16.msra.mxu0 %v2685
        %2717 = vmatprep.subr.bf16.mxu0 0
        %2718 = vmatpush2.bf16.msra.mxu0 0
        %2719 = vmatprep.subr.bf16.mxu0 0
        %2720 = vmatpush2.bf16.msra.mxu0 0
        %2721 = vmatprep.subr.bf16.mxu0 0
        %2722 = vmatpush2.bf16.msra.mxu0 0
        %2723 = vmatprep.subr.bf16.mxu0 0
        %2724 = vmatpush2.bf16.msra.mxu0 0
        %2725 = vmatprep.subr.bf16.mxu0 0
        %2726 = vmatpush2.bf16.msra.mxu0 0
        %2727 = vmatprep.subr.bf16.mxu0 0
        %2728 = vmatpush2.bf16.msra.mxu0 0
        %2729 = vmatprep.subr.bf16.mxu0 0
        %2730 = vmatpush2.bf16.msra.mxu0 0
        %2731 = vmatprep.subr.bf16.mxu0 0
        %2732 = vmatpush2.bf16.msra.mxu0 0
        %2733 = vmatprep.mubr.bf16.mxu0 0
        %2734 = vmatmul.mubr.bf16.gmra.mxu0 %v2632
        %v2735 = vpop.f32.mrf.mxu0
        %v2736 = vadd.f32 0.0, %v2735
        %v2737 = vpop.f32.mrf.mxu0
        %v2738 = vpop.f32.mrf.mxu0
        %v2739 = vadd.f32 0.0, %v2738
        %v2740 = vpop.f32.mrf.mxu0
        %2741 = vmatprep.mubr.bf16.mxu0 0
        %2742 = vmatmul.mubr.bf16.gmra.mxu0 %v2633
        %v2743 = vpop.f32.mrf.mxu0
        %v2744 = vadd.f32 0.0, %v2743
        %v2745 = vpop.f32.mrf.mxu0
        %v2746 = vpop.f32.mrf.mxu0
        %v2747 = vadd.f32 0.0, %v2746
        %v2748 = vpop.f32.mrf.mxu0
        %2749 = vmatprep.mubr.bf16.mxu0 0
        %2750 = vmatmul.mubr.bf16.gmra.mxu0 %v2634
        %v2751 = vpop.f32.mrf.mxu0
        %v2752 = vadd.f32 0.0, %v2751
        %v2753 = vpop.f32.mrf.mxu0
        %v2754 = vpop.f32.mrf.mxu0
        %v2755 = vadd.f32 0.0, %v2754
        %v2756 = vpop.f32.mrf.mxu0
        %2757 = vmatprep.mubr.bf16.mxu0 0
        %2758 = vmatmul.mubr.bf16.gmra.mxu0 %v2635
        %v2759 = vpop.f32.mrf.mxu0
        %v2760 = vadd.f32 0.0, %v2759
        %v2761 = vpop.f32.mrf.mxu0
        %v2762 = vpop.f32.mrf.mxu0
        %v2763 = vadd.f32 0.0, %v2762
        %v2764 = vpop.f32.mrf.mxu0
        %2765 = vdwg.mxu0
        %v2766 = vadd.f32 %v2424, %v2736
        %v2767 = vadd.f32 %v2425, %v2739
        %v2768 = vadd.f32 %v2426, %v2744
        %v2769 = vadd.f32 %v2427, %v2747
        %v2770 = vadd.f32 %v2428, %v2752
        %v2771 = vadd.f32 %v2429, %v2755
        %v2772 = vadd.f32 %v2430, %v2760
        %v2773 = vadd.f32 %v2431, %v2763
        %v2774 = vld [vmem:[%s2192] sm:$0xe]
        %v2775 = vld [vmem:[%s2192 + $0x8] sm:$0xe]
        %v2776 = vld [vmem:[%s2192 + $0x10] sm:$0xe]
        %v2777 = vld [vmem:[%s2192 + $0x18] sm:$0xe]
        %v2778 = vld [vmem:[%s2192 + $0x20] sm:$0xe]
        %v2779 = vld [vmem:[%s2192 + $0x28] sm:$0xe]
        %v2780 = vld [vmem:[%s2192 + $0x30] sm:$0xe]
        %v2781 = vld [vmem:[%s2192 + $0x38] sm:$0xe]
        %v2782 = vunpack.c.l.bf16 %v2774
        %v2783 = vunpack.c.l.bf16 %v2775
        %v2784 = vunpack.c.l.bf16 %v2776
        %v2785 = vunpack.c.l.bf16 %v2777
        %v2786 = vunpack.c.l.bf16 %v2778
        %v2787 = vunpack.c.l.bf16 %v2779
        %v2788 = vunpack.c.l.bf16 %v2780
        %v2789 = vunpack.c.l.bf16 %v2781
        %v2790 = vld [vmem:[%s2209 + $0x2] sm:$0xff]
        %v2791 = vld [vmem:[%s2209 + $0x12] sm:$0xff]
        %v2792 = vld [vmem:[%s2209 + $0x22] sm:$0xff]
        %v2793 = vld [vmem:[%s2209 + $0x32] sm:$0xff]
        %v2794 = vld [vmem:[%s2209 + $0x42] sm:$0xff]
        %v2795 = vld [vmem:[%s2209 + $0x52] sm:$0xff]
        %v2796 = vld [vmem:[%s2209 + $0x62] sm:$0xff]
        %v2797 = vld [vmem:[%s2209 + $0x72] sm:$0xff]
        %v2798 = vmul.f32 %v2782, %v457
        %v2799 = vmul.f32 %v2783, %v457
        %v2800 = vmul.f32 %v2784, %v457
        %v2801 = vmul.f32 %v2785, %v457
        %v2802 = vmul.f32 %v2786, %v457
        %v2803 = vmul.f32 %v2787, %v457
        %v2804 = vmul.f32 %v2788, %v457
        %v2805 = vmul.f32 %v2789, %v457
        %v2806 = vadd.f32 %v2798, %v471
        %v2807 = vadd.f32 %v2799, %v471
        %v2808 = vadd.f32 %v2800, %v471
        %v2809 = vadd.f32 %v2801, %v471
        %v2810 = vadd.f32 %v2802, %v471
        %v2811 = vadd.f32 %v2803, %v471
        %v2812 = vadd.f32 %v2804, %v471
        %v2813 = vadd.f32 %v2805, %v471
        %v2814 = vmax.f32 %v2806, 0.0
        %v2815 = vmax.f32 %v2807, 0.0
        %v2816 = vmax.f32 %v2808, 0.0
        %v2817 = vmax.f32 %v2809, 0.0
        %v2818 = vmax.f32 %v2810, 0.0
        %v2819 = vmax.f32 %v2811, 0.0
        %v2820 = vmax.f32 %v2812, 0.0
        %v2821 = vmax.f32 %v2813, 0.0
        %2823 = vset.pattern.permute.xlu0 0
        %2824 = vperm.xlu0 %2823, %v2790
        %v2825 = vpop.permute.xlu0 %2824
        %2827 = vset.pattern.permute.xlu0 0
        %2828 = vperm.xlu0 %2827, %v2791
        %v2829 = vpop.permute.xlu0 %2828
        %2831 = vset.pattern.permute.xlu0 0
        %2832 = vperm.xlu0 %2831, %v2792
        %v2833 = vpop.permute.xlu0 %2832
        %2835 = vset.pattern.permute.xlu0 0
        %2836 = vperm.xlu0 %2835, %v2793
        %v2837 = vpop.permute.xlu0 %2836
        %2839 = vset.pattern.permute.xlu0 0
        %2840 = vperm.xlu0 %2839, %v2794
        %v2841 = vpop.permute.xlu0 %2840
        %2843 = vset.pattern.permute.xlu0 0
        %2844 = vperm.xlu0 %2843, %v2795
        %v2845 = vpop.permute.xlu0 %2844
        %2847 = vset.pattern.permute.xlu0 0
        %2848 = vperm.xlu0 %2847, %v2796
        %v2849 = vpop.permute.xlu0 %2848
        %2851 = vset.pattern.permute.xlu0 0
        %2852 = vperm.xlu0 %2851, %v2797
        %v2853 = vpop.permute.xlu0 %2852
        %v2854 = vrot.slane %v2825, 6
        %v2855 = vrot.slane %v2829, 6
        %v2856 = vrot.slane %v2833, 6
        %v2857 = vrot.slane %v2837, 6
        %v2858 = vrot.slane %v2841, 6
        %v2859 = vrot.slane %v2845, 6
        %v2860 = vrot.slane %v2849, 6
        %v2861 = vrot.slane %v2853, 6
        %v2870 = vmul.f32 %v2814, %v2854
        %v2871 = vmul.f32 %v2505, %v2854
        %v2872 = vmul.f32 %v2815, %v2855
        %v2873 = vmul.f32 %v2507, %v2855
        %v2874 = vmul.f32 %v2816, %v2856
        %v2875 = vmul.f32 %v2509, %v2856
        %v2876 = vmul.f32 %v2817, %v2857
        %v2877 = vmul.f32 %v2511, %v2857
        %v2878 = vmul.f32 %v2818, %v2858
        %v2879 = vmul.f32 %v2513, %v2858
        %v2880 = vmul.f32 %v2819, %v2859
        %v2881 = vmul.f32 %v2515, %v2859
        %v2882 = vmul.f32 %v2820, %v2860
        %v2883 = vmul.f32 %v2517, %v2860
        %v2884 = vmul.f32 %v2821, %v2861
        %v2885 = vmul.f32 %v2519, %v2861
        %v2902 = vrot.slane %v2870, 2
        %v2903 = vrot.slane %v2871, 2
        %v2904 = vsel %vm1133, %v2902, %v2903
        %v2905 = vrot.slane %v2872, 2
        %v2906 = vrot.slane %v2873, 2
        %v2907 = vsel %vm1133, %v2905, %v2906
        %v2908 = vrot.slane %v2874, 2
        %v2909 = vrot.slane %v2875, 2
        %v2910 = vsel %vm1133, %v2908, %v2909
        %v2911 = vrot.slane %v2876, 2
        %v2912 = vrot.slane %v2877, 2
        %v2913 = vsel %vm1133, %v2911, %v2912
        %v2914 = vrot.slane %v2878, 2
        %v2915 = vrot.slane %v2879, 2
        %v2916 = vsel %vm1133, %v2914, %v2915
        %v2917 = vrot.slane %v2880, 2
        %v2918 = vrot.slane %v2881, 2
        %v2919 = vsel %vm1133, %v2917, %v2918
        %v2920 = vrot.slane %v2882, 2
        %v2921 = vrot.slane %v2883, 2
        %v2922 = vsel %vm1133, %v2920, %v2921
        %v2923 = vrot.slane %v2884, 2
        %v2924 = vrot.slane %v2885, 2
        %v2925 = vsel %vm1133, %v2923, %v2924
        %v2934 = vpack.c.bf16 %v2907, %v2904
        %v2935 = vpack.c.bf16 %v2913, %v2910
        %v2936 = vpack.c.bf16 %v2919, %v2916
        %v2937 = vpack.c.bf16 %v2925, %v2922
        %s2938 = scalar_lea.vmem %s4, 512
        %v2939 = vld [vmem:[%s2938] sm:$0xf]
        %v2940 = vld [vmem:[%s2938 + $0x4] sm:$0xf]
        %v2941 = vld [vmem:[%s2938 + $0x8] sm:$0xf]
        %v2942 = vld [vmem:[%s2938 + $0xc] sm:$0xf]
        %v2943 = vld [vmem:[%s2938 + $0x10] sm:$0xf]
        %v2944 = vld [vmem:[%s2938 + $0x14] sm:$0xf]
        %v2945 = vld [vmem:[%s2938 + $0x18] sm:$0xf]
        %v2946 = vld [vmem:[%s2938 + $0x1c] sm:$0xf]
        %v2947 = vld [vmem:[%s2938 + $0x20] sm:$0xf]
        %v2948 = vld [vmem:[%s2938 + $0x24] sm:$0xf]
        %v2949 = vld [vmem:[%s2938 + $0x28] sm:$0xf]
        %v2950 = vld [vmem:[%s2938 + $0x2c] sm:$0xf]
        %v2951 = vld [vmem:[%s2938 + $0x30] sm:$0xf]
        %v2952 = vld [vmem:[%s2938 + $0x34] sm:$0xf]
        %v2953 = vld [vmem:[%s2938 + $0x38] sm:$0xf]
        %v2954 = vld [vmem:[%s2938 + $0x3c] sm:$0xf]
        %v2971 = vunpack.c.l.b16 %v2939
        %v2972 = vunpack.c.l.b16 %v2940
        %v2973 = vunpack.c.l.b16 %v2941
        %v2974 = vunpack.c.l.b16 %v2942
        %v2975 = vunpack.c.l.b16 %v2943
        %v2976 = vunpack.c.l.b16 %v2944
        %v2977 = vunpack.c.l.b16 %v2945
        %v2978 = vunpack.c.l.b16 %v2946
        %v2979 = vunpack.c.l.b16 %v2947
        %v2980 = vunpack.c.l.b16 %v2948
        %v2981 = vunpack.c.l.b16 %v2949
        %v2982 = vunpack.c.l.b16 %v2950
        %v2983 = vunpack.c.l.b16 %v2951
        %v2984 = vunpack.c.l.b16 %v2952
        %v2985 = vunpack.c.l.b16 %v2953
        %v2986 = vunpack.c.l.b16 %v2954
        %v2987 = vpack.c.b16 %v2972, %v2971
        %v2988 = vpack.c.b16 %v2974, %v2973
        %v2989 = vpack.c.b16 %v2976, %v2975
        %v2990 = vpack.c.b16 %v2978, %v2977
        %v2991 = vpack.c.b16 %v2980, %v2979
        %v2992 = vpack.c.b16 %v2982, %v2981
        %v2993 = vpack.c.b16 %v2984, %v2983
        %v2994 = vpack.c.b16 %v2986, %v2985
        %3003 = vmatprep.subr.bf16.mxu0 0
        %3004 = vmatpush1.bf16.msra.mxu0 %v2994
        %3005 = vmatprep.subr.bf16.mxu0 0
        %3006 = vmatpush1.bf16.msra.mxu0 %v2993
        %3007 = vmatprep.subr.bf16.mxu0 0
        %3008 = vmatpush1.bf16.msra.mxu0 %v2992
        %3009 = vmatprep.subr.bf16.mxu0 0
        %3010 = vmatpush1.bf16.msra.mxu0 %v2991
        %3011 = vmatprep.subr.bf16.mxu0 0
        %3012 = vmatpush1.bf16.msra.mxu0 %v2990
        %3013 = vmatprep.subr.bf16.mxu0 0
        %3014 = vmatpush1.bf16.msra.mxu0 %v2989
        %3015 = vmatprep.subr.bf16.mxu0 0
        %3016 = vmatpush1.bf16.msra.mxu0 %v2988
        %3017 = vmatprep.subr.bf16.mxu0 0
        %3018 = vmatpush1.bf16.msra.mxu0 %v2987
        %3019 = vmatprep.subr.bf16.mxu0 0
        %3020 = vmatpush2.bf16.msra.mxu0 0
        %3021 = vmatprep.subr.bf16.mxu0 0
        %3022 = vmatpush2.bf16.msra.mxu0 0
        %3023 = vmatprep.subr.bf16.mxu0 0
        %3024 = vmatpush2.bf16.msra.mxu0 0
        %3025 = vmatprep.subr.bf16.mxu0 0
        %3026 = vmatpush2.bf16.msra.mxu0 0
        %3027 = vmatprep.subr.bf16.mxu0 0
        %3028 = vmatpush2.bf16.msra.mxu0 0
        %3029 = vmatprep.subr.bf16.mxu0 0
        %3030 = vmatpush2.bf16.msra.mxu0 0
        %3031 = vmatprep.subr.bf16.mxu0 0
        %3032 = vmatpush2.bf16.msra.mxu0 0
        %3033 = vmatprep.subr.bf16.mxu0 0
        %3034 = vmatpush2.bf16.msra.mxu0 0
        %3035 = vmatprep.mubr.bf16.mxu0 0
        %3036 = vmatmul.mubr.bf16.gmra.mxu0 %v2934
        %v3037 = vpop.f32.mrf.mxu0
        %v3038 = vadd.f32 0.0, %v3037
        %v3039 = vpop.f32.mrf.mxu0
        %v3040 = vpop.f32.mrf.mxu0
        %v3041 = vadd.f32 0.0, %v3040
        %v3042 = vpop.f32.mrf.mxu0
        %3043 = vmatprep.mubr.bf16.mxu0 0
        %3044 = vmatmul.mubr.bf16.gmra.mxu0 %v2935
        %v3045 = vpop.f32.mrf.mxu0
        %v3046 = vadd.f32 0.0, %v3045
        %v3047 = vpop.f32.mrf.mxu0
        %v3048 = vpop.f32.mrf.mxu0
        %v3049 = vadd.f32 0.0, %v3048
        %v3050 = vpop.f32.mrf.mxu0
        %3051 = vmatprep.mubr.bf16.mxu0 0
        %3052 = vmatmul.mubr.bf16.gmra.mxu0 %v2936
        %v3053 = vpop.f32.mrf.mxu0
        %v3054 = vadd.f32 0.0, %v3053
        %v3055 = vpop.f32.mrf.mxu0
        %v3056 = vpop.f32.mrf.mxu0
        %v3057 = vadd.f32 0.0, %v3056
        %v3058 = vpop.f32.mrf.mxu0
        %3059 = vmatprep.mubr.bf16.mxu0 0
        %3060 = vmatmul.mubr.bf16.gmra.mxu0 %v2937
        %v3061 = vpop.f32.mrf.mxu0
        %v3062 = vadd.f32 0.0, %v3061
        %v3063 = vpop.f32.mrf.mxu0
        %v3064 = vpop.f32.mrf.mxu0
        %v3065 = vadd.f32 0.0, %v3064
        %v3066 = vpop.f32.mrf.mxu0
        %3067 = vdwg.mxu0
        %v3068 = vadd.f32 %v2766, %v3038
        %v3069 = vadd.f32 %v2767, %v3041
        %v3070 = vadd.f32 %v2768, %v3046
        %v3071 = vadd.f32 %v2769, %v3049
        %v3072 = vadd.f32 %v2770, %v3054
        %v3073 = vadd.f32 %v2771, %v3057
        %v3074 = vadd.f32 %v2772, %v3062
        %v3075 = vadd.f32 %v2773, %v3065
        %v3076 = vld [vmem:[%s5] sm:$0x1]
        %v3078 = vlaneseq
        %v3079 = vshrl.u32 %v3078, 7
        %v3080 = vsub.s32 0, %v3079
        %v3081 = vrot.slane %v3076, %v3080
        %v3083 = vadd.f32 %v3068, %v3081
        %v3084 = vadd.f32 %v3069, %v3081
        %v3085 = vadd.f32 %v3070, %v3081
        %v3086 = vadd.f32 %v3071, %v3081
        %v3087 = vadd.f32 %v3072, %v3081
        %v3088 = vadd.f32 %v3073, %v3081
        %v3089 = vadd.f32 %v3074, %v3081
        %v3090 = vadd.f32 %v3075, %v3081
        %v3091 = vadd.f32 %v3083, %v3084
        %v3092 = vadd.f32 %v3091, %v3085
        %v3093 = vadd.f32 %v3092, %v3086
        %v3094 = vadd.f32 %v3093, %v3087
        %v3095 = vadd.f32 %v3094, %v3088
        %v3096 = vadd.f32 %v3095, %v3089
        %v3097 = vadd.f32 %v3096, %v3090
        %v3098 = vrot.slane %v3097, 4
        %v3099 = vadd.f32 %v3097, %v3098
        %v3100 = vrot.slane %v3099, 2
        %v3101 = vadd.f32 %v3099, %v3100
        %v3102 = vrot.slane %v3101, 1
        %v3103 = vadd.f32 %v3101, %v3102
        %3104 = vst [vmem:[%s404] sm:$0x1] %v3103
        %v3105 = vmul.f32 %v3083, %v3083
        %v3106 = vmul.f32 %v3084, %v3084
        %v3107 = vmul.f32 %v3085, %v3085
        %v3108 = vmul.f32 %v3086, %v3086
        %v3109 = vmul.f32 %v3087, %v3087
        %v3110 = vmul.f32 %v3088, %v3088
        %v3111 = vmul.f32 %v3089, %v3089
        %v3112 = vmul.f32 %v3090, %v3090
        %v3113 = vadd.f32 %v3105, %v3106
        %v3114 = vadd.f32 %v3113, %v3107
        %v3115 = vadd.f32 %v3114, %v3108
        %v3116 = vadd.f32 %v3115, %v3109
        %v3117 = vadd.f32 %v3116, %v3110
        %v3118 = vadd.f32 %v3117, %v3111
        %v3119 = vadd.f32 %v3118, %v3112
        %v3120 = vrot.slane %v3119, 4
        %v3121 = vadd.f32 %v3119, %v3120
        %v3122 = vrot.slane %v3121, 2
        %v3123 = vadd.f32 %v3121, %v3122
        %v3124 = vrot.slane %v3123, 1
        %v3125 = vadd.f32 %v3123, %v3124
        %3126 = vst [vmem:[%s410] sm:$0x1] %v3125
        %v3127 = vld [vmem:[%s420] sm:$0xff]
        %v3128 = vld [vmem:[%s420 + $0x8] sm:$0xff]
        %v3129 = vld [vmem:[%s420 + $0x10] sm:$0xff]
        %v3130 = vld [vmem:[%s420 + $0x18] sm:$0xff]
        %v3131 = vld [vmem:[%s420 + $0x20] sm:$0xff]
        %v3132 = vld [vmem:[%s420 + $0x28] sm:$0xff]
        %v3133 = vld [vmem:[%s420 + $0x30] sm:$0xff]
        %v3134 = vld [vmem:[%s420 + $0x38] sm:$0xff]
        %v3135 = vld [vmem:[%s7] sm:$0x1]
        %v3137 = vlaneseq
        %v3138 = vshrl.u32 %v3137, 7
        %v3139 = vsub.s32 0, %v3138
        %v3140 = vrot.slane %v3135, %v3139
        %v3142 = vmul.f32 %v3127, %v3140
        %v3143 = vmul.f32 %v3128, %v3140
        %v3144 = vmul.f32 %v3129, %v3140
        %v3145 = vmul.f32 %v3130, %v3140
        %v3146 = vmul.f32 %v3131, %v3140
        %v3147 = vmul.f32 %v3132, %v3140
        %v3148 = vmul.f32 %v3133, %v3140
        %v3149 = vmul.f32 %v3134, %v3140
        %v3150 = vadd.f32 %v3083, %v3142
        %v3151 = vadd.f32 %v3084, %v3143
        %v3152 = vadd.f32 %v3085, %v3144
        %v3153 = vadd.f32 %v3086, %v3145
        %v3154 = vadd.f32 %v3087, %v3146
        %v3155 = vadd.f32 %v3088, %v3147
        %v3156 = vadd.f32 %v3089, %v3148
        %v3157 = vadd.f32 %v3090, %v3149
        %v3158 = vld [vmem:[%s8] sm:$0x1]
        %v3160 = vlaneseq
        %v3161 = vshrl.u32 %v3160, 7
        %v3162 = vsub.s32 0, %v3161
        %v3163 = vrot.slane %v3158, %v3162
        %v3165 = vadd.f32 %v3150, %v3163
        %v3166 = vadd.f32 %v3151, %v3163
        %v3167 = vadd.f32 %v3152, %v3163
        %v3168 = vadd.f32 %v3153, %v3163
        %v3169 = vadd.f32 %v3154, %v3163
        %v3170 = vadd.f32 %v3155, %v3163
        %v3171 = vadd.f32 %v3156, %v3163
        %v3172 = vadd.f32 %v3157, %v3163
        %3173 = vst [vmem:[%s425] sm:$0xff] %v3165
        %3174 = vst [vmem:[%s425 + $0x8] sm:$0xff] %v3166
        %3175 = vst [vmem:[%s425 + $0x10] sm:$0xff] %v3167
        %3176 = vst [vmem:[%s425 + $0x18] sm:$0xff] %v3168
        %3177 = vst [vmem:[%s425 + $0x20] sm:$0xff] %v3169
        %3178 = vst [vmem:[%s425 + $0x28] sm:$0xff] %v3170
        %3179 = vst [vmem:[%s425 + $0x30] sm:$0xff] %v3171
        %3180 = vst [vmem:[%s425 + $0x38] sm:$0xff] %v3172
        %p3181 = scmp.lt.s32.totalorder %s29, 1
        %s3182 = scalar_select %p3181, %s29, 1
        %s3183 = smul.addr %s3182, 8
        %s3184 = smul.addr %s3183, 8
        %s3185 = scalar_lea.vmem %s9, %s3184
        %s3186 = sand.u32 %s262, 1
        %s3187 = scalar_lea.sflag [#allocation3], %s3186
        %s3188 = sand.u32 %s262, 1
        %s3189 = scalar_lea.vmem [#allocation2], %s3188
        %s3190 = sand.u32 %s288, 1
        %s3191 = scalar_lea.sflag [#allocation5], %s3190
        %s3192 = sand.u32 %s288, 1
        %s3193 = scalar_lea.vmem [#allocation4], %s3192
        // Predicated region
        $region57: #{res_unet_down_block_forward.7} parent=55 // pred_check
          %p3194 = pneg %p246
        $region58: #{res_unet_down_block_forward.7} parent=55 // pred_check_branch
          %3196 = sbr.rel (%p3194) target = $region60
        $region59: #{res_unet_down_block_forward.7} parent=55 // pred_region
          _
        $region60: #{res_unet_down_block_forward.7} parent=55 // pred_fallthru
          _
        // Predicated region
        $region61: #{res_unet_down_block_forward.7} parent=55 // pred_check
          %p3197 = pneg %p272
        $region62: #{res_unet_down_block_forward.7} parent=55 // pred_check_branch
          %3199 = sbr.rel (%p3197) target = $region64
        $region63: #{res_unet_down_block_forward.7} parent=55 // pred_region
          %s3201 = ssub.s32 16, 16
          %3202 = vsyncadd %s3187, %s3201
          %s3203 = smul.addr %s29, 16
          %s3204 = scalar_lea.hbm %s10, %s3203
          %s3206 = sshll.u32 %s3189, 4
          %s3207 = int_to_ptr.vmem [resolvable:$true] %s3206
          %3209 = dma.vmem_to_hbm [thread:$0]  %s3207, 16, %s3204, %s3187
        $region64: #{res_unet_down_block_forward.7} parent=55 // pred_fallthru
          _
        // Predicated region
        $region65: #{res_unet_down_block_forward.7} parent=55 // pred_check
          %p3210 = pneg %p298
        $region66: #{res_unet_down_block_forward.7} parent=55 // pred_check_branch
          %3212 = sbr.rel (%p3210) target = $region68
        $region67: #{res_unet_down_block_forward.7} parent=55 // pred_region
          %s3214 = ssub.s32 16, 16
          %3215 = vsyncadd %s3191, %s3214
          %s3216 = smul.addr %s29, 16
          %s3217 = scalar_lea.hbm %s11, %s3216
          %s3219 = sshll.u32 %s3193, 4
          %s3220 = int_to_ptr.vmem [resolvable:$true] %s3219
          %3222 = dma.vmem_to_hbm [thread:$0]  %s3220, 16, %s3217, %s3191
        $region68: #{res_unet_down_block_forward.7} parent=55 // pred_fallthru
          _
      $region56: #{res_unet_down_block_forward.7} parent=5 // pred_fallthru
        _
      %p3223 = scmp.le.s32.totalorder 2, %s24
      // Predicated region
      $region69: #{res_unet_down_block_forward.7} parent=5 // pred_check
        %p3224 = pneg %p3223
      $region70: #{res_unet_down_block_forward.7} parent=5 // pred_check_branch
        %3226 = sbr.rel (%p3224) target = $region72
      $region71: #{res_unet_down_block_forward.7} parent=5 // pred_region
        %s3227 = ssub.s32 %s24, 2
        // Predicated region
        $region73: #{res_unet_down_block_forward.7} parent=71 // pred_check
          %p3228 = pneg %p252
        $region74: #{res_unet_down_block_forward.7} parent=71 // pred_check_branch
          %3230 = sbr.rel (%p3228) target = $region76
        $region75: #{res_unet_down_block_forward.7} parent=71 // pred_region
          %p3231 = scmp.lt.s32.totalorder %s30, 1
          %s3232 = scalar_select %p3231, %s30, 1
          %s3233 = smul.addr %s3232, 8
          %s3234 = smul.addr %s3233, 8
          %s3235 = scalar_lea.vmem %s9, %s3234
        $region76: #{res_unet_down_block_forward.7} parent=71 // pred_fallthru
          _
        // Predicated region
        $region77: #{res_unet_down_block_forward.7} parent=71 // pred_check
          %p3236 = pneg %p278
        $region78: #{res_unet_down_block_forward.7} parent=71 // pred_check_branch
          %3238 = sbr.rel (%p3236) target = $region80
        $region79: #{res_unet_down_block_forward.7} parent=71 // pred_region
          %s3239 = sand.u32 %s263, 1
          %s3240 = scalar_lea.sflag [#allocation3], %s3239
          %s3241 = sand.u32 %s263, 1
          %s3242 = scalar_lea.vmem [#allocation2], %s3241
          %3243 = dma.done %s3240, 16
        $region80: #{res_unet_down_block_forward.7} parent=71 // pred_fallthru
          _
        // Predicated region
        $region81: #{res_unet_down_block_forward.7} parent=71 // pred_check
          %p3244 = pneg %p304
        $region82: #{res_unet_down_block_forward.7} parent=71 // pred_check_branch
          %3246 = sbr.rel (%p3244) target = $region84
        $region83: #{res_unet_down_block_forward.7} parent=71 // pred_region
          %s3247 = sand.u32 %s289, 1
          %s3248 = scalar_lea.sflag [#allocation5], %s3247
          %s3249 = sand.u32 %s289, 1
          %s3250 = scalar_lea.vmem [#allocation4], %s3249
          %3251 = dma.done %s3248, 16
        $region84: #{res_unet_down_block_forward.7} parent=71 // pred_fallthru
          _
      $region72: #{res_unet_down_block_forward.7} parent=5 // pred_fallthru
        _
    $region6: #{res_unet_down_block_forward.7} parent=1 // loop_footer
      %s28 = sadd.s32 1, %s24
    $region7: #{res_unet_down_block_forward.7} parent=1 // loop_footer_branch
      %23 = sbr.rel target = $region3
    $region8: #{res_unet_down_block_forward.7} parent=1 // loop_exit
      _
    %3252 = vsyncpa [#allocation3], 1
    %s3253 = scalar_lea.sflag [#allocation3], 1
    %3254 = vsyncpa %s3253, 1
    %3255 = vsyncpa [#allocation5], 1
    %s3256 = scalar_lea.sflag [#allocation5], 1
    %3257 = vsyncpa %s3256, 1

</llo_original>
